<compile_context>
chip_gen: v7x
topology: tpu7x:2x2x1
jax: 0.10.0
libtpu: 0.0.40
codegen_flags: <defaults>
</compile_context>

<pallas_src>
import functools
import math

import jax
import jax.numpy as jnp
from jax.experimental import pallas as pl
from jax.experimental.pallas import tpu as pltpu

EPS = 1e-5


# ----------------------------------------------------------------------------
# Helpers
# ----------------------------------------------------------------------------
def _rms_norm(x, w, eps):
    return x * jax.lax.rsqrt(jnp.mean(x * x, axis=-1, keepdims=True) + eps) * w


# ----------------------------------------------------------------------------
# Kernels
# ----------------------------------------------------------------------------
def _conv_body(x_ref, w_ref, scale_ref, bias_ref, o_ref, xpad_ref, res,
               *, NB, H, W, Cin, Cout):
    """3x3 conv (padding=1) + folded BN (+ optional residual) + ReLU.

    x_ref   : (NB, H, W, Cin)      unpadded NHWC batch tile
    w_ref   : (9*Cin, Cout)        weight rows in (dy, dx, cin) order
    scale/bias : (1, Cout) fp32    folded BN affine
    o_ref   : (NB, H, W, Cout)
    xpad_ref: (NB, H+2, W+2, Cin)  VMEM scratch (in-kernel zero padding)
    res     : (NB, H, W, Cout) value or None
    """
    # zero-pad inside the kernel: no wrapper-side jnp.pad HBM round trip.
    xpad_ref[...] = jnp.zeros_like(xpad_ref)
    xpad_ref[:, 1:H + 1, 1:W + 1, :] = x_ref[...]
    # im2col: 9 shifted windows concatenated along channels -> one big MXU dot
    # with M = NB*H*W and K = 9*Cin (instead of 9 small K=Cin dots per sample).
    cols = jnp.concatenate(
        [xpad_ref[:, dy:dy + H, dx:dx + W, :]
         for dy in range(3) for dx in range(3)],
        axis=-1).reshape(NB * H * W, 9 * Cin)
    y = jnp.dot(cols, w_ref[...], preferred_element_type=jnp.float32)
    y = y * scale_ref[...] + bias_ref[...]
    if res is not None:
        y = y + res.reshape(NB * H * W, Cout).astype(jnp.float32)
    y = jnp.maximum(y, 0.0)
    o_ref[...] = y.reshape(NB, H, W, Cout).astype(o_ref.dtype)


def conv_bn_relu_kernel(x_ref, w_ref, scale_ref, bias_ref, o_ref, xpad_ref,
                        *, NB, H, W, Cin, Cout):
    _conv_body(x_ref, w_ref, scale_ref, bias_ref, o_ref, xpad_ref, None,
               NB=NB, H=H, W=W, Cin=Cin, Cout=Cout)


def conv_bn_relu_res_kernel(x_ref, w_ref, scale_ref, bias_ref, res_ref, o_ref,
                            xpad_ref, *, NB, H, W, Cin, Cout):
    _conv_body(x_ref, w_ref, scale_ref, bias_ref, o_ref, xpad_ref, res_ref[...],
               NB=NB, H=H, W=W, Cin=Cin, Cout=Cout)


def linear_kernel(x_ref, w_ref, b_ref, o_ref, acc_ref):
    """K-tiled Linear: grid over K chunks, fp32 accumulator, bias at the end."""
    k = pl.program_id(0)

    @pl.when(k == 0)
    def _():
        acc_ref[...] = jnp.zeros_like(acc_ref)

    acc_ref[...] += jnp.dot(x_ref[...], w_ref[...],
                            preferred_element_type=jnp.float32)

    @pl.when(k == pl.num_programs(0) - 1)
    def _():
        o_ref[...] = (acc_ref[...] + b_ref[...].astype(jnp.float32)
                      ).astype(o_ref.dtype)


def llama_stack_kernel(x_ref, an_ref, wv_ref, wo_ref, mn_ref, wg_ref, wu_ref,
                       wd_ref, fn_ref, pw_ref, pb_ref, vw_ref, vb_ref,
                       pol_ref, val_ref, acc_ref, *, eps):
    """All decoder layers in one call (grid axis = layer) + fused heads.

    seq_len == 1: softmax over one key is identity, RoPE@pos0 is identity, so
    the attention sub-block is o_proj(v_proj(rmsnorm(x))).  The hidden state is
    carried across layers in a resident fp32 VMEM accumulator; the final-norm /
    policy / value epilogue runs only on the last layer.
    """
    l = pl.program_id(0)

    @pl.when(l == 0)
    def _():
        acc_ref[...] = x_ref[...].astype(jnp.float32)

    x = acc_ref[...]                                             # (N, Hd) fp32
    # --- attention sub-block ---
    h = _rms_norm(x, an_ref[0].astype(jnp.float32), eps)
    v = jnp.dot(h.astype(jnp.bfloat16), wv_ref[0],
                preferred_element_type=jnp.float32)
    x = x + jnp.dot(v.astype(jnp.bfloat16), wo_ref[0],
                    preferred_element_type=jnp.float32)
    # --- SwiGLU MLP sub-block ---
    g = _rms_norm(x, mn_ref[0].astype(jnp.float32), eps).astype(jnp.bfloat16)
    gate = jnp.dot(g, wg_ref[0], preferred_element_type=jnp.float32)
    up = jnp.dot(g, wu_ref[0], preferred_element_type=jnp.float32)
    act = (gate * jax.nn.sigmoid(gate)) * up
    x = x + jnp.dot(act.astype(jnp.bfloat16), wd_ref[0],
                    preferred_element_type=jnp.float32)
    acc_ref[...] = x

    @pl.when(l == pl.num_programs(0) - 1)
    def _():
        hf = _rms_norm(x, fn_ref[...].astype(jnp.float32), eps
                       ).astype(jnp.bfloat16)
        pol = jnp.dot(hf, pw_ref[...], preferred_element_type=jnp.float32) \
            + pb_ref[...].astype(jnp.float32)
        val = jnp.dot(hf, vw_ref[...], preferred_element_type=jnp.float32) \
            + vb_ref[...].astype(jnp.float32)
        pol_ref[...] = pol.astype(pol_ref.dtype)
        val_ref[...] = jnp.tanh(val).astype(val_ref.dtype)


# ----------------------------------------------------------------------------
# pallas_call wrappers
# ----------------------------------------------------------------------------
def conv3x3_bn_relu(x_nhwc, w, scale, bias, residual=None):
    N, H, W, Cin = x_nhwc.shape
    Cout = w.shape[-1]
    NB = N                      # fold the whole (small) batch into the MXU M dim
    grid = (N // NB,)
    common = dict(NB=NB, H=H, W=W, Cin=Cin, Cout=Cout)

    x_spec = pl.BlockSpec((NB, H, W, Cin), lambda n: (n, 0, 0, 0))
    w_spec = pl.BlockSpec((9 * Cin, Cout), lambda n: (0, 0))
    sb_spec = pl.BlockSpec((1, Cout), lambda n: (0, 0))
    io_spec = pl.BlockSpec((NB, H, W, Cout), lambda n: (n, 0, 0, 0))

    if residual is None:
        kernel = functools.partial(conv_bn_relu_kernel, **common)
        in_specs = [x_spec, w_spec, sb_spec, sb_spec]
        args = (x_nhwc, w, scale, bias)
    else:
        kernel = functools.partial(conv_bn_relu_res_kernel, **common)
        in_specs = [x_spec, w_spec, sb_spec, sb_spec, io_spec]
        args = (x_nhwc, w, scale, bias, residual)

    return pl.pallas_call(
        kernel,
        out_shape=jax.ShapeDtypeStruct((N, H, W, Cout), jnp.bfloat16),
        grid=grid,
        in_specs=in_specs,
        out_specs=io_spec,
        scratch_shapes=[pltpu.VMEM((NB, H + 2, W + 2, Cin), jnp.bfloat16)],
        compiler_params=pltpu.CompilerParams(
            dimension_semantics=("parallel",)),   # batch tiles are independent
    )(*args)


def linear(x, w, b, *, block_k=2048):
    N, K = x.shape
    M = w.shape[1]
    tk = min(K, block_k)
    if K % tk:
        tk = K
    return pl.pallas_call(
        linear_kernel,
        out_shape=jax.ShapeDtypeStruct((N, M), jnp.bfloat16),
        grid=(K // tk,),
        in_specs=[
            pl.BlockSpec((N, tk), lambda k: (0, k)),
            pl.BlockSpec((tk, M), lambda k: (k, 0)),
            pl.BlockSpec((1, M), lambda k: (0, 0)),
        ],
        out_specs=pl.BlockSpec((N, M), lambda k: (0, 0)),
        scratch_shapes=[pltpu.VMEM((N, M), jnp.float32)],
        compiler_params=pltpu.CompilerParams(
            dimension_semantics=("arbitrary",)),
    )(x, w, b)


def llama_stack_and_heads(x, params, eps=EPS):
    N, Hd = x.shape
    lp = params["llama"]
    L = lp["w_v"].shape[0]
    I = lp["w_gate"].shape[-1]
    A = params["policy_w"].shape[1]
    kernel = functools.partial(llama_stack_kernel, eps=eps)
    return pl.pallas_call(
        kernel,
        out_shape=(jax.ShapeDtypeStruct((N, A), jnp.bfloat16),
                   jax.ShapeDtypeStruct((N, 1), jnp.bfloat16)),
        grid=(L,),
        in_specs=[
            pl.BlockSpec((N, Hd), lambda l: (0, 0)),          # x (resident)
            pl.BlockSpec((1, 1, Hd), lambda l: (l, 0, 0)),    # attn_norm[l]
            pl.BlockSpec((1, Hd, Hd), lambda l: (l, 0, 0)),   # w_v[l]
            pl.BlockSpec((1, Hd, Hd), lambda l: (l, 0, 0)),   # w_o[l]
            pl.BlockSpec((1, 1, Hd), lambda l: (l, 0, 0)),    # mlp_norm[l]
            pl.BlockSpec((1, Hd, I), lambda l: (l, 0, 0)),    # w_gate[l]
            pl.BlockSpec((1, Hd, I), lambda l: (l, 0, 0)),    # w_up[l]
            pl.BlockSpec((1, I, Hd), lambda l: (l, 0, 0)),    # w_down[l]
            pl.BlockSpec((1, Hd), lambda l: (0, 0)),          # final_norm
            pl.BlockSpec((Hd, A), lambda l: (0, 0)),          # policy_w
            pl.BlockSpec((1, A), lambda l: (0, 0)),           # policy_b
            pl.BlockSpec((Hd, 1), lambda l: (0, 0)),          # value_w
            pl.BlockSpec((1, 1), lambda l: (0, 0)),           # value_b
        ],
        out_specs=(pl.BlockSpec((N, A), lambda l: (0, 0)),
                   pl.BlockSpec((N, 1), lambda l: (0, 0))),
        scratch_shapes=[pltpu.VMEM((N, Hd), jnp.float32)],
        compiler_params=pltpu.CompilerParams(
            dimension_semantics=("arbitrary",)),   # hidden state carried across l
    )(x, lp["attn_norm"], lp["w_v"], lp["w_o"], lp["mlp_norm"],
      lp["w_gate"], lp["w_up"], lp["w_down"],
      params["final_norm"], params["policy_w"], params["policy_b"],
      params["value_w"], params["value_b"])


# ----------------------------------------------------------------------------
# Forward pass (glue: only the NCHW->NHWC input transpose and a flat reshape)
# ----------------------------------------------------------------------------
def forward(params, x_nchw):
    x = x_nchw.astype(jnp.bfloat16)
    x = jnp.transpose(x, (0, 2, 3, 1))                  # NCHW -> NHWC (tiny input)
    # cnn_head: Conv+BN+ReLU stem, then residual blocks
    x = conv3x3_bn_relu(x, params["head_w"], params["head_scale"],
                        params["head_bias"])
    for blk in params["res_blocks"]:
        y = conv3x3_bn_relu(x, blk["w1"], blk["scale1"], blk["bias1"])
        x = conv3x3_bn_relu(y, blk["w2"], blk["scale2"], blk["bias2"],
                            residual=x)
    # flatten directly in NHWC order; bridge weight rows are stored in matching
    # (h, w, c) order so no channel-major transpose / relayout pass is needed.
    N, H, W, C = x.shape
    flat = x.reshape(N, H * W * C)
    emb = linear(flat, params["bridge_w"], params["bridge_b"])   # bridge (K-tiled)
    # fused decoder stack + heads (seq_len == 1)
    policy_logits, value = llama_stack_and_heads(emb, params)
    return policy_logits, value


# ----------------------------------------------------------------------------
# Deterministic parameter init (synthetic, matches module shapes)
# ----------------------------------------------------------------------------
def init_params(key, *, board_shape, in_channels, action_space_size,
                cnn_channels, num_res_blocks, hidden, intermediate, num_layers):
    H, W = board_shape
    keys = iter(jax.random.split(key, 256))

    def nk():
        return next(keys)

    def conv_w(cin, cout):
        # rows in (dy, dx, cin) order == torch weight.permute(2, 3, 1, 0).reshape
        return (jax.random.normal(nk(), (9 * cin, cout), jnp.float32)
                * (1.0 / math.sqrt(9 * cin))).astype(jnp.bfloat16)

    def bn(c):
        gamma = 1.0 + 0.1 * jax.random.normal(nk(), (1, c), jnp.float32)
        beta = 0.1 * jax.random.normal(nk(), (1, c), jnp.float32)
        mean = 0.1 * jax.random.normal(nk(), (1, c), jnp.float32)
        var = 1.0 + 0.1 * jnp.abs(jax.random.normal(nk(), (1, c), jnp.float32))
        scale = gamma / jnp.sqrt(var + EPS)
        bias = beta - mean * scale
        return scale.astype(jnp.float32), bias.astype(jnp.float32)

    def lin(k_in, k_out):
        w = (jax.random.normal(nk(), (k_in, k_out), jnp.float32)
             * (1.0 / math.sqrt(k_in))).astype(jnp.bfloat16)
        b = jnp.zeros((1, k_out), jnp.bfloat16)
        return w, b

    def stacked(shape, fan_in):
        return (jax.random.normal(nk(), shape, jnp.float32)
                * (1.0 / math.sqrt(fan_in))).astype(jnp.bfloat16)

    params = {}
    params["head_w"] = conv_w(in_channels, cnn_channels)
    params["head_scale"], params["head_bias"] = bn(cnn_channels)
    res = []
    for _ in range(num_res_blocks):
        w1 = conv_w(cnn_channels, cnn_channels)
        s1, b1 = bn(cnn_channels)
        w2 = conv_w(cnn_channels, cnn_channels)
        s2, b2 = bn(cnn_channels)
        res.append(dict(w1=w1, scale1=s1, bias1=b1, w2=w2, scale2=s2, bias2=b2))
    params["res_blocks"] = res

    cnn_out = cnn_channels * H * W
    # bridge weight rows stored in NHWC-flatten order (pretrained torch weights,
    # whose rows are in C,H,W order, would be row-permuted once at load time).
    params["bridge_w"], params["bridge_b"] = lin(cnn_out, hidden)

    L, Hd, I = num_layers, hidden, intermediate
    params["llama"] = dict(
        attn_norm=jnp.ones((L, 1, Hd), jnp.bfloat16),
        w_v=stacked((L, Hd, Hd), Hd),
        w_o=stacked((L, Hd, Hd), Hd),
        mlp_norm=jnp.ones((L, 1, Hd), jnp.bfloat16),
        w_gate=stacked((L, Hd, I), Hd),
        w_up=stacked((L, Hd, I), Hd),
        w_down=stacked((L, I, Hd), I),
    )
    params["final_norm"] = jnp.ones((1, Hd), jnp.bfloat16)
    params["policy_w"], params["policy_b"] = lin(Hd, action_space_size)
    params["value_w"], params["value_b"] = lin(Hd, 1)
    return params


# ----------------------------------------------------------------------------
if __name__ == "__main__":
    key = jax.random.PRNGKey(0)
    pkey, xkey = jax.random.split(key)

    board_shape = (8, 8)
    in_channels = 4
    action_space_size = 16
    cnn_channels = 128       # small but lane-dense stand-in for 256
    num_res_blocks = 2       # small stand-in for 5
    hidden = 128             # small, lane-dense stand-in for SmolLM2's 576
    intermediate = 256
    num_layers = 2

    params = init_params(
        pkey, board_shape=board_shape, in_channels=in_channels,
        action_space_size=action_space_size, cnn_channels=cnn_channels,
        num_res_blocks=num_res_blocks, hidden=hidden,
        intermediate=intermediate, num_layers=num_layers)

    x = jax.random.normal(xkey, (2, in_channels, *board_shape), jnp.float32)

    fwd = jax.jit(forward)
    policy_logits, value = fwd(params, x)
    jax.block_until_ready((policy_logits, value))

    assert policy_logits.shape == (2, action_space_size)
    assert value.shape == (2, 1)
    assert policy_logits.dtype == jnp.bfloat16 and value.dtype == jnp.bfloat16
    assert bool(jnp.all(jnp.isfinite(policy_logits.astype(jnp.float32))))
    assert bool(jnp.all(jnp.isfinite(value.astype(jnp.float32))))
    print("KERNEL_OK")
</pallas_src>

<mosaic_0001>
module attributes {stable_mosaic.version = 11 : i64} {
  func.func @conv_bn_relu_kernel(%arg0: i32, %arg1: memref<2x8x8x4xbf16, #tpu.memory_space<vmem>>, %arg2: memref<36x128xbf16, #tpu.memory_space<vmem>>, %arg3: memref<1x128xf32, #tpu.memory_space<vmem>>, %arg4: memref<1x128xf32, #tpu.memory_space<vmem>>, %arg5: memref<2x8x8x128xbf16, #tpu.memory_space<vmem>>, %arg6: memref<2x10x10x4xbf16, #tpu.memory_space<vmem>>) attributes {dimension_semantics = [#tpu.dimension_semantics<parallel>], iteration_bounds = array<i64: 1>, scalar_prefetch = 0 : i64, scratch_operands = 1 : i64, tpu.core_type = #tpu.core_type<tc>, window_params = [{transform_indices = @transform_0, window_bounds = array<i64: 2, 8, 8, 4>}, {pipeline_mode = #tpu.pipeline_mode<synchronous>, transform_indices = @transform_1, window_bounds = array<i64: 36, 128>}, {pipeline_mode = #tpu.pipeline_mode<synchronous>, transform_indices = @transform_2, window_bounds = array<i64: 1, 128>}, {pipeline_mode = #tpu.pipeline_mode<synchronous>, transform_indices = @transform_3, window_bounds = array<i64: 1, 128>}, {transform_indices = @transform_4, window_bounds = array<i64: 2, 8, 8, 128>}]} {
    %cst = arith.constant 0.000000e+00 : bf16
    %0 = vector.broadcast %cst : bf16 to vector<2x10x10x4xbf16>
    %c0 = arith.constant 0 : index
    %c0_0 = arith.constant 0 : index
    %c0_1 = arith.constant 0 : index
    %c0_2 = arith.constant 0 : index
    %1 = vector.load %arg6[%c0, %c0_0, %c0_1, %c0_2] : memref<2x10x10x4xbf16, #tpu.memory_space<vmem>>, vector<2x10x10x4xbf16>
    tpu.vector_store %arg6[%c0, %c0_0, %c0_1, %c0_2], %0 {strides = array<i32>} : memref<2x10x10x4xbf16, #tpu.memory_space<vmem>>, vector<2x10x10x4xbf16>,
    %c0_3 = arith.constant 0 : index
    %c0_4 = arith.constant 0 : index
    %c0_5 = arith.constant 0 : index
    %c0_6 = arith.constant 0 : index
    %2 = vector.load %arg1[%c0_3, %c0_4, %c0_5, %c0_6] : memref<2x8x8x4xbf16, #tpu.memory_space<vmem>>, vector<2x8x8x4xbf16>
    %c0_7 = arith.constant 0 : index
    %c1 = arith.constant 1 : index
    %c1_8 = arith.constant 1 : index
    %c0_9 = arith.constant 0 : index
    %3 = vector.load %arg6[%c0_7, %c1, %c1_8, %c0_9] : memref<2x10x10x4xbf16, #tpu.memory_space<vmem>>, vector<2x8x8x4xbf16>
    tpu.vector_store %arg6[%c0_7, %c1, %c1_8, %c0_9], %2 {strides = array<i32>} : memref<2x10x10x4xbf16, #tpu.memory_space<vmem>>, vector<2x8x8x4xbf16>,
    %c0_10 = arith.constant 0 : index
    %c0_11 = arith.constant 0 : index
    %c0_12 = arith.constant 0 : index
    %c0_13 = arith.constant 0 : index
    %4 = vector.load %arg6[%c0_10, %c0_11, %c0_12, %c0_13] : memref<2x10x10x4xbf16, #tpu.memory_space<vmem>>, vector<2x8x8x4xbf16>
    %c0_14 = arith.constant 0 : index
    %c0_15 = arith.constant 0 : index
    %c1_16 = arith.constant 1 : index
    %c0_17 = arith.constant 0 : index
    %5 = vector.load %arg6[%c0_14, %c0_15, %c1_16, %c0_17] : memref<2x10x10x4xbf16, #tpu.memory_space<vmem>>, vector<2x8x8x4xbf16>
    %c0_18 = arith.constant 0 : index
    %c0_19 = arith.constant 0 : index
    %c2 = arith.constant 2 : index
    %c0_20 = arith.constant 0 : index
    %6 = vector.load %arg6[%c0_18, %c0_19, %c2, %c0_20] : memref<2x10x10x4xbf16, #tpu.memory_space<vmem>>, vector<2x8x8x4xbf16>
    %c0_21 = arith.constant 0 : index
    %c1_22 = arith.constant 1 : index
    %c0_23 = arith.constant 0 : index
    %c0_24 = arith.constant 0 : index
    %7 = vector.load %arg6[%c0_21, %c1_22, %c0_23, %c0_24] : memref<2x10x10x4xbf16, #tpu.memory_space<vmem>>, vector<2x8x8x4xbf16>
    %c0_25 = arith.constant 0 : index
    %c1_26 = arith.constant 1 : index
    %c1_27 = arith.constant 1 : index
    %c0_28 = arith.constant 0 : index
    %8 = vector.load %arg6[%c0_25, %c1_26, %c1_27, %c0_28] : memref<2x10x10x4xbf16, #tpu.memory_space<vmem>>, vector<2x8x8x4xbf16>
    %c0_29 = arith.constant 0 : index
    %c1_30 = arith.constant 1 : index
    %c2_31 = arith.constant 2 : index
    %c0_32 = arith.constant 0 : index
    %9 = vector.load %arg6[%c0_29, %c1_30, %c2_31, %c0_32] : memref<2x10x10x4xbf16, #tpu.memory_space<vmem>>, vector<2x8x8x4xbf16>
    %c0_33 = arith.constant 0 : index
    %c2_34 = arith.constant 2 : index
    %c0_35 = arith.constant 0 : index
    %c0_36 = arith.constant 0 : index
    %10 = vector.load %arg6[%c0_33, %c2_34, %c0_35, %c0_36] : memref<2x10x10x4xbf16, #tpu.memory_space<vmem>>, vector<2x8x8x4xbf16>
    %c0_37 = arith.constant 0 : index
    %c2_38 = arith.constant 2 : index
    %c1_39 = arith.constant 1 : index
    %c0_40 = arith.constant 0 : index
    %11 = vector.load %arg6[%c0_37, %c2_38, %c1_39, %c0_40] : memref<2x10x10x4xbf16, #tpu.memory_space<vmem>>, vector<2x8x8x4xbf16>
    %c0_41 = arith.constant 0 : index
    %c2_42 = arith.constant 2 : index
    %c2_43 = arith.constant 2 : index
    %c0_44 = arith.constant 0 : index
    %12 = vector.load %arg6[%c0_41, %c2_42, %c2_43, %c0_44] : memref<2x10x10x4xbf16, #tpu.memory_space<vmem>>, vector<2x8x8x4xbf16>
    %13 = tpu.concatenate %4, %5, %6, %7, %8, %9, %10, %11, %12 in 3 : vector<2x8x8x4xbf16>, vector<2x8x8x4xbf16>, vector<2x8x8x4xbf16>, vector<2x8x8x4xbf16>, vector<2x8x8x4xbf16>, vector<2x8x8x4xbf16>, vector<2x8x8x4xbf16>, vector<2x8x8x4xbf16>, vector<2x8x8x4xbf16> -> vector<2x8x8x36xbf16>
    %14 = vector.shape_cast %13 : vector<2x8x8x36xbf16> to vector<128x36xbf16>
    %c0_45 = arith.constant 0 : index
    %c0_46 = arith.constant 0 : index
    %15 = vector.load %arg2[%c0_45, %c0_46] : memref<36x128xbf16, #tpu.memory_space<vmem>>, vector<36x128xbf16>
    %cst_47 = arith.constant dense<0.000000e+00> : vector<128x128xf32>
    %16 = tpu.matmul %14, %15, %cst_47 {dimension_numbers = #tpu.dot_dimension_numbers<[1], [0], [0], [1], [0, 0, 1, 1], [], []>} : vector<128x36xbf16>, vector<36x128xbf16>, vector<128x128xf32> -> vector<128x128xf32>
    %c0_48 = arith.constant 0 : index
    %c0_49 = arith.constant 0 : index
    %17 = vector.load %arg3[%c0_48, %c0_49] : memref<1x128xf32, #tpu.memory_space<vmem>>, vector<1x128xf32>
    %18 = vector.broadcast %17 : vector<1x128xf32> to vector<128x128xf32>
    %19 = arith.mulf %16, %18 : vector<128x128xf32>
    %c0_50 = arith.constant 0 : index
    %c0_51 = arith.constant 0 : index
    %20 = vector.load %arg4[%c0_50, %c0_51] : memref<1x128xf32, #tpu.memory_space<vmem>>, vector<1x128xf32>
    %21 = vector.broadcast %20 : vector<1x128xf32> to vector<128x128xf32>
    %22 = arith.addf %19, %21 : vector<128x128xf32>
    %cst_52 = arith.constant 0.000000e+00 : f32
    %23 = vector.broadcast %cst_52 : f32 to vector<128x128xf32>
    %24 = arith.maximumf %22, %23 : vector<128x128xf32>
    %25 = vector.shape_cast %24 : vector<128x128xf32> to vector<2x8x8x128xf32>
    %26 = arith.truncf %25 : vector<2x8x8x128xf32> to vector<2x8x8x128xbf16>
    %c0_53 = arith.constant 0 : index
    %c0_54 = arith.constant 0 : index
    %c0_55 = arith.constant 0 : index
    %c0_56 = arith.constant 0 : index
    %27 = vector.load %arg5[%c0_53, %c0_54, %c0_55, %c0_56] : memref<2x8x8x128xbf16, #tpu.memory_space<vmem>>, vector<2x8x8x128xbf16>
    tpu.vector_store %arg5[%c0_53, %c0_54, %c0_55, %c0_56], %26 {strides = array<i32>} : memref<2x8x8x128xbf16, #tpu.memory_space<vmem>>, vector<2x8x8x128xbf16>,
    return
  }
  func.func @transform_0(%arg0: i32) -> (i32, i32, i32, i32) {
    %c0_i32 = arith.constant 0 : i32
    %c0_i32_0 = arith.constant 0 : i32
    %c0_i32_1 = arith.constant 0 : i32
    %c0_i32_2 = arith.constant 0 : i32
    return %arg0, %c0_i32, %c0_i32_0, %c0_i32_1 : i32, i32, i32, i32
  }
  func.func @transform_1(%arg0: i32) -> (i32, i32) {
    %c0_i32 = arith.constant 0 : i32
    %c0_i32_0 = arith.constant 0 : i32
    %c0_i32_1 = arith.constant 0 : i32
    return %c0_i32, %c0_i32_0 : i32, i32
  }
  func.func @transform_2(%arg0: i32) -> (i32, i32) {
    %c0_i32 = arith.constant 0 : i32
    %c0_i32_0 = arith.constant 0 : i32
    %c0_i32_1 = arith.constant 0 : i32
    return %c0_i32, %c0_i32_0 : i32, i32
  }
  func.func @transform_3(%arg0: i32) -> (i32, i32) {
    %c0_i32 = arith.constant 0 : i32
    %c0_i32_0 = arith.constant 0 : i32
    %c0_i32_1 = arith.constant 0 : i32
    return %c0_i32, %c0_i32_0 : i32, i32
  }
  func.func @transform_4(%arg0: i32) -> (i32, i32, i32, i32) {
    %c0_i32 = arith.constant 0 : i32
    %c0_i32_0 = arith.constant 0 : i32
    %c0_i32_1 = arith.constant 0 : i32
    %c0_i32_2 = arith.constant 0 : i32
    return %arg0, %c0_i32, %c0_i32_0, %c0_i32_1 : i32, i32, i32, i32
  }
}

module attributes {stable_mosaic.version = 11 : i64} {
  func.func @conv_bn_relu_kernel(%arg0: i32, %arg1: memref<2x8x8x128xbf16, #tpu.memory_space<vmem>>, %arg2: memref<1152x128xbf16, #tpu.memory_space<vmem>>, %arg3: memref<1x128xf32, #tpu.memory_space<vmem>>, %arg4: memref<1x128xf32, #tpu.memory_space<vmem>>, %arg5: memref<2x8x8x128xbf16, #tpu.memory_space<vmem>>, %arg6: memref<2x10x10x128xbf16, #tpu.memory_space<vmem>>) attributes {dimension_semantics = [#tpu.dimension_semantics<parallel>], iteration_bounds = array<i64: 1>, scalar_prefetch = 0 : i64, scratch_operands = 1 : i64, tpu.core_type = #tpu.core_type<tc>, window_params = [{transform_indices = @transform_0, window_bounds = array<i64: 2, 8, 8, 128>}, {pipeline_mode = #tpu.pipeline_mode<synchronous>, transform_indices = @transform_1, window_bounds = array<i64: 1152, 128>}, {pipeline_mode = #tpu.pipeline_mode<synchronous>, transform_indices = @transform_2, window_bounds = array<i64: 1, 128>}, {pipeline_mode = #tpu.pipeline_mode<synchronous>, transform_indices = @transform_3, window_bounds = array<i64: 1, 128>}, {transform_indices = @transform_4, window_bounds = array<i64: 2, 8, 8, 128>}]} {
    %cst = arith.constant 0.000000e+00 : bf16
    %0 = vector.broadcast %cst : bf16 to vector<2x10x10x128xbf16>
    %c0 = arith.constant 0 : index
    %c0_0 = arith.constant 0 : index
    %c0_1 = arith.constant 0 : index
    %c0_2 = arith.constant 0 : index
    %1 = vector.load %arg6[%c0, %c0_0, %c0_1, %c0_2] : memref<2x10x10x128xbf16, #tpu.memory_space<vmem>>, vector<2x10x10x128xbf16>
    tpu.vector_store %arg6[%c0, %c0_0, %c0_1, %c0_2], %0 {strides = array<i32>} : memref<2x10x10x128xbf16, #tpu.memory_space<vmem>>, vector<2x10x10x128xbf16>,
    %c0_3 = arith.constant 0 : index
    %c0_4 = arith.constant 0 : index
    %c0_5 = arith.constant 0 : index
    %c0_6 = arith.constant 0 : index
    %2 = vector.load %arg1[%c0_3, %c0_4, %c0_5, %c0_6] : memref<2x8x8x128xbf16, #tpu.memory_space<vmem>>, vector<2x8x8x128xbf16>
    %c0_7 = arith.constant 0 : index
    %c1 = arith.constant 1 : index
    %c1_8 = arith.constant 1 : index
    %c0_9 = arith.constant 0 : index
    %3 = vector.load %arg6[%c0_7, %c1, %c1_8, %c0_9] : memref<2x10x10x128xbf16, #tpu.memory_space<vmem>>, vector<2x8x8x128xbf16>
    tpu.vector_store %arg6[%c0_7, %c1, %c1_8, %c0_9], %2 {strides = array<i32>} : memref<2x10x10x128xbf16, #tpu.memory_space<vmem>>, vector<2x8x8x128xbf16>,
    %c0_10 = arith.constant 0 : index
    %c0_11 = arith.constant 0 : index
    %c0_12 = arith.constant 0 : index
    %c0_13 = arith.constant 0 : index
    %4 = vector.load %arg6[%c0_10, %c0_11, %c0_12, %c0_13] : memref<2x10x10x128xbf16, #tpu.memory_space<vmem>>, vector<2x8x8x128xbf16>
    %c0_14 = arith.constant 0 : index
    %c0_15 = arith.constant 0 : index
    %c1_16 = arith.constant 1 : index
    %c0_17 = arith.constant 0 : index
    %5 = vector.load %arg6[%c0_14, %c0_15, %c1_16, %c0_17] : memref<2x10x10x128xbf16, #tpu.memory_space<vmem>>, vector<2x8x8x128xbf16>
    %c0_18 = arith.constant 0 : index
    %c0_19 = arith.constant 0 : index
    %c2 = arith.constant 2 : index
    %c0_20 = arith.constant 0 : index
    %6 = vector.load %arg6[%c0_18, %c0_19, %c2, %c0_20] : memref<2x10x10x128xbf16, #tpu.memory_space<vmem>>, vector<2x8x8x128xbf16>
    %c0_21 = arith.constant 0 : index
    %c1_22 = arith.constant 1 : index
    %c0_23 = arith.constant 0 : index
    %c0_24 = arith.constant 0 : index
    %7 = vector.load %arg6[%c0_21, %c1_22, %c0_23, %c0_24] : memref<2x10x10x128xbf16, #tpu.memory_space<vmem>>, vector<2x8x8x128xbf16>
    %c0_25 = arith.constant 0 : index
    %c1_26 = arith.constant 1 : index
    %c1_27 = arith.constant 1 : index
    %c0_28 = arith.constant 0 : index
    %8 = vector.load %arg6[%c0_25, %c1_26, %c1_27, %c0_28] : memref<2x10x10x128xbf16, #tpu.memory_space<vmem>>, vector<2x8x8x128xbf16>
    %c0_29 = arith.constant 0 : index
    %c1_30 = arith.constant 1 : index
    %c2_31 = arith.constant 2 : index
    %c0_32 = arith.constant 0 : index
    %9 = vector.load %arg6[%c0_29, %c1_30, %c2_31, %c0_32] : memref<2x10x10x128xbf16, #tpu.memory_space<vmem>>, vector<2x8x8x128xbf16>
    %c0_33 = arith.constant 0 : index
    %c2_34 = arith.constant 2 : index
    %c0_35 = arith.constant 0 : index
    %c0_36 = arith.constant 0 : index
    %10 = vector.load %arg6[%c0_33, %c2_34, %c0_35, %c0_36] : memref<2x10x10x128xbf16, #tpu.memory_space<vmem>>, vector<2x8x8x128xbf16>
    %c0_37 = arith.constant 0 : index
    %c2_38 = arith.constant 2 : index
    %c1_39 = arith.constant 1 : index
    %c0_40 = arith.constant 0 : index
    %11 = vector.load %arg6[%c0_37, %c2_38, %c1_39, %c0_40] : memref<2x10x10x128xbf16, #tpu.memory_space<vmem>>, vector<2x8x8x128xbf16>
    %c0_41 = arith.constant 0 : index
    %c2_42 = arith.constant 2 : index
    %c2_43 = arith.constant 2 : index
    %c0_44 = arith.constant 0 : index
    %12 = vector.load %arg6[%c0_41, %c2_42, %c2_43, %c0_44] : memref<2x10x10x128xbf16, #tpu.memory_space<vmem>>, vector<2x8x8x128xbf16>
    %13 = tpu.concatenate %4, %5, %6, %7, %8, %9, %10, %11, %12 in 3 : vector<2x8x8x128xbf16>, vector<2x8x8x128xbf16>, vector<2x8x8x128xbf16>, vector<2x8x8x128xbf16>, vector<2x8x8x128xbf16>, vector<2x8x8x128xbf16>, vector<2x8x8x128xbf16>, vector<2x8x8x128xbf16>, vector<2x8x8x128xbf16> -> vector<2x8x8x1152xbf16>
    %14 = vector.shape_cast %13 : vector<2x8x8x1152xbf16> to vector<128x1152xbf16>
    %c0_45 = arith.constant 0 : index
    %c0_46 = arith.constant 0 : index
    %15 = vector.load %arg2[%c0_45, %c0_46] : memref<1152x128xbf16, #tpu.memory_space<vmem>>, vector<1152x128xbf16>
    %cst_47 = arith.constant dense<0.000000e+00> : vector<128x128xf32>
    %16 = tpu.matmul %14, %15, %cst_47 {dimension_numbers = #tpu.dot_dimension_numbers<[1], [0], [0], [1], [0, 0, 1, 1], [], []>} : vector<128x1152xbf16>, vector<1152x128xbf16>, vector<128x128xf32> -> vector<128x128xf32>
    %c0_48 = arith.constant 0 : index
    %c0_49 = arith.constant 0 : index
    %17 = vector.load %arg3[%c0_48, %c0_49] : memref<1x128xf32, #tpu.memory_space<vmem>>, vector<1x128xf32>
    %18 = vector.broadcast %17 : vector<1x128xf32> to vector<128x128xf32>
    %19 = arith.mulf %16, %18 : vector<128x128xf32>
    %c0_50 = arith.constant 0 : index
    %c0_51 = arith.constant 0 : index
    %20 = vector.load %arg4[%c0_50, %c0_51] : memref<1x128xf32, #tpu.memory_space<vmem>>, vector<1x128xf32>
    %21 = vector.broadcast %20 : vector<1x128xf32> to vector<128x128xf32>
    %22 = arith.addf %19, %21 : vector<128x128xf32>
    %cst_52 = arith.constant 0.000000e+00 : f32
    %23 = vector.broadcast %cst_52 : f32 to vector<128x128xf32>
    %24 = arith.maximumf %22, %23 : vector<128x128xf32>
    %25 = vector.shape_cast %24 : vector<128x128xf32> to vector<2x8x8x128xf32>
    %26 = arith.truncf %25 : vector<2x8x8x128xf32> to vector<2x8x8x128xbf16>
    %c0_53 = arith.constant 0 : index
    %c0_54 = arith.constant 0 : index
    %c0_55 = arith.constant 0 : index
    %c0_56 = arith.constant 0 : index
    %27 = vector.load %arg5[%c0_53, %c0_54, %c0_55, %c0_56] : memref<2x8x8x128xbf16, #tpu.memory_space<vmem>>, vector<2x8x8x128xbf16>
    tpu.vector_store %arg5[%c0_53, %c0_54, %c0_55, %c0_56], %26 {strides = array<i32>} : memref<2x8x8x128xbf16, #tpu.memory_space<vmem>>, vector<2x8x8x128xbf16>,
    return
  }
  func.func @transform_0(%arg0: i32) -> (i32, i32, i32, i32) {
    %c0_i32 = arith.constant 0 : i32
    %c0_i32_0 = arith.constant 0 : i32
    %c0_i32_1 = arith.constant 0 : i32
    %c0_i32_2 = arith.constant 0 : i32
    return %arg0, %c0_i32, %c0_i32_0, %c0_i32_1 : i32, i32, i32, i32
  }
  func.func @transform_1(%arg0: i32) -> (i32, i32) {
    %c0_i32 = arith.constant 0 : i32
    %c0_i32_0 = arith.constant 0 : i32
    %c0_i32_1 = arith.constant 0 : i32
    return %c0_i32, %c0_i32_0 : i32, i32
  }
  func.func @transform_2(%arg0: i32) -> (i32, i32) {
    %c0_i32 = arith.constant 0 : i32
    %c0_i32_0 = arith.constant 0 : i32
    %c0_i32_1 = arith.constant 0 : i32
    return %c0_i32, %c0_i32_0 : i32, i32
  }
  func.func @transform_3(%arg0: i32) -> (i32, i32) {
    %c0_i32 = arith.constant 0 : i32
    %c0_i32_0 = arith.constant 0 : i32
    %c0_i32_1 = arith.constant 0 : i32
    return %c0_i32, %c0_i32_0 : i32, i32
  }
  func.func @transform_4(%arg0: i32) -> (i32, i32, i32, i32) {
    %c0_i32 = arith.constant 0 : i32
    %c0_i32_0 = arith.constant 0 : i32
    %c0_i32_1 = arith.constant 0 : i32
    %c0_i32_2 = arith.constant 0 : i32
    return %arg0, %c0_i32, %c0_i32_0, %c0_i32_1 : i32, i32, i32, i32
  }
}

module attributes {stable_mosaic.version = 11 : i64} {
  func.func @linear_kernel(%arg0: i32, %arg1: memref<2x2048xbf16, #tpu.memory_space<vmem>>, %arg2: memref<2048x128xbf16, #tpu.memory_space<vmem>>, %arg3: memref<1x128xbf16, #tpu.memory_space<vmem>>, %arg4: memref<2x128xbf16, #tpu.memory_space<vmem>>, %arg5: memref<2x128xf32, #tpu.memory_space<vmem>>) attributes {dimension_semantics = [#tpu.dimension_semantics<arbitrary>], iteration_bounds = array<i64: 4>, scalar_prefetch = 0 : i64, scratch_operands = 1 : i64, tpu.core_type = #tpu.core_type<tc>, window_params = [{transform_indices = @transform_0, window_bounds = array<i64: 2, 2048>}, {transform_indices = @transform_1, window_bounds = array<i64: 2048, 128>}, {pipeline_mode = #tpu.pipeline_mode<synchronous>, transform_indices = @transform_2, window_bounds = array<i64: 1, 128>}, {pipeline_mode = #tpu.pipeline_mode<synchronous>, transform_indices = @transform_3, window_bounds = array<i64: 2, 128>}]} {
    %c0_i32 = arith.constant 0 : i32
    %0 = arith.cmpi eq, %arg0, %c0_i32 : i32
    %1 = arith.extui %0 : i1 to i32
    %c0_i32_0 = arith.constant 0 : i32
    %2 = arith.cmpi ne, %1, %c0_i32_0 : i32
    scf.if %2 {
      %cst_9 = arith.constant 0.000000e+00 : f32
      %12 = vector.broadcast %cst_9 : f32 to vector<2x128xf32>
      %c0_10 = arith.constant 0 : index
      %c0_11 = arith.constant 0 : index
      %13 = vector.load %arg5[%c0_10, %c0_11] : memref<2x128xf32, #tpu.memory_space<vmem>>, vector<2x128xf32>
      tpu.vector_store %arg5[%c0_10, %c0_11], %12 {strides = array<i32>} : memref<2x128xf32, #tpu.memory_space<vmem>>, vector<2x128xf32>,
    } else {
    }
    %c0 = arith.constant 0 : index
    %c0_1 = arith.constant 0 : index
    %3 = vector.load %arg5[%c0, %c0_1] : memref<2x128xf32, #tpu.memory_space<vmem>>, vector<2x128xf32>
    %c0_2 = arith.constant 0 : index
    %c0_3 = arith.constant 0 : index
    %4 = vector.load %arg1[%c0_2, %c0_3] : memref<2x2048xbf16, #tpu.memory_space<vmem>>, vector<2x2048xbf16>
    %c0_4 = arith.constant 0 : index
    %c0_5 = arith.constant 0 : index
    %5 = vector.load %arg2[%c0_4, %c0_5] : memref<2048x128xbf16, #tpu.memory_space<vmem>>, vector<2048x128xbf16>
    %cst = arith.constant dense<0.000000e+00> : vector<2x128xf32>
    %6 = tpu.matmul %4, %5, %cst {dimension_numbers = #tpu.dot_dimension_numbers<[1], [0], [0], [1], [0, 0, 1, 1], [], []>} : vector<2x2048xbf16>, vector<2048x128xbf16>, vector<2x128xf32> -> vector<2x128xf32>
    %7 = arith.addf %3, %6 : vector<2x128xf32>
    %c0_6 = arith.constant 0 : index
    %c0_7 = arith.constant 0 : index
    %8 = vector.load %arg5[%c0_6, %c0_7] : memref<2x128xf32, #tpu.memory_space<vmem>>, vector<2x128xf32>
    tpu.vector_store %arg5[%c0_6, %c0_7], %7 {strides = array<i32>} : memref<2x128xf32, #tpu.memory_space<vmem>>, vector<2x128xf32>,
    %c3_i32 = arith.constant 3 : i32
    %9 = arith.cmpi eq, %arg0, %c3_i32 : i32
    %10 = arith.extui %9 : i1 to i32
    %c0_i32_8 = arith.constant 0 : i32
    %11 = arith.cmpi ne, %10, %c0_i32_8 : i32
    scf.if %11 {
      %c0_9 = arith.constant 0 : index
      %c0_10 = arith.constant 0 : index
      %12 = vector.load %arg5[%c0_9, %c0_10] : memref<2x128xf32, #tpu.memory_space<vmem>>, vector<2x128xf32>
      %c0_11 = arith.constant 0 : index
      %c0_12 = arith.constant 0 : index
      %13 = vector.load %arg3[%c0_11, %c0_12] : memref<1x128xbf16, #tpu.memory_space<vmem>>, vector<1x128xbf16>
      %14 = arith.extf %13 : vector<1x128xbf16> to vector<1x128xf32>
      %15 = vector.broadcast %14 : vector<1x128xf32> to vector<2x128xf32>
      %16 = arith.addf %12, %15 : vector<2x128xf32>
      %17 = arith.truncf %16 : vector<2x128xf32> to vector<2x128xbf16>
      %c0_13 = arith.constant 0 : index
      %c0_14 = arith.constant 0 : index
      %18 = vector.load %arg4[%c0_13, %c0_14] : memref<2x128xbf16, #tpu.memory_space<vmem>>, vector<2x128xbf16>
      tpu.vector_store %arg4[%c0_13, %c0_14], %17 {strides = array<i32>} : memref<2x128xbf16, #tpu.memory_space<vmem>>, vector<2x128xbf16>,
    } else {
    }
    return
  }
  func.func @transform_0(%arg0: i32) -> (i32, i32) {
    %c0_i32 = arith.constant 0 : i32
    %c0_i32_0 = arith.constant 0 : i32
    return %c0_i32, %arg0 : i32, i32
  }
  func.func @transform_1(%arg0: i32) -> (i32, i32) {
    %c0_i32 = arith.constant 0 : i32
    %c0_i32_0 = arith.constant 0 : i32
    return %arg0, %c0_i32 : i32, i32
  }
  func.func @transform_2(%arg0: i32) -> (i32, i32) {
    %c0_i32 = arith.constant 0 : i32
    %c0_i32_0 = arith.constant 0 : i32
    %c0_i32_1 = arith.constant 0 : i32
    return %c0_i32, %c0_i32_0 : i32, i32
  }
  func.func @transform_3(%arg0: i32) -> (i32, i32) {
    %c0_i32 = arith.constant 0 : i32
    %c0_i32_0 = arith.constant 0 : i32
    %c0_i32_1 = arith.constant 0 : i32
    return %c0_i32, %c0_i32_0 : i32, i32
  }
}

module attributes {stable_mosaic.version = 11 : i64} {
  func.func @conv_bn_relu_res_kernel(%arg0: i32, %arg1: memref<2x8x8x128xbf16, #tpu.memory_space<vmem>>, %arg2: memref<1152x128xbf16, #tpu.memory_space<vmem>>, %arg3: memref<1x128xf32, #tpu.memory_space<vmem>>, %arg4: memref<1x128xf32, #tpu.memory_space<vmem>>, %arg5: memref<2x8x8x128xbf16, #tpu.memory_space<vmem>>, %arg6: memref<2x8x8x128xbf16, #tpu.memory_space<vmem>>, %arg7: memref<2x10x10x128xbf16, #tpu.memory_space<vmem>>) attributes {dimension_semantics = [#tpu.dimension_semantics<parallel>], iteration_bounds = array<i64: 1>, scalar_prefetch = 0 : i64, scratch_operands = 1 : i64, tpu.core_type = #tpu.core_type<tc>, window_params = [{transform_indices = @transform_0, window_bounds = array<i64: 2, 8, 8, 128>}, {pipeline_mode = #tpu.pipeline_mode<synchronous>, transform_indices = @transform_1, window_bounds = array<i64: 1152, 128>}, {pipeline_mode = #tpu.pipeline_mode<synchronous>, transform_indices = @transform_2, window_bounds = array<i64: 1, 128>}, {pipeline_mode = #tpu.pipeline_mode<synchronous>, transform_indices = @transform_3, window_bounds = array<i64: 1, 128>}, {transform_indices = @transform_4, window_bounds = array<i64: 2, 8, 8, 128>}, {transform_indices = @transform_5, window_bounds = array<i64: 2, 8, 8, 128>}]} {
    %c0 = arith.constant 0 : index
    %c0_0 = arith.constant 0 : index
    %c0_1 = arith.constant 0 : index
    %c0_2 = arith.constant 0 : index
    %0 = vector.load %arg5[%c0, %c0_0, %c0_1, %c0_2] : memref<2x8x8x128xbf16, #tpu.memory_space<vmem>>, vector<2x8x8x128xbf16>
    %cst = arith.constant 0.000000e+00 : bf16
    %1 = vector.broadcast %cst : bf16 to vector<2x10x10x128xbf16>
    %c0_3 = arith.constant 0 : index
    %c0_4 = arith.constant 0 : index
    %c0_5 = arith.constant 0 : index
    %c0_6 = arith.constant 0 : index
    %2 = vector.load %arg7[%c0_3, %c0_4, %c0_5, %c0_6] : memref<2x10x10x128xbf16, #tpu.memory_space<vmem>>, vector<2x10x10x128xbf16>
    tpu.vector_store %arg7[%c0_3, %c0_4, %c0_5, %c0_6], %1 {strides = array<i32>} : memref<2x10x10x128xbf16, #tpu.memory_space<vmem>>, vector<2x10x10x128xbf16>,
    %c0_7 = arith.constant 0 : index
    %c0_8 = arith.constant 0 : index
    %c0_9 = arith.constant 0 : index
    %c0_10 = arith.constant 0 : index
    %3 = vector.load %arg1[%c0_7, %c0_8, %c0_9, %c0_10] : memref<2x8x8x128xbf16, #tpu.memory_space<vmem>>, vector<2x8x8x128xbf16>
    %c0_11 = arith.constant 0 : index
    %c1 = arith.constant 1 : index
    %c1_12 = arith.constant 1 : index
    %c0_13 = arith.constant 0 : index
    %4 = vector.load %arg7[%c0_11, %c1, %c1_12, %c0_13] : memref<2x10x10x128xbf16, #tpu.memory_space<vmem>>, vector<2x8x8x128xbf16>
    tpu.vector_store %arg7[%c0_11, %c1, %c1_12, %c0_13], %3 {strides = array<i32>} : memref<2x10x10x128xbf16, #tpu.memory_space<vmem>>, vector<2x8x8x128xbf16>,
    %c0_14 = arith.constant 0 : index
    %c0_15 = arith.constant 0 : index
    %c0_16 = arith.constant 0 : index
    %c0_17 = arith.constant 0 : index
    %5 = vector.load %arg7[%c0_14, %c0_15, %c0_16, %c0_17] : memref<2x10x10x128xbf16, #tpu.memory_space<vmem>>, vector<2x8x8x128xbf16>
    %c0_18 = arith.constant 0 : index
    %c0_19 = arith.constant 0 : index
    %c1_20 = arith.constant 1 : index
    %c0_21 = arith.constant 0 : index
    %6 = vector.load %arg7[%c0_18, %c0_19, %c1_20, %c0_21] : memref<2x10x10x128xbf16, #tpu.memory_space<vmem>>, vector<2x8x8x128xbf16>
    %c0_22 = arith.constant 0 : index
    %c0_23 = arith.constant 0 : index
    %c2 = arith.constant 2 : index
    %c0_24 = arith.constant 0 : index
    %7 = vector.load %arg7[%c0_22, %c0_23, %c2, %c0_24] : memref<2x10x10x128xbf16, #tpu.memory_space<vmem>>, vector<2x8x8x128xbf16>
    %c0_25 = arith.constant 0 : index
    %c1_26 = arith.constant 1 : index
    %c0_27 = arith.constant 0 : index
    %c0_28 = arith.constant 0 : index
    %8 = vector.load %arg7[%c0_25, %c1_26, %c0_27, %c0_28] : memref<2x10x10x128xbf16, #tpu.memory_space<vmem>>, vector<2x8x8x128xbf16>
    %c0_29 = arith.constant 0 : index
    %c1_30 = arith.constant 1 : index
    %c1_31 = arith.constant 1 : index
    %c0_32 = arith.constant 0 : index
    %9 = vector.load %arg7[%c0_29, %c1_30, %c1_31, %c0_32] : memref<2x10x10x128xbf16, #tpu.memory_space<vmem>>, vector<2x8x8x128xbf16>
    %c0_33 = arith.constant 0 : index
    %c1_34 = arith.constant 1 : index
    %c2_35 = arith.constant 2 : index
    %c0_36 = arith.constant 0 : index
    %10 = vector.load %arg7[%c0_33, %c1_34, %c2_35, %c0_36] : memref<2x10x10x128xbf16, #tpu.memory_space<vmem>>, vector<2x8x8x128xbf16>
    %c0_37 = arith.constant 0 : index
    %c2_38 = arith.constant 2 : index
    %c0_39 = arith.constant 0 : index
    %c0_40 = arith.constant 0 : index
    %11 = vector.load %arg7[%c0_37, %c2_38, %c0_39, %c0_40] : memref<2x10x10x128xbf16, #tpu.memory_space<vmem>>, vector<2x8x8x128xbf16>
    %c0_41 = arith.constant 0 : index
    %c2_42 = arith.constant 2 : index
    %c1_43 = arith.constant 1 : index
    %c0_44 = arith.constant 0 : index
    %12 = vector.load %arg7[%c0_41, %c2_42, %c1_43, %c0_44] : memref<2x10x10x128xbf16, #tpu.memory_space<vmem>>, vector<2x8x8x128xbf16>
    %c0_45 = arith.constant 0 : index
    %c2_46 = arith.constant 2 : index
    %c2_47 = arith.constant 2 : index
    %c0_48 = arith.constant 0 : index
    %13 = vector.load %arg7[%c0_45, %c2_46, %c2_47, %c0_48] : memref<2x10x10x128xbf16, #tpu.memory_space<vmem>>, vector<2x8x8x128xbf16>
    %14 = tpu.concatenate %5, %6, %7, %8, %9, %10, %11, %12, %13 in 3 : vector<2x8x8x128xbf16>, vector<2x8x8x128xbf16>, vector<2x8x8x128xbf16>, vector<2x8x8x128xbf16>, vector<2x8x8x128xbf16>, vector<2x8x8x128xbf16>, vector<2x8x8x128xbf16>, vector<2x8x8x128xbf16>, vector<2x8x8x128xbf16> -> vector<2x8x8x1152xbf16>
    %15 = vector.shape_cast %14 : vector<2x8x8x1152xbf16> to vector<128x1152xbf16>
    %c0_49 = arith.constant 0 : index
    %c0_50 = arith.constant 0 : index
    %16 = vector.load %arg2[%c0_49, %c0_50] : memref<1152x128xbf16, #tpu.memory_space<vmem>>, vector<1152x128xbf16>
    %cst_51 = arith.constant dense<0.000000e+00> : vector<128x128xf32>
    %17 = tpu.matmul %15, %16, %cst_51 {dimension_numbers = #tpu.dot_dimension_numbers<[1], [0], [0], [1], [0, 0, 1, 1], [], []>} : vector<128x1152xbf16>, vector<1152x128xbf16>, vector<128x128xf32> -> vector<128x128xf32>
    %c0_52 = arith.constant 0 : index
    %c0_53 = arith.constant 0 : index
    %18 = vector.load %arg3[%c0_52, %c0_53] : memref<1x128xf32, #tpu.memory_space<vmem>>, vector<1x128xf32>
    %19 = vector.broadcast %18 : vector<1x128xf32> to vector<128x128xf32>
    %20 = arith.mulf %17, %19 : vector<128x128xf32>
    %c0_54 = arith.constant 0 : index
    %c0_55 = arith.constant 0 : index
    %21 = vector.load %arg4[%c0_54, %c0_55] : memref<1x128xf32, #tpu.memory_space<vmem>>, vector<1x128xf32>
    %22 = vector.broadcast %21 : vector<1x128xf32> to vector<128x128xf32>
    %23 = arith.addf %20, %22 : vector<128x128xf32>
    %24 = vector.shape_cast %0 : vector<2x8x8x128xbf16> to vector<128x128xbf16>
    %25 = arith.extf %24 : vector<128x128xbf16> to vector<128x128xf32>
    %26 = arith.addf %23, %25 : vector<128x128xf32>
    %cst_56 = arith.constant 0.000000e+00 : f32
    %27 = vector.broadcast %cst_56 : f32 to vector<128x128xf32>
    %28 = arith.maximumf %26, %27 : vector<128x128xf32>
    %29 = vector.shape_cast %28 : vector<128x128xf32> to vector<2x8x8x128xf32>
    %30 = arith.truncf %29 : vector<2x8x8x128xf32> to vector<2x8x8x128xbf16>
    %c0_57 = arith.constant 0 : index
    %c0_58 = arith.constant 0 : index
    %c0_59 = arith.constant 0 : index
    %c0_60 = arith.constant 0 : index
    %31 = vector.load %arg6[%c0_57, %c0_58, %c0_59, %c0_60] : memref<2x8x8x128xbf16, #tpu.memory_space<vmem>>, vector<2x8x8x128xbf16>
    tpu.vector_store %arg6[%c0_57, %c0_58, %c0_59, %c0_60], %30 {strides = array<i32>} : memref<2x8x8x128xbf16, #tpu.memory_space<vmem>>, vector<2x8x8x128xbf16>,
    return
  }
  func.func @transform_0(%arg0: i32) -> (i32, i32, i32, i32) {
    %c0_i32 = arith.constant 0 : i32
    %c0_i32_0 = arith.constant 0 : i32
    %c0_i32_1 = arith.constant 0 : i32
    %c0_i32_2 = arith.constant 0 : i32
    return %arg0, %c0_i32, %c0_i32_0, %c0_i32_1 : i32, i32, i32, i32
  }
  func.func @transform_1(%arg0: i32) -> (i32, i32) {
    %c0_i32 = arith.constant 0 : i32
    %c0_i32_0 = arith.constant 0 : i32
    %c0_i32_1 = arith.constant 0 : i32
    return %c0_i32, %c0_i32_0 : i32, i32
  }
  func.func @transform_2(%arg0: i32) -> (i32, i32) {
    %c0_i32 = arith.constant 0 : i32
    %c0_i32_0 = arith.constant 0 : i32
    %c0_i32_1 = arith.constant 0 : i32
    return %c0_i32, %c0_i32_0 : i32, i32
  }
  func.func @transform_3(%arg0: i32) -> (i32, i32) {
    %c0_i32 = arith.constant 0 : i32
    %c0_i32_0 = arith.constant 0 : i32
    %c0_i32_1 = arith.constant 0 : i32
    return %c0_i32, %c0_i32_0 : i32, i32
  }
  func.func @transform_4(%arg0: i32) -> (i32, i32, i32, i32) {
    %c0_i32 = arith.constant 0 : i32
    %c0_i32_0 = arith.constant 0 : i32
    %c0_i32_1 = arith.constant 0 : i32
    %c0_i32_2 = arith.constant 0 : i32
    return %arg0, %c0_i32, %c0_i32_0, %c0_i32_1 : i32, i32, i32, i32
  }
  func.func @transform_5(%arg0: i32) -> (i32, i32, i32, i32) {
    %c0_i32 = arith.constant 0 : i32
    %c0_i32_0 = arith.constant 0 : i32
    %c0_i32_1 = arith.constant 0 : i32
    %c0_i32_2 = arith.constant 0 : i32
    return %arg0, %c0_i32, %c0_i32_0, %c0_i32_1 : i32, i32, i32, i32
  }
}

module attributes {stable_mosaic.version = 11 : i64} {
  func.func @llama_stack_kernel(%arg0: i32, %arg1: memref<2x128xbf16, #tpu.memory_space<vmem>>, %arg2: memref<1x1x128xbf16, #tpu.memory_space<vmem>>, %arg3: memref<1x128x128xbf16, #tpu.memory_space<vmem>>, %arg4: memref<1x128x128xbf16, #tpu.memory_space<vmem>>, %arg5: memref<1x1x128xbf16, #tpu.memory_space<vmem>>, %arg6: memref<1x128x256xbf16, #tpu.memory_space<vmem>>, %arg7: memref<1x128x256xbf16, #tpu.memory_space<vmem>>, %arg8: memref<1x256x128xbf16, #tpu.memory_space<vmem>>, %arg9: memref<1x128xbf16, #tpu.memory_space<vmem>>, %arg10: memref<128x16xbf16, #tpu.memory_space<vmem>>, %arg11: memref<1x16xbf16, #tpu.memory_space<vmem>>, %arg12: memref<128x1xbf16, #tpu.memory_space<vmem>>, %arg13: memref<1x1xbf16, #tpu.memory_space<vmem>>, %arg14: memref<2x16xbf16, #tpu.memory_space<vmem>>, %arg15: memref<2x1xbf16, #tpu.memory_space<vmem>>, %arg16: memref<2x128xf32, #tpu.memory_space<vmem>>) attributes {dimension_semantics = [#tpu.dimension_semantics<arbitrary>], iteration_bounds = array<i64: 2>, scalar_prefetch = 0 : i64, scratch_operands = 1 : i64, tpu.core_type = #tpu.core_type<tc>, window_params = [{pipeline_mode = #tpu.pipeline_mode<synchronous>, transform_indices = @transform_0, window_bounds = array<i64: 2, 128>}, {transform_indices = @transform_1, window_bounds = array<i64: 1, 1, 128>}, {transform_indices = @transform_2, window_bounds = array<i64: 1, 128, 128>}, {transform_indices = @transform_3, window_bounds = array<i64: 1, 128, 128>}, {transform_indices = @transform_4, window_bounds = array<i64: 1, 1, 128>}, {transform_indices = @transform_5, window_bounds = array<i64: 1, 128, 256>}, {transform_indices = @transform_6, window_bounds = array<i64: 1, 128, 256>}, {transform_indices = @transform_7, window_bounds = array<i64: 1, 256, 128>}, {pipeline_mode = #tpu.pipeline_mode<synchronous>, transform_indices = @transform_8, window_bounds = array<i64: 1, 128>}, {pipeline_mode = #tpu.pipeline_mode<synchronous>, transform_indices = @transform_9, window_bounds = array<i64: 128, 16>}, {pipeline_mode = #tpu.pipeline_mode<synchronous>, transform_indices = @transform_10, window_bounds = array<i64: 1, 16>}, {pipeline_mode = #tpu.pipeline_mode<synchronous>, transform_indices = @transform_11, window_bounds = array<i64: 128, 1>}, {pipeline_mode = #tpu.pipeline_mode<synchronous>, transform_indices = @transform_12, window_bounds = array<i64: 1, 1>}, {pipeline_mode = #tpu.pipeline_mode<synchronous>, transform_indices = @transform_13, window_bounds = array<i64: 2, 16>}, {pipeline_mode = #tpu.pipeline_mode<synchronous>, transform_indices = @transform_14, window_bounds = array<i64: 2, 1>}]} {
    %c0_i32 = arith.constant 0 : i32
    %0 = arith.cmpi eq, %arg0, %c0_i32 : i32
    %1 = arith.extui %0 : i1 to i32
    %c0_i32_0 = arith.constant 0 : i32
    %2 = arith.cmpi ne, %1, %c0_i32_0 : i32
    scf.if %2 {
      %c0_37 = arith.constant 0 : index
      %c0_38 = arith.constant 0 : index
      %66 = vector.load %arg1[%c0_37, %c0_38] : memref<2x128xbf16, #tpu.memory_space<vmem>>, vector<2x128xbf16>
      %67 = arith.extf %66 : vector<2x128xbf16> to vector<2x128xf32>
      %c0_39 = arith.constant 0 : index
      %c0_40 = arith.constant 0 : index
      %68 = vector.load %arg16[%c0_39, %c0_40] : memref<2x128xf32, #tpu.memory_space<vmem>>, vector<2x128xf32>
      tpu.vector_store %arg16[%c0_39, %c0_40], %67 {strides = array<i32>} : memref<2x128xf32, #tpu.memory_space<vmem>>, vector<2x128xf32>,
    } else {
    }
    %c0 = arith.constant 0 : index
    %c0_1 = arith.constant 0 : index
    %3 = vector.load %arg16[%c0, %c0_1] : memref<2x128xf32, #tpu.memory_space<vmem>>, vector<2x128xf32>
    %c0_2 = arith.constant 0 : index
    %c0_3 = arith.constant 0 : index
    %c0_4 = arith.constant 0 : index
    %4 = vector.load %arg2[%c0_2, %c0_3, %c0_4] : memref<1x1x128xbf16, #tpu.memory_space<vmem>>, vector<1x1x128xbf16>
    %5 = vector.shape_cast %4 : vector<1x1x128xbf16> to vector<1x128xbf16>
    %6 = arith.extf %5 : vector<1x128xbf16> to vector<1x128xf32>
    %7 = arith.mulf %3, %3 : vector<2x128xf32>
    %cst = arith.constant dense<0.000000e+00> : vector<2xf32>
    %8 = vector.multi_reduction <add>, %7, %cst [1] : vector<2x128xf32> to vector<2xf32>
    %9 = vector.shape_cast %8 : vector<2xf32> to vector<2x1xf32>
    %cst_5 = arith.constant 1.280000e+02 : f32
    %10 = vector.broadcast %cst_5 : f32 to vector<2x1xf32>
    %11 = arith.divf %9, %10 : vector<2x1xf32>
    %cst_6 = arith.constant 9.99999974E-6 : f32
    %12 = vector.broadcast %cst_6 : f32 to vector<2x1xf32>
    %13 = arith.addf %11, %12 : vector<2x1xf32>
    %14 = math.rsqrt %13 : vector<2x1xf32>
    %15 = vector.broadcast %14 : vector<2x1xf32> to vector<2x128xf32>
    %16 = arith.mulf %3, %15 : vector<2x128xf32>
    %17 = vector.broadcast %6 : vector<1x128xf32> to vector<2x128xf32>
    %18 = arith.mulf %16, %17 : vector<2x128xf32>
    %19 = arith.truncf %18 : vector<2x128xf32> to vector<2x128xbf16>
    %c0_7 = arith.constant 0 : index
    %c0_8 = arith.constant 0 : index
    %c0_9 = arith.constant 0 : index
    %20 = vector.load %arg3[%c0_7, %c0_8, %c0_9] : memref<1x128x128xbf16, #tpu.memory_space<vmem>>, vector<1x128x128xbf16>
    %21 = vector.shape_cast %20 : vector<1x128x128xbf16> to vector<128x128xbf16>
    %cst_10 = arith.constant dense<0.000000e+00> : vector<2x128xf32>
    %22 = tpu.matmul %19, %21, %cst_10 {dimension_numbers = #tpu.dot_dimension_numbers<[1], [0], [0], [1], [0, 0, 1, 1], [], []>} : vector<2x128xbf16>, vector<128x128xbf16>, vector<2x128xf32> -> vector<2x128xf32>
    %23 = arith.truncf %22 : vector<2x128xf32> to vector<2x128xbf16>
    %c0_11 = arith.constant 0 : index
    %c0_12 = arith.constant 0 : index
    %c0_13 = arith.constant 0 : index
    %24 = vector.load %arg4[%c0_11, %c0_12, %c0_13] : memref<1x128x128xbf16, #tpu.memory_space<vmem>>, vector<1x128x128xbf16>
    %25 = vector.shape_cast %24 : vector<1x128x128xbf16> to vector<128x128xbf16>
    %cst_14 = arith.constant dense<0.000000e+00> : vector<2x128xf32>
    %26 = tpu.matmul %23, %25, %cst_14 {dimension_numbers = #tpu.dot_dimension_numbers<[1], [0], [0], [1], [0, 0, 1, 1], [], []>} : vector<2x128xbf16>, vector<128x128xbf16>, vector<2x128xf32> -> vector<2x128xf32>
    %27 = arith.addf %3, %26 : vector<2x128xf32>
    %c0_15 = arith.constant 0 : index
    %c0_16 = arith.constant 0 : index
    %c0_17 = arith.constant 0 : index
    %28 = vector.load %arg5[%c0_15, %c0_16, %c0_17] : memref<1x1x128xbf16, #tpu.memory_space<vmem>>, vector<1x1x128xbf16>
    %29 = vector.shape_cast %28 : vector<1x1x128xbf16> to vector<1x128xbf16>
    %30 = arith.extf %29 : vector<1x128xbf16> to vector<1x128xf32>
    %31 = arith.mulf %27, %27 : vector<2x128xf32>
    %cst_18 = arith.constant dense<0.000000e+00> : vector<2xf32>
    %32 = vector.multi_reduction <add>, %31, %cst_18 [1] : vector<2x128xf32> to vector<2xf32>
    %33 = vector.shape_cast %32 : vector<2xf32> to vector<2x1xf32>
    %cst_19 = arith.constant 1.280000e+02 : f32
    %34 = vector.broadcast %cst_19 : f32 to vector<2x1xf32>
    %35 = arith.divf %33, %34 : vector<2x1xf32>
    %cst_20 = arith.constant 9.99999974E-6 : f32
    %36 = vector.broadcast %cst_20 : f32 to vector<2x1xf32>
    %37 = arith.addf %35, %36 : vector<2x1xf32>
    %38 = math.rsqrt %37 : vector<2x1xf32>
    %39 = vector.broadcast %38 : vector<2x1xf32> to vector<2x128xf32>
    %40 = arith.mulf %27, %39 : vector<2x128xf32>
    %41 = vector.broadcast %30 : vector<1x128xf32> to vector<2x128xf32>
    %42 = arith.mulf %40, %41 : vector<2x128xf32>
    %43 = arith.truncf %42 : vector<2x128xf32> to vector<2x128xbf16>
    %c0_21 = arith.constant 0 : index
    %c0_22 = arith.constant 0 : index
    %c0_23 = arith.constant 0 : index
    %44 = vector.load %arg6[%c0_21, %c0_22, %c0_23] : memref<1x128x256xbf16, #tpu.memory_space<vmem>>, vector<1x128x256xbf16>
    %45 = vector.shape_cast %44 : vector<1x128x256xbf16> to vector<128x256xbf16>
    %cst_24 = arith.constant dense<0.000000e+00> : vector<2x256xf32>
    %46 = tpu.matmul %43, %45, %cst_24 {dimension_numbers = #tpu.dot_dimension_numbers<[1], [0], [0], [1], [0, 0, 1, 1], [], []>} : vector<2x128xbf16>, vector<128x256xbf16>, vector<2x256xf32> -> vector<2x256xf32>
    %c0_25 = arith.constant 0 : index
    %c0_26 = arith.constant 0 : index
    %c0_27 = arith.constant 0 : index
    %47 = vector.load %arg7[%c0_25, %c0_26, %c0_27] : memref<1x128x256xbf16, #tpu.memory_space<vmem>>, vector<1x128x256xbf16>
    %48 = vector.shape_cast %47 : vector<1x128x256xbf16> to vector<128x256xbf16>
    %cst_28 = arith.constant dense<0.000000e+00> : vector<2x256xf32>
    %49 = tpu.matmul %43, %48, %cst_28 {dimension_numbers = #tpu.dot_dimension_numbers<[1], [0], [0], [1], [0, 0, 1, 1], [], []>} : vector<2x128xbf16>, vector<128x256xbf16>, vector<2x256xf32> -> vector<2x256xf32>
    %50 = arith.negf %46 : vector<2x256xf32>
    %51 = math.exp %50 : vector<2x256xf32>
    %cst_29 = arith.constant 1.000000e+00 : f32
    %52 = vector.broadcast %cst_29 : f32 to vector<2x256xf32>
    %53 = arith.addf %52, %51 : vector<2x256xf32>
    %54 = arith.divf %52, %53 : vector<2x256xf32>
    %55 = arith.mulf %46, %54 : vector<2x256xf32>
    %56 = arith.mulf %55, %49 : vector<2x256xf32>
    %57 = arith.truncf %56 : vector<2x256xf32> to vector<2x256xbf16>
    %c0_30 = arith.constant 0 : index
    %c0_31 = arith.constant 0 : index
    %c0_32 = arith.constant 0 : index
    %58 = vector.load %arg8[%c0_30, %c0_31, %c0_32] : memref<1x256x128xbf16, #tpu.memory_space<vmem>>, vector<1x256x128xbf16>
    %59 = vector.shape_cast %58 : vector<1x256x128xbf16> to vector<256x128xbf16>
    %cst_33 = arith.constant dense<0.000000e+00> : vector<2x128xf32>
    %60 = tpu.matmul %57, %59, %cst_33 {dimension_numbers = #tpu.dot_dimension_numbers<[1], [0], [0], [1], [0, 0, 1, 1], [], []>} : vector<2x256xbf16>, vector<256x128xbf16>, vector<2x128xf32> -> vector<2x128xf32>
    %61 = arith.addf %27, %60 : vector<2x128xf32>
    %c0_34 = arith.constant 0 : index
    %c0_35 = arith.constant 0 : index
    %62 = vector.load %arg16[%c0_34, %c0_35] : memref<2x128xf32, #tpu.memory_space<vmem>>, vector<2x128xf32>
    tpu.vector_store %arg16[%c0_34, %c0_35], %61 {strides = array<i32>} : memref<2x128xf32, #tpu.memory_space<vmem>>, vector<2x128xf32>,
    %c1_i32 = arith.constant 1 : i32
    %63 = arith.cmpi eq, %arg0, %c1_i32 : i32
    %64 = arith.extui %63 : i1 to i32
    %c0_i32_36 = arith.constant 0 : i32
    %65 = arith.cmpi ne, %64, %c0_i32_36 : i32
    scf.if %65 {
      %c0_37 = arith.constant 0 : index
      %c0_38 = arith.constant 0 : index
      %66 = vector.load %arg9[%c0_37, %c0_38] : memref<1x128xbf16, #tpu.memory_space<vmem>>, vector<1x128xbf16>
      %67 = arith.extf %66 : vector<1x128xbf16> to vector<1x128xf32>
      %68 = arith.mulf %61, %61 : vector<2x128xf32>
      %cst_39 = arith.constant dense<0.000000e+00> : vector<2xf32>
      %69 = vector.multi_reduction <add>, %68, %cst_39 [1] : vector<2x128xf32> to vector<2xf32>
      %70 = vector.shape_cast %69 : vector<2xf32> to vector<2x1xf32>
      %cst_40 = arith.constant 1.280000e+02 : f32
      %71 = vector.broadcast %cst_40 : f32 to vector<2x1xf32>
      %72 = arith.divf %70, %71 : vector<2x1xf32>
      %cst_41 = arith.constant 9.99999974E-6 : f32
      %73 = vector.broadcast %cst_41 : f32 to vector<2x1xf32>
      %74 = arith.addf %72, %73 : vector<2x1xf32>
      %75 = math.rsqrt %74 : vector<2x1xf32>
      %76 = vector.broadcast %75 : vector<2x1xf32> to vector<2x128xf32>
      %77 = arith.mulf %61, %76 : vector<2x128xf32>
      %78 = vector.broadcast %67 : vector<1x128xf32> to vector<2x128xf32>
      %79 = arith.mulf %77, %78 : vector<2x128xf32>
      %80 = arith.truncf %79 : vector<2x128xf32> to vector<2x128xbf16>
      %c0_42 = arith.constant 0 : index
      %c0_43 = arith.constant 0 : index
      %81 = vector.load %arg10[%c0_42, %c0_43] : memref<128x16xbf16, #tpu.memory_space<vmem>>, vector<128x16xbf16>
      %cst_44 = arith.constant dense<0.000000e+00> : vector<2x16xf32>
      %82 = tpu.matmul %80, %81, %cst_44 {dimension_numbers = #tpu.dot_dimension_numbers<[1], [0], [0], [1], [0, 0, 1, 1], [], []>} : vector<2x128xbf16>, vector<128x16xbf16>, vector<2x16xf32> -> vector<2x16xf32>
      %c0_45 = arith.constant 0 : index
      %c0_46 = arith.constant 0 : index
      %83 = vector.load %arg11[%c0_45, %c0_46] : memref<1x16xbf16, #tpu.memory_space<vmem>>, vector<1x16xbf16>
      %84 = arith.extf %83 : vector<1x16xbf16> to vector<1x16xf32>
      %85 = vector.broadcast %84 : vector<1x16xf32> to vector<2x16xf32>
      %86 = arith.addf %82, %85 : vector<2x16xf32>
      %c0_47 = arith.constant 0 : index
      %c0_48 = arith.constant 0 : index
      %87 = vector.load %arg12[%c0_47, %c0_48] : memref<128x1xbf16, #tpu.memory_space<vmem>>, vector<128x1xbf16>
      %cst_49 = arith.constant dense<0.000000e+00> : vector<2x1xf32>
      %88 = tpu.matmul %80, %87, %cst_49 {dimension_numbers = #tpu.dot_dimension_numbers<[1], [0], [0], [1], [0, 0, 1, 1], [], []>} : vector<2x128xbf16>, vector<128x1xbf16>, vector<2x1xf32> -> vector<2x1xf32>
      %c0_50 = arith.constant 0 : index
      %c0_51 = arith.constant 0 : index
      %89 = vector.load %arg13[%c0_50, %c0_51] : memref<1x1xbf16, #tpu.memory_space<vmem>>, vector<1x1xbf16>
      %90 = arith.extf %89 : vector<1x1xbf16> to vector<1x1xf32>
      %91 = vector.broadcast %90 : vector<1x1xf32> to vector<2x1xf32>
      %92 = arith.addf %88, %91 : vector<2x1xf32>
      %93 = arith.truncf %86 : vector<2x16xf32> to vector<2x16xbf16>
      %c0_52 = arith.constant 0 : index
      %c0_53 = arith.constant 0 : index
      %94 = vector.load %arg14[%c0_52, %c0_53] : memref<2x16xbf16, #tpu.memory_space<vmem>>, vector<2x16xbf16>
      tpu.vector_store %arg14[%c0_52, %c0_53], %93 {strides = array<i32>} : memref<2x16xbf16, #tpu.memory_space<vmem>>, vector<2x16xbf16>,
      %95 = math.tanh %92 : vector<2x1xf32>
      %96 = arith.truncf %95 : vector<2x1xf32> to vector<2x1xbf16>
      %c0_54 = arith.constant 0 : index
      %c0_55 = arith.constant 0 : index
      %97 = vector.load %arg15[%c0_54, %c0_55] : memref<2x1xbf16, #tpu.memory_space<vmem>>, vector<2x1xbf16>
      tpu.vector_store %arg15[%c0_54, %c0_55], %96 {strides = array<i32>} : memref<2x1xbf16, #tpu.memory_space<vmem>>, vector<2x1xbf16>,
    } else {
    }
    return
  }
  func.func @transform_0(%arg0: i32) -> (i32, i32) {
    %c0_i32 = arith.constant 0 : i32
    %c0_i32_0 = arith.constant 0 : i32
    %c0_i32_1 = arith.constant 0 : i32
    return %c0_i32, %c0_i32_0 : i32, i32
  }
  func.func @transform_1(%arg0: i32) -> (i32, i32, i32) {
    %c0_i32 = arith.constant 0 : i32
    %c0_i32_0 = arith.constant 0 : i32
    %c0_i32_1 = arith.constant 0 : i32
    return %arg0, %c0_i32, %c0_i32_0 : i32, i32, i32
  }
  func.func @transform_2(%arg0: i32) -> (i32, i32, i32) {
    %c0_i32 = arith.constant 0 : i32
    %c0_i32_0 = arith.constant 0 : i32
    %c0_i32_1 = arith.constant 0 : i32
    return %arg0, %c0_i32, %c0_i32_0 : i32, i32, i32
  }
  func.func @transform_3(%arg0: i32) -> (i32, i32, i32) {
    %c0_i32 = arith.constant 0 : i32
    %c0_i32_0 = arith.constant 0 : i32
    %c0_i32_1 = arith.constant 0 : i32
    return %arg0, %c0_i32, %c0_i32_0 : i32, i32, i32
  }
  func.func @transform_4(%arg0: i32) -> (i32, i32, i32) {
    %c0_i32 = arith.constant 0 : i32
    %c0_i32_0 = arith.constant 0 : i32
    %c0_i32_1 = arith.constant 0 : i32
    return %arg0, %c0_i32, %c0_i32_0 : i32, i32, i32
  }
  func.func @transform_5(%arg0: i32) -> (i32, i32, i32) {
    %c0_i32 = arith.constant 0 : i32
    %c0_i32_0 = arith.constant 0 : i32
    %c0_i32_1 = arith.constant 0 : i32
    return %arg0, %c0_i32, %c0_i32_0 : i32, i32, i32
  }
  func.func @transform_6(%arg0: i32) -> (i32, i32, i32) {
    %c0_i32 = arith.constant 0 : i32
    %c0_i32_0 = arith.constant 0 : i32
    %c0_i32_1 = arith.constant 0 : i32
    return %arg0, %c0_i32, %c0_i32_0 : i32, i32, i32
  }
  func.func @transform_7(%arg0: i32) -> (i32, i32, i32) {
    %c0_i32 = arith.constant 0 : i32
    %c0_i32_0 = arith.constant 0 : i32
    %c0_i32_1 = arith.constant 0 : i32
    return %arg0, %c0_i32, %c0_i32_0 : i32, i32, i32
  }
  func.func @transform_8(%arg0: i32) -> (i32, i32) {
    %c0_i32 = arith.constant 0 : i32
    %c0_i32_0 = arith.constant 0 : i32
    %c0_i32_1 = arith.constant 0 : i32
    return %c0_i32, %c0_i32_0 : i32, i32
  }
  func.func @transform_9(%arg0: i32) -> (i32, i32) {
    %c0_i32 = arith.constant 0 : i32
    %c0_i32_0 = arith.constant 0 : i32
    %c0_i32_1 = arith.constant 0 : i32
    return %c0_i32, %c0_i32_0 : i32, i32
  }
  func.func @transform_10(%arg0: i32) -> (i32, i32) {
    %c0_i32 = arith.constant 0 : i32
    %c0_i32_0 = arith.constant 0 : i32
    %c0_i32_1 = arith.constant 0 : i32
    return %c0_i32, %c0_i32_0 : i32, i32
  }
  func.func @transform_11(%arg0: i32) -> (i32, i32) {
    %c0_i32 = arith.constant 0 : i32
    %c0_i32_0 = arith.constant 0 : i32
    %c0_i32_1 = arith.constant 0 : i32
    return %c0_i32, %c0_i32_0 : i32, i32
  }
  func.func @transform_12(%arg0: i32) -> (i32, i32) {
    %c0_i32 = arith.constant 0 : i32
    %c0_i32_0 = arith.constant 0 : i32
    %c0_i32_1 = arith.constant 0 : i32
    return %c0_i32, %c0_i32_0 : i32, i32
  }
  func.func @transform_13(%arg0: i32) -> (i32, i32) {
    %c0_i32 = arith.constant 0 : i32
    %c0_i32_0 = arith.constant 0 : i32
    %c0_i32_1 = arith.constant 0 : i32
    return %c0_i32, %c0_i32_0 : i32, i32
  }
  func.func @transform_14(%arg0: i32) -> (i32, i32) {
    %c0_i32 = arith.constant 0 : i32
    %c0_i32_0 = arith.constant 0 : i32
    %c0_i32_1 = arith.constant 0 : i32
    return %c0_i32, %c0_i32_0 : i32, i32
  }
}

</mosaic_0001>

<llo_original>
// kernel: forward.12
$region0: #{forward.12}
  #allocation0 [shape = 'u32[]', space=smem, size = 0x4, offset = 0x4, fixed_abs, tag = 'smem constant byte address 0x4 - core index']
  #allocation1 [shape = 'u32[144,128]{1,0:T(1,128)}', space=vmem, size = 0x12000, scoped, tag = 'internal scratch']
  #allocation2 [shape = 'f32[2,128]{1,0:T(2,128)}', space=vmem, size = 0x400, scoped, tag = 'scratch operand']
  %s0 = inlined_call_operand.vmem [shape: bf16[2,8192], index: 0, kind: input, shape index: {}]
  %s1 = inlined_call_operand.hbm [shape: bf16[8192,128], index: 1, kind: input, shape index: {}]
  %s2 = inlined_call_operand.hbm [shape: bf16[1,128], index: 2, kind: input, shape index: {}]
  %s3 = inlined_call_operand.vmem [shape: bf16[2,128], index: 3, kind: output, shape index: {}]
  %s4 = sld [smem:[#allocation0]]
  $region61: #{forward.12} parent=0
    _
  %s6 = ssub.s32 1, %s4
  %s7 = scalar_select 0, %s6, %s4
  $region1: #{forward.12} parent=0
    #allocation3 [shape = 'u8[1048576]{0}', space=vmem, size = 0x100000, scoped, tag = 'input window, operand 1']
    #allocation4 [shape = 's32[2]{0}', space=sflag, size = 0x8, scoped, tag = 'scoped memory for forward.12']
    #allocation5 [shape = 'u8[512]{0}', space=vmem, size = 0x400, scoped, tag = 'input window, operand 2, single buffered']
    #allocation6 [shape = 's32[1]{0}', space=sflag, size = 0x4, scoped, tag = 'scoped memory for forward.12']
    %8 = vsyncpa [#allocation4], 0
    %s9 = scalar_lea.sflag [#allocation4], 1
    %10 = vsyncpa %s9, 0
    %11 = vsyncpa [#allocation6], 0
    loop: start=0, step=1, limit=6
    $region2: #{forward.12} parent=1 // loop_pre_header
      _
    $region3: #{forward.12} parent=1 // loop_header
      %s13 = sphi 0, %s17
      %p14 = scmp.ge.s32.totalorder %s13, 6
      %s23 = sphi 0, %s25
      %s26 = sphi 0, %s23
      %s27 = sphi 0, %s26
      %s43 = sphi 0, %s27
      %s49 = sphi 0, %s51
      %s52 = sphi 0, %s49
      %s53 = sphi 0, %s52
      %s69 = sphi 0, %s53
      %s73 = sphi 0, %s73
      %s75 = sphi 0, %s73
      %s76 = sphi 0, %s75
      %s90 = sphi 0, %s76
      %s94 = sphi 0, %s94
      %s96 = sphi 0, %s94
      %s97 = sphi 0, %s96
      %s111 = sphi 0, %s97
    $region4: #{forward.12} parent=1 // loop_header_branch
      %16 = sbr.rel (%p14) target = $region8
    $region5: #{forward.12} parent=1 // loop_body
      %s18 = ssub.s32 %s13, 1
      %s19 = ssub.s32 %s13, 2
      %s20 = sadd.s32 %s13, 1
      %s21 = ssub.s32 %s13, %s20
      %p22 = scmp.eq.s32.totalorder %s21, 0
      %s24 = sadd.s32 %s23, 1
      %s25 = scalar_select %p22, %s23, %s24
      %p28 = pneg %p22
      %p29 = scmp.eq.s32.totalorder %s13, 3
      %p30 = por %p28, %p29
      %p31 = scmp.ne.s32.totalorder %s23, %s26
      %p32 = scmp.eq.s32.totalorder %s13, 0
      %p33 = por %p31, %p32
      %p34 = scmp.ne.s32.totalorder %s23, %s26
      %p35 = scmp.eq.s32.totalorder %s18, 3
      %p36 = por %p34, %p35
      %p37 = scmp.ne.s32.totalorder %s26, %s27
      %p38 = scmp.eq.s32.totalorder %s18, 0
      %p39 = por %p37, %p38
      %p40 = scmp.ne.s32.totalorder %s26, %s27
      %p41 = scmp.eq.s32.totalorder %s19, 3
      %p42 = por %p40, %p41
      %p44 = scmp.ne.s32.totalorder %s27, %s43
      %p45 = scmp.eq.s32.totalorder %s19, 0
      %p46 = por %p44, %p45
      %s47 = ssub.s32 %s13, %s20
      %p48 = scmp.eq.s32.totalorder %s47, 0
      %s50 = sadd.s32 %s49, 1
      %s51 = scalar_select %p48, %s49, %s50
      %p54 = pneg %p48
      %p55 = scmp.eq.s32.totalorder %s13, 3
      %p56 = por %p54, %p55
      %p57 = scmp.ne.s32.totalorder %s49, %s52
      %p58 = scmp.eq.s32.totalorder %s13, 0
      %p59 = por %p57, %p58
      %p60 = scmp.ne.s32.totalorder %s49, %s52
      %p61 = scmp.eq.s32.totalorder %s18, 3
      %p62 = por %p60, %p61
      %p63 = scmp.ne.s32.totalorder %s52, %s53
      %p64 = scmp.eq.s32.totalorder %s18, 0
      %p65 = por %p63, %p64
      %p66 = scmp.ne.s32.totalorder %s52, %s53
      %p67 = scmp.eq.s32.totalorder %s19, 3
      %p68 = por %p66, %p67
      %p70 = scmp.ne.s32.totalorder %s53, %s69
      %p71 = scmp.eq.s32.totalorder %s19, 0
      %p72 = por %p70, %p71
      %s74 = sadd.s32 %s73, 1
      %p77 = scmp.eq.s32.totalorder %s13, 3
      %p78 = scmp.ne.s32.totalorder %s73, %s75
      %p79 = scmp.eq.s32.totalorder %s13, 0
      %p80 = por %p78, %p79
      %p81 = scmp.ne.s32.totalorder %s73, %s75
      %p82 = scmp.eq.s32.totalorder %s18, 3
      %p83 = por %p81, %p82
      %p84 = scmp.ne.s32.totalorder %s75, %s76
      %p85 = scmp.eq.s32.totalorder %s18, 0
      %p86 = por %p84, %p85
      %p87 = scmp.ne.s32.totalorder %s75, %s76
      %p88 = scmp.eq.s32.totalorder %s19, 3
      %p89 = por %p87, %p88
      %p91 = scmp.ne.s32.totalorder %s76, %s90
      %p92 = scmp.eq.s32.totalorder %s19, 0
      %p93 = por %p91, %p92
      %s95 = sadd.s32 %s94, 1
      %p98 = scmp.eq.s32.totalorder %s13, 3
      %p99 = scmp.ne.s32.totalorder %s94, %s96
      %p100 = scmp.eq.s32.totalorder %s13, 0
      %p101 = por %p99, %p100
      %p102 = scmp.ne.s32.totalorder %s94, %s96
      %p103 = scmp.eq.s32.totalorder %s18, 3
      %p104 = por %p102, %p103
      %p105 = scmp.ne.s32.totalorder %s96, %s97
      %p106 = scmp.eq.s32.totalorder %s18, 0
      %p107 = por %p105, %p106
      %p108 = scmp.ne.s32.totalorder %s96, %s97
      %p109 = scmp.eq.s32.totalorder %s19, 3
      %p110 = por %p108, %p109
      %p112 = scmp.ne.s32.totalorder %s97, %s111
      %p113 = scmp.eq.s32.totalorder %s19, 0
      %p114 = por %p112, %p113
      %p115 = scmp.le.s32.totalorder 1, %s13
      %p116 = scmp.lt.s32.totalorder %s13, 5
      %p117 = pnand %p115, %p116
      %p118 = pneg %p117
      // Predicated region
      $region9: #{forward.12} parent=5 // pred_check
        _
      $region10: #{forward.12} parent=5 // pred_check_branch
        %120 = sbr.rel (%p117) target = $region12
      $region11: #{forward.12} parent=5 // pred_region
        %s121 = ssub.s32 %s13, 1
        // Predicated region
        $region13: #{forward.12} parent=11 // pred_check
          %p122 = pneg %p86
        $region14: #{forward.12} parent=11 // pred_check_branch
          %124 = sbr.rel (%p122) target = $region16
        $region15: #{forward.12} parent=11 // pred_region
          %s126 = ssub.s32 16, 16
          %127 = vsyncadd [#allocation6], %s126
          %s129 = sshll.u32 [#allocation5], 4
          %s130 = int_to_ptr.vmem [resolvable:$true] %s129
          %132 = dma.hbm_to_vmem [thread:$0]  %s2, 16, %s130, [#allocation6]
        $region16: #{forward.12} parent=11 // pred_fallthru
          _
      $region12: #{forward.12} parent=5 // pred_fallthru
        _
      %p133 = scmp.lt.s32.totalorder %s13, 4
      // Predicated region
      $region17: #{forward.12} parent=5 // pred_check
        %p134 = pneg %p133
      $region18: #{forward.12} parent=5 // pred_check_branch
        %136 = sbr.rel (%p134) target = $region20
      $region19: #{forward.12} parent=5 // pred_region
        // Predicated region
        $region21: #{forward.12} parent=19 // pred_check
          %p137 = pneg %p33
        $region22: #{forward.12} parent=19 // pred_check_branch
          %139 = sbr.rel (%p137) target = $region24
        $region23: #{forward.12} parent=19 // pred_region
          %s140 = smul.u32 16, %s13
          %p141 = scmp.lt.s32.totalorder %s140, 63
          %s142 = scalar_select %p141, %s140, 63
          %s143 = scalar_lea.vmem %s0, %s142
          %s144 = smul.u32 16, %s13
        $region24: #{forward.12} parent=19 // pred_fallthru
          _
        // Predicated region
        $region25: #{forward.12} parent=19 // pred_check
          %p145 = pneg %p59
        $region26: #{forward.12} parent=19 // pred_check_branch
          %147 = sbr.rel (%p145) target = $region28
        $region27: #{forward.12} parent=19 // pred_region
          %s148 = sand.u32 %s49, 1
          %s149 = scalar_lea.sflag [#allocation4], %s148
          %s150 = sand.u32 %s49, 1
          %s151 = smul.addr %s150, 1024
          %s152 = scalar_lea.vmem [#allocation3], %s151
          %s153 = smul.u32 256, %s13
          %s155 = ssub.s32 16384, 16384
          %156 = vsyncadd %s149, %s155
          %s157 = smul.addr %s153, 64
          %s158 = scalar_lea.hbm %s1, %s157
          %s159 = sshll.u32 %s152, 4
          %s160 = int_to_ptr.vmem [resolvable:$true] %s159
          %165 = dma.hbm_to_vmem [thread:$0]  %s158, 16384, %s160, %s149, 64, 64, 4
        $region28: #{forward.12} parent=19 // pred_fallthru
          _
      $region20: #{forward.12} parent=5 // pred_fallthru
        _
      %p166 = scmp.le.s32.totalorder 1, %s13
      %p167 = scmp.lt.s32.totalorder %s13, 5
      %p168 = pnand %p166, %p167
      %p169 = pneg %p168
      // Predicated region
      $region29: #{forward.12} parent=5 // pred_check
        _
      $region30: #{forward.12} parent=5 // pred_check_branch
        %171 = sbr.rel (%p168) target = $region32
      $region31: #{forward.12} parent=5 // pred_region
        %s172 = ssub.s32 %s13, 1
        %s173 = sand.u32 %s52, 1
        %s174 = scalar_lea.sflag [#allocation4], %s173
        %s175 = sand.u32 %s52, 1
        %s176 = smul.addr %s175, 1024
        %s177 = scalar_lea.vmem [#allocation3], %s176
        // Predicated region
        $region33: #{forward.12} parent=31 // pred_check
          %p178 = pneg %p65
        $region34: #{forward.12} parent=31 // pred_check_branch
          %180 = sbr.rel (%p178) target = $region36
        $region35: #{forward.12} parent=31 // pred_region
          %181 = dma.done %s174, 16384
        $region36: #{forward.12} parent=31 // pred_fallthru
          _
        // Predicated region
        $region37: #{forward.12} parent=31 // pred_check
          %p182 = pneg %p86
        $region38: #{forward.12} parent=31 // pred_check_branch
          %184 = sbr.rel (%p182) target = $region40
        $region39: #{forward.12} parent=31 // pred_region
          %185 = dma.done [#allocation6], 16
        $region40: #{forward.12} parent=31 // pred_fallthru
          _
        %s186 = smul.u32 16, %s18
        %p187 = scmp.lt.s32.totalorder %s186, 63
        %s188 = scalar_select %p187, %s186, 63
        %s189 = scalar_lea.vmem %s0, %s188
        %p190 = pneg %p39
        %p191 = pneg %p36
        %s192 = sand.u32 %s52, 1
        %s193 = scalar_lea.sflag [#allocation4], %s192
        %s194 = sand.u32 %s52, 1
        %s195 = smul.addr %s194, 1024
        %s196 = scalar_lea.vmem [#allocation3], %s195
        %p197 = pneg %p65
        %p198 = pneg %p62
        %p199 = pneg %p86
        %p200 = pneg %p83
        %p201 = pneg %p107
        %p202 = pneg %p104
        %s203 = smul.u32 16, %s18
        %p204 = scmp.lt.s32.totalorder %s203, 63
        %s205 = scalar_select %p204, %s203, 63
        %s206 = scalar_lea.vmem %s0, %s205
        %s207 = smul.u32 16, %s18
        %s208 = smul.u32 256, %s18
        %p210 = scmp.eq.s32.totalorder %s18, 0
        // Predicated region
        $region41: #{forward.12} parent=31 // pred_check
          %p211 = pneg %p210
        $region42: #{forward.12} parent=31 // pred_check_branch
          %213 = sbr.rel (%p211) target = $region44
        $region43: #{forward.12} parent=31 // pred_region
          %214 = vst [vmem:[#allocation2] sm:$0x3] 0.0
        $region44: #{forward.12} parent=31 // pred_fallthru
          _
        %v215 = vld [vmem:[#allocation2] sm:$0x3]
        %v216 = vld [vmem:[%s206] sm:$0xff]
        %v217 = vld [vmem:[%s206 + $0x8] sm:$0xff]
        %v218 = vld [vmem:[%s177] sm:$0xf]
        %v219 = vld [vmem:[%s177 + $0x4] sm:$0xf]
        %v220 = vld [vmem:[%s177 + $0x8] sm:$0xf]
        %v221 = vld [vmem:[%s177 + $0xc] sm:$0xf]
        %v222 = vld [vmem:[%s177 + $0x10] sm:$0xf]
        %v223 = vld [vmem:[%s177 + $0x14] sm:$0xf]
        %v224 = vld [vmem:[%s177 + $0x18] sm:$0xf]
        %v225 = vld [vmem:[%s177 + $0x1c] sm:$0xf]
        %v226 = vld [vmem:[%s177 + $0x20] sm:$0xf]
        %v227 = vld [vmem:[%s177 + $0x24] sm:$0xf]
        %v228 = vld [vmem:[%s177 + $0x28] sm:$0xf]
        %v229 = vld [vmem:[%s177 + $0x2c] sm:$0xf]
        %v230 = vld [vmem:[%s177 + $0x30] sm:$0xf]
        %v231 = vld [vmem:[%s177 + $0x34] sm:$0xf]
        %v232 = vld [vmem:[%s177 + $0x38] sm:$0xf]
        %v233 = vld [vmem:[%s177 + $0x3c] sm:$0xf]
        %v234 = vld [vmem:[%s177 + $0x40] sm:$0xf]
        %v235 = vld [vmem:[%s177 + $0x44] sm:$0xf]
        %v236 = vld [vmem:[%s177 + $0x48] sm:$0xf]
        %v237 = vld [vmem:[%s177 + $0x4c] sm:$0xf]
        %v238 = vld [vmem:[%s177 + $0x50] sm:$0xf]
        %v239 = vld [vmem:[%s177 + $0x54] sm:$0xf]
        %v240 = vld [vmem:[%s177 + $0x58] sm:$0xf]
        %v241 = vld [vmem:[%s177 + $0x5c] sm:$0xf]
        %v242 = vld [vmem:[%s177 + $0x60] sm:$0xf]
        %v243 = vld [vmem:[%s177 + $0x64] sm:$0xf]
        %v244 = vld [vmem:[%s177 + $0x68] sm:$0xf]
        %v245 = vld [vmem:[%s177 + $0x6c] sm:$0xf]
        %v246 = vld [vmem:[%s177 + $0x70] sm:$0xf]
        %v247 = vld [vmem:[%s177 + $0x74] sm:$0xf]
        %v248 = vld [vmem:[%s177 + $0x78] sm:$0xf]
        %v249 = vld [vmem:[%s177 + $0x7c] sm:$0xf]
        %v250 = vld [vmem:[%s177 + $0x80] sm:$0xf]
        %v251 = vld [vmem:[%s177 + $0x84] sm:$0xf]
        %v252 = vld [vmem:[%s177 + $0x88] sm:$0xf]
        %v253 = vld [vmem:[%s177 + $0x8c] sm:$0xf]
        %v254 = vld [vmem:[%s177 + $0x90] sm:$0xf]
        %v255 = vld [vmem:[%s177 + $0x94] sm:$0xf]
        %v256 = vld [vmem:[%s177 + $0x98] sm:$0xf]
        %v257 = vld [vmem:[%s177 + $0x9c] sm:$0xf]
        %v258 = vld [vmem:[%s177 + $0xa0] sm:$0xf]
        %v259 = vld [vmem:[%s177 + $0xa4] sm:$0xf]
        %v260 = vld [vmem:[%s177 + $0xa8] sm:$0xf]
        %v261 = vld [vmem:[%s177 + $0xac] sm:$0xf]
        %v262 = vld [vmem:[%s177 + $0xb0] sm:$0xf]
        %v263 = vld [vmem:[%s177 + $0xb4] sm:$0xf]
        %v264 = vld [vmem:[%s177 + $0xb8] sm:$0xf]
        %v265 = vld [vmem:[%s177 + $0xbc] sm:$0xf]
        %v266 = vld [vmem:[%s177 + $0xc0] sm:$0xf]
        %v267 = vld [vmem:[%s177 + $0xc4] sm:$0xf]
        %v268 = vld [vmem:[%s177 + $0xc8] sm:$0xf]
        %v269 = vld [vmem:[%s177 + $0xcc] sm:$0xf]
        %v270 = vld [vmem:[%s177 + $0xd0] sm:$0xf]
        %v271 = vld [vmem:[%s177 + $0xd4] sm:$0xf]
        %v272 = vld [vmem:[%s177 + $0xd8] sm:$0xf]
        %v273 = vld [vmem:[%s177 + $0xdc] sm:$0xf]
        %v274 = vld [vmem:[%s177 + $0xe0] sm:$0xf]
        %v275 = vld [vmem:[%s177 + $0xe4] sm:$0xf]
        %v276 = vld [vmem:[%s177 + $0xe8] sm:$0xf]
        %v277 = vld [vmem:[%s177 + $0xec] sm:$0xf]
        %v278 = vld [vmem:[%s177 + $0xf0] sm:$0xf]
        %v279 = vld [vmem:[%s177 + $0xf4] sm:$0xf]
        %v280 = vld [vmem:[%s177 + $0xf8] sm:$0xf]
        %v281 = vld [vmem:[%s177 + $0xfc] sm:$0xf]
        %v282 = vld [vmem:[%s177 + $0x100] sm:$0xf]
        %v283 = vld [vmem:[%s177 + $0x104] sm:$0xf]
        %v284 = vld [vmem:[%s177 + $0x108] sm:$0xf]
        %v285 = vld [vmem:[%s177 + $0x10c] sm:$0xf]
        %v286 = vld [vmem:[%s177 + $0x110] sm:$0xf]
        %v287 = vld [vmem:[%s177 + $0x114] sm:$0xf]
        %v288 = vld [vmem:[%s177 + $0x118] sm:$0xf]
        %v289 = vld [vmem:[%s177 + $0x11c] sm:$0xf]
        %v290 = vld [vmem:[%s177 + $0x120] sm:$0xf]
        %v291 = vld [vmem:[%s177 + $0x124] sm:$0xf]
        %v292 = vld [vmem:[%s177 + $0x128] sm:$0xf]
        %v293 = vld [vmem:[%s177 + $0x12c] sm:$0xf]
        %v294 = vld [vmem:[%s177 + $0x130] sm:$0xf]
        %v295 = vld [vmem:[%s177 + $0x134] sm:$0xf]
        %v296 = vld [vmem:[%s177 + $0x138] sm:$0xf]
        %v297 = vld [vmem:[%s177 + $0x13c] sm:$0xf]
        %v298 = vld [vmem:[%s177 + $0x140] sm:$0xf]
        %v299 = vld [vmem:[%s177 + $0x144] sm:$0xf]
        %v300 = vld [vmem:[%s177 + $0x148] sm:$0xf]
        %v301 = vld [vmem:[%s177 + $0x14c] sm:$0xf]
        %v302 = vld [vmem:[%s177 + $0x150] sm:$0xf]
        %v303 = vld [vmem:[%s177 + $0x154] sm:$0xf]
        %v304 = vld [vmem:[%s177 + $0x158] sm:$0xf]
        %v305 = vld [vmem:[%s177 + $0x15c] sm:$0xf]
        %v306 = vld [vmem:[%s177 + $0x160] sm:$0xf]
        %v307 = vld [vmem:[%s177 + $0x164] sm:$0xf]
        %v308 = vld [vmem:[%s177 + $0x168] sm:$0xf]
        %v309 = vld [vmem:[%s177 + $0x16c] sm:$0xf]
        %v310 = vld [vmem:[%s177 + $0x170] sm:$0xf]
        %v311 = vld [vmem:[%s177 + $0x174] sm:$0xf]
        %v312 = vld [vmem:[%s177 + $0x178] sm:$0xf]
        %v313 = vld [vmem:[%s177 + $0x17c] sm:$0xf]
        %v314 = vld [vmem:[%s177 + $0x180] sm:$0xf]
        %v315 = vld [vmem:[%s177 + $0x184] sm:$0xf]
        %v316 = vld [vmem:[%s177 + $0x188] sm:$0xf]
        %v317 = vld [vmem:[%s177 + $0x18c] sm:$0xf]
        %v318 = vld [vmem:[%s177 + $0x190] sm:$0xf]
        %v319 = vld [vmem:[%s177 + $0x194] sm:$0xf]
        %v320 = vld [vmem:[%s177 + $0x198] sm:$0xf]
        %v321 = vld [vmem:[%s177 + $0x19c] sm:$0xf]
        %v322 = vld [vmem:[%s177 + $0x1a0] sm:$0xf]
        %v323 = vld [vmem:[%s177 + $0x1a4] sm:$0xf]
        %v324 = vld [vmem:[%s177 + $0x1a8] sm:$0xf]
        %v325 = vld [vmem:[%s177 + $0x1ac] sm:$0xf]
        %v326 = vld [vmem:[%s177 + $0x1b0] sm:$0xf]
        %v327 = vld [vmem:[%s177 + $0x1b4] sm:$0xf]
        %v328 = vld [vmem:[%s177 + $0x1b8] sm:$0xf]
        %v329 = vld [vmem:[%s177 + $0x1bc] sm:$0xf]
        %v330 = vld [vmem:[%s177 + $0x1c0] sm:$0xf]
        %v331 = vld [vmem:[%s177 + $0x1c4] sm:$0xf]
        %v332 = vld [vmem:[%s177 + $0x1c8] sm:$0xf]
        %v333 = vld [vmem:[%s177 + $0x1cc] sm:$0xf]
        %v334 = vld [vmem:[%s177 + $0x1d0] sm:$0xf]
        %v335 = vld [vmem:[%s177 + $0x1d4] sm:$0xf]
        %v336 = vld [vmem:[%s177 + $0x1d8] sm:$0xf]
        %v337 = vld [vmem:[%s177 + $0x1dc] sm:$0xf]
        %v338 = vld [vmem:[%s177 + $0x1e0] sm:$0xf]
        %v339 = vld [vmem:[%s177 + $0x1e4] sm:$0xf]
        %v340 = vld [vmem:[%s177 + $0x1e8] sm:$0xf]
        %v341 = vld [vmem:[%s177 + $0x1ec] sm:$0xf]
        %v342 = vld [vmem:[%s177 + $0x1f0] sm:$0xf]
        %v343 = vld [vmem:[%s177 + $0x1f4] sm:$0xf]
        %v344 = vld [vmem:[%s177 + $0x1f8] sm:$0xf]
        %v345 = vld [vmem:[%s177 + $0x1fc] sm:$0xf]
        %v346 = vld [vmem:[%s177 + $0x200] sm:$0xf]
        %v347 = vld [vmem:[%s177 + $0x204] sm:$0xf]
        %v348 = vld [vmem:[%s177 + $0x208] sm:$0xf]
        %v349 = vld [vmem:[%s177 + $0x20c] sm:$0xf]
        %v350 = vld [vmem:[%s177 + $0x210] sm:$0xf]
        %v351 = vld [vmem:[%s177 + $0x214] sm:$0xf]
        %v352 = vld [vmem:[%s177 + $0x218] sm:$0xf]
        %v353 = vld [vmem:[%s177 + $0x21c] sm:$0xf]
        %v354 = vld [vmem:[%s177 + $0x220] sm:$0xf]
        %v355 = vld [vmem:[%s177 + $0x224] sm:$0xf]
        %v356 = vld [vmem:[%s177 + $0x228] sm:$0xf]
        %v357 = vld [vmem:[%s177 + $0x22c] sm:$0xf]
        %v358 = vld [vmem:[%s177 + $0x230] sm:$0xf]
        %v359 = vld [vmem:[%s177 + $0x234] sm:$0xf]
        %v360 = vld [vmem:[%s177 + $0x238] sm:$0xf]
        %v361 = vld [vmem:[%s177 + $0x23c] sm:$0xf]
        %v362 = vld [vmem:[%s177 + $0x240] sm:$0xf]
        %v363 = vld [vmem:[%s177 + $0x244] sm:$0xf]
        %v364 = vld [vmem:[%s177 + $0x248] sm:$0xf]
        %v365 = vld [vmem:[%s177 + $0x24c] sm:$0xf]
        %v366 = vld [vmem:[%s177 + $0x250] sm:$0xf]
        %v367 = vld [vmem:[%s177 + $0x254] sm:$0xf]
        %v368 = vld [vmem:[%s177 + $0x258] sm:$0xf]
        %v369 = vld [vmem:[%s177 + $0x25c] sm:$0xf]
        %v370 = vld [vmem:[%s177 + $0x260] sm:$0xf]
        %v371 = vld [vmem:[%s177 + $0x264] sm:$0xf]
        %v372 = vld [vmem:[%s177 + $0x268] sm:$0xf]
        %v373 = vld [vmem:[%s177 + $0x26c] sm:$0xf]
        %v374 = vld [vmem:[%s177 + $0x270] sm:$0xf]
        %v375 = vld [vmem:[%s177 + $0x274] sm:$0xf]
        %v376 = vld [vmem:[%s177 + $0x278] sm:$0xf]
        %v377 = vld [vmem:[%s177 + $0x27c] sm:$0xf]
        %v378 = vld [vmem:[%s177 + $0x280] sm:$0xf]
        %v379 = vld [vmem:[%s177 + $0x284] sm:$0xf]
        %v380 = vld [vmem:[%s177 + $0x288] sm:$0xf]
        %v381 = vld [vmem:[%s177 + $0x28c] sm:$0xf]
        %v382 = vld [vmem:[%s177 + $0x290] sm:$0xf]
        %v383 = vld [vmem:[%s177 + $0x294] sm:$0xf]
        %v384 = vld [vmem:[%s177 + $0x298] sm:$0xf]
        %v385 = vld [vmem:[%s177 + $0x29c] sm:$0xf]
        %v386 = vld [vmem:[%s177 + $0x2a0] sm:$0xf]
        %v387 = vld [vmem:[%s177 + $0x2a4] sm:$0xf]
        %v388 = vld [vmem:[%s177 + $0x2a8] sm:$0xf]
        %v389 = vld [vmem:[%s177 + $0x2ac] sm:$0xf]
        %v390 = vld [vmem:[%s177 + $0x2b0] sm:$0xf]
        %v391 = vld [vmem:[%s177 + $0x2b4] sm:$0xf]
        %v392 = vld [vmem:[%s177 + $0x2b8] sm:$0xf]
        %v393 = vld [vmem:[%s177 + $0x2bc] sm:$0xf]
        %v394 = vld [vmem:[%s177 + $0x2c0] sm:$0xf]
        %v395 = vld [vmem:[%s177 + $0x2c4] sm:$0xf]
        %v396 = vld [vmem:[%s177 + $0x2c8] sm:$0xf]
        %v397 = vld [vmem:[%s177 + $0x2cc] sm:$0xf]
        %v398 = vld [vmem:[%s177 + $0x2d0] sm:$0xf]
        %v399 = vld [vmem:[%s177 + $0x2d4] sm:$0xf]
        %v400 = vld [vmem:[%s177 + $0x2d8] sm:$0xf]
        %v401 = vld [vmem:[%s177 + $0x2dc] sm:$0xf]
        %v402 = vld [vmem:[%s177 + $0x2e0] sm:$0xf]
        %v403 = vld [vmem:[%s177 + $0x2e4] sm:$0xf]
        %v404 = vld [vmem:[%s177 + $0x2e8] sm:$0xf]
        %v405 = vld [vmem:[%s177 + $0x2ec] sm:$0xf]
        %v406 = vld [vmem:[%s177 + $0x2f0] sm:$0xf]
        %v407 = vld [vmem:[%s177 + $0x2f4] sm:$0xf]
        %v408 = vld [vmem:[%s177 + $0x2f8] sm:$0xf]
        %v409 = vld [vmem:[%s177 + $0x2fc] sm:$0xf]
        %v410 = vld [vmem:[%s177 + $0x300] sm:$0xf]
        %v411 = vld [vmem:[%s177 + $0x304] sm:$0xf]
        %v412 = vld [vmem:[%s177 + $0x308] sm:$0xf]
        %v413 = vld [vmem:[%s177 + $0x30c] sm:$0xf]
        %v414 = vld [vmem:[%s177 + $0x310] sm:$0xf]
        %v415 = vld [vmem:[%s177 + $0x314] sm:$0xf]
        %v416 = vld [vmem:[%s177 + $0x318] sm:$0xf]
        %v417 = vld [vmem:[%s177 + $0x31c] sm:$0xf]
        %v418 = vld [vmem:[%s177 + $0x320] sm:$0xf]
        %v419 = vld [vmem:[%s177 + $0x324] sm:$0xf]
        %v420 = vld [vmem:[%s177 + $0x328] sm:$0xf]
        %v421 = vld [vmem:[%s177 + $0x32c] sm:$0xf]
        %v422 = vld [vmem:[%s177 + $0x330] sm:$0xf]
        %v423 = vld [vmem:[%s177 + $0x334] sm:$0xf]
        %v424 = vld [vmem:[%s177 + $0x338] sm:$0xf]
        %v425 = vld [vmem:[%s177 + $0x33c] sm:$0xf]
        %v426 = vld [vmem:[%s177 + $0x340] sm:$0xf]
        %v427 = vld [vmem:[%s177 + $0x344] sm:$0xf]
        %v428 = vld [vmem:[%s177 + $0x348] sm:$0xf]
        %v429 = vld [vmem:[%s177 + $0x34c] sm:$0xf]
        %v430 = vld [vmem:[%s177 + $0x350] sm:$0xf]
        %v431 = vld [vmem:[%s177 + $0x354] sm:$0xf]
        %v432 = vld [vmem:[%s177 + $0x358] sm:$0xf]
        %v433 = vld [vmem:[%s177 + $0x35c] sm:$0xf]
        %v434 = vld [vmem:[%s177 + $0x360] sm:$0xf]
        %v435 = vld [vmem:[%s177 + $0x364] sm:$0xf]
        %v436 = vld [vmem:[%s177 + $0x368] sm:$0xf]
        %v437 = vld [vmem:[%s177 + $0x36c] sm:$0xf]
        %v438 = vld [vmem:[%s177 + $0x370] sm:$0xf]
        %v439 = vld [vmem:[%s177 + $0x374] sm:$0xf]
        %v440 = vld [vmem:[%s177 + $0x378] sm:$0xf]
        %v441 = vld [vmem:[%s177 + $0x37c] sm:$0xf]
        %v442 = vld [vmem:[%s177 + $0x380] sm:$0xf]
        %v443 = vld [vmem:[%s177 + $0x384] sm:$0xf]
        %v444 = vld [vmem:[%s177 + $0x388] sm:$0xf]
        %v445 = vld [vmem:[%s177 + $0x38c] sm:$0xf]
        %v446 = vld [vmem:[%s177 + $0x390] sm:$0xf]
        %v447 = vld [vmem:[%s177 + $0x394] sm:$0xf]
        %v448 = vld [vmem:[%s177 + $0x398] sm:$0xf]
        %v449 = vld [vmem:[%s177 + $0x39c] sm:$0xf]
        %v450 = vld [vmem:[%s177 + $0x3a0] sm:$0xf]
        %v451 = vld [vmem:[%s177 + $0x3a4] sm:$0xf]
        %v452 = vld [vmem:[%s177 + $0x3a8] sm:$0xf]
        %v453 = vld [vmem:[%s177 + $0x3ac] sm:$0xf]
        %v454 = vld [vmem:[%s177 + $0x3b0] sm:$0xf]
        %v455 = vld [vmem:[%s177 + $0x3b4] sm:$0xf]
        %v456 = vld [vmem:[%s177 + $0x3b8] sm:$0xf]
        %v457 = vld [vmem:[%s177 + $0x3bc] sm:$0xf]
        %v458 = vld [vmem:[%s177 + $0x3c0] sm:$0xf]
        %v459 = vld [vmem:[%s177 + $0x3c4] sm:$0xf]
        %v460 = vld [vmem:[%s177 + $0x3c8] sm:$0xf]
        %v461 = vld [vmem:[%s177 + $0x3cc] sm:$0xf]
        %v462 = vld [vmem:[%s177 + $0x3d0] sm:$0xf]
        %v463 = vld [vmem:[%s177 + $0x3d4] sm:$0xf]
        %v464 = vld [vmem:[%s177 + $0x3d8] sm:$0xf]
        %v465 = vld [vmem:[%s177 + $0x3dc] sm:$0xf]
        %v466 = vld [vmem:[%s177 + $0x3e0] sm:$0xf]
        %v467 = vld [vmem:[%s177 + $0x3e4] sm:$0xf]
        %v468 = vld [vmem:[%s177 + $0x3e8] sm:$0xf]
        %v469 = vld [vmem:[%s177 + $0x3ec] sm:$0xf]
        %v470 = vld [vmem:[%s177 + $0x3f0] sm:$0xf]
        %v471 = vld [vmem:[%s177 + $0x3f4] sm:$0xf]
        %v472 = vld [vmem:[%s177 + $0x3f8] sm:$0xf]
        %v473 = vld [vmem:[%s177 + $0x3fc] sm:$0xf]
        %v476 = vcombine.high %v216, %v216
        %v478 = vunpack.c.l.s4 1966171168
        %v479 = vunpack.c.0.s8 %v478
        %v480 = vlaneseq
        %v481 = vshrl.u32 %v480, 7
        %v482 = vsub.s32 %v479, %v481
        %v483 = vrot.slane %v216, %v482
        %v485 = vunpack.c.l.s4 1966171168
        %v486 = vunpack.c.0.s8 %v485
        %v487 = vlaneseq
        %v488 = vshrl.u32 %v487, 7
        %v489 = vsub.s32 %v486, %v488
        %v490 = vrot.slane %v476, %v489
        %v491 = vcombine.high %v483, %v483
        %v492 = vcombine.high %v490, %v490
        %v494 = vunpack.c.l.s4 1966171168
        %v495 = vunpack.c.0.s8 %v494
        %v496 = vlaneseq
        %v497 = vshrl.u32 %v496, 7
        %v498 = vsub.s32 %v495, %v497
        %v499 = vrot.slane %v483, %v498
        %v501 = vunpack.c.l.s4 1966171168
        %v502 = vunpack.c.0.s8 %v501
        %v503 = vlaneseq
        %v504 = vshrl.u32 %v503, 7
        %v505 = vsub.s32 %v502, %v504
        %v506 = vrot.slane %v490, %v505
        %v508 = vunpack.c.l.s4 1966171168
        %v509 = vunpack.c.0.s8 %v508
        %v510 = vlaneseq
        %v511 = vshrl.u32 %v510, 7
        %v512 = vsub.s32 %v509, %v511
        %v513 = vrot.slane %v491, %v512
        %v515 = vunpack.c.l.s4 1966171168
        %v516 = vunpack.c.0.s8 %v515
        %v517 = vlaneseq
        %v518 = vshrl.u32 %v517, 7
        %v519 = vsub.s32 %v516, %v518
        %v520 = vrot.slane %v492, %v519
        %v521 = vcombine.high %v499, %v499
        %v522 = vcombine.high %v506, %v506
        %v523 = vcombine.high %v513, %v513
        %v524 = vcombine.high %v520, %v520
        %v525 = vcombine.high %v217, %v217
        %v527 = vunpack.c.l.s4 1966171168
        %v528 = vunpack.c.0.s8 %v527
        %v529 = vlaneseq
        %v530 = vshrl.u32 %v529, 7
        %v531 = vsub.s32 %v528, %v530
        %v532 = vrot.slane %v217, %v531
        %v534 = vunpack.c.l.s4 1966171168
        %v535 = vunpack.c.0.s8 %v534
        %v536 = vlaneseq
        %v537 = vshrl.u32 %v536, 7
        %v538 = vsub.s32 %v535, %v537
        %v539 = vrot.slane %v525, %v538
        %v540 = vcombine.high %v532, %v532
        %v541 = vcombine.high %v539, %v539
        %v543 = vunpack.c.l.s4 1966171168
        %v544 = vunpack.c.0.s8 %v543
        %v545 = vlaneseq
        %v546 = vshrl.u32 %v545, 7
        %v547 = vsub.s32 %v544, %v546
        %v548 = vrot.slane %v532, %v547
        %v550 = vunpack.c.l.s4 1966171168
        %v551 = vunpack.c.0.s8 %v550
        %v552 = vlaneseq
        %v553 = vshrl.u32 %v552, 7
        %v554 = vsub.s32 %v551, %v553
        %v555 = vrot.slane %v539, %v554
        %v557 = vunpack.c.l.s4 1966171168
        %v558 = vunpack.c.0.s8 %v557
        %v559 = vlaneseq
        %v560 = vshrl.u32 %v559, 7
        %v561 = vsub.s32 %v558, %v560
        %v562 = vrot.slane %v540, %v561
        %v564 = vunpack.c.l.s4 1966171168
        %v565 = vunpack.c.0.s8 %v564
        %v566 = vlaneseq
        %v567 = vshrl.u32 %v566, 7
        %v568 = vsub.s32 %v565, %v567
        %v569 = vrot.slane %v541, %v568
        %v570 = vcombine.high %v548, %v548
        %v571 = vcombine.high %v555, %v555
        %v572 = vcombine.high %v562, %v562
        %v573 = vcombine.high %v569, %v569
        %v846 = vunpack.c.l.b16 %v218
        %v847 = vunpack.c.l.b16 %v219
        %v848 = vunpack.c.l.b16 %v220
        %v849 = vunpack.c.l.b16 %v221
        %v850 = vunpack.c.l.b16 %v222
        %v851 = vunpack.c.l.b16 %v223
        %v852 = vunpack.c.l.b16 %v224
        %v853 = vunpack.c.l.b16 %v225
        %v854 = vunpack.c.l.b16 %v226
        %v855 = vunpack.c.l.b16 %v227
        %v856 = vunpack.c.l.b16 %v228
        %v857 = vunpack.c.l.b16 %v229
        %v858 = vunpack.c.l.b16 %v230
        %v859 = vunpack.c.l.b16 %v231
        %v860 = vunpack.c.l.b16 %v232
        %v861 = vunpack.c.l.b16 %v233
        %v862 = vunpack.c.l.b16 %v234
        %v863 = vunpack.c.l.b16 %v235
        %v864 = vunpack.c.l.b16 %v236
        %v865 = vunpack.c.l.b16 %v237
        %v866 = vunpack.c.l.b16 %v238
        %v867 = vunpack.c.l.b16 %v239
        %v868 = vunpack.c.l.b16 %v240
        %v869 = vunpack.c.l.b16 %v241
        %v870 = vunpack.c.l.b16 %v242
        %v871 = vunpack.c.l.b16 %v243
        %v872 = vunpack.c.l.b16 %v244
        %v873 = vunpack.c.l.b16 %v245
        %v874 = vunpack.c.l.b16 %v246
        %v875 = vunpack.c.l.b16 %v247
        %v876 = vunpack.c.l.b16 %v248
        %v877 = vunpack.c.l.b16 %v249
        %v878 = vunpack.c.l.b16 %v250
        %v879 = vunpack.c.l.b16 %v251
        %v880 = vunpack.c.l.b16 %v252
        %v881 = vunpack.c.l.b16 %v253
        %v882 = vunpack.c.l.b16 %v254
        %v883 = vunpack.c.l.b16 %v255
        %v884 = vunpack.c.l.b16 %v256
        %v885 = vunpack.c.l.b16 %v257
        %v886 = vunpack.c.l.b16 %v258
        %v887 = vunpack.c.l.b16 %v259
        %v888 = vunpack.c.l.b16 %v260
        %v889 = vunpack.c.l.b16 %v261
        %v890 = vunpack.c.l.b16 %v262
        %v891 = vunpack.c.l.b16 %v263
        %v892 = vunpack.c.l.b16 %v264
        %v893 = vunpack.c.l.b16 %v265
        %v894 = vunpack.c.l.b16 %v266
        %v895 = vunpack.c.l.b16 %v267
        %v896 = vunpack.c.l.b16 %v268
        %v897 = vunpack.c.l.b16 %v269
        %v898 = vunpack.c.l.b16 %v270
        %v899 = vunpack.c.l.b16 %v271
        %v900 = vunpack.c.l.b16 %v272
        %v901 = vunpack.c.l.b16 %v273
        %v902 = vunpack.c.l.b16 %v274
        %v903 = vunpack.c.l.b16 %v275
        %v904 = vunpack.c.l.b16 %v276
        %v905 = vunpack.c.l.b16 %v277
        %v906 = vunpack.c.l.b16 %v278
        %v907 = vunpack.c.l.b16 %v279
        %v908 = vunpack.c.l.b16 %v280
        %v909 = vunpack.c.l.b16 %v281
        %v910 = vunpack.c.l.b16 %v282
        %v911 = vunpack.c.l.b16 %v283
        %v912 = vunpack.c.l.b16 %v284
        %v913 = vunpack.c.l.b16 %v285
        %v914 = vunpack.c.l.b16 %v286
        %v915 = vunpack.c.l.b16 %v287
        %v916 = vunpack.c.l.b16 %v288
        %v917 = vunpack.c.l.b16 %v289
        %v918 = vunpack.c.l.b16 %v290
        %v919 = vunpack.c.l.b16 %v291
        %v920 = vunpack.c.l.b16 %v292
        %v921 = vunpack.c.l.b16 %v293
        %v922 = vunpack.c.l.b16 %v294
        %v923 = vunpack.c.l.b16 %v295
        %v924 = vunpack.c.l.b16 %v296
        %v925 = vunpack.c.l.b16 %v297
        %v926 = vunpack.c.l.b16 %v298
        %v927 = vunpack.c.l.b16 %v299
        %v928 = vunpack.c.l.b16 %v300
        %v929 = vunpack.c.l.b16 %v301
        %v930 = vunpack.c.l.b16 %v302
        %v931 = vunpack.c.l.b16 %v303
        %v932 = vunpack.c.l.b16 %v304
        %v933 = vunpack.c.l.b16 %v305
        %v934 = vunpack.c.l.b16 %v306
        %v935 = vunpack.c.l.b16 %v307
        %v936 = vunpack.c.l.b16 %v308
        %v937 = vunpack.c.l.b16 %v309
        %v938 = vunpack.c.l.b16 %v310
        %v939 = vunpack.c.l.b16 %v311
        %v940 = vunpack.c.l.b16 %v312
        %v941 = vunpack.c.l.b16 %v313
        %v942 = vunpack.c.l.b16 %v314
        %v943 = vunpack.c.l.b16 %v315
        %v944 = vunpack.c.l.b16 %v316
        %v945 = vunpack.c.l.b16 %v317
        %v946 = vunpack.c.l.b16 %v318
        %v947 = vunpack.c.l.b16 %v319
        %v948 = vunpack.c.l.b16 %v320
        %v949 = vunpack.c.l.b16 %v321
        %v950 = vunpack.c.l.b16 %v322
        %v951 = vunpack.c.l.b16 %v323
        %v952 = vunpack.c.l.b16 %v324
        %v953 = vunpack.c.l.b16 %v325
        %v954 = vunpack.c.l.b16 %v326
        %v955 = vunpack.c.l.b16 %v327
        %v956 = vunpack.c.l.b16 %v328
        %v957 = vunpack.c.l.b16 %v329
        %v958 = vunpack.c.l.b16 %v330
        %v959 = vunpack.c.l.b16 %v331
        %v960 = vunpack.c.l.b16 %v332
        %v961 = vunpack.c.l.b16 %v333
        %v962 = vunpack.c.l.b16 %v334
        %v963 = vunpack.c.l.b16 %v335
        %v964 = vunpack.c.l.b16 %v336
        %v965 = vunpack.c.l.b16 %v337
        %v966 = vunpack.c.l.b16 %v338
        %v967 = vunpack.c.l.b16 %v339
        %v968 = vunpack.c.l.b16 %v340
        %v969 = vunpack.c.l.b16 %v341
        %v970 = vunpack.c.l.b16 %v342
        %v971 = vunpack.c.l.b16 %v343
        %v972 = vunpack.c.l.b16 %v344
        %v973 = vunpack.c.l.b16 %v345
        %v974 = vunpack.c.l.b16 %v346
        %v975 = vunpack.c.l.b16 %v347
        %v976 = vunpack.c.l.b16 %v348
        %v977 = vunpack.c.l.b16 %v349
        %v978 = vunpack.c.l.b16 %v350
        %v979 = vunpack.c.l.b16 %v351
        %v980 = vunpack.c.l.b16 %v352
        %v981 = vunpack.c.l.b16 %v353
        %v982 = vunpack.c.l.b16 %v354
        %v983 = vunpack.c.l.b16 %v355
        %v984 = vunpack.c.l.b16 %v356
        %v985 = vunpack.c.l.b16 %v357
        %v986 = vunpack.c.l.b16 %v358
        %v987 = vunpack.c.l.b16 %v359
        %v988 = vunpack.c.l.b16 %v360
        %v989 = vunpack.c.l.b16 %v361
        %v990 = vunpack.c.l.b16 %v362
        %v991 = vunpack.c.l.b16 %v363
        %v992 = vunpack.c.l.b16 %v364
        %v993 = vunpack.c.l.b16 %v365
        %v994 = vunpack.c.l.b16 %v366
        %v995 = vunpack.c.l.b16 %v367
        %v996 = vunpack.c.l.b16 %v368
        %v997 = vunpack.c.l.b16 %v369
        %v998 = vunpack.c.l.b16 %v370
        %v999 = vunpack.c.l.b16 %v371
        %v1000 = vunpack.c.l.b16 %v372
        %v1001 = vunpack.c.l.b16 %v373
        %v1002 = vunpack.c.l.b16 %v374
        %v1003 = vunpack.c.l.b16 %v375
        %v1004 = vunpack.c.l.b16 %v376
        %v1005 = vunpack.c.l.b16 %v377
        %v1006 = vunpack.c.l.b16 %v378
        %v1007 = vunpack.c.l.b16 %v379
        %v1008 = vunpack.c.l.b16 %v380
        %v1009 = vunpack.c.l.b16 %v381
        %v1010 = vunpack.c.l.b16 %v382
        %v1011 = vunpack.c.l.b16 %v383
        %v1012 = vunpack.c.l.b16 %v384
        %v1013 = vunpack.c.l.b16 %v385
        %v1014 = vunpack.c.l.b16 %v386
        %v1015 = vunpack.c.l.b16 %v387
        %v1016 = vunpack.c.l.b16 %v388
        %v1017 = vunpack.c.l.b16 %v389
        %v1018 = vunpack.c.l.b16 %v390
        %v1019 = vunpack.c.l.b16 %v391
        %v1020 = vunpack.c.l.b16 %v392
        %v1021 = vunpack.c.l.b16 %v393
        %v1022 = vunpack.c.l.b16 %v394
        %v1023 = vunpack.c.l.b16 %v395
        %v1024 = vunpack.c.l.b16 %v396
        %v1025 = vunpack.c.l.b16 %v397
        %v1026 = vunpack.c.l.b16 %v398
        %v1027 = vunpack.c.l.b16 %v399
        %v1028 = vunpack.c.l.b16 %v400
        %v1029 = vunpack.c.l.b16 %v401
        %v1030 = vunpack.c.l.b16 %v402
        %v1031 = vunpack.c.l.b16 %v403
        %v1032 = vunpack.c.l.b16 %v404
        %v1033 = vunpack.c.l.b16 %v405
        %v1034 = vunpack.c.l.b16 %v406
        %v1035 = vunpack.c.l.b16 %v407
        %v1036 = vunpack.c.l.b16 %v408
        %v1037 = vunpack.c.l.b16 %v409
        %v1038 = vunpack.c.l.b16 %v410
        %v1039 = vunpack.c.l.b16 %v411
        %v1040 = vunpack.c.l.b16 %v412
        %v1041 = vunpack.c.l.b16 %v413
        %v1042 = vunpack.c.l.b16 %v414
        %v1043 = vunpack.c.l.b16 %v415
        %v1044 = vunpack.c.l.b16 %v416
        %v1045 = vunpack.c.l.b16 %v417
        %v1046 = vunpack.c.l.b16 %v418
        %v1047 = vunpack.c.l.b16 %v419
        %v1048 = vunpack.c.l.b16 %v420
        %v1049 = vunpack.c.l.b16 %v421
        %v1050 = vunpack.c.l.b16 %v422
        %v1051 = vunpack.c.l.b16 %v423
        %v1052 = vunpack.c.l.b16 %v424
        %v1053 = vunpack.c.l.b16 %v425
        %v1054 = vunpack.c.l.b16 %v426
        %v1055 = vunpack.c.l.b16 %v427
        %v1056 = vunpack.c.l.b16 %v428
        %v1057 = vunpack.c.l.b16 %v429
        %v1058 = vunpack.c.l.b16 %v430
        %v1059 = vunpack.c.l.b16 %v431
        %v1060 = vunpack.c.l.b16 %v432
        %v1061 = vunpack.c.l.b16 %v433
        %v1062 = vunpack.c.l.b16 %v434
        %v1063 = vunpack.c.l.b16 %v435
        %v1064 = vunpack.c.l.b16 %v436
        %v1065 = vunpack.c.l.b16 %v437
        %v1066 = vunpack.c.l.b16 %v438
        %v1067 = vunpack.c.l.b16 %v439
        %v1068 = vunpack.c.l.b16 %v440
        %v1069 = vunpack.c.l.b16 %v441
        %v1070 = vunpack.c.l.b16 %v442
        %v1071 = vunpack.c.l.b16 %v443
        %v1072 = vunpack.c.l.b16 %v444
        %v1073 = vunpack.c.l.b16 %v445
        %v1074 = vunpack.c.l.b16 %v446
        %v1075 = vunpack.c.l.b16 %v447
        %v1076 = vunpack.c.l.b16 %v448
        %v1077 = vunpack.c.l.b16 %v449
        %v1078 = vunpack.c.l.b16 %v450
        %v1079 = vunpack.c.l.b16 %v451
        %v1080 = vunpack.c.l.b16 %v452
        %v1081 = vunpack.c.l.b16 %v453
        %v1082 = vunpack.c.l.b16 %v454
        %v1083 = vunpack.c.l.b16 %v455
        %v1084 = vunpack.c.l.b16 %v456
        %v1085 = vunpack.c.l.b16 %v457
        %v1086 = vunpack.c.l.b16 %v458
        %v1087 = vunpack.c.l.b16 %v459
        %v1088 = vunpack.c.l.b16 %v460
        %v1089 = vunpack.c.l.b16 %v461
        %v1090 = vunpack.c.l.b16 %v462
        %v1091 = vunpack.c.l.b16 %v463
        %v1092 = vunpack.c.l.b16 %v464
        %v1093 = vunpack.c.l.b16 %v465
        %v1094 = vunpack.c.l.b16 %v466
        %v1095 = vunpack.c.l.b16 %v467
        %v1096 = vunpack.c.l.b16 %v468
        %v1097 = vunpack.c.l.b16 %v469
        %v1098 = vunpack.c.l.b16 %v470
        %v1099 = vunpack.c.l.b16 %v471
        %v1100 = vunpack.c.l.b16 %v472
        %v1101 = vunpack.c.l.b16 %v473
        %v1102 = vpack.c.b16 %v847, %v846
        %v1103 = vpack.c.b16 %v849, %v848
        %v1104 = vpack.c.b16 %v851, %v850
        %v1105 = vpack.c.b16 %v853, %v852
        %v1106 = vpack.c.b16 %v855, %v854
        %v1107 = vpack.c.b16 %v857, %v856
        %v1108 = vpack.c.b16 %v859, %v858
        %v1109 = vpack.c.b16 %v861, %v860
        %v1110 = vpack.c.b16 %v863, %v862
        %v1111 = vpack.c.b16 %v865, %v864
        %v1112 = vpack.c.b16 %v867, %v866
        %v1113 = vpack.c.b16 %v869, %v868
        %v1114 = vpack.c.b16 %v871, %v870
        %v1115 = vpack.c.b16 %v873, %v872
        %v1116 = vpack.c.b16 %v875, %v874
        %v1117 = vpack.c.b16 %v877, %v876
        %v1118 = vpack.c.b16 %v879, %v878
        %v1119 = vpack.c.b16 %v881, %v880
        %v1120 = vpack.c.b16 %v883, %v882
        %v1121 = vpack.c.b16 %v885, %v884
        %v1122 = vpack.c.b16 %v887, %v886
        %v1123 = vpack.c.b16 %v889, %v888
        %v1124 = vpack.c.b16 %v891, %v890
        %v1125 = vpack.c.b16 %v893, %v892
        %v1126 = vpack.c.b16 %v895, %v894
        %v1127 = vpack.c.b16 %v897, %v896
        %v1128 = vpack.c.b16 %v899, %v898
        %v1129 = vpack.c.b16 %v901, %v900
        %v1130 = vpack.c.b16 %v903, %v902
        %v1131 = vpack.c.b16 %v905, %v904
        %v1132 = vpack.c.b16 %v907, %v906
        %v1133 = vpack.c.b16 %v909, %v908
        %v1134 = vpack.c.b16 %v911, %v910
        %v1135 = vpack.c.b16 %v913, %v912
        %v1136 = vpack.c.b16 %v915, %v914
        %v1137 = vpack.c.b16 %v917, %v916
        %v1138 = vpack.c.b16 %v919, %v918
        %v1139 = vpack.c.b16 %v921, %v920
        %v1140 = vpack.c.b16 %v923, %v922
        %v1141 = vpack.c.b16 %v925, %v924
        %v1142 = vpack.c.b16 %v927, %v926
        %v1143 = vpack.c.b16 %v929, %v928
        %v1144 = vpack.c.b16 %v931, %v930
        %v1145 = vpack.c.b16 %v933, %v932
        %v1146 = vpack.c.b16 %v935, %v934
        %v1147 = vpack.c.b16 %v937, %v936
        %v1148 = vpack.c.b16 %v939, %v938
        %v1149 = vpack.c.b16 %v941, %v940
        %v1150 = vpack.c.b16 %v943, %v942
        %v1151 = vpack.c.b16 %v945, %v944
        %v1152 = vpack.c.b16 %v947, %v946
        %v1153 = vpack.c.b16 %v949, %v948
        %v1154 = vpack.c.b16 %v951, %v950
        %v1155 = vpack.c.b16 %v953, %v952
        %v1156 = vpack.c.b16 %v955, %v954
        %v1157 = vpack.c.b16 %v957, %v956
        %v1158 = vpack.c.b16 %v959, %v958
        %v1159 = vpack.c.b16 %v961, %v960
        %v1160 = vpack.c.b16 %v963, %v962
        %v1161 = vpack.c.b16 %v965, %v964
        %v1162 = vpack.c.b16 %v967, %v966
        %v1163 = vpack.c.b16 %v969, %v968
        %v1164 = vpack.c.b16 %v971, %v970
        %v1165 = vpack.c.b16 %v973, %v972
        %v1166 = vpack.c.b16 %v975, %v974
        %v1167 = vpack.c.b16 %v977, %v976
        %v1168 = vpack.c.b16 %v979, %v978
        %v1169 = vpack.c.b16 %v981, %v980
        %v1170 = vpack.c.b16 %v983, %v982
        %v1171 = vpack.c.b16 %v985, %v984
        %v1172 = vpack.c.b16 %v987, %v986
        %v1173 = vpack.c.b16 %v989, %v988
        %v1174 = vpack.c.b16 %v991, %v990
        %v1175 = vpack.c.b16 %v993, %v992
        %v1176 = vpack.c.b16 %v995, %v994
        %v1177 = vpack.c.b16 %v997, %v996
        %v1178 = vpack.c.b16 %v999, %v998
        %v1179 = vpack.c.b16 %v1001, %v1000
        %v1180 = vpack.c.b16 %v1003, %v1002
        %v1181 = vpack.c.b16 %v1005, %v1004
        %v1182 = vpack.c.b16 %v1007, %v1006
        %v1183 = vpack.c.b16 %v1009, %v1008
        %v1184 = vpack.c.b16 %v1011, %v1010
        %v1185 = vpack.c.b16 %v1013, %v1012
        %v1186 = vpack.c.b16 %v1015, %v1014
        %v1187 = vpack.c.b16 %v1017, %v1016
        %v1188 = vpack.c.b16 %v1019, %v1018
        %v1189 = vpack.c.b16 %v1021, %v1020
        %v1190 = vpack.c.b16 %v1023, %v1022
        %v1191 = vpack.c.b16 %v1025, %v1024
        %v1192 = vpack.c.b16 %v1027, %v1026
        %v1193 = vpack.c.b16 %v1029, %v1028
        %v1194 = vpack.c.b16 %v1031, %v1030
        %v1195 = vpack.c.b16 %v1033, %v1032
        %v1196 = vpack.c.b16 %v1035, %v1034
        %v1197 = vpack.c.b16 %v1037, %v1036
        %v1198 = vpack.c.b16 %v1039, %v1038
        %v1199 = vpack.c.b16 %v1041, %v1040
        %v1200 = vpack.c.b16 %v1043, %v1042
        %v1201 = vpack.c.b16 %v1045, %v1044
        %v1202 = vpack.c.b16 %v1047, %v1046
        %v1203 = vpack.c.b16 %v1049, %v1048
        %v1204 = vpack.c.b16 %v1051, %v1050
        %v1205 = vpack.c.b16 %v1053, %v1052
        %v1206 = vpack.c.b16 %v1055, %v1054
        %v1207 = vpack.c.b16 %v1057, %v1056
        %v1208 = vpack.c.b16 %v1059, %v1058
        %v1209 = vpack.c.b16 %v1061, %v1060
        %v1210 = vpack.c.b16 %v1063, %v1062
        %v1211 = vpack.c.b16 %v1065, %v1064
        %v1212 = vpack.c.b16 %v1067, %v1066
        %v1213 = vpack.c.b16 %v1069, %v1068
        %v1214 = vpack.c.b16 %v1071, %v1070
        %v1215 = vpack.c.b16 %v1073, %v1072
        %v1216 = vpack.c.b16 %v1075, %v1074
        %v1217 = vpack.c.b16 %v1077, %v1076
        %v1218 = vpack.c.b16 %v1079, %v1078
        %v1219 = vpack.c.b16 %v1081, %v1080
        %v1220 = vpack.c.b16 %v1083, %v1082
        %v1221 = vpack.c.b16 %v1085, %v1084
        %v1222 = vpack.c.b16 %v1087, %v1086
        %v1223 = vpack.c.b16 %v1089, %v1088
        %v1224 = vpack.c.b16 %v1091, %v1090
        %v1225 = vpack.c.b16 %v1093, %v1092
        %v1226 = vpack.c.b16 %v1095, %v1094
        %v1227 = vpack.c.b16 %v1097, %v1096
        %v1228 = vpack.c.b16 %v1099, %v1098
        %v1229 = vpack.c.b16 %v1101, %v1100
        %1358 = vmatprep.subr.bf16.mxu0 0
        %1359 = vmatpush1.bf16.msra.mxu0 %v1102
        %1360 = vmatprep.subr.bf16.mxu0 0
        %1361 = vmatpush1.bf16.msra.mxu0 %v1103
        %1362 = vmatprep.subr.bf16.mxu0 0
        %1363 = vmatpush1.bf16.msra.mxu0 %v1104
        %1364 = vmatprep.subr.bf16.mxu0 0
        %1365 = vmatpush1.bf16.msra.mxu0 %v1105
        %1366 = vmatprep.subr.bf16.mxu0 0
        %1367 = vmatpush1.bf16.msra.mxu0 %v1106
        %1368 = vmatprep.subr.bf16.mxu0 0
        %1369 = vmatpush1.bf16.msra.mxu0 %v1107
        %1370 = vmatprep.subr.bf16.mxu0 0
        %1371 = vmatpush1.bf16.msra.mxu0 %v1108
        %1372 = vmatprep.subr.bf16.mxu0 0
        %1373 = vmatpush1.bf16.msra.mxu0 %v1109
        %1374 = vmatprep.subr.bf16.mxu0 0
        %1375 = vmatpush1.bf16.msra.mxu0 %v1110
        %1376 = vmatprep.subr.bf16.mxu0 0
        %1377 = vmatpush1.bf16.msra.mxu0 %v1111
        %1378 = vmatprep.subr.bf16.mxu0 0
        %1379 = vmatpush1.bf16.msra.mxu0 %v1112
        %1380 = vmatprep.subr.bf16.mxu0 0
        %1381 = vmatpush1.bf16.msra.mxu0 %v1113
        %1382 = vmatprep.subr.bf16.mxu0 0
        %1383 = vmatpush1.bf16.msra.mxu0 %v1114
        %1384 = vmatprep.subr.bf16.mxu0 0
        %1385 = vmatpush1.bf16.msra.mxu0 %v1115
        %1386 = vmatprep.subr.bf16.mxu0 0
        %1387 = vmatpush1.bf16.msra.mxu0 %v1116
        %1388 = vmatprep.subr.bf16.mxu0 0
        %1389 = vmatpush1.bf16.msra.mxu0 %v1117
        %1390 = vmatprep.mubr.bf16.mxu0 %v513
        %1391 = vmatmul.mubr.bf16.gmra.mrb[0].mxu0 %v499
        %v1392 = vpop.f32.mrb[0].mxu0
        %v1393 = vadd.f32 0.0, %v1392
        %v1394 = vpop.f32.mrb[0].mxu0
        %v1395 = vpop.f32.mrb[0].mxu0
        %v1396 = vpop.f32.mrb[0].mxu0
        %1397 = vdwg.mxu0
        %1398 = vmatprep.subr.bf16.mxu0 0
        %1399 = vmatpush1.bf16.msra.mxu0 %v1118
        %1400 = vmatprep.subr.bf16.mxu0 0
        %1401 = vmatpush1.bf16.msra.mxu0 %v1119
        %1402 = vmatprep.subr.bf16.mxu0 0
        %1403 = vmatpush1.bf16.msra.mxu0 %v1120
        %1404 = vmatprep.subr.bf16.mxu0 0
        %1405 = vmatpush1.bf16.msra.mxu0 %v1121
        %1406 = vmatprep.subr.bf16.mxu0 0
        %1407 = vmatpush1.bf16.msra.mxu0 %v1122
        %1408 = vmatprep.subr.bf16.mxu0 0
        %1409 = vmatpush1.bf16.msra.mxu0 %v1123
        %1410 = vmatprep.subr.bf16.mxu0 0
        %1411 = vmatpush1.bf16.msra.mxu0 %v1124
        %1412 = vmatprep.subr.bf16.mxu0 0
        %1413 = vmatpush1.bf16.msra.mxu0 %v1125
        %1414 = vmatprep.subr.bf16.mxu0 0
        %1415 = vmatpush1.bf16.msra.mxu0 %v1126
        %1416 = vmatprep.subr.bf16.mxu0 0
        %1417 = vmatpush1.bf16.msra.mxu0 %v1127
        %1418 = vmatprep.subr.bf16.mxu0 0
        %1419 = vmatpush1.bf16.msra.mxu0 %v1128
        %1420 = vmatprep.subr.bf16.mxu0 0
        %1421 = vmatpush1.bf16.msra.mxu0 %v1129
        %1422 = vmatprep.subr.bf16.mxu0 0
        %1423 = vmatpush1.bf16.msra.mxu0 %v1130
        %1424 = vmatprep.subr.bf16.mxu0 0
        %1425 = vmatpush1.bf16.msra.mxu0 %v1131
        %1426 = vmatprep.subr.bf16.mxu0 0
        %1427 = vmatpush1.bf16.msra.mxu0 %v1132
        %1428 = vmatprep.subr.bf16.mxu0 0
        %1429 = vmatpush1.bf16.msra.mxu0 %v1133
        %1430 = vmatprep.mubr.bf16.mxu0 %v523
        %1431 = vmatmul.mubr.bf16.gmra.mrb[0].mxu0 %v521
        %v1432 = vpop.f32.mrb[0].mxu0
        %v1433 = vadd.f32 %v1393, %v1432
        %v1434 = vpop.f32.mrb[0].mxu0
        %v1435 = vpop.f32.mrb[0].mxu0
        %v1436 = vpop.f32.mrb[0].mxu0
        %1437 = vdwg.mxu0
        %1438 = vmatprep.subr.bf16.mxu0 0
        %1439 = vmatpush1.bf16.msra.mxu0 %v1134
        %1440 = vmatprep.subr.bf16.mxu0 0
        %1441 = vmatpush1.bf16.msra.mxu0 %v1135
        %1442 = vmatprep.subr.bf16.mxu0 0
        %1443 = vmatpush1.bf16.msra.mxu0 %v1136
        %1444 = vmatprep.subr.bf16.mxu0 0
        %1445 = vmatpush1.bf16.msra.mxu0 %v1137
        %1446 = vmatprep.subr.bf16.mxu0 0
        %1447 = vmatpush1.bf16.msra.mxu0 %v1138
        %1448 = vmatprep.subr.bf16.mxu0 0
        %1449 = vmatpush1.bf16.msra.mxu0 %v1139
        %1450 = vmatprep.subr.bf16.mxu0 0
        %1451 = vmatpush1.bf16.msra.mxu0 %v1140
        %1452 = vmatprep.subr.bf16.mxu0 0
        %1453 = vmatpush1.bf16.msra.mxu0 %v1141
        %1454 = vmatprep.subr.bf16.mxu0 0
        %1455 = vmatpush1.bf16.msra.mxu0 %v1142
        %1456 = vmatprep.subr.bf16.mxu0 0
        %1457 = vmatpush1.bf16.msra.mxu0 %v1143
        %1458 = vmatprep.subr.bf16.mxu0 0
        %1459 = vmatpush1.bf16.msra.mxu0 %v1144
        %1460 = vmatprep.subr.bf16.mxu0 0
        %1461 = vmatpush1.bf16.msra.mxu0 %v1145
        %1462 = vmatprep.subr.bf16.mxu0 0
        %1463 = vmatpush1.bf16.msra.mxu0 %v1146
        %1464 = vmatprep.subr.bf16.mxu0 0
        %1465 = vmatpush1.bf16.msra.mxu0 %v1147
        %1466 = vmatprep.subr.bf16.mxu0 0
        %1467 = vmatpush1.bf16.msra.mxu0 %v1148
        %1468 = vmatprep.subr.bf16.mxu0 0
        %1469 = vmatpush1.bf16.msra.mxu0 %v1149
        %1470 = vmatprep.mubr.bf16.mxu0 %v520
        %1471 = vmatmul.mubr.bf16.gmra.mrb[0].mxu0 %v506
        %v1472 = vpop.f32.mrb[0].mxu0
        %v1473 = vadd.f32 %v1433, %v1472
        %v1474 = vpop.f32.mrb[0].mxu0
        %v1475 = vpop.f32.mrb[0].mxu0
        %v1476 = vpop.f32.mrb[0].mxu0
        %1477 = vdwg.mxu0
        %1478 = vmatprep.subr.bf16.mxu0 0
        %1479 = vmatpush1.bf16.msra.mxu0 %v1150
        %1480 = vmatprep.subr.bf16.mxu0 0
        %1481 = vmatpush1.bf16.msra.mxu0 %v1151
        %1482 = vmatprep.subr.bf16.mxu0 0
        %1483 = vmatpush1.bf16.msra.mxu0 %v1152
        %1484 = vmatprep.subr.bf16.mxu0 0
        %1485 = vmatpush1.bf16.msra.mxu0 %v1153
        %1486 = vmatprep.subr.bf16.mxu0 0
        %1487 = vmatpush1.bf16.msra.mxu0 %v1154
        %1488 = vmatprep.subr.bf16.mxu0 0
        %1489 = vmatpush1.bf16.msra.mxu0 %v1155
        %1490 = vmatprep.subr.bf16.mxu0 0
        %1491 = vmatpush1.bf16.msra.mxu0 %v1156
        %1492 = vmatprep.subr.bf16.mxu0 0
        %1493 = vmatpush1.bf16.msra.mxu0 %v1157
        %1494 = vmatprep.subr.bf16.mxu0 0
        %1495 = vmatpush1.bf16.msra.mxu0 %v1158
        %1496 = vmatprep.subr.bf16.mxu0 0
        %1497 = vmatpush1.bf16.msra.mxu0 %v1159
        %1498 = vmatprep.subr.bf16.mxu0 0
        %1499 = vmatpush1.bf16.msra.mxu0 %v1160
        %1500 = vmatprep.subr.bf16.mxu0 0
        %1501 = vmatpush1.bf16.msra.mxu0 %v1161
        %1502 = vmatprep.subr.bf16.mxu0 0
        %1503 = vmatpush1.bf16.msra.mxu0 %v1162
        %1504 = vmatprep.subr.bf16.mxu0 0
        %1505 = vmatpush1.bf16.msra.mxu0 %v1163
        %1506 = vmatprep.subr.bf16.mxu0 0
        %1507 = vmatpush1.bf16.msra.mxu0 %v1164
        %1508 = vmatprep.subr.bf16.mxu0 0
        %1509 = vmatpush1.bf16.msra.mxu0 %v1165
        %1510 = vmatprep.mubr.bf16.mxu0 %v524
        %1511 = vmatmul.mubr.bf16.gmra.mrb[0].mxu0 %v522
        %v1512 = vpop.f32.mrb[0].mxu0
        %v1513 = vadd.f32 %v1473, %v1512
        %v1514 = vpop.f32.mrb[0].mxu0
        %v1515 = vpop.f32.mrb[0].mxu0
        %v1516 = vpop.f32.mrb[0].mxu0
        %1517 = vdwg.mxu0
        %1518 = vmatprep.subr.bf16.mxu0 0
        %1519 = vmatpush1.bf16.msra.mxu0 %v1166
        %1520 = vmatprep.subr.bf16.mxu0 0
        %1521 = vmatpush1.bf16.msra.mxu0 %v1167
        %1522 = vmatprep.subr.bf16.mxu0 0
        %1523 = vmatpush1.bf16.msra.mxu0 %v1168
        %1524 = vmatprep.subr.bf16.mxu0 0
        %1525 = vmatpush1.bf16.msra.mxu0 %v1169
        %1526 = vmatprep.subr.bf16.mxu0 0
        %1527 = vmatpush1.bf16.msra.mxu0 %v1170
        %1528 = vmatprep.subr.bf16.mxu0 0
        %1529 = vmatpush1.bf16.msra.mxu0 %v1171
        %1530 = vmatprep.subr.bf16.mxu0 0
        %1531 = vmatpush1.bf16.msra.mxu0 %v1172
        %1532 = vmatprep.subr.bf16.mxu0 0
        %1533 = vmatpush1.bf16.msra.mxu0 %v1173
        %1534 = vmatprep.subr.bf16.mxu0 0
        %1535 = vmatpush1.bf16.msra.mxu0 %v1174
        %1536 = vmatprep.subr.bf16.mxu0 0
        %1537 = vmatpush1.bf16.msra.mxu0 %v1175
        %1538 = vmatprep.subr.bf16.mxu0 0
        %1539 = vmatpush1.bf16.msra.mxu0 %v1176
        %1540 = vmatprep.subr.bf16.mxu0 0
        %1541 = vmatpush1.bf16.msra.mxu0 %v1177
        %1542 = vmatprep.subr.bf16.mxu0 0
        %1543 = vmatpush1.bf16.msra.mxu0 %v1178
        %1544 = vmatprep.subr.bf16.mxu0 0
        %1545 = vmatpush1.bf16.msra.mxu0 %v1179
        %1546 = vmatprep.subr.bf16.mxu0 0
        %1547 = vmatpush1.bf16.msra.mxu0 %v1180
        %1548 = vmatprep.subr.bf16.mxu0 0
        %1549 = vmatpush1.bf16.msra.mxu0 %v1181
        %1550 = vmatprep.mubr.bf16.mxu0 %v562
        %1551 = vmatmul.mubr.bf16.gmra.mrb[0].mxu0 %v548
        %v1552 = vpop.f32.mrb[0].mxu0
        %v1553 = vadd.f32 %v1513, %v1552
        %v1554 = vpop.f32.mrb[0].mxu0
        %v1555 = vpop.f32.mrb[0].mxu0
        %v1556 = vpop.f32.mrb[0].mxu0
        %1557 = vdwg.mxu0
        %1558 = vmatprep.subr.bf16.mxu0 0
        %1559 = vmatpush1.bf16.msra.mxu0 %v1182
        %1560 = vmatprep.subr.bf16.mxu0 0
        %1561 = vmatpush1.bf16.msra.mxu0 %v1183
        %1562 = vmatprep.subr.bf16.mxu0 0
        %1563 = vmatpush1.bf16.msra.mxu0 %v1184
        %1564 = vmatprep.subr.bf16.mxu0 0
        %1565 = vmatpush1.bf16.msra.mxu0 %v1185
        %1566 = vmatprep.subr.bf16.mxu0 0
        %1567 = vmatpush1.bf16.msra.mxu0 %v1186
        %1568 = vmatprep.subr.bf16.mxu0 0
        %1569 = vmatpush1.bf16.msra.mxu0 %v1187
        %1570 = vmatprep.subr.bf16.mxu0 0
        %1571 = vmatpush1.bf16.msra.mxu0 %v1188
        %1572 = vmatprep.subr.bf16.mxu0 0
        %1573 = vmatpush1.bf16.msra.mxu0 %v1189
        %1574 = vmatprep.subr.bf16.mxu0 0
        %1575 = vmatpush1.bf16.msra.mxu0 %v1190
        %1576 = vmatprep.subr.bf16.mxu0 0
        %1577 = vmatpush1.bf16.msra.mxu0 %v1191
        %1578 = vmatprep.subr.bf16.mxu0 0
        %1579 = vmatpush1.bf16.msra.mxu0 %v1192
        %1580 = vmatprep.subr.bf16.mxu0 0
        %1581 = vmatpush1.bf16.msra.mxu0 %v1193
        %1582 = vmatprep.subr.bf16.mxu0 0
        %1583 = vmatpush1.bf16.msra.mxu0 %v1194
        %1584 = vmatprep.subr.bf16.mxu0 0
        %1585 = vmatpush1.bf16.msra.mxu0 %v1195
        %1586 = vmatprep.subr.bf16.mxu0 0
        %1587 = vmatpush1.bf16.msra.mxu0 %v1196
        %1588 = vmatprep.subr.bf16.mxu0 0
        %1589 = vmatpush1.bf16.msra.mxu0 %v1197
        %1590 = vmatprep.mubr.bf16.mxu0 %v572
        %1591 = vmatmul.mubr.bf16.gmra.mrb[0].mxu0 %v570
        %v1592 = vpop.f32.mrb[0].mxu0
        %v1593 = vadd.f32 %v1553, %v1592
        %v1594 = vpop.f32.mrb[0].mxu0
        %v1595 = vpop.f32.mrb[0].mxu0
        %v1596 = vpop.f32.mrb[0].mxu0
        %1597 = vdwg.mxu0
        %1598 = vmatprep.subr.bf16.mxu0 0
        %1599 = vmatpush1.bf16.msra.mxu0 %v1198
        %1600 = vmatprep.subr.bf16.mxu0 0
        %1601 = vmatpush1.bf16.msra.mxu0 %v1199
        %1602 = vmatprep.subr.bf16.mxu0 0
        %1603 = vmatpush1.bf16.msra.mxu0 %v1200
        %1604 = vmatprep.subr.bf16.mxu0 0
        %1605 = vmatpush1.bf16.msra.mxu0 %v1201
        %1606 = vmatprep.subr.bf16.mxu0 0
        %1607 = vmatpush1.bf16.msra.mxu0 %v1202
        %1608 = vmatprep.subr.bf16.mxu0 0
        %1609 = vmatpush1.bf16.msra.mxu0 %v1203
        %1610 = vmatprep.subr.bf16.mxu0 0
        %1611 = vmatpush1.bf16.msra.mxu0 %v1204
        %1612 = vmatprep.subr.bf16.mxu0 0
        %1613 = vmatpush1.bf16.msra.mxu0 %v1205
        %1614 = vmatprep.subr.bf16.mxu0 0
        %1615 = vmatpush1.bf16.msra.mxu0 %v1206
        %1616 = vmatprep.subr.bf16.mxu0 0
        %1617 = vmatpush1.bf16.msra.mxu0 %v1207
        %1618 = vmatprep.subr.bf16.mxu0 0
        %1619 = vmatpush1.bf16.msra.mxu0 %v1208
        %1620 = vmatprep.subr.bf16.mxu0 0
        %1621 = vmatpush1.bf16.msra.mxu0 %v1209
        %1622 = vmatprep.subr.bf16.mxu0 0
        %1623 = vmatpush1.bf16.msra.mxu0 %v1210
        %1624 = vmatprep.subr.bf16.mxu0 0
        %1625 = vmatpush1.bf16.msra.mxu0 %v1211
        %1626 = vmatprep.subr.bf16.mxu0 0
        %1627 = vmatpush1.bf16.msra.mxu0 %v1212
        %1628 = vmatprep.subr.bf16.mxu0 0
        %1629 = vmatpush1.bf16.msra.mxu0 %v1213
        %1630 = vmatprep.mubr.bf16.mxu0 %v569
        %1631 = vmatmul.mubr.bf16.gmra.mrb[0].mxu0 %v555
        %v1632 = vpop.f32.mrb[0].mxu0
        %v1633 = vadd.f32 %v1593, %v1632
        %v1634 = vpop.f32.mrb[0].mxu0
        %v1635 = vpop.f32.mrb[0].mxu0
        %v1636 = vpop.f32.mrb[0].mxu0
        %1637 = vdwg.mxu0
        %1638 = vmatprep.subr.bf16.mxu0 0
        %1639 = vmatpush1.bf16.msra.mxu0 %v1214
        %1640 = vmatprep.subr.bf16.mxu0 0
        %1641 = vmatpush1.bf16.msra.mxu0 %v1215
        %1642 = vmatprep.subr.bf16.mxu0 0
        %1643 = vmatpush1.bf16.msra.mxu0 %v1216
        %1644 = vmatprep.subr.bf16.mxu0 0
        %1645 = vmatpush1.bf16.msra.mxu0 %v1217
        %1646 = vmatprep.subr.bf16.mxu0 0
        %1647 = vmatpush1.bf16.msra.mxu0 %v1218
        %1648 = vmatprep.subr.bf16.mxu0 0
        %1649 = vmatpush1.bf16.msra.mxu0 %v1219
        %1650 = vmatprep.subr.bf16.mxu0 0
        %1651 = vmatpush1.bf16.msra.mxu0 %v1220
        %1652 = vmatprep.subr.bf16.mxu0 0
        %1653 = vmatpush1.bf16.msra.mxu0 %v1221
        %1654 = vmatprep.subr.bf16.mxu0 0
        %1655 = vmatpush1.bf16.msra.mxu0 %v1222
        %1656 = vmatprep.subr.bf16.mxu0 0
        %1657 = vmatpush1.bf16.msra.mxu0 %v1223
        %1658 = vmatprep.subr.bf16.mxu0 0
        %1659 = vmatpush1.bf16.msra.mxu0 %v1224
        %1660 = vmatprep.subr.bf16.mxu0 0
        %1661 = vmatpush1.bf16.msra.mxu0 %v1225
        %1662 = vmatprep.subr.bf16.mxu0 0
        %1663 = vmatpush1.bf16.msra.mxu0 %v1226
        %1664 = vmatprep.subr.bf16.mxu0 0
        %1665 = vmatpush1.bf16.msra.mxu0 %v1227
        %1666 = vmatprep.subr.bf16.mxu0 0
        %1667 = vmatpush1.bf16.msra.mxu0 %v1228
        %1668 = vmatprep.subr.bf16.mxu0 0
        %1669 = vmatpush1.bf16.msra.mxu0 %v1229
        %1670 = vmatprep.mubr.bf16.mxu0 %v573
        %1671 = vmatmul.mubr.bf16.gmra.mrb[0].mxu0 %v571
        %v1672 = vpop.f32.mrb[0].mxu0
        %v1673 = vadd.f32 %v1633, %v1672
        %v1674 = vpop.f32.mrb[0].mxu0
        %v1675 = vpop.f32.mrb[0].mxu0
        %v1676 = vpop.f32.mrb[0].mxu0
        %1677 = vdwg.mxu0
        %v1678 = vadd.f32 %v215, %v1673
        %1679 = vst [vmem:[#allocation2] sm:$0x3] %v1678
        %p1680 = scmp.eq.s32.totalorder %s18, 3
        // Predicated region
        $region45: #{forward.12} parent=31 // pred_check
          %p1681 = pneg %p1680
        $region46: #{forward.12} parent=31 // pred_check_branch
          %1683 = sbr.rel (%p1681) target = $region48
        $region47: #{forward.12} parent=31 // pred_region
          %v1684 = vld [vmem:[#allocation2] sm:$0x3]
          %v1685 = vld [vmem:[#allocation5] sm:$0x1]
          %v1686 = vunpack.c.l.bf16 %v1685
          %v1687 = vlaneseq
          %v1688 = vshrl.u32 %v1687, 7
          %v1689 = vsub.s32 0, %v1688
          %v1690 = vrot.slane %v1686, %v1689
          %v1691 = vadd.f32 %v1684, %v1690
          %v1692 = vpack.c.bf16 %v1691, %v1691
          %1693 = vst [vmem:[%s3] sm:$0x1] %v1692
        $region48: #{forward.12} parent=31 // pred_fallthru
          _
        // Predicated region
        $region49: #{forward.12} parent=31 // pred_check
          %p1694 = pneg %p104
        $region50: #{forward.12} parent=31 // pred_check_branch
          %1696 = sbr.rel (%p1694) target = $region52
        $region51: #{forward.12} parent=31 // pred_region
          _
        $region52: #{forward.12} parent=31 // pred_fallthru
          _
        // Predicated region
        $region53: #{forward.12} parent=31 // pred_check
          %p1697 = pneg %p104
        $region54: #{forward.12} parent=31 // pred_check_branch
          %1699 = sbr.rel (%p1697) target = $region56
        $region55: #{forward.12} parent=31 // pred_region
          _
        $region56: #{forward.12} parent=31 // pred_fallthru
          _
      $region32: #{forward.12} parent=5 // pred_fallthru
        _
      %p1700 = scmp.le.s32.totalorder 2, %s13
      // Predicated region
      $region57: #{forward.12} parent=5 // pred_check
        %p1701 = pneg %p1700
      $region58: #{forward.12} parent=5 // pred_check_branch
        %1703 = sbr.rel (%p1701) target = $region60
      $region59: #{forward.12} parent=5 // pred_region
        %s1704 = ssub.s32 %s13, 2
      $region60: #{forward.12} parent=5 // pred_fallthru
        _
    $region6: #{forward.12} parent=1 // loop_footer
      %s17 = sadd.s32 1, %s13
    $region7: #{forward.12} parent=1 // loop_footer_branch
      %12 = sbr.rel target = $region3
    $region8: #{forward.12} parent=1 // loop_exit
      _
    %1705 = vsyncpa [#allocation4], 1
    %s1706 = scalar_lea.sflag [#allocation4], 1
    %1707 = vsyncpa %s1706, 1
    %1708 = vsyncpa [#allocation6], 1

// kernel: forward.7
$region0: #{forward.7}
  #allocation0 [shape = 'u32[]', space=smem, size = 0x4, offset = 0x4, fixed_abs, tag = 'smem constant byte address 0x4 - core index']
  #allocation1 [shape = 'u32[144,128]{1,0:T(1,128)}', space=vmem, size = 0x12000, scoped, tag = 'internal scratch']
  #allocation2 [shape = 'bf16[2,10,10,4]{3,2,1,0:T(8,128)(2,1)}', space=vmem, size = 0x14000, scoped, tag = 'scratch operand']
  %s0 = inlined_call_operand.vmem [shape: bf16[2,8,8,4], index: 0, kind: input, shape index: {}]
  %s1 = inlined_call_operand.hbm [shape: bf16[36,128], index: 1, kind: input, shape index: {}]
  %s2 = inlined_call_operand.hbm [shape: f32[1,128], index: 2, kind: input, shape index: {}]
  %s3 = inlined_call_operand.hbm [shape: f32[1,128], index: 3, kind: input, shape index: {}]
  %s4 = inlined_call_operand.vmem [shape: bf16[2,8,8,128], index: 4, kind: output, shape index: {}]
  %s5 = sld [smem:[#allocation0]]
  $region38: #{forward.7} parent=0
    _
  %s7 = ssub.s32 1, %s5
  %s8 = scalar_select 0, %s7, %s5
  $region1: #{forward.7} parent=0
    #allocation3 [shape = 'u8[10240]{0}', space=vmem, size = 0x2800, scoped, tag = 'input window, operand 1, single buffered']
    #allocation4 [shape = 's32[1]{0}', space=sflag, size = 0x4, scoped, tag = 'scoped memory for forward.7']
    #allocation5 [shape = 'u8[512]{0}', space=vmem, size = 0x400, scoped, tag = 'input window, operand 2, single buffered']
    #allocation6 [shape = 's32[1]{0}', space=sflag, size = 0x4, scoped, tag = 'scoped memory for forward.7']
    #allocation7 [shape = 'u8[512]{0}', space=vmem, size = 0x400, scoped, tag = 'input window, operand 3, single buffered']
    %9 = vsyncpa [#allocation4], 0
    %10 = vsyncpa [#allocation6], 0
    // Predicated region
    $region2: #{forward.7} parent=1 // pred_check
      _
    $region3: #{forward.7} parent=1 // pred_check_branch
      %12 = sbr.rel (0) target = $region5
    $region4: #{forward.7} parent=1 // pred_region
      _
    $region5: #{forward.7} parent=1 // pred_fallthru
      _
    // Predicated region
    $region6: #{forward.7} parent=1 // pred_check
      _
    $region7: #{forward.7} parent=1 // pred_check_branch
      %14 = sbr.rel (0) target = $region9
    $region8: #{forward.7} parent=1 // pred_region
      %s16 = ssub.s32 320, 320
      %17 = vsyncadd [#allocation4], %s16
      %s18 = sshll.u32 [#allocation3], 4
      %s19 = int_to_ptr.vmem [resolvable:$true] %s18
      %24 = dma.hbm_to_vmem [thread:$0]  %s1, 320, %s19, [#allocation4], 64, 64, 4
    $region9: #{forward.7} parent=1 // pred_fallthru
      _
    // Predicated region
    $region10: #{forward.7} parent=1 // pred_check
      _
    $region11: #{forward.7} parent=1 // pred_check_branch
      %26 = sbr.rel (0) target = $region13
    $region12: #{forward.7} parent=1 // pred_region
      %s28 = ssub.s32 16, 16
      %29 = vsyncadd [#allocation6], %s28
      %s31 = sshll.u32 [#allocation5], 4
      %s32 = int_to_ptr.vmem [resolvable:$true] %s31
      %34 = dma.hbm_to_vmem [thread:$0]  %s2, 16, %s32, [#allocation6]
    $region13: #{forward.7} parent=1 // pred_fallthru
      _
    // Predicated region
    $region14: #{forward.7} parent=1 // pred_check
      _
    $region15: #{forward.7} parent=1 // pred_check_branch
      %36 = sbr.rel (0) target = $region17
    $region16: #{forward.7} parent=1 // pred_region
      %s38 = ssub.s32 16, 16
      %39 = vsyncadd [#allocation6], %s38
      %s41 = sshll.u32 [#allocation7], 4
      %s42 = int_to_ptr.vmem [resolvable:$true] %s41
      %44 = dma.hbm_to_vmem [thread:$0]  %s3, 16, %s42, [#allocation6]
    $region17: #{forward.7} parent=1 // pred_fallthru
      _
    // Predicated region
    $region18: #{forward.7} parent=1 // pred_check
      _
    $region19: #{forward.7} parent=1 // pred_check_branch
      %46 = sbr.rel (0) target = $region21
    $region20: #{forward.7} parent=1 // pred_region
      %47 = dma.done [#allocation4], 320
    $region21: #{forward.7} parent=1 // pred_fallthru
      _
    // Predicated region
    $region22: #{forward.7} parent=1 // pred_check
      _
    $region23: #{forward.7} parent=1 // pred_check_branch
      %49 = sbr.rel (0) target = $region25
    $region24: #{forward.7} parent=1 // pred_region
      %50 = dma.done [#allocation6], 16
    $region25: #{forward.7} parent=1 // pred_fallthru
      _
    // Predicated region
    $region26: #{forward.7} parent=1 // pred_check
      _
    $region27: #{forward.7} parent=1 // pred_check_branch
      %52 = sbr.rel (0) target = $region29
    $region28: #{forward.7} parent=1 // pred_region
      %53 = dma.done [#allocation6], 16
    $region29: #{forward.7} parent=1 // pred_fallthru
      _
    %vm55 = vcmask 27648
    %56 = vst.msk [vmem:[#allocation2] sm:$0xf] %vm55, 0
    %vm57 = vcmask 24576
    %58 = vst.msk [vmem:[#allocation2 + $0x4] sm:$0x1] %vm57, 0
    %59 = vst.msk [vmem:[#allocation2 + $0x8] sm:$0xf] %vm55, 0
    %60 = vst.msk [vmem:[#allocation2 + $0xc] sm:$0x1] %vm57, 0
    %61 = vst.msk [vmem:[#allocation2 + $0x10] sm:$0xf] %vm55, 0
    %62 = vst.msk [vmem:[#allocation2 + $0x14] sm:$0x1] %vm57, 0
    %63 = vst.msk [vmem:[#allocation2 + $0x18] sm:$0xf] %vm55, 0
    %64 = vst.msk [vmem:[#allocation2 + $0x1c] sm:$0x1] %vm57, 0
    %65 = vst.msk [vmem:[#allocation2 + $0x20] sm:$0xf] %vm55, 0
    %66 = vst.msk [vmem:[#allocation2 + $0x24] sm:$0x1] %vm57, 0
    %67 = vst.msk [vmem:[#allocation2 + $0x28] sm:$0xf] %vm55, 0
    %68 = vst.msk [vmem:[#allocation2 + $0x2c] sm:$0x1] %vm57, 0
    %69 = vst.msk [vmem:[#allocation2 + $0x30] sm:$0xf] %vm55, 0
    %70 = vst.msk [vmem:[#allocation2 + $0x34] sm:$0x1] %vm57, 0
    %71 = vst.msk [vmem:[#allocation2 + $0x38] sm:$0xf] %vm55, 0
    %72 = vst.msk [vmem:[#allocation2 + $0x3c] sm:$0x1] %vm57, 0
    %73 = vst.msk [vmem:[#allocation2 + $0x40] sm:$0xf] %vm55, 0
    %74 = vst.msk [vmem:[#allocation2 + $0x44] sm:$0x1] %vm57, 0
    %75 = vst.msk [vmem:[#allocation2 + $0x48] sm:$0xf] %vm55, 0
    %76 = vst.msk [vmem:[#allocation2 + $0x4c] sm:$0x1] %vm57, 0
    %77 = vst.msk [vmem:[#allocation2 + $0x50] sm:$0xf] %vm55, 0
    %78 = vst.msk [vmem:[#allocation2 + $0x54] sm:$0x1] %vm57, 0
    %79 = vst.msk [vmem:[#allocation2 + $0x58] sm:$0xf] %vm55, 0
    %80 = vst.msk [vmem:[#allocation2 + $0x5c] sm:$0x1] %vm57, 0
    %81 = vst.msk [vmem:[#allocation2 + $0x60] sm:$0xf] %vm55, 0
    %82 = vst.msk [vmem:[#allocation2 + $0x64] sm:$0x1] %vm57, 0
    %83 = vst.msk [vmem:[#allocation2 + $0x68] sm:$0xf] %vm55, 0
    %84 = vst.msk [vmem:[#allocation2 + $0x6c] sm:$0x1] %vm57, 0
    %85 = vst.msk [vmem:[#allocation2 + $0x70] sm:$0xf] %vm55, 0
    %86 = vst.msk [vmem:[#allocation2 + $0x74] sm:$0x1] %vm57, 0
    %87 = vst.msk [vmem:[#allocation2 + $0x78] sm:$0xf] %vm55, 0
    %88 = vst.msk [vmem:[#allocation2 + $0x7c] sm:$0x1] %vm57, 0
    %89 = vst.msk [vmem:[#allocation2 + $0x80] sm:$0xf] %vm55, 0
    %90 = vst.msk [vmem:[#allocation2 + $0x84] sm:$0x1] %vm57, 0
    %91 = vst.msk [vmem:[#allocation2 + $0x88] sm:$0xf] %vm55, 0
    %92 = vst.msk [vmem:[#allocation2 + $0x8c] sm:$0x1] %vm57, 0
    %93 = vst.msk [vmem:[#allocation2 + $0x90] sm:$0xf] %vm55, 0
    %94 = vst.msk [vmem:[#allocation2 + $0x94] sm:$0x1] %vm57, 0
    %95 = vst.msk [vmem:[#allocation2 + $0x98] sm:$0xf] %vm55, 0
    %96 = vst.msk [vmem:[#allocation2 + $0x9c] sm:$0x1] %vm57, 0
    %v97 = vld [vmem:[%s0] sm:$0xf]
    %v98 = vld [vmem:[%s0 + $0x4] sm:$0xf]
    %v99 = vld [vmem:[%s0 + $0x8] sm:$0xf]
    %v100 = vld [vmem:[%s0 + $0xc] sm:$0xf]
    %v101 = vld [vmem:[%s0 + $0x10] sm:$0xf]
    %v102 = vld [vmem:[%s0 + $0x14] sm:$0xf]
    %v103 = vld [vmem:[%s0 + $0x18] sm:$0xf]
    %v104 = vld [vmem:[%s0 + $0x1c] sm:$0xf]
    %v105 = vld [vmem:[%s0 + $0x20] sm:$0xf]
    %v106 = vld [vmem:[%s0 + $0x24] sm:$0xf]
    %v107 = vld [vmem:[%s0 + $0x28] sm:$0xf]
    %v108 = vld [vmem:[%s0 + $0x2c] sm:$0xf]
    %v109 = vld [vmem:[%s0 + $0x30] sm:$0xf]
    %v110 = vld [vmem:[%s0 + $0x34] sm:$0xf]
    %v111 = vld [vmem:[%s0 + $0x38] sm:$0xf]
    %v112 = vld [vmem:[%s0 + $0x3c] sm:$0xf]
    %v114 = vshrl.u32 %v97, 16
    %v116 = vrot.slane %v114, 7
    %v117 = vshll.u32 %v97, 16
    %v119 = vor.u32 %v116, %v117
    %v120 = vrot.slane %v116, 4
    %v122 = vshrl.u32 %v98, 16
    %v124 = vrot.slane %v122, 7
    %v125 = vshll.u32 %v98, 16
    %v127 = vor.u32 %v124, %v125
    %v128 = vrot.slane %v124, 4
    %v130 = vshrl.u32 %v99, 16
    %v132 = vrot.slane %v130, 7
    %v133 = vshll.u32 %v99, 16
    %v135 = vor.u32 %v132, %v133
    %v136 = vrot.slane %v132, 4
    %v138 = vshrl.u32 %v100, 16
    %v140 = vrot.slane %v138, 7
    %v141 = vshll.u32 %v100, 16
    %v143 = vor.u32 %v140, %v141
    %v144 = vrot.slane %v140, 4
    %v146 = vshrl.u32 %v101, 16
    %v148 = vrot.slane %v146, 7
    %v149 = vshll.u32 %v101, 16
    %v151 = vor.u32 %v148, %v149
    %v152 = vrot.slane %v148, 4
    %v154 = vshrl.u32 %v102, 16
    %v156 = vrot.slane %v154, 7
    %v157 = vshll.u32 %v102, 16
    %v159 = vor.u32 %v156, %v157
    %v160 = vrot.slane %v156, 4
    %v162 = vshrl.u32 %v103, 16
    %v164 = vrot.slane %v162, 7
    %v165 = vshll.u32 %v103, 16
    %v167 = vor.u32 %v164, %v165
    %v168 = vrot.slane %v164, 4
    %v170 = vshrl.u32 %v104, 16
    %v172 = vrot.slane %v170, 7
    %v173 = vshll.u32 %v104, 16
    %v175 = vor.u32 %v172, %v173
    %v176 = vrot.slane %v172, 4
    %v178 = vshrl.u32 %v105, 16
    %v180 = vrot.slane %v178, 7
    %v181 = vshll.u32 %v105, 16
    %v183 = vor.u32 %v180, %v181
    %v184 = vrot.slane %v180, 4
    %v186 = vshrl.u32 %v106, 16
    %v188 = vrot.slane %v186, 7
    %v189 = vshll.u32 %v106, 16
    %v191 = vor.u32 %v188, %v189
    %v192 = vrot.slane %v188, 4
    %v194 = vshrl.u32 %v107, 16
    %v196 = vrot.slane %v194, 7
    %v197 = vshll.u32 %v107, 16
    %v199 = vor.u32 %v196, %v197
    %v200 = vrot.slane %v196, 4
    %v202 = vshrl.u32 %v108, 16
    %v204 = vrot.slane %v202, 7
    %v205 = vshll.u32 %v108, 16
    %v207 = vor.u32 %v204, %v205
    %v208 = vrot.slane %v204, 4
    %v210 = vshrl.u32 %v109, 16
    %v212 = vrot.slane %v210, 7
    %v213 = vshll.u32 %v109, 16
    %v215 = vor.u32 %v212, %v213
    %v216 = vrot.slane %v212, 4
    %v218 = vshrl.u32 %v110, 16
    %v220 = vrot.slane %v218, 7
    %v221 = vshll.u32 %v110, 16
    %v223 = vor.u32 %v220, %v221
    %v224 = vrot.slane %v220, 4
    %v226 = vshrl.u32 %v111, 16
    %v228 = vrot.slane %v226, 7
    %v229 = vshll.u32 %v111, 16
    %v231 = vor.u32 %v228, %v229
    %v232 = vrot.slane %v228, 4
    %v234 = vshrl.u32 %v112, 16
    %v236 = vrot.slane %v234, 7
    %v237 = vshll.u32 %v112, 16
    %v239 = vor.u32 %v236, %v237
    %v240 = vrot.slane %v236, 4
    %s273 = scalar_lea.vmem [#allocation2], 8
    %vm274 = vcmask 27648
    %vm275 = vsmask.f32 7938
    %vm276 = vmand %vm274, %vm275
    %v277 = vld [vmem:[%s273] sm:$0xf]
    %v278 = vsel %vm276, %v119, %v277
    %279 = vst [vmem:[%s273] sm:$0xf] %v278
    %vm280 = vcmask 24576
    %vm281 = vsmask.f32 256
    %vm282 = vmand %vm280, %vm281
    %v283 = vld [vmem:[%s273 + $0x4] sm:$0x1]
    %v284 = vsel %vm282, %v120, %v283
    %285 = vst [vmem:[%s273 + $0x4] sm:$0x1] %v284
    %v286 = vld [vmem:[%s273 + $0x8] sm:$0xf]
    %v287 = vsel %vm276, %v127, %v286
    %288 = vst [vmem:[%s273 + $0x8] sm:$0xf] %v287
    %v289 = vld [vmem:[%s273 + $0xc] sm:$0x1]
    %v290 = vsel %vm282, %v128, %v289
    %291 = vst [vmem:[%s273 + $0xc] sm:$0x1] %v290
    %v292 = vld [vmem:[%s273 + $0x10] sm:$0xf]
    %v293 = vsel %vm276, %v135, %v292
    %294 = vst [vmem:[%s273 + $0x10] sm:$0xf] %v293
    %v295 = vld [vmem:[%s273 + $0x14] sm:$0x1]
    %v296 = vsel %vm282, %v136, %v295
    %297 = vst [vmem:[%s273 + $0x14] sm:$0x1] %v296
    %v298 = vld [vmem:[%s273 + $0x18] sm:$0xf]
    %v299 = vsel %vm276, %v143, %v298
    %300 = vst [vmem:[%s273 + $0x18] sm:$0xf] %v299
    %v301 = vld [vmem:[%s273 + $0x1c] sm:$0x1]
    %v302 = vsel %vm282, %v144, %v301
    %303 = vst [vmem:[%s273 + $0x1c] sm:$0x1] %v302
    %v304 = vld [vmem:[%s273 + $0x20] sm:$0xf]
    %v305 = vsel %vm276, %v151, %v304
    %306 = vst [vmem:[%s273 + $0x20] sm:$0xf] %v305
    %v307 = vld [vmem:[%s273 + $0x24] sm:$0x1]
    %v308 = vsel %vm282, %v152, %v307
    %309 = vst [vmem:[%s273 + $0x24] sm:$0x1] %v308
    %v310 = vld [vmem:[%s273 + $0x28] sm:$0xf]
    %v311 = vsel %vm276, %v159, %v310
    %312 = vst [vmem:[%s273 + $0x28] sm:$0xf] %v311
    %v313 = vld [vmem:[%s273 + $0x2c] sm:$0x1]
    %v314 = vsel %vm282, %v160, %v313
    %315 = vst [vmem:[%s273 + $0x2c] sm:$0x1] %v314
    %v316 = vld [vmem:[%s273 + $0x30] sm:$0xf]
    %v317 = vsel %vm276, %v167, %v316
    %318 = vst [vmem:[%s273 + $0x30] sm:$0xf] %v317
    %v319 = vld [vmem:[%s273 + $0x34] sm:$0x1]
    %v320 = vsel %vm282, %v168, %v319
    %321 = vst [vmem:[%s273 + $0x34] sm:$0x1] %v320
    %v322 = vld [vmem:[%s273 + $0x38] sm:$0xf]
    %v323 = vsel %vm276, %v175, %v322
    %324 = vst [vmem:[%s273 + $0x38] sm:$0xf] %v323
    %v325 = vld [vmem:[%s273 + $0x3c] sm:$0x1]
    %v326 = vsel %vm282, %v176, %v325
    %327 = vst [vmem:[%s273 + $0x3c] sm:$0x1] %v326
    %v328 = vld [vmem:[%s273 + $0x50] sm:$0xf]
    %v329 = vsel %vm276, %v183, %v328
    %330 = vst [vmem:[%s273 + $0x50] sm:$0xf] %v329
    %v331 = vld [vmem:[%s273 + $0x54] sm:$0x1]
    %v332 = vsel %vm282, %v184, %v331
    %333 = vst [vmem:[%s273 + $0x54] sm:$0x1] %v332
    %v334 = vld [vmem:[%s273 + $0x58] sm:$0xf]
    %v335 = vsel %vm276, %v191, %v334
    %336 = vst [vmem:[%s273 + $0x58] sm:$0xf] %v335
    %v337 = vld [vmem:[%s273 + $0x5c] sm:$0x1]
    %v338 = vsel %vm282, %v192, %v337
    %339 = vst [vmem:[%s273 + $0x5c] sm:$0x1] %v338
    %v340 = vld [vmem:[%s273 + $0x60] sm:$0xf]
    %v341 = vsel %vm276, %v199, %v340
    %342 = vst [vmem:[%s273 + $0x60] sm:$0xf] %v341
    %v343 = vld [vmem:[%s273 + $0x64] sm:$0x1]
    %v344 = vsel %vm282, %v200, %v343
    %345 = vst [vmem:[%s273 + $0x64] sm:$0x1] %v344
    %v346 = vld [vmem:[%s273 + $0x68] sm:$0xf]
    %v347 = vsel %vm276, %v207, %v346
    %348 = vst [vmem:[%s273 + $0x68] sm:$0xf] %v347
    %v349 = vld [vmem:[%s273 + $0x6c] sm:$0x1]
    %v350 = vsel %vm282, %v208, %v349
    %351 = vst [vmem:[%s273 + $0x6c] sm:$0x1] %v350
    %v352 = vld [vmem:[%s273 + $0x70] sm:$0xf]
    %v353 = vsel %vm276, %v215, %v352
    %354 = vst [vmem:[%s273 + $0x70] sm:$0xf] %v353
    %v355 = vld [vmem:[%s273 + $0x74] sm:$0x1]
    %v356 = vsel %vm282, %v216, %v355
    %357 = vst [vmem:[%s273 + $0x74] sm:$0x1] %v356
    %v358 = vld [vmem:[%s273 + $0x78] sm:$0xf]
    %v359 = vsel %vm276, %v223, %v358
    %360 = vst [vmem:[%s273 + $0x78] sm:$0xf] %v359
    %v361 = vld [vmem:[%s273 + $0x7c] sm:$0x1]
    %v362 = vsel %vm282, %v224, %v361
    %363 = vst [vmem:[%s273 + $0x7c] sm:$0x1] %v362
    %v364 = vld [vmem:[%s273 + $0x80] sm:$0xf]
    %v365 = vsel %vm276, %v231, %v364
    %366 = vst [vmem:[%s273 + $0x80] sm:$0xf] %v365
    %v367 = vld [vmem:[%s273 + $0x84] sm:$0x1]
    %v368 = vsel %vm282, %v232, %v367
    %369 = vst [vmem:[%s273 + $0x84] sm:$0x1] %v368
    %v370 = vld [vmem:[%s273 + $0x88] sm:$0xf]
    %v371 = vsel %vm276, %v239, %v370
    %372 = vst [vmem:[%s273 + $0x88] sm:$0xf] %v371
    %v373 = vld [vmem:[%s273 + $0x8c] sm:$0x1]
    %v374 = vsel %vm282, %v240, %v373
    %375 = vst [vmem:[%s273 + $0x8c] sm:$0x1] %v374
    %v376 = vld [vmem:[#allocation2] sm:$0xf]
    %v377 = vld [vmem:[#allocation2 + $0x8] sm:$0xf]
    %v378 = vld [vmem:[#allocation2 + $0x10] sm:$0xf]
    %v379 = vld [vmem:[#allocation2 + $0x18] sm:$0xf]
    %v380 = vld [vmem:[#allocation2 + $0x20] sm:$0xf]
    %v381 = vld [vmem:[#allocation2 + $0x28] sm:$0xf]
    %v382 = vld [vmem:[#allocation2 + $0x30] sm:$0xf]
    %v383 = vld [vmem:[#allocation2 + $0x38] sm:$0xf]
    %v384 = vld [vmem:[#allocation2 + $0x50] sm:$0xf]
    %v385 = vld [vmem:[#allocation2 + $0x58] sm:$0xf]
    %v386 = vld [vmem:[#allocation2 + $0x60] sm:$0xf]
    %v387 = vld [vmem:[#allocation2 + $0x68] sm:$0xf]
    %v388 = vld [vmem:[#allocation2 + $0x70] sm:$0xf]
    %v389 = vld [vmem:[#allocation2 + $0x78] sm:$0xf]
    %v390 = vld [vmem:[#allocation2 + $0x80] sm:$0xf]
    %v391 = vld [vmem:[#allocation2 + $0x88] sm:$0xf]
    %v392 = vld [vmem:[#allocation2 + $0x4] sm:$0x1]
    %v393 = vld [vmem:[#allocation2 + $0xc] sm:$0x1]
    %v394 = vld [vmem:[#allocation2 + $0x14] sm:$0x1]
    %v395 = vld [vmem:[#allocation2 + $0x1c] sm:$0x1]
    %v396 = vld [vmem:[#allocation2 + $0x24] sm:$0x1]
    %v397 = vld [vmem:[#allocation2 + $0x2c] sm:$0x1]
    %v398 = vld [vmem:[#allocation2 + $0x34] sm:$0x1]
    %v399 = vld [vmem:[#allocation2 + $0x3c] sm:$0x1]
    %v400 = vld [vmem:[#allocation2 + $0x54] sm:$0x1]
    %v401 = vld [vmem:[#allocation2 + $0x5c] sm:$0x1]
    %v402 = vld [vmem:[#allocation2 + $0x64] sm:$0x1]
    %v403 = vld [vmem:[#allocation2 + $0x6c] sm:$0x1]
    %v404 = vld [vmem:[#allocation2 + $0x74] sm:$0x1]
    %v405 = vld [vmem:[#allocation2 + $0x7c] sm:$0x1]
    %v406 = vld [vmem:[#allocation2 + $0x84] sm:$0x1]
    %v407 = vld [vmem:[#allocation2 + $0x8c] sm:$0x1]
    %v408 = vld [vmem:[#allocation2] sm:$0xe]
    %v409 = vld [vmem:[#allocation2 + $0x8] sm:$0xe]
    %v410 = vld [vmem:[#allocation2 + $0x10] sm:$0xe]
    %v411 = vld [vmem:[#allocation2 + $0x18] sm:$0xe]
    %v412 = vld [vmem:[#allocation2 + $0x20] sm:$0xe]
    %v413 = vld [vmem:[#allocation2 + $0x28] sm:$0xe]
    %v414 = vld [vmem:[#allocation2 + $0x30] sm:$0xe]
    %v415 = vld [vmem:[#allocation2 + $0x38] sm:$0xe]
    %v416 = vld [vmem:[#allocation2 + $0x50] sm:$0xe]
    %v417 = vld [vmem:[#allocation2 + $0x58] sm:$0xe]
    %v418 = vld [vmem:[#allocation2 + $0x60] sm:$0xe]
    %v419 = vld [vmem:[#allocation2 + $0x68] sm:$0xe]
    %v420 = vld [vmem:[#allocation2 + $0x70] sm:$0xe]
    %v421 = vld [vmem:[#allocation2 + $0x78] sm:$0xe]
    %v422 = vld [vmem:[#allocation2 + $0x80] sm:$0xe]
    %v423 = vld [vmem:[#allocation2 + $0x88] sm:$0xe]
    %v424 = vld [vmem:[%s273] sm:$0xf]
    %v425 = vld [vmem:[%s273 + $0x8] sm:$0xf]
    %v426 = vld [vmem:[%s273 + $0x10] sm:$0xf]
    %v427 = vld [vmem:[%s273 + $0x18] sm:$0xf]
    %v428 = vld [vmem:[%s273 + $0x20] sm:$0xf]
    %v429 = vld [vmem:[%s273 + $0x28] sm:$0xf]
    %v430 = vld [vmem:[%s273 + $0x30] sm:$0xf]
    %v431 = vld [vmem:[%s273 + $0x38] sm:$0xf]
    %v432 = vld [vmem:[%s273 + $0x50] sm:$0xf]
    %v433 = vld [vmem:[%s273 + $0x58] sm:$0xf]
    %v434 = vld [vmem:[%s273 + $0x60] sm:$0xf]
    %v435 = vld [vmem:[%s273 + $0x68] sm:$0xf]
    %v436 = vld [vmem:[%s273 + $0x70] sm:$0xf]
    %v437 = vld [vmem:[%s273 + $0x78] sm:$0xf]
    %v438 = vld [vmem:[%s273 + $0x80] sm:$0xf]
    %v439 = vld [vmem:[%s273 + $0x88] sm:$0xf]
    %v440 = vld [vmem:[%s273 + $0x4] sm:$0x1]
    %v441 = vld [vmem:[%s273 + $0xc] sm:$0x1]
    %v442 = vld [vmem:[%s273 + $0x14] sm:$0x1]
    %v443 = vld [vmem:[%s273 + $0x1c] sm:$0x1]
    %v444 = vld [vmem:[%s273 + $0x24] sm:$0x1]
    %v445 = vld [vmem:[%s273 + $0x2c] sm:$0x1]
    %v446 = vld [vmem:[%s273 + $0x34] sm:$0x1]
    %v447 = vld [vmem:[%s273 + $0x3c] sm:$0x1]
    %v448 = vld [vmem:[%s273 + $0x54] sm:$0x1]
    %v449 = vld [vmem:[%s273 + $0x5c] sm:$0x1]
    %v450 = vld [vmem:[%s273 + $0x64] sm:$0x1]
    %v451 = vld [vmem:[%s273 + $0x6c] sm:$0x1]
    %v452 = vld [vmem:[%s273 + $0x74] sm:$0x1]
    %v453 = vld [vmem:[%s273 + $0x7c] sm:$0x1]
    %v454 = vld [vmem:[%s273 + $0x84] sm:$0x1]
    %v455 = vld [vmem:[%s273 + $0x8c] sm:$0x1]
    %v456 = vld [vmem:[%s273] sm:$0xe]
    %v457 = vld [vmem:[%s273 + $0x8] sm:$0xe]
    %v458 = vld [vmem:[%s273 + $0x10] sm:$0xe]
    %v459 = vld [vmem:[%s273 + $0x18] sm:$0xe]
    %v460 = vld [vmem:[%s273 + $0x20] sm:$0xe]
    %v461 = vld [vmem:[%s273 + $0x28] sm:$0xe]
    %v462 = vld [vmem:[%s273 + $0x30] sm:$0xe]
    %v463 = vld [vmem:[%s273 + $0x38] sm:$0xe]
    %v464 = vld [vmem:[%s273 + $0x50] sm:$0xe]
    %v465 = vld [vmem:[%s273 + $0x58] sm:$0xe]
    %v466 = vld [vmem:[%s273 + $0x60] sm:$0xe]
    %v467 = vld [vmem:[%s273 + $0x68] sm:$0xe]
    %v468 = vld [vmem:[%s273 + $0x70] sm:$0xe]
    %v469 = vld [vmem:[%s273 + $0x78] sm:$0xe]
    %v470 = vld [vmem:[%s273 + $0x80] sm:$0xe]
    %v471 = vld [vmem:[%s273 + $0x88] sm:$0xe]
    %s472 = scalar_lea.vmem [#allocation2], 16
    %v473 = vld [vmem:[%s472] sm:$0xf]
    %v474 = vld [vmem:[%s472 + $0x8] sm:$0xf]
    %v475 = vld [vmem:[%s472 + $0x10] sm:$0xf]
    %v476 = vld [vmem:[%s472 + $0x18] sm:$0xf]
    %v477 = vld [vmem:[%s472 + $0x20] sm:$0xf]
    %v478 = vld [vmem:[%s472 + $0x28] sm:$0xf]
    %v479 = vld [vmem:[%s472 + $0x30] sm:$0xf]
    %v480 = vld [vmem:[%s472 + $0x38] sm:$0xf]
    %v481 = vld [vmem:[%s472 + $0x50] sm:$0xf]
    %v482 = vld [vmem:[%s472 + $0x58] sm:$0xf]
    %v483 = vld [vmem:[%s472 + $0x60] sm:$0xf]
    %v484 = vld [vmem:[%s472 + $0x68] sm:$0xf]
    %v485 = vld [vmem:[%s472 + $0x70] sm:$0xf]
    %v486 = vld [vmem:[%s472 + $0x78] sm:$0xf]
    %v487 = vld [vmem:[%s472 + $0x80] sm:$0xf]
    %v488 = vld [vmem:[%s472 + $0x88] sm:$0xf]
    %v489 = vld [vmem:[%s472 + $0x4] sm:$0x1]
    %v490 = vld [vmem:[%s472 + $0xc] sm:$0x1]
    %v491 = vld [vmem:[%s472 + $0x14] sm:$0x1]
    %v492 = vld [vmem:[%s472 + $0x1c] sm:$0x1]
    %v493 = vld [vmem:[%s472 + $0x24] sm:$0x1]
    %v494 = vld [vmem:[%s472 + $0x2c] sm:$0x1]
    %v495 = vld [vmem:[%s472 + $0x34] sm:$0x1]
    %v496 = vld [vmem:[%s472 + $0x3c] sm:$0x1]
    %v497 = vld [vmem:[%s472 + $0x54] sm:$0x1]
    %v498 = vld [vmem:[%s472 + $0x5c] sm:$0x1]
    %v499 = vld [vmem:[%s472 + $0x64] sm:$0x1]
    %v500 = vld [vmem:[%s472 + $0x6c] sm:$0x1]
    %v501 = vld [vmem:[%s472 + $0x74] sm:$0x1]
    %v502 = vld [vmem:[%s472 + $0x7c] sm:$0x1]
    %v503 = vld [vmem:[%s472 + $0x84] sm:$0x1]
    %v504 = vld [vmem:[%s472 + $0x8c] sm:$0x1]
    %v505 = vld [vmem:[%s472] sm:$0xe]
    %v506 = vld [vmem:[%s472 + $0x8] sm:$0xe]
    %v507 = vld [vmem:[%s472 + $0x10] sm:$0xe]
    %v508 = vld [vmem:[%s472 + $0x18] sm:$0xe]
    %v509 = vld [vmem:[%s472 + $0x20] sm:$0xe]
    %v510 = vld [vmem:[%s472 + $0x28] sm:$0xe]
    %v511 = vld [vmem:[%s472 + $0x30] sm:$0xe]
    %v512 = vld [vmem:[%s472 + $0x38] sm:$0xe]
    %v513 = vld [vmem:[%s472 + $0x50] sm:$0xe]
    %v514 = vld [vmem:[%s472 + $0x58] sm:$0xe]
    %v515 = vld [vmem:[%s472 + $0x60] sm:$0xe]
    %v516 = vld [vmem:[%s472 + $0x68] sm:$0xe]
    %v517 = vld [vmem:[%s472 + $0x70] sm:$0xe]
    %v518 = vld [vmem:[%s472 + $0x78] sm:$0xe]
    %v519 = vld [vmem:[%s472 + $0x80] sm:$0xe]
    %v520 = vld [vmem:[%s472 + $0x88] sm:$0xe]
    %v553 = vunpack.c.l.b16 %v376
    %v554 = vunpack.c.l.b16 %v392
    %v555 = vunpack.c.l.b16 %v377
    %v556 = vunpack.c.l.b16 %v393
    %v557 = vunpack.c.l.b16 %v378
    %v558 = vunpack.c.l.b16 %v394
    %v559 = vunpack.c.l.b16 %v379
    %v560 = vunpack.c.l.b16 %v395
    %v561 = vunpack.c.l.b16 %v380
    %v562 = vunpack.c.l.b16 %v396
    %v563 = vunpack.c.l.b16 %v381
    %v564 = vunpack.c.l.b16 %v397
    %v565 = vunpack.c.l.b16 %v382
    %v566 = vunpack.c.l.b16 %v398
    %v567 = vunpack.c.l.b16 %v383
    %v568 = vunpack.c.l.b16 %v399
    %v569 = vunpack.c.l.b16 %v384
    %v570 = vunpack.c.l.b16 %v400
    %v571 = vunpack.c.l.b16 %v385
    %v572 = vunpack.c.l.b16 %v401
    %v573 = vunpack.c.l.b16 %v386
    %v574 = vunpack.c.l.b16 %v402
    %v575 = vunpack.c.l.b16 %v387
    %v576 = vunpack.c.l.b16 %v403
    %v577 = vunpack.c.l.b16 %v388
    %v578 = vunpack.c.l.b16 %v404
    %v579 = vunpack.c.l.b16 %v389
    %v580 = vunpack.c.l.b16 %v405
    %v581 = vunpack.c.l.b16 %v390
    %v582 = vunpack.c.l.b16 %v406
    %v583 = vunpack.c.l.b16 %v391
    %v584 = vunpack.c.l.b16 %v407
    %v585 = vpack.c.b16 %v554, %v553
    %v586 = vpack.c.b16 %v556, %v555
    %v587 = vpack.c.b16 %v558, %v557
    %v588 = vpack.c.b16 %v560, %v559
    %v589 = vpack.c.b16 %v562, %v561
    %v590 = vpack.c.b16 %v564, %v563
    %v591 = vpack.c.b16 %v566, %v565
    %v592 = vpack.c.b16 %v568, %v567
    %v593 = vpack.c.b16 %v570, %v569
    %v594 = vpack.c.b16 %v572, %v571
    %v595 = vpack.c.b16 %v574, %v573
    %v596 = vpack.c.b16 %v576, %v575
    %v597 = vpack.c.b16 %v578, %v577
    %v598 = vpack.c.b16 %v580, %v579
    %v599 = vpack.c.b16 %v582, %v581
    %v600 = vpack.c.b16 %v584, %v583
    %v602 = vshrl.u32 %v585, 16
    %v604 = vshll.u32 %v585, 16
    %v606 = vrot.slane %v604, 1
    %v607 = vor.u32 %v602, %v606
    %v609 = vshrl.u32 %v586, 16
    %v611 = vshll.u32 %v586, 16
    %v613 = vrot.slane %v611, 1
    %v614 = vor.u32 %v609, %v613
    %v616 = vshrl.u32 %v587, 16
    %v618 = vshll.u32 %v587, 16
    %v620 = vrot.slane %v618, 1
    %v621 = vor.u32 %v616, %v620
    %v623 = vshrl.u32 %v588, 16
    %v625 = vshll.u32 %v588, 16
    %v627 = vrot.slane %v625, 1
    %v628 = vor.u32 %v623, %v627
    %v630 = vshrl.u32 %v589, 16
    %v632 = vshll.u32 %v589, 16
    %v634 = vrot.slane %v632, 1
    %v635 = vor.u32 %v630, %v634
    %v637 = vshrl.u32 %v590, 16
    %v639 = vshll.u32 %v590, 16
    %v641 = vrot.slane %v639, 1
    %v642 = vor.u32 %v637, %v641
    %v644 = vshrl.u32 %v591, 16
    %v646 = vshll.u32 %v591, 16
    %v648 = vrot.slane %v646, 1
    %v649 = vor.u32 %v644, %v648
    %v651 = vshrl.u32 %v592, 16
    %v653 = vshll.u32 %v592, 16
    %v655 = vrot.slane %v653, 1
    %v656 = vor.u32 %v651, %v655
    %v658 = vshrl.u32 %v593, 16
    %v660 = vshll.u32 %v593, 16
    %v662 = vrot.slane %v660, 1
    %v663 = vor.u32 %v658, %v662
    %v665 = vshrl.u32 %v594, 16
    %v667 = vshll.u32 %v594, 16
    %v669 = vrot.slane %v667, 1
    %v670 = vor.u32 %v665, %v669
    %v672 = vshrl.u32 %v595, 16
    %v674 = vshll.u32 %v595, 16
    %v676 = vrot.slane %v674, 1
    %v677 = vor.u32 %v672, %v676
    %v679 = vshrl.u32 %v596, 16
    %v681 = vshll.u32 %v596, 16
    %v683 = vrot.slane %v681, 1
    %v684 = vor.u32 %v679, %v683
    %v686 = vshrl.u32 %v597, 16
    %v688 = vshll.u32 %v597, 16
    %v690 = vrot.slane %v688, 1
    %v691 = vor.u32 %v686, %v690
    %v693 = vshrl.u32 %v598, 16
    %v695 = vshll.u32 %v598, 16
    %v697 = vrot.slane %v695, 1
    %v698 = vor.u32 %v693, %v697
    %v700 = vshrl.u32 %v599, 16
    %v702 = vshll.u32 %v599, 16
    %v704 = vrot.slane %v702, 1
    %v705 = vor.u32 %v700, %v704
    %v707 = vshrl.u32 %v600, 16
    %v709 = vshll.u32 %v600, 16
    %v711 = vrot.slane %v709, 1
    %v712 = vor.u32 %v707, %v711
    %713 = vrot.lane.b32.xlu0 %v607, 4
    %v714 = vpop.permute.xlu0 %713
    %715 = vrot.lane.b32.xlu0 %v614, 4
    %v716 = vpop.permute.xlu0 %715
    %717 = vrot.lane.b32.xlu0 %v621, 4
    %v718 = vpop.permute.xlu0 %717
    %719 = vrot.lane.b32.xlu0 %v628, 4
    %v720 = vpop.permute.xlu0 %719
    %721 = vrot.lane.b32.xlu0 %v635, 4
    %v722 = vpop.permute.xlu0 %721
    %723 = vrot.lane.b32.xlu0 %v642, 4
    %v724 = vpop.permute.xlu0 %723
    %725 = vrot.lane.b32.xlu0 %v649, 4
    %v726 = vpop.permute.xlu0 %725
    %727 = vrot.lane.b32.xlu0 %v656, 4
    %v728 = vpop.permute.xlu0 %727
    %729 = vrot.lane.b32.xlu0 %v663, 4
    %v730 = vpop.permute.xlu0 %729
    %731 = vrot.lane.b32.xlu0 %v670, 4
    %v732 = vpop.permute.xlu0 %731
    %733 = vrot.lane.b32.xlu0 %v677, 4
    %v734 = vpop.permute.xlu0 %733
    %735 = vrot.lane.b32.xlu0 %v684, 4
    %v736 = vpop.permute.xlu0 %735
    %737 = vrot.lane.b32.xlu0 %v691, 4
    %v738 = vpop.permute.xlu0 %737
    %739 = vrot.lane.b32.xlu0 %v698, 4
    %v740 = vpop.permute.xlu0 %739
    %741 = vrot.lane.b32.xlu0 %v705, 4
    %v742 = vpop.permute.xlu0 %741
    %743 = vrot.lane.b32.xlu0 %v712, 4
    %v744 = vpop.permute.xlu0 %743
    %v761 = vunpack.c.l.b16 %v408
    %v762 = vunpack.c.l.b16 %v409
    %v763 = vunpack.c.l.b16 %v410
    %v764 = vunpack.c.l.b16 %v411
    %v765 = vunpack.c.l.b16 %v412
    %v766 = vunpack.c.l.b16 %v413
    %v767 = vunpack.c.l.b16 %v414
    %v768 = vunpack.c.l.b16 %v415
    %v769 = vunpack.c.l.b16 %v416
    %v770 = vunpack.c.l.b16 %v417
    %v771 = vunpack.c.l.b16 %v418
    %v772 = vunpack.c.l.b16 %v419
    %v773 = vunpack.c.l.b16 %v420
    %v774 = vunpack.c.l.b16 %v421
    %v775 = vunpack.c.l.b16 %v422
    %v776 = vunpack.c.l.b16 %v423
    %v777 = vpack.c.b16 %v554, %v761
    %v778 = vpack.c.b16 %v556, %v762
    %v779 = vpack.c.b16 %v558, %v763
    %v780 = vpack.c.b16 %v560, %v764
    %v781 = vpack.c.b16 %v562, %v765
    %v782 = vpack.c.b16 %v564, %v766
    %v783 = vpack.c.b16 %v566, %v767
    %v784 = vpack.c.b16 %v568, %v768
    %v785 = vpack.c.b16 %v570, %v769
    %v786 = vpack.c.b16 %v572, %v770
    %v787 = vpack.c.b16 %v574, %v771
    %v788 = vpack.c.b16 %v576, %v772
    %v789 = vpack.c.b16 %v578, %v773
    %v790 = vpack.c.b16 %v580, %v774
    %v791 = vpack.c.b16 %v582, %v775
    %v792 = vpack.c.b16 %v584, %v776
    %v793 = vrot.slane %v777, 1
    %v794 = vrot.slane %v778, 1
    %v795 = vrot.slane %v779, 1
    %v796 = vrot.slane %v780, 1
    %v797 = vrot.slane %v781, 1
    %v798 = vrot.slane %v782, 1
    %v799 = vrot.slane %v783, 1
    %v800 = vrot.slane %v784, 1
    %v801 = vrot.slane %v785, 1
    %v802 = vrot.slane %v786, 1
    %v803 = vrot.slane %v787, 1
    %v804 = vrot.slane %v788, 1
    %v805 = vrot.slane %v789, 1
    %v806 = vrot.slane %v790, 1
    %v807 = vrot.slane %v791, 1
    %v808 = vrot.slane %v792, 1
    %809 = vrot.lane.b32.xlu0 %v793, 8
    %v810 = vpop.permute.xlu0 %809
    %811 = vrot.lane.b32.xlu0 %v794, 8
    %v812 = vpop.permute.xlu0 %811
    %813 = vrot.lane.b32.xlu0 %v795, 8
    %v814 = vpop.permute.xlu0 %813
    %815 = vrot.lane.b32.xlu0 %v796, 8
    %v816 = vpop.permute.xlu0 %815
    %817 = vrot.lane.b32.xlu0 %v797, 8
    %v818 = vpop.permute.xlu0 %817
    %819 = vrot.lane.b32.xlu0 %v798, 8
    %v820 = vpop.permute.xlu0 %819
    %821 = vrot.lane.b32.xlu0 %v799, 8
    %v822 = vpop.permute.xlu0 %821
    %823 = vrot.lane.b32.xlu0 %v800, 8
    %v824 = vpop.permute.xlu0 %823
    %825 = vrot.lane.b32.xlu0 %v801, 8
    %v826 = vpop.permute.xlu0 %825
    %827 = vrot.lane.b32.xlu0 %v802, 8
    %v828 = vpop.permute.xlu0 %827
    %829 = vrot.lane.b32.xlu0 %v803, 8
    %v830 = vpop.permute.xlu0 %829
    %831 = vrot.lane.b32.xlu0 %v804, 8
    %v832 = vpop.permute.xlu0 %831
    %833 = vrot.lane.b32.xlu0 %v805, 8
    %v834 = vpop.permute.xlu0 %833
    %835 = vrot.lane.b32.xlu0 %v806, 8
    %v836 = vpop.permute.xlu0 %835
    %837 = vrot.lane.b32.xlu0 %v807, 8
    %v838 = vpop.permute.xlu0 %837
    %839 = vrot.lane.b32.xlu0 %v808, 8
    %v840 = vpop.permute.xlu0 %839
    %v857 = vunpack.c.l.b16 %v424
    %v858 = vunpack.c.l.b16 %v425
    %v859 = vunpack.c.l.b16 %v426
    %v860 = vunpack.c.l.b16 %v427
    %v861 = vunpack.c.l.b16 %v428
    %v862 = vunpack.c.l.b16 %v429
    %v863 = vunpack.c.l.b16 %v430
    %v864 = vunpack.c.l.b16 %v431
    %v865 = vunpack.c.l.b16 %v432
    %v866 = vunpack.c.l.b16 %v433
    %v867 = vunpack.c.l.b16 %v434
    %v868 = vunpack.c.l.b16 %v435
    %v869 = vunpack.c.l.b16 %v436
    %v870 = vunpack.c.l.b16 %v437
    %v871 = vunpack.c.l.b16 %v438
    %v872 = vunpack.c.l.b16 %v439
    %v873 = vpack.c.b16 %v857, %v857
    %v874 = vpack.c.b16 %v858, %v858
    %v875 = vpack.c.b16 %v859, %v859
    %v876 = vpack.c.b16 %v860, %v860
    %v877 = vpack.c.b16 %v861, %v861
    %v878 = vpack.c.b16 %v862, %v862
    %v879 = vpack.c.b16 %v863, %v863
    %v880 = vpack.c.b16 %v864, %v864
    %v881 = vpack.c.b16 %v865, %v865
    %v882 = vpack.c.b16 %v866, %v866
    %v883 = vpack.c.b16 %v867, %v867
    %v884 = vpack.c.b16 %v868, %v868
    %v885 = vpack.c.b16 %v869, %v869
    %v886 = vpack.c.b16 %v870, %v870
    %v887 = vpack.c.b16 %v871, %v871
    %v888 = vpack.c.b16 %v872, %v872
    %889 = vrot.lane.b32.xlu0 %v873, 12
    %v890 = vpop.permute.xlu0 %889
    %891 = vrot.lane.b32.xlu0 %v874, 12
    %v892 = vpop.permute.xlu0 %891
    %893 = vrot.lane.b32.xlu0 %v875, 12
    %v894 = vpop.permute.xlu0 %893
    %895 = vrot.lane.b32.xlu0 %v876, 12
    %v896 = vpop.permute.xlu0 %895
    %897 = vrot.lane.b32.xlu0 %v877, 12
    %v898 = vpop.permute.xlu0 %897
    %899 = vrot.lane.b32.xlu0 %v878, 12
    %v900 = vpop.permute.xlu0 %899
    %901 = vrot.lane.b32.xlu0 %v879, 12
    %v902 = vpop.permute.xlu0 %901
    %903 = vrot.lane.b32.xlu0 %v880, 12
    %v904 = vpop.permute.xlu0 %903
    %905 = vrot.lane.b32.xlu0 %v881, 12
    %v906 = vpop.permute.xlu0 %905
    %907 = vrot.lane.b32.xlu0 %v882, 12
    %v908 = vpop.permute.xlu0 %907
    %909 = vrot.lane.b32.xlu0 %v883, 12
    %v910 = vpop.permute.xlu0 %909
    %911 = vrot.lane.b32.xlu0 %v884, 12
    %v912 = vpop.permute.xlu0 %911
    %913 = vrot.lane.b32.xlu0 %v885, 12
    %v914 = vpop.permute.xlu0 %913
    %915 = vrot.lane.b32.xlu0 %v886, 12
    %v916 = vpop.permute.xlu0 %915
    %917 = vrot.lane.b32.xlu0 %v887, 12
    %v918 = vpop.permute.xlu0 %917
    %919 = vrot.lane.b32.xlu0 %v888, 12
    %v920 = vpop.permute.xlu0 %919
    %v937 = vunpack.c.l.b16 %v440
    %v938 = vunpack.c.l.b16 %v441
    %v939 = vunpack.c.l.b16 %v442
    %v940 = vunpack.c.l.b16 %v443
    %v941 = vunpack.c.l.b16 %v444
    %v942 = vunpack.c.l.b16 %v445
    %v943 = vunpack.c.l.b16 %v446
    %v944 = vunpack.c.l.b16 %v447
    %v945 = vunpack.c.l.b16 %v448
    %v946 = vunpack.c.l.b16 %v449
    %v947 = vunpack.c.l.b16 %v450
    %v948 = vunpack.c.l.b16 %v451
    %v949 = vunpack.c.l.b16 %v452
    %v950 = vunpack.c.l.b16 %v453
    %v951 = vunpack.c.l.b16 %v454
    %v952 = vunpack.c.l.b16 %v455
    %v953 = vpack.c.b16 %v937, %v857
    %v954 = vpack.c.b16 %v938, %v858
    %v955 = vpack.c.b16 %v939, %v859
    %v956 = vpack.c.b16 %v940, %v860
    %v957 = vpack.c.b16 %v941, %v861
    %v958 = vpack.c.b16 %v942, %v862
    %v959 = vpack.c.b16 %v943, %v863
    %v960 = vpack.c.b16 %v944, %v864
    %v961 = vpack.c.b16 %v945, %v865
    %v962 = vpack.c.b16 %v946, %v866
    %v963 = vpack.c.b16 %v947, %v867
    %v964 = vpack.c.b16 %v948, %v868
    %v965 = vpack.c.b16 %v949, %v869
    %v966 = vpack.c.b16 %v950, %v870
    %v967 = vpack.c.b16 %v951, %v871
    %v968 = vpack.c.b16 %v952, %v872
    %v970 = vshrl.u32 %v953, 16
    %v972 = vshll.u32 %v953, 16
    %v974 = vrot.slane %v972, 1
    %v975 = vor.u32 %v970, %v974
    %v977 = vshrl.u32 %v954, 16
    %v979 = vshll.u32 %v954, 16
    %v981 = vrot.slane %v979, 1
    %v982 = vor.u32 %v977, %v981
    %v984 = vshrl.u32 %v955, 16
    %v986 = vshll.u32 %v955, 16
    %v988 = vrot.slane %v986, 1
    %v989 = vor.u32 %v984, %v988
    %v991 = vshrl.u32 %v956, 16
    %v993 = vshll.u32 %v956, 16
    %v995 = vrot.slane %v993, 1
    %v996 = vor.u32 %v991, %v995
    %v998 = vshrl.u32 %v957, 16
    %v1000 = vshll.u32 %v957, 16
    %v1002 = vrot.slane %v1000, 1
    %v1003 = vor.u32 %v998, %v1002
    %v1005 = vshrl.u32 %v958, 16
    %v1007 = vshll.u32 %v958, 16
    %v1009 = vrot.slane %v1007, 1
    %v1010 = vor.u32 %v1005, %v1009
    %v1012 = vshrl.u32 %v959, 16
    %v1014 = vshll.u32 %v959, 16
    %v1016 = vrot.slane %v1014, 1
    %v1017 = vor.u32 %v1012, %v1016
    %v1019 = vshrl.u32 %v960, 16
    %v1021 = vshll.u32 %v960, 16
    %v1023 = vrot.slane %v1021, 1
    %v1024 = vor.u32 %v1019, %v1023
    %v1026 = vshrl.u32 %v961, 16
    %v1028 = vshll.u32 %v961, 16
    %v1030 = vrot.slane %v1028, 1
    %v1031 = vor.u32 %v1026, %v1030
    %v1033 = vshrl.u32 %v962, 16
    %v1035 = vshll.u32 %v962, 16
    %v1037 = vrot.slane %v1035, 1
    %v1038 = vor.u32 %v1033, %v1037
    %v1040 = vshrl.u32 %v963, 16
    %v1042 = vshll.u32 %v963, 16
    %v1044 = vrot.slane %v1042, 1
    %v1045 = vor.u32 %v1040, %v1044
    %v1047 = vshrl.u32 %v964, 16
    %v1049 = vshll.u32 %v964, 16
    %v1051 = vrot.slane %v1049, 1
    %v1052 = vor.u32 %v1047, %v1051
    %v1054 = vshrl.u32 %v965, 16
    %v1056 = vshll.u32 %v965, 16
    %v1058 = vrot.slane %v1056, 1
    %v1059 = vor.u32 %v1054, %v1058
    %v1061 = vshrl.u32 %v966, 16
    %v1063 = vshll.u32 %v966, 16
    %v1065 = vrot.slane %v1063, 1
    %v1066 = vor.u32 %v1061, %v1065
    %v1068 = vshrl.u32 %v967, 16
    %v1070 = vshll.u32 %v967, 16
    %v1072 = vrot.slane %v1070, 1
    %v1073 = vor.u32 %v1068, %v1072
    %v1075 = vshrl.u32 %v968, 16
    %v1077 = vshll.u32 %v968, 16
    %v1079 = vrot.slane %v1077, 1
    %v1080 = vor.u32 %v1075, %v1079
    %1081 = vrot.lane.b32.xlu0 %v975, 16
    %v1082 = vpop.permute.xlu0 %1081
    %1083 = vrot.lane.b32.xlu0 %v982, 16
    %v1084 = vpop.permute.xlu0 %1083
    %1085 = vrot.lane.b32.xlu0 %v989, 16
    %v1086 = vpop.permute.xlu0 %1085
    %1087 = vrot.lane.b32.xlu0 %v996, 16
    %v1088 = vpop.permute.xlu0 %1087
    %1089 = vrot.lane.b32.xlu0 %v1003, 16
    %v1090 = vpop.permute.xlu0 %1089
    %1091 = vrot.lane.b32.xlu0 %v1010, 16
    %v1092 = vpop.permute.xlu0 %1091
    %1093 = vrot.lane.b32.xlu0 %v1017, 16
    %v1094 = vpop.permute.xlu0 %1093
    %1095 = vrot.lane.b32.xlu0 %v1024, 16
    %v1096 = vpop.permute.xlu0 %1095
    %1097 = vrot.lane.b32.xlu0 %v1031, 16
    %v1098 = vpop.permute.xlu0 %1097
    %1099 = vrot.lane.b32.xlu0 %v1038, 16
    %v1100 = vpop.permute.xlu0 %1099
    %1101 = vrot.lane.b32.xlu0 %v1045, 16
    %v1102 = vpop.permute.xlu0 %1101
    %1103 = vrot.lane.b32.xlu0 %v1052, 16
    %v1104 = vpop.permute.xlu0 %1103
    %1105 = vrot.lane.b32.xlu0 %v1059, 16
    %v1106 = vpop.permute.xlu0 %1105
    %1107 = vrot.lane.b32.xlu0 %v1066, 16
    %v1108 = vpop.permute.xlu0 %1107
    %1109 = vrot.lane.b32.xlu0 %v1073, 16
    %v1110 = vpop.permute.xlu0 %1109
    %1111 = vrot.lane.b32.xlu0 %v1080, 16
    %v1112 = vpop.permute.xlu0 %1111
    %v1129 = vunpack.c.l.b16 %v456
    %v1130 = vunpack.c.l.b16 %v457
    %v1131 = vunpack.c.l.b16 %v458
    %v1132 = vunpack.c.l.b16 %v459
    %v1133 = vunpack.c.l.b16 %v460
    %v1134 = vunpack.c.l.b16 %v461
    %v1135 = vunpack.c.l.b16 %v462
    %v1136 = vunpack.c.l.b16 %v463
    %v1137 = vunpack.c.l.b16 %v464
    %v1138 = vunpack.c.l.b16 %v465
    %v1139 = vunpack.c.l.b16 %v466
    %v1140 = vunpack.c.l.b16 %v467
    %v1141 = vunpack.c.l.b16 %v468
    %v1142 = vunpack.c.l.b16 %v469
    %v1143 = vunpack.c.l.b16 %v470
    %v1144 = vunpack.c.l.b16 %v471
    %v1145 = vpack.c.b16 %v937, %v1129
    %v1146 = vpack.c.b16 %v938, %v1130
    %v1147 = vpack.c.b16 %v939, %v1131
    %v1148 = vpack.c.b16 %v940, %v1132
    %v1149 = vpack.c.b16 %v941, %v1133
    %v1150 = vpack.c.b16 %v942, %v1134
    %v1151 = vpack.c.b16 %v943, %v1135
    %v1152 = vpack.c.b16 %v944, %v1136
    %v1153 = vpack.c.b16 %v945, %v1137
    %v1154 = vpack.c.b16 %v946, %v1138
    %v1155 = vpack.c.b16 %v947, %v1139
    %v1156 = vpack.c.b16 %v948, %v1140
    %v1157 = vpack.c.b16 %v949, %v1141
    %v1158 = vpack.c.b16 %v950, %v1142
    %v1159 = vpack.c.b16 %v951, %v1143
    %v1160 = vpack.c.b16 %v952, %v1144
    %v1161 = vrot.slane %v1145, 1
    %v1162 = vrot.slane %v1146, 1
    %v1163 = vrot.slane %v1147, 1
    %v1164 = vrot.slane %v1148, 1
    %v1165 = vrot.slane %v1149, 1
    %v1166 = vrot.slane %v1150, 1
    %v1167 = vrot.slane %v1151, 1
    %v1168 = vrot.slane %v1152, 1
    %v1169 = vrot.slane %v1153, 1
    %v1170 = vrot.slane %v1154, 1
    %v1171 = vrot.slane %v1155, 1
    %v1172 = vrot.slane %v1156, 1
    %v1173 = vrot.slane %v1157, 1
    %v1174 = vrot.slane %v1158, 1
    %v1175 = vrot.slane %v1159, 1
    %v1176 = vrot.slane %v1160, 1
    %1177 = vrot.lane.b32.xlu0 %v1161, 20
    %v1178 = vpop.permute.xlu0 %1177
    %1179 = vrot.lane.b32.xlu0 %v1162, 20
    %v1180 = vpop.permute.xlu0 %1179
    %1181 = vrot.lane.b32.xlu0 %v1163, 20
    %v1182 = vpop.permute.xlu0 %1181
    %1183 = vrot.lane.b32.xlu0 %v1164, 20
    %v1184 = vpop.permute.xlu0 %1183
    %1185 = vrot.lane.b32.xlu0 %v1165, 20
    %v1186 = vpop.permute.xlu0 %1185
    %1187 = vrot.lane.b32.xlu0 %v1166, 20
    %v1188 = vpop.permute.xlu0 %1187
    %1189 = vrot.lane.b32.xlu0 %v1167, 20
    %v1190 = vpop.permute.xlu0 %1189
    %1191 = vrot.lane.b32.xlu0 %v1168, 20
    %v1192 = vpop.permute.xlu0 %1191
    %1193 = vrot.lane.b32.xlu0 %v1169, 20
    %v1194 = vpop.permute.xlu0 %1193
    %1195 = vrot.lane.b32.xlu0 %v1170, 20
    %v1196 = vpop.permute.xlu0 %1195
    %1197 = vrot.lane.b32.xlu0 %v1171, 20
    %v1198 = vpop.permute.xlu0 %1197
    %1199 = vrot.lane.b32.xlu0 %v1172, 20
    %v1200 = vpop.permute.xlu0 %1199
    %1201 = vrot.lane.b32.xlu0 %v1173, 20
    %v1202 = vpop.permute.xlu0 %1201
    %1203 = vrot.lane.b32.xlu0 %v1174, 20
    %v1204 = vpop.permute.xlu0 %1203
    %1205 = vrot.lane.b32.xlu0 %v1175, 20
    %v1206 = vpop.permute.xlu0 %1205
    %1207 = vrot.lane.b32.xlu0 %v1176, 20
    %v1208 = vpop.permute.xlu0 %1207
    %v1225 = vunpack.c.l.b16 %v473
    %v1226 = vunpack.c.l.b16 %v474
    %v1227 = vunpack.c.l.b16 %v475
    %v1228 = vunpack.c.l.b16 %v476
    %v1229 = vunpack.c.l.b16 %v477
    %v1230 = vunpack.c.l.b16 %v478
    %v1231 = vunpack.c.l.b16 %v479
    %v1232 = vunpack.c.l.b16 %v480
    %v1233 = vunpack.c.l.b16 %v481
    %v1234 = vunpack.c.l.b16 %v482
    %v1235 = vunpack.c.l.b16 %v483
    %v1236 = vunpack.c.l.b16 %v484
    %v1237 = vunpack.c.l.b16 %v485
    %v1238 = vunpack.c.l.b16 %v486
    %v1239 = vunpack.c.l.b16 %v487
    %v1240 = vunpack.c.l.b16 %v488
    %v1241 = vpack.c.b16 %v1225, %v1225
    %v1242 = vpack.c.b16 %v1226, %v1226
    %v1243 = vpack.c.b16 %v1227, %v1227
    %v1244 = vpack.c.b16 %v1228, %v1228
    %v1245 = vpack.c.b16 %v1229, %v1229
    %v1246 = vpack.c.b16 %v1230, %v1230
    %v1247 = vpack.c.b16 %v1231, %v1231
    %v1248 = vpack.c.b16 %v1232, %v1232
    %v1249 = vpack.c.b16 %v1233, %v1233
    %v1250 = vpack.c.b16 %v1234, %v1234
    %v1251 = vpack.c.b16 %v1235, %v1235
    %v1252 = vpack.c.b16 %v1236, %v1236
    %v1253 = vpack.c.b16 %v1237, %v1237
    %v1254 = vpack.c.b16 %v1238, %v1238
    %v1255 = vpack.c.b16 %v1239, %v1239
    %v1256 = vpack.c.b16 %v1240, %v1240
    %1257 = vrot.lane.b32.xlu0 %v1241, 24
    %v1258 = vpop.permute.xlu0 %1257
    %1259 = vrot.lane.b32.xlu0 %v1242, 24
    %v1260 = vpop.permute.xlu0 %1259
    %1261 = vrot.lane.b32.xlu0 %v1243, 24
    %v1262 = vpop.permute.xlu0 %1261
    %1263 = vrot.lane.b32.xlu0 %v1244, 24
    %v1264 = vpop.permute.xlu0 %1263
    %1265 = vrot.lane.b32.xlu0 %v1245, 24
    %v1266 = vpop.permute.xlu0 %1265
    %1267 = vrot.lane.b32.xlu0 %v1246, 24
    %v1268 = vpop.permute.xlu0 %1267
    %1269 = vrot.lane.b32.xlu0 %v1247, 24
    %v1270 = vpop.permute.xlu0 %1269
    %1271 = vrot.lane.b32.xlu0 %v1248, 24
    %v1272 = vpop.permute.xlu0 %1271
    %1273 = vrot.lane.b32.xlu0 %v1249, 24
    %v1274 = vpop.permute.xlu0 %1273
    %1275 = vrot.lane.b32.xlu0 %v1250, 24
    %v1276 = vpop.permute.xlu0 %1275
    %1277 = vrot.lane.b32.xlu0 %v1251, 24
    %v1278 = vpop.permute.xlu0 %1277
    %1279 = vrot.lane.b32.xlu0 %v1252, 24
    %v1280 = vpop.permute.xlu0 %1279
    %1281 = vrot.lane.b32.xlu0 %v1253, 24
    %v1282 = vpop.permute.xlu0 %1281
    %1283 = vrot.lane.b32.xlu0 %v1254, 24
    %v1284 = vpop.permute.xlu0 %1283
    %1285 = vrot.lane.b32.xlu0 %v1255, 24
    %v1286 = vpop.permute.xlu0 %1285
    %1287 = vrot.lane.b32.xlu0 %v1256, 24
    %v1288 = vpop.permute.xlu0 %1287
    %v1305 = vunpack.c.l.b16 %v489
    %v1306 = vunpack.c.l.b16 %v490
    %v1307 = vunpack.c.l.b16 %v491
    %v1308 = vunpack.c.l.b16 %v492
    %v1309 = vunpack.c.l.b16 %v493
    %v1310 = vunpack.c.l.b16 %v494
    %v1311 = vunpack.c.l.b16 %v495
    %v1312 = vunpack.c.l.b16 %v496
    %v1313 = vunpack.c.l.b16 %v497
    %v1314 = vunpack.c.l.b16 %v498
    %v1315 = vunpack.c.l.b16 %v499
    %v1316 = vunpack.c.l.b16 %v500
    %v1317 = vunpack.c.l.b16 %v501
    %v1318 = vunpack.c.l.b16 %v502
    %v1319 = vunpack.c.l.b16 %v503
    %v1320 = vunpack.c.l.b16 %v504
    %v1321 = vpack.c.b16 %v1305, %v1225
    %v1322 = vpack.c.b16 %v1306, %v1226
    %v1323 = vpack.c.b16 %v1307, %v1227
    %v1324 = vpack.c.b16 %v1308, %v1228
    %v1325 = vpack.c.b16 %v1309, %v1229
    %v1326 = vpack.c.b16 %v1310, %v1230
    %v1327 = vpack.c.b16 %v1311, %v1231
    %v1328 = vpack.c.b16 %v1312, %v1232
    %v1329 = vpack.c.b16 %v1313, %v1233
    %v1330 = vpack.c.b16 %v1314, %v1234
    %v1331 = vpack.c.b16 %v1315, %v1235
    %v1332 = vpack.c.b16 %v1316, %v1236
    %v1333 = vpack.c.b16 %v1317, %v1237
    %v1334 = vpack.c.b16 %v1318, %v1238
    %v1335 = vpack.c.b16 %v1319, %v1239
    %v1336 = vpack.c.b16 %v1320, %v1240
    %v1338 = vshrl.u32 %v1321, 16
    %v1340 = vshll.u32 %v1321, 16
    %v1342 = vrot.slane %v1340, 1
    %v1343 = vor.u32 %v1338, %v1342
    %v1345 = vshrl.u32 %v1322, 16
    %v1347 = vshll.u32 %v1322, 16
    %v1349 = vrot.slane %v1347, 1
    %v1350 = vor.u32 %v1345, %v1349
    %v1352 = vshrl.u32 %v1323, 16
    %v1354 = vshll.u32 %v1323, 16
    %v1356 = vrot.slane %v1354, 1
    %v1357 = vor.u32 %v1352, %v1356
    %v1359 = vshrl.u32 %v1324, 16
    %v1361 = vshll.u32 %v1324, 16
    %v1363 = vrot.slane %v1361, 1
    %v1364 = vor.u32 %v1359, %v1363
    %v1366 = vshrl.u32 %v1325, 16
    %v1368 = vshll.u32 %v1325, 16
    %v1370 = vrot.slane %v1368, 1
    %v1371 = vor.u32 %v1366, %v1370
    %v1373 = vshrl.u32 %v1326, 16
    %v1375 = vshll.u32 %v1326, 16
    %v1377 = vrot.slane %v1375, 1
    %v1378 = vor.u32 %v1373, %v1377
    %v1380 = vshrl.u32 %v1327, 16
    %v1382 = vshll.u32 %v1327, 16
    %v1384 = vrot.slane %v1382, 1
    %v1385 = vor.u32 %v1380, %v1384
    %v1387 = vshrl.u32 %v1328, 16
    %v1389 = vshll.u32 %v1328, 16
    %v1391 = vrot.slane %v1389, 1
    %v1392 = vor.u32 %v1387, %v1391
    %v1394 = vshrl.u32 %v1329, 16
    %v1396 = vshll.u32 %v1329, 16
    %v1398 = vrot.slane %v1396, 1
    %v1399 = vor.u32 %v1394, %v1398
    %v1401 = vshrl.u32 %v1330, 16
    %v1403 = vshll.u32 %v1330, 16
    %v1405 = vrot.slane %v1403, 1
    %v1406 = vor.u32 %v1401, %v1405
    %v1408 = vshrl.u32 %v1331, 16
    %v1410 = vshll.u32 %v1331, 16
    %v1412 = vrot.slane %v1410, 1
    %v1413 = vor.u32 %v1408, %v1412
    %v1415 = vshrl.u32 %v1332, 16
    %v1417 = vshll.u32 %v1332, 16
    %v1419 = vrot.slane %v1417, 1
    %v1420 = vor.u32 %v1415, %v1419
    %v1422 = vshrl.u32 %v1333, 16
    %v1424 = vshll.u32 %v1333, 16
    %v1426 = vrot.slane %v1424, 1
    %v1427 = vor.u32 %v1422, %v1426
    %v1429 = vshrl.u32 %v1334, 16
    %v1431 = vshll.u32 %v1334, 16
    %v1433 = vrot.slane %v1431, 1
    %v1434 = vor.u32 %v1429, %v1433
    %v1436 = vshrl.u32 %v1335, 16
    %v1438 = vshll.u32 %v1335, 16
    %v1440 = vrot.slane %v1438, 1
    %v1441 = vor.u32 %v1436, %v1440
    %v1443 = vshrl.u32 %v1336, 16
    %v1445 = vshll.u32 %v1336, 16
    %v1447 = vrot.slane %v1445, 1
    %v1448 = vor.u32 %v1443, %v1447
    %1449 = vrot.lane.b32.xlu0 %v1343, 28
    %v1450 = vpop.permute.xlu0 %1449
    %1451 = vrot.lane.b32.xlu0 %v1350, 28
    %v1452 = vpop.permute.xlu0 %1451
    %1453 = vrot.lane.b32.xlu0 %v1357, 28
    %v1454 = vpop.permute.xlu0 %1453
    %1455 = vrot.lane.b32.xlu0 %v1364, 28
    %v1456 = vpop.permute.xlu0 %1455
    %1457 = vrot.lane.b32.xlu0 %v1371, 28
    %v1458 = vpop.permute.xlu0 %1457
    %1459 = vrot.lane.b32.xlu0 %v1378, 28
    %v1460 = vpop.permute.xlu0 %1459
    %1461 = vrot.lane.b32.xlu0 %v1385, 28
    %v1462 = vpop.permute.xlu0 %1461
    %1463 = vrot.lane.b32.xlu0 %v1392, 28
    %v1464 = vpop.permute.xlu0 %1463
    %1465 = vrot.lane.b32.xlu0 %v1399, 28
    %v1466 = vpop.permute.xlu0 %1465
    %1467 = vrot.lane.b32.xlu0 %v1406, 28
    %v1468 = vpop.permute.xlu0 %1467
    %1469 = vrot.lane.b32.xlu0 %v1413, 28
    %v1470 = vpop.permute.xlu0 %1469
    %1471 = vrot.lane.b32.xlu0 %v1420, 28
    %v1472 = vpop.permute.xlu0 %1471
    %1473 = vrot.lane.b32.xlu0 %v1427, 28
    %v1474 = vpop.permute.xlu0 %1473
    %1475 = vrot.lane.b32.xlu0 %v1434, 28
    %v1476 = vpop.permute.xlu0 %1475
    %1477 = vrot.lane.b32.xlu0 %v1441, 28
    %v1478 = vpop.permute.xlu0 %1477
    %1479 = vrot.lane.b32.xlu0 %v1448, 28
    %v1480 = vpop.permute.xlu0 %1479
    %v1497 = vunpack.c.l.b16 %v505
    %v1498 = vunpack.c.l.b16 %v506
    %v1499 = vunpack.c.l.b16 %v507
    %v1500 = vunpack.c.l.b16 %v508
    %v1501 = vunpack.c.l.b16 %v509
    %v1502 = vunpack.c.l.b16 %v510
    %v1503 = vunpack.c.l.b16 %v511
    %v1504 = vunpack.c.l.b16 %v512
    %v1505 = vunpack.c.l.b16 %v513
    %v1506 = vunpack.c.l.b16 %v514
    %v1507 = vunpack.c.l.b16 %v515
    %v1508 = vunpack.c.l.b16 %v516
    %v1509 = vunpack.c.l.b16 %v517
    %v1510 = vunpack.c.l.b16 %v518
    %v1511 = vunpack.c.l.b16 %v519
    %v1512 = vunpack.c.l.b16 %v520
    %v1513 = vpack.c.b16 %v1305, %v1497
    %v1514 = vpack.c.b16 %v1306, %v1498
    %v1515 = vpack.c.b16 %v1307, %v1499
    %v1516 = vpack.c.b16 %v1308, %v1500
    %v1517 = vpack.c.b16 %v1309, %v1501
    %v1518 = vpack.c.b16 %v1310, %v1502
    %v1519 = vpack.c.b16 %v1311, %v1503
    %v1520 = vpack.c.b16 %v1312, %v1504
    %v1521 = vpack.c.b16 %v1313, %v1505
    %v1522 = vpack.c.b16 %v1314, %v1506
    %v1523 = vpack.c.b16 %v1315, %v1507
    %v1524 = vpack.c.b16 %v1316, %v1508
    %v1525 = vpack.c.b16 %v1317, %v1509
    %v1526 = vpack.c.b16 %v1318, %v1510
    %v1527 = vpack.c.b16 %v1319, %v1511
    %v1528 = vpack.c.b16 %v1320, %v1512
    %v1529 = vrot.slane %v1513, 1
    %v1530 = vrot.slane %v1514, 1
    %v1531 = vrot.slane %v1515, 1
    %v1532 = vrot.slane %v1516, 1
    %v1533 = vrot.slane %v1517, 1
    %v1534 = vrot.slane %v1518, 1
    %v1535 = vrot.slane %v1519, 1
    %v1536 = vrot.slane %v1520, 1
    %v1537 = vrot.slane %v1521, 1
    %v1538 = vrot.slane %v1522, 1
    %v1539 = vrot.slane %v1523, 1
    %v1540 = vrot.slane %v1524, 1
    %v1541 = vrot.slane %v1525, 1
    %v1542 = vrot.slane %v1526, 1
    %v1543 = vrot.slane %v1527, 1
    %v1544 = vrot.slane %v1528, 1
    %1545 = vrot.lane.b32.xlu0 %v1529, 32
    %v1546 = vpop.permute.xlu0 %1545
    %1547 = vrot.lane.b32.xlu0 %v1530, 32
    %v1548 = vpop.permute.xlu0 %1547
    %1549 = vrot.lane.b32.xlu0 %v1531, 32
    %v1550 = vpop.permute.xlu0 %1549
    %1551 = vrot.lane.b32.xlu0 %v1532, 32
    %v1552 = vpop.permute.xlu0 %1551
    %1553 = vrot.lane.b32.xlu0 %v1533, 32
    %v1554 = vpop.permute.xlu0 %1553
    %1555 = vrot.lane.b32.xlu0 %v1534, 32
    %v1556 = vpop.permute.xlu0 %1555
    %1557 = vrot.lane.b32.xlu0 %v1535, 32
    %v1558 = vpop.permute.xlu0 %1557
    %1559 = vrot.lane.b32.xlu0 %v1536, 32
    %v1560 = vpop.permute.xlu0 %1559
    %1561 = vrot.lane.b32.xlu0 %v1537, 32
    %v1562 = vpop.permute.xlu0 %1561
    %1563 = vrot.lane.b32.xlu0 %v1538, 32
    %v1564 = vpop.permute.xlu0 %1563
    %1565 = vrot.lane.b32.xlu0 %v1539, 32
    %v1566 = vpop.permute.xlu0 %1565
    %1567 = vrot.lane.b32.xlu0 %v1540, 32
    %v1568 = vpop.permute.xlu0 %1567
    %1569 = vrot.lane.b32.xlu0 %v1541, 32
    %v1570 = vpop.permute.xlu0 %1569
    %1571 = vrot.lane.b32.xlu0 %v1542, 32
    %v1572 = vpop.permute.xlu0 %1571
    %1573 = vrot.lane.b32.xlu0 %v1543, 32
    %v1574 = vpop.permute.xlu0 %1573
    %1575 = vrot.lane.b32.xlu0 %v1544, 32
    %v1576 = vpop.permute.xlu0 %1575
    %vm1577 = vcmask 31744
    %v1580 = vsel %vm1577, %v376, %v714
    %v1583 = vsel %vm1577, %v377, %v716
    %v1586 = vsel %vm1577, %v378, %v718
    %v1589 = vsel %vm1577, %v379, %v720
    %v1592 = vsel %vm1577, %v380, %v722
    %v1595 = vsel %vm1577, %v381, %v724
    %v1598 = vsel %vm1577, %v382, %v726
    %v1601 = vsel %vm1577, %v383, %v728
    %v1604 = vsel %vm1577, %v384, %v730
    %v1607 = vsel %vm1577, %v385, %v732
    %v1610 = vsel %vm1577, %v386, %v734
    %v1613 = vsel %vm1577, %v387, %v736
    %v1616 = vsel %vm1577, %v388, %v738
    %v1619 = vsel %vm1577, %v389, %v740
    %v1622 = vsel %vm1577, %v390, %v742
    %v1625 = vsel %vm1577, %v391, %v744
    %vm1626 = vcmask 64512
    %v1628 = vsel %vm1626, %v1580, %v810
    %v1630 = vsel %vm1626, %v1583, %v812
    %v1632 = vsel %vm1626, %v1586, %v814
    %v1634 = vsel %vm1626, %v1589, %v816
    %v1636 = vsel %vm1626, %v1592, %v818
    %v1638 = vsel %vm1626, %v1595, %v820
    %v1640 = vsel %vm1626, %v1598, %v822
    %v1642 = vsel %vm1626, %v1601, %v824
    %v1644 = vsel %vm1626, %v1604, %v826
    %v1646 = vsel %vm1626, %v1607, %v828
    %v1648 = vsel %vm1626, %v1610, %v830
    %v1650 = vsel %vm1626, %v1613, %v832
    %v1652 = vsel %vm1626, %v1616, %v834
    %v1654 = vsel %vm1626, %v1619, %v836
    %v1656 = vsel %vm1626, %v1622, %v838
    %v1658 = vsel %vm1626, %v1625, %v840
    %vm1659 = vcmask 97280
    %v1661 = vsel %vm1659, %v1628, %v890
    %v1663 = vsel %vm1659, %v1630, %v892
    %v1665 = vsel %vm1659, %v1632, %v894
    %v1667 = vsel %vm1659, %v1634, %v896
    %v1669 = vsel %vm1659, %v1636, %v898
    %v1671 = vsel %vm1659, %v1638, %v900
    %v1673 = vsel %vm1659, %v1640, %v902
    %v1675 = vsel %vm1659, %v1642, %v904
    %v1677 = vsel %vm1659, %v1644, %v906
    %v1679 = vsel %vm1659, %v1646, %v908
    %v1681 = vsel %vm1659, %v1648, %v910
    %v1683 = vsel %vm1659, %v1650, %v912
    %v1685 = vsel %vm1659, %v1652, %v914
    %v1687 = vsel %vm1659, %v1654, %v916
    %v1689 = vsel %vm1659, %v1656, %v918
    %v1691 = vsel %vm1659, %v1658, %v920
    %vm1692 = vcmask 130048
    %v1694 = vsel %vm1692, %v1661, %v1082
    %v1696 = vsel %vm1692, %v1663, %v1084
    %v1698 = vsel %vm1692, %v1665, %v1086
    %v1700 = vsel %vm1692, %v1667, %v1088
    %v1702 = vsel %vm1692, %v1669, %v1090
    %v1704 = vsel %vm1692, %v1671, %v1092
    %v1706 = vsel %vm1692, %v1673, %v1094
    %v1708 = vsel %vm1692, %v1675, %v1096
    %v1710 = vsel %vm1692, %v1677, %v1098
    %v1712 = vsel %vm1692, %v1679, %v1100
    %v1714 = vsel %vm1692, %v1681, %v1102
    %v1716 = vsel %vm1692, %v1683, %v1104
    %v1718 = vsel %vm1692, %v1685, %v1106
    %v1720 = vsel %vm1692, %v1687, %v1108
    %v1722 = vsel %vm1692, %v1689, %v1110
    %v1724 = vsel %vm1692, %v1691, %v1112
    %vm1725 = vcmask 162816
    %v1727 = vsel %vm1725, %v1694, %v1178
    %v1729 = vsel %vm1725, %v1696, %v1180
    %v1731 = vsel %vm1725, %v1698, %v1182
    %v1733 = vsel %vm1725, %v1700, %v1184
    %v1735 = vsel %vm1725, %v1702, %v1186
    %v1737 = vsel %vm1725, %v1704, %v1188
    %v1739 = vsel %vm1725, %v1706, %v1190
    %v1741 = vsel %vm1725, %v1708, %v1192
    %v1743 = vsel %vm1725, %v1710, %v1194
    %v1745 = vsel %vm1725, %v1712, %v1196
    %v1747 = vsel %vm1725, %v1714, %v1198
    %v1749 = vsel %vm1725, %v1716, %v1200
    %v1751 = vsel %vm1725, %v1718, %v1202
    %v1753 = vsel %vm1725, %v1720, %v1204
    %v1755 = vsel %vm1725, %v1722, %v1206
    %v1757 = vsel %vm1725, %v1724, %v1208
    %vm1758 = vcmask 195584
    %v1760 = vsel %vm1758, %v1727, %v1258
    %v1762 = vsel %vm1758, %v1729, %v1260
    %v1764 = vsel %vm1758, %v1731, %v1262
    %v1766 = vsel %vm1758, %v1733, %v1264
    %v1768 = vsel %vm1758, %v1735, %v1266
    %v1770 = vsel %vm1758, %v1737, %v1268
    %v1772 = vsel %vm1758, %v1739, %v1270
    %v1774 = vsel %vm1758, %v1741, %v1272
    %v1776 = vsel %vm1758, %v1743, %v1274
    %v1778 = vsel %vm1758, %v1745, %v1276
    %v1780 = vsel %vm1758, %v1747, %v1278
    %v1782 = vsel %vm1758, %v1749, %v1280
    %v1784 = vsel %vm1758, %v1751, %v1282
    %v1786 = vsel %vm1758, %v1753, %v1284
    %v1788 = vsel %vm1758, %v1755, %v1286
    %v1790 = vsel %vm1758, %v1757, %v1288
    %vm1791 = vcmask 228352
    %v1793 = vsel %vm1791, %v1760, %v1450
    %v1795 = vsel %vm1791, %v1762, %v1452
    %v1797 = vsel %vm1791, %v1764, %v1454
    %v1799 = vsel %vm1791, %v1766, %v1456
    %v1801 = vsel %vm1791, %v1768, %v1458
    %v1803 = vsel %vm1791, %v1770, %v1460
    %v1805 = vsel %vm1791, %v1772, %v1462
    %v1807 = vsel %vm1791, %v1774, %v1464
    %v1809 = vsel %vm1791, %v1776, %v1466
    %v1811 = vsel %vm1791, %v1778, %v1468
    %v1813 = vsel %vm1791, %v1780, %v1470
    %v1815 = vsel %vm1791, %v1782, %v1472
    %v1817 = vsel %vm1791, %v1784, %v1474
    %v1819 = vsel %vm1791, %v1786, %v1476
    %v1821 = vsel %vm1791, %v1788, %v1478
    %v1823 = vsel %vm1791, %v1790, %v1480
    %vm1824 = vcmask 261120
    %v1826 = vsel %vm1824, %v1793, %v1546
    %v1828 = vsel %vm1824, %v1795, %v1548
    %v1830 = vsel %vm1824, %v1797, %v1550
    %v1832 = vsel %vm1824, %v1799, %v1552
    %v1834 = vsel %vm1824, %v1801, %v1554
    %v1836 = vsel %vm1824, %v1803, %v1556
    %v1838 = vsel %vm1824, %v1805, %v1558
    %v1840 = vsel %vm1824, %v1807, %v1560
    %v1842 = vsel %vm1824, %v1809, %v1562
    %v1844 = vsel %vm1824, %v1811, %v1564
    %v1846 = vsel %vm1824, %v1813, %v1566
    %v1848 = vsel %vm1824, %v1815, %v1568
    %v1850 = vsel %vm1824, %v1817, %v1570
    %v1852 = vsel %vm1824, %v1819, %v1572
    %v1854 = vsel %vm1824, %v1821, %v1574
    %v1856 = vsel %vm1824, %v1823, %v1576
    %v1857 = vld [vmem:[#allocation3] sm:$0xf]
    %v1858 = vld [vmem:[#allocation3 + $0x4] sm:$0xf]
    %v1859 = vld [vmem:[#allocation3 + $0x8] sm:$0xf]
    %v1860 = vld [vmem:[#allocation3 + $0xc] sm:$0xf]
    %v1861 = vld [vmem:[#allocation3 + $0x10] sm:$0x3]
    %v1878 = vunpack.c.l.b16 %v1826
    %v1879 = vunpack.c.l.b16 %v1828
    %v1880 = vunpack.c.l.b16 %v1830
    %v1881 = vunpack.c.l.b16 %v1832
    %v1882 = vunpack.c.l.b16 %v1834
    %v1883 = vunpack.c.l.b16 %v1836
    %v1884 = vunpack.c.l.b16 %v1838
    %v1885 = vunpack.c.l.b16 %v1840
    %v1886 = vunpack.c.l.b16 %v1842
    %v1887 = vunpack.c.l.b16 %v1844
    %v1888 = vunpack.c.l.b16 %v1846
    %v1889 = vunpack.c.l.b16 %v1848
    %v1890 = vunpack.c.l.b16 %v1850
    %v1891 = vunpack.c.l.b16 %v1852
    %v1892 = vunpack.c.l.b16 %v1854
    %v1893 = vunpack.c.l.b16 %v1856
    %v1894 = vpack.c.b16 %v1879, %v1878
    %v1895 = vpack.c.b16 %v1881, %v1880
    %v1896 = vpack.c.b16 %v1883, %v1882
    %v1897 = vpack.c.b16 %v1885, %v1884
    %v1898 = vpack.c.b16 %v1887, %v1886
    %v1899 = vpack.c.b16 %v1889, %v1888
    %v1900 = vpack.c.b16 %v1891, %v1890
    %v1901 = vpack.c.b16 %v1893, %v1892
    %v1907 = vunpack.c.l.b16 %v1857
    %v1908 = vunpack.c.l.b16 %v1858
    %v1909 = vunpack.c.l.b16 %v1859
    %v1910 = vunpack.c.l.b16 %v1860
    %v1911 = vunpack.c.l.b16 %v1861
    %v1912 = vpack.c.b16 %v1908, %v1907
    %v1913 = vpack.c.b16 %v1910, %v1909
    %v1914 = vpack.c.b16 %v1911, %v1911
    %vm1917 = vcmask 293888
    %v1919 = vsel %vm1917, %v1894, 0
    %v1922 = vsel %vm1917, %v1895, 0
    %v1925 = vsel %vm1917, %v1896, 0
    %v1928 = vsel %vm1917, %v1897, 0
    %v1931 = vsel %vm1917, %v1898, 0
    %v1934 = vsel %vm1917, %v1899, 0
    %v1937 = vsel %vm1917, %v1900, 0
    %v1940 = vsel %vm1917, %v1901, 0
    %vm1942 = vcmask 1041408
    %v1944 = vsel %vm1942, %v1914, 0
    %1946 = vmatprep.subr.bf16.mxu0 0
    %1947 = vmatpush1.bf16.msra.mxu0 %v1912
    %1948 = vmatprep.subr.bf16.mxu0 0
    %1949 = vmatpush1.bf16.msra.mxu0 %v1913
    %1950 = vmatprep.subr.bf16.mxu0 0
    %1951 = vmatpush1.bf16.msra.mxu0 %v1944
    %1952 = vmatprep.subr.bf16.mxu0 0
    %1953 = vmatpush1.bf16.msra.mxu0 0
    %1954 = vmatprep.subr.bf16.mxu0 0
    %1955 = vmatpush1.bf16.msra.mxu0 0
    %1956 = vmatprep.subr.bf16.mxu0 0
    %1957 = vmatpush1.bf16.msra.mxu0 0
    %1958 = vmatprep.subr.bf16.mxu0 0
    %1959 = vmatpush1.bf16.msra.mxu0 0
    %1960 = vmatprep.subr.bf16.mxu0 0
    %1961 = vmatpush1.bf16.msra.mxu0 0
    %1962 = vmatprep.subr.bf16.mxu0 0
    %1963 = vmatpush1.bf16.msra.mxu0 0
    %1964 = vmatprep.subr.bf16.mxu0 0
    %1965 = vmatpush1.bf16.msra.mxu0 0
    %1966 = vmatprep.subr.bf16.mxu0 0
    %1967 = vmatpush1.bf16.msra.mxu0 0
    %1968 = vmatprep.subr.bf16.mxu0 0
    %1969 = vmatpush1.bf16.msra.mxu0 0
    %1970 = vmatprep.subr.bf16.mxu0 0
    %1971 = vmatpush1.bf16.msra.mxu0 0
    %1972 = vmatprep.subr.bf16.mxu0 0
    %1973 = vmatpush1.bf16.msra.mxu0 0
    %1974 = vmatprep.subr.bf16.mxu0 0
    %1975 = vmatpush1.bf16.msra.mxu0 0
    %1976 = vmatprep.subr.bf16.mxu0 0
    %1977 = vmatpush1.bf16.msra.mxu0 0
    %1978 = vmatprep.mubr.bf16.mxu0 0
    %1979 = vmatmul.mubr.bf16.gmra.mrb[0].mxu0 %v1919
    %v1980 = vpop.f32.mrb[0].mxu0
    %v1981 = vadd.f32 0.0, %v1980
    %v1982 = vpop.f32.mrb[0].mxu0
    %v1983 = vpop.f32.mrb[0].mxu0
    %v1984 = vadd.f32 0.0, %v1983
    %v1985 = vpop.f32.mrb[0].mxu0
    %1986 = vmatprep.mubr.bf16.mxu0 0
    %1987 = vmatmul.mubr.bf16.gmra.mrb[0].mxu0 %v1922
    %v1988 = vpop.f32.mrb[0].mxu0
    %v1989 = vadd.f32 0.0, %v1988
    %v1990 = vpop.f32.mrb[0].mxu0
    %v1991 = vpop.f32.mrb[0].mxu0
    %v1992 = vadd.f32 0.0, %v1991
    %v1993 = vpop.f32.mrb[0].mxu0
    %1994 = vmatprep.mubr.bf16.mxu0 0
    %1995 = vmatmul.mubr.bf16.gmra.mrb[0].mxu0 %v1925
    %v1996 = vpop.f32.mrb[0].mxu0
    %v1997 = vadd.f32 0.0, %v1996
    %v1998 = vpop.f32.mrb[0].mxu0
    %v1999 = vpop.f32.mrb[0].mxu0
    %v2000 = vadd.f32 0.0, %v1999
    %v2001 = vpop.f32.mrb[0].mxu0
    %2002 = vmatprep.mubr.bf16.mxu0 0
    %2003 = vmatmul.mubr.bf16.gmra.mrb[0].mxu0 %v1928
    %v2004 = vpop.f32.mrb[0].mxu0
    %v2005 = vadd.f32 0.0, %v2004
    %v2006 = vpop.f32.mrb[0].mxu0
    %v2007 = vpop.f32.mrb[0].mxu0
    %v2008 = vadd.f32 0.0, %v2007
    %v2009 = vpop.f32.mrb[0].mxu0
    %2010 = vmatprep.mubr.bf16.mxu0 0
    %2011 = vmatmul.mubr.bf16.gmra.mrb[0].mxu0 %v1931
    %v2012 = vpop.f32.mrb[0].mxu0
    %v2013 = vadd.f32 0.0, %v2012
    %v2014 = vpop.f32.mrb[0].mxu0
    %v2015 = vpop.f32.mrb[0].mxu0
    %v2016 = vadd.f32 0.0, %v2015
    %v2017 = vpop.f32.mrb[0].mxu0
    %2018 = vmatprep.mubr.bf16.mxu0 0
    %2019 = vmatmul.mubr.bf16.gmra.mrb[0].mxu0 %v1934
    %v2020 = vpop.f32.mrb[0].mxu0
    %v2021 = vadd.f32 0.0, %v2020
    %v2022 = vpop.f32.mrb[0].mxu0
    %v2023 = vpop.f32.mrb[0].mxu0
    %v2024 = vadd.f32 0.0, %v2023
    %v2025 = vpop.f32.mrb[0].mxu0
    %2026 = vmatprep.mubr.bf16.mxu0 0
    %2027 = vmatmul.mubr.bf16.gmra.mrb[0].mxu0 %v1937
    %v2028 = vpop.f32.mrb[0].mxu0
    %v2029 = vadd.f32 0.0, %v2028
    %v2030 = vpop.f32.mrb[0].mxu0
    %v2031 = vpop.f32.mrb[0].mxu0
    %v2032 = vadd.f32 0.0, %v2031
    %v2033 = vpop.f32.mrb[0].mxu0
    %2034 = vmatprep.mubr.bf16.mxu0 0
    %2035 = vmatmul.mubr.bf16.gmra.mrb[0].mxu0 %v1940
    %v2036 = vpop.f32.mrb[0].mxu0
    %v2037 = vadd.f32 0.0, %v2036
    %v2038 = vpop.f32.mrb[0].mxu0
    %v2039 = vpop.f32.mrb[0].mxu0
    %v2040 = vadd.f32 0.0, %v2039
    %v2041 = vpop.f32.mrb[0].mxu0
    %2042 = vdwg.mxu0
    %v2043 = vld [vmem:[#allocation5] sm:$0x1]
    %v2045 = vlaneseq
    %v2046 = vshrl.u32 %v2045, 7
    %v2047 = vsub.s32 0, %v2046
    %v2048 = vrot.slane %v2043, %v2047
    %v2050 = vmul.f32 %v1981, %v2048
    %v2051 = vmul.f32 %v1984, %v2048
    %v2052 = vmul.f32 %v1989, %v2048
    %v2053 = vmul.f32 %v1992, %v2048
    %v2054 = vmul.f32 %v1997, %v2048
    %v2055 = vmul.f32 %v2000, %v2048
    %v2056 = vmul.f32 %v2005, %v2048
    %v2057 = vmul.f32 %v2008, %v2048
    %v2058 = vmul.f32 %v2013, %v2048
    %v2059 = vmul.f32 %v2016, %v2048
    %v2060 = vmul.f32 %v2021, %v2048
    %v2061 = vmul.f32 %v2024, %v2048
    %v2062 = vmul.f32 %v2029, %v2048
    %v2063 = vmul.f32 %v2032, %v2048
    %v2064 = vmul.f32 %v2037, %v2048
    %v2065 = vmul.f32 %v2040, %v2048
    %v2066 = vld [vmem:[#allocation7] sm:$0x1]
    %v2068 = vlaneseq
    %v2069 = vshrl.u32 %v2068, 7
    %v2070 = vsub.s32 0, %v2069
    %v2071 = vrot.slane %v2066, %v2070
    %v2073 = vadd.f32 %v2050, %v2071
    %v2074 = vadd.f32 %v2051, %v2071
    %v2075 = vadd.f32 %v2052, %v2071
    %v2076 = vadd.f32 %v2053, %v2071
    %v2077 = vadd.f32 %v2054, %v2071
    %v2078 = vadd.f32 %v2055, %v2071
    %v2079 = vadd.f32 %v2056, %v2071
    %v2080 = vadd.f32 %v2057, %v2071
    %v2081 = vadd.f32 %v2058, %v2071
    %v2082 = vadd.f32 %v2059, %v2071
    %v2083 = vadd.f32 %v2060, %v2071
    %v2084 = vadd.f32 %v2061, %v2071
    %v2085 = vadd.f32 %v2062, %v2071
    %v2086 = vadd.f32 %v2063, %v2071
    %v2087 = vadd.f32 %v2064, %v2071
    %v2088 = vadd.f32 %v2065, %v2071
    %v2089 = vmax.f32 %v2073, 0.0
    %v2090 = vmax.f32 %v2074, 0.0
    %v2091 = vmax.f32 %v2075, 0.0
    %v2092 = vmax.f32 %v2076, 0.0
    %v2093 = vmax.f32 %v2077, 0.0
    %v2094 = vmax.f32 %v2078, 0.0
    %v2095 = vmax.f32 %v2079, 0.0
    %v2096 = vmax.f32 %v2080, 0.0
    %v2097 = vmax.f32 %v2081, 0.0
    %v2098 = vmax.f32 %v2082, 0.0
    %v2099 = vmax.f32 %v2083, 0.0
    %v2100 = vmax.f32 %v2084, 0.0
    %v2101 = vmax.f32 %v2085, 0.0
    %v2102 = vmax.f32 %v2086, 0.0
    %v2103 = vmax.f32 %v2087, 0.0
    %v2104 = vmax.f32 %v2088, 0.0
    %v2105 = vpack.c.bf16 %v2089, %v2089
    %v2106 = vpack.c.bf16 %v2090, %v2090
    %v2107 = vpack.c.bf16 %v2091, %v2091
    %v2108 = vpack.c.bf16 %v2092, %v2092
    %v2109 = vpack.c.bf16 %v2093, %v2093
    %v2110 = vpack.c.bf16 %v2094, %v2094
    %v2111 = vpack.c.bf16 %v2095, %v2095
    %v2112 = vpack.c.bf16 %v2096, %v2096
    %v2113 = vpack.c.bf16 %v2097, %v2097
    %v2114 = vpack.c.bf16 %v2098, %v2098
    %v2115 = vpack.c.bf16 %v2099, %v2099
    %v2116 = vpack.c.bf16 %v2100, %v2100
    %v2117 = vpack.c.bf16 %v2101, %v2101
    %v2118 = vpack.c.bf16 %v2102, %v2102
    %v2119 = vpack.c.bf16 %v2103, %v2103
    %v2120 = vpack.c.bf16 %v2104, %v2104
    %2121 = vst [vmem:[%s4] sm:$0xf] %v2105
    %2122 = vst [vmem:[%s4 + $0x4] sm:$0xf] %v2106
    %2123 = vst [vmem:[%s4 + $0x8] sm:$0xf] %v2107
    %2124 = vst [vmem:[%s4 + $0xc] sm:$0xf] %v2108
    %2125 = vst [vmem:[%s4 + $0x10] sm:$0xf] %v2109
    %2126 = vst [vmem:[%s4 + $0x14] sm:$0xf] %v2110
    %2127 = vst [vmem:[%s4 + $0x18] sm:$0xf] %v2111
    %2128 = vst [vmem:[%s4 + $0x1c] sm:$0xf] %v2112
    %2129 = vst [vmem:[%s4 + $0x20] sm:$0xf] %v2113
    %2130 = vst [vmem:[%s4 + $0x24] sm:$0xf] %v2114
    %2131 = vst [vmem:[%s4 + $0x28] sm:$0xf] %v2115
    %2132 = vst [vmem:[%s4 + $0x2c] sm:$0xf] %v2116
    %2133 = vst [vmem:[%s4 + $0x30] sm:$0xf] %v2117
    %2134 = vst [vmem:[%s4 + $0x34] sm:$0xf] %v2118
    %2135 = vst [vmem:[%s4 + $0x38] sm:$0xf] %v2119
    %2136 = vst [vmem:[%s4 + $0x3c] sm:$0xf] %v2120
    // Predicated region
    $region30: #{forward.7} parent=1 // pred_check
      _
    $region31: #{forward.7} parent=1 // pred_check_branch
      %2138 = sbr.rel (0) target = $region33
    $region32: #{forward.7} parent=1 // pred_region
      _
    $region33: #{forward.7} parent=1 // pred_fallthru
      _
    // Predicated region
    $region34: #{forward.7} parent=1 // pred_check
      _
    $region35: #{forward.7} parent=1 // pred_check_branch
      %2140 = sbr.rel (0) target = $region37
    $region36: #{forward.7} parent=1 // pred_region
      _
    $region37: #{forward.7} parent=1 // pred_fallthru
      _
    %2141 = vsyncpa [#allocation4], 1
    %2142 = vsyncpa [#allocation6], 1

// kernel: forward.8
$region0: #{forward.8}
  #allocation0 [shape = 'u32[]', space=smem, size = 0x4, offset = 0x4, fixed_abs, tag = 'smem constant byte address 0x4 - core index']
  #allocation1 [shape = 'u32[144,128]{1,0:T(1,128)}', space=vmem, size = 0x12000, scoped, tag = 'internal scratch']
  #allocation2 [shape = 'bf16[2,10,10,128]{3,2,1,0:T(8,128)(2,1)}', space=vmem, size = 0x14000, scoped, tag = 'scratch operand']
  %s0 = inlined_call_operand.vmem [shape: bf16[2,8,8,128], index: 0, kind: input, shape index: {}]
  %s1 = inlined_call_operand.hbm [shape: bf16[1152,128], index: 1, kind: input, shape index: {}]
  %s2 = inlined_call_operand.hbm [shape: f32[1,128], index: 2, kind: input, shape index: {}]
  %s3 = inlined_call_operand.hbm [shape: f32[1,128], index: 3, kind: input, shape index: {}]
  %s4 = inlined_call_operand.vmem [shape: bf16[2,8,8,128], index: 4, kind: output, shape index: {}]
  %s5 = sld [smem:[#allocation0]]
  $region38: #{forward.8} parent=0
    _
  %s7 = ssub.s32 1, %s5
  %s8 = scalar_select 0, %s7, %s5
  $region1: #{forward.8} parent=0
    #allocation3 [shape = 'u8[294912]{0}', space=vmem, size = 0x48000, scoped, tag = 'input window, operand 1, single buffered']
    #allocation4 [shape = 's32[1]{0}', space=sflag, size = 0x4, scoped, tag = 'scoped memory for forward.8']
    #allocation5 [shape = 'u8[512]{0}', space=vmem, size = 0x400, scoped, tag = 'input window, operand 2, single buffered']
    #allocation6 [shape = 's32[1]{0}', space=sflag, size = 0x4, scoped, tag = 'scoped memory for forward.8']
    #allocation7 [shape = 'u8[512]{0}', space=vmem, size = 0x400, scoped, tag = 'input window, operand 3, single buffered']
    %9 = vsyncpa [#allocation4], 0
    %10 = vsyncpa [#allocation6], 0
    // Predicated region
    $region2: #{forward.8} parent=1 // pred_check
      _
    $region3: #{forward.8} parent=1 // pred_check_branch
      %12 = sbr.rel (0) target = $region5
    $region4: #{forward.8} parent=1 // pred_region
      _
    $region5: #{forward.8} parent=1 // pred_fallthru
      _
    // Predicated region
    $region6: #{forward.8} parent=1 // pred_check
      _
    $region7: #{forward.8} parent=1 // pred_check_branch
      %14 = sbr.rel (0) target = $region9
    $region8: #{forward.8} parent=1 // pred_region
      %s16 = ssub.s32 9216, 9216
      %17 = vsyncadd [#allocation4], %s16
      %s18 = sshll.u32 [#allocation3], 4
      %s19 = int_to_ptr.vmem [resolvable:$true] %s18
      %24 = dma.hbm_to_vmem [thread:$0]  %s1, 9216, %s19, [#allocation4], 64, 64, 4
    $region9: #{forward.8} parent=1 // pred_fallthru
      _
    // Predicated region
    $region10: #{forward.8} parent=1 // pred_check
      _
    $region11: #{forward.8} parent=1 // pred_check_branch
      %26 = sbr.rel (0) target = $region13
    $region12: #{forward.8} parent=1 // pred_region
      %s28 = ssub.s32 16, 16
      %29 = vsyncadd [#allocation6], %s28
      %s31 = sshll.u32 [#allocation5], 4
      %s32 = int_to_ptr.vmem [resolvable:$true] %s31
      %34 = dma.hbm_to_vmem [thread:$0]  %s2, 16, %s32, [#allocation6]
    $region13: #{forward.8} parent=1 // pred_fallthru
      _
    // Predicated region
    $region14: #{forward.8} parent=1 // pred_check
      _
    $region15: #{forward.8} parent=1 // pred_check_branch
      %36 = sbr.rel (0) target = $region17
    $region16: #{forward.8} parent=1 // pred_region
      %s38 = ssub.s32 16, 16
      %39 = vsyncadd [#allocation6], %s38
      %s41 = sshll.u32 [#allocation7], 4
      %s42 = int_to_ptr.vmem [resolvable:$true] %s41
      %44 = dma.hbm_to_vmem [thread:$0]  %s3, 16, %s42, [#allocation6]
    $region17: #{forward.8} parent=1 // pred_fallthru
      _
    // Predicated region
    $region18: #{forward.8} parent=1 // pred_check
      _
    $region19: #{forward.8} parent=1 // pred_check_branch
      %46 = sbr.rel (0) target = $region21
    $region20: #{forward.8} parent=1 // pred_region
      %47 = dma.done [#allocation4], 9216
    $region21: #{forward.8} parent=1 // pred_fallthru
      _
    // Predicated region
    $region22: #{forward.8} parent=1 // pred_check
      _
    $region23: #{forward.8} parent=1 // pred_check_branch
      %49 = sbr.rel (0) target = $region25
    $region24: #{forward.8} parent=1 // pred_region
      %50 = dma.done [#allocation6], 16
    $region25: #{forward.8} parent=1 // pred_fallthru
      _
    // Predicated region
    $region26: #{forward.8} parent=1 // pred_check
      _
    $region27: #{forward.8} parent=1 // pred_check_branch
      %52 = sbr.rel (0) target = $region29
    $region28: #{forward.8} parent=1 // pred_region
      %53 = dma.done [#allocation6], 16
    $region29: #{forward.8} parent=1 // pred_fallthru
      _
    %55 = vst [vmem:[#allocation2] sm:$0xf] 0
    %56 = vst [vmem:[#allocation2 + $0x4] sm:$0x1] 0
    %57 = vst [vmem:[#allocation2 + $0x8] sm:$0xf] 0
    %58 = vst [vmem:[#allocation2 + $0xc] sm:$0x1] 0
    %59 = vst [vmem:[#allocation2 + $0x10] sm:$0xf] 0
    %60 = vst [vmem:[#allocation2 + $0x14] sm:$0x1] 0
    %61 = vst [vmem:[#allocation2 + $0x18] sm:$0xf] 0
    %62 = vst [vmem:[#allocation2 + $0x1c] sm:$0x1] 0
    %63 = vst [vmem:[#allocation2 + $0x20] sm:$0xf] 0
    %64 = vst [vmem:[#allocation2 + $0x24] sm:$0x1] 0
    %65 = vst [vmem:[#allocation2 + $0x28] sm:$0xf] 0
    %66 = vst [vmem:[#allocation2 + $0x2c] sm:$0x1] 0
    %67 = vst [vmem:[#allocation2 + $0x30] sm:$0xf] 0
    %68 = vst [vmem:[#allocation2 + $0x34] sm:$0x1] 0
    %69 = vst [vmem:[#allocation2 + $0x38] sm:$0xf] 0
    %70 = vst [vmem:[#allocation2 + $0x3c] sm:$0x1] 0
    %71 = vst [vmem:[#allocation2 + $0x40] sm:$0xf] 0
    %72 = vst [vmem:[#allocation2 + $0x44] sm:$0x1] 0
    %73 = vst [vmem:[#allocation2 + $0x48] sm:$0xf] 0
    %74 = vst [vmem:[#allocation2 + $0x4c] sm:$0x1] 0
    %75 = vst [vmem:[#allocation2 + $0x50] sm:$0xf] 0
    %76 = vst [vmem:[#allocation2 + $0x54] sm:$0x1] 0
    %77 = vst [vmem:[#allocation2 + $0x58] sm:$0xf] 0
    %78 = vst [vmem:[#allocation2 + $0x5c] sm:$0x1] 0
    %79 = vst [vmem:[#allocation2 + $0x60] sm:$0xf] 0
    %80 = vst [vmem:[#allocation2 + $0x64] sm:$0x1] 0
    %81 = vst [vmem:[#allocation2 + $0x68] sm:$0xf] 0
    %82 = vst [vmem:[#allocation2 + $0x6c] sm:$0x1] 0
    %83 = vst [vmem:[#allocation2 + $0x70] sm:$0xf] 0
    %84 = vst [vmem:[#allocation2 + $0x74] sm:$0x1] 0
    %85 = vst [vmem:[#allocation2 + $0x78] sm:$0xf] 0
    %86 = vst [vmem:[#allocation2 + $0x7c] sm:$0x1] 0
    %87 = vst [vmem:[#allocation2 + $0x80] sm:$0xf] 0
    %88 = vst [vmem:[#allocation2 + $0x84] sm:$0x1] 0
    %89 = vst [vmem:[#allocation2 + $0x88] sm:$0xf] 0
    %90 = vst [vmem:[#allocation2 + $0x8c] sm:$0x1] 0
    %91 = vst [vmem:[#allocation2 + $0x90] sm:$0xf] 0
    %92 = vst [vmem:[#allocation2 + $0x94] sm:$0x1] 0
    %93 = vst [vmem:[#allocation2 + $0x98] sm:$0xf] 0
    %94 = vst [vmem:[#allocation2 + $0x9c] sm:$0x1] 0
    %v95 = vld [vmem:[%s0] sm:$0xf]
    %v96 = vld [vmem:[%s0 + $0x4] sm:$0xf]
    %v97 = vld [vmem:[%s0 + $0x8] sm:$0xf]
    %v98 = vld [vmem:[%s0 + $0xc] sm:$0xf]
    %v99 = vld [vmem:[%s0 + $0x10] sm:$0xf]
    %v100 = vld [vmem:[%s0 + $0x14] sm:$0xf]
    %v101 = vld [vmem:[%s0 + $0x18] sm:$0xf]
    %v102 = vld [vmem:[%s0 + $0x1c] sm:$0xf]
    %v103 = vld [vmem:[%s0 + $0x20] sm:$0xf]
    %v104 = vld [vmem:[%s0 + $0x24] sm:$0xf]
    %v105 = vld [vmem:[%s0 + $0x28] sm:$0xf]
    %v106 = vld [vmem:[%s0 + $0x2c] sm:$0xf]
    %v107 = vld [vmem:[%s0 + $0x30] sm:$0xf]
    %v108 = vld [vmem:[%s0 + $0x34] sm:$0xf]
    %v109 = vld [vmem:[%s0 + $0x38] sm:$0xf]
    %v110 = vld [vmem:[%s0 + $0x3c] sm:$0xf]
    %v112 = vshrl.u32 %v95, 16
    %v114 = vrot.slane %v112, 7
    %v115 = vshll.u32 %v95, 16
    %v117 = vor.u32 %v114, %v115
    %v118 = vrot.slane %v114, 4
    %v120 = vshrl.u32 %v96, 16
    %v122 = vrot.slane %v120, 7
    %v123 = vshll.u32 %v96, 16
    %v125 = vor.u32 %v122, %v123
    %v126 = vrot.slane %v122, 4
    %v128 = vshrl.u32 %v97, 16
    %v130 = vrot.slane %v128, 7
    %v131 = vshll.u32 %v97, 16
    %v133 = vor.u32 %v130, %v131
    %v134 = vrot.slane %v130, 4
    %v136 = vshrl.u32 %v98, 16
    %v138 = vrot.slane %v136, 7
    %v139 = vshll.u32 %v98, 16
    %v141 = vor.u32 %v138, %v139
    %v142 = vrot.slane %v138, 4
    %v144 = vshrl.u32 %v99, 16
    %v146 = vrot.slane %v144, 7
    %v147 = vshll.u32 %v99, 16
    %v149 = vor.u32 %v146, %v147
    %v150 = vrot.slane %v146, 4
    %v152 = vshrl.u32 %v100, 16
    %v154 = vrot.slane %v152, 7
    %v155 = vshll.u32 %v100, 16
    %v157 = vor.u32 %v154, %v155
    %v158 = vrot.slane %v154, 4
    %v160 = vshrl.u32 %v101, 16
    %v162 = vrot.slane %v160, 7
    %v163 = vshll.u32 %v101, 16
    %v165 = vor.u32 %v162, %v163
    %v166 = vrot.slane %v162, 4
    %v168 = vshrl.u32 %v102, 16
    %v170 = vrot.slane %v168, 7
    %v171 = vshll.u32 %v102, 16
    %v173 = vor.u32 %v170, %v171
    %v174 = vrot.slane %v170, 4
    %v176 = vshrl.u32 %v103, 16
    %v178 = vrot.slane %v176, 7
    %v179 = vshll.u32 %v103, 16
    %v181 = vor.u32 %v178, %v179
    %v182 = vrot.slane %v178, 4
    %v184 = vshrl.u32 %v104, 16
    %v186 = vrot.slane %v184, 7
    %v187 = vshll.u32 %v104, 16
    %v189 = vor.u32 %v186, %v187
    %v190 = vrot.slane %v186, 4
    %v192 = vshrl.u32 %v105, 16
    %v194 = vrot.slane %v192, 7
    %v195 = vshll.u32 %v105, 16
    %v197 = vor.u32 %v194, %v195
    %v198 = vrot.slane %v194, 4
    %v200 = vshrl.u32 %v106, 16
    %v202 = vrot.slane %v200, 7
    %v203 = vshll.u32 %v106, 16
    %v205 = vor.u32 %v202, %v203
    %v206 = vrot.slane %v202, 4
    %v208 = vshrl.u32 %v107, 16
    %v210 = vrot.slane %v208, 7
    %v211 = vshll.u32 %v107, 16
    %v213 = vor.u32 %v210, %v211
    %v214 = vrot.slane %v210, 4
    %v216 = vshrl.u32 %v108, 16
    %v218 = vrot.slane %v216, 7
    %v219 = vshll.u32 %v108, 16
    %v221 = vor.u32 %v218, %v219
    %v222 = vrot.slane %v218, 4
    %v224 = vshrl.u32 %v109, 16
    %v226 = vrot.slane %v224, 7
    %v227 = vshll.u32 %v109, 16
    %v229 = vor.u32 %v226, %v227
    %v230 = vrot.slane %v226, 4
    %v232 = vshrl.u32 %v110, 16
    %v234 = vrot.slane %v232, 7
    %v235 = vshll.u32 %v110, 16
    %v237 = vor.u32 %v234, %v235
    %v238 = vrot.slane %v234, 4
    %s271 = scalar_lea.vmem [#allocation2], 8
    %vm272 = vcmask 1043456
    %vm273 = vsmask.f32 7938
    %vm274 = vmand %vm272, %vm273
    %v275 = vld [vmem:[%s271] sm:$0xf]
    %v276 = vsel %vm274, %v117, %v275
    %277 = vst [vmem:[%s271] sm:$0xf] %v276
    %vm278 = vcmask 1040384
    %vm279 = vsmask.f32 256
    %vm280 = vmand %vm278, %vm279
    %v281 = vld [vmem:[%s271 + $0x4] sm:$0x1]
    %v282 = vsel %vm280, %v118, %v281
    %283 = vst [vmem:[%s271 + $0x4] sm:$0x1] %v282
    %v284 = vld [vmem:[%s271 + $0x8] sm:$0xf]
    %v285 = vsel %vm274, %v125, %v284
    %286 = vst [vmem:[%s271 + $0x8] sm:$0xf] %v285
    %v287 = vld [vmem:[%s271 + $0xc] sm:$0x1]
    %v288 = vsel %vm280, %v126, %v287
    %289 = vst [vmem:[%s271 + $0xc] sm:$0x1] %v288
    %v290 = vld [vmem:[%s271 + $0x10] sm:$0xf]
    %v291 = vsel %vm274, %v133, %v290
    %292 = vst [vmem:[%s271 + $0x10] sm:$0xf] %v291
    %v293 = vld [vmem:[%s271 + $0x14] sm:$0x1]
    %v294 = vsel %vm280, %v134, %v293
    %295 = vst [vmem:[%s271 + $0x14] sm:$0x1] %v294
    %v296 = vld [vmem:[%s271 + $0x18] sm:$0xf]
    %v297 = vsel %vm274, %v141, %v296
    %298 = vst [vmem:[%s271 + $0x18] sm:$0xf] %v297
    %v299 = vld [vmem:[%s271 + $0x1c] sm:$0x1]
    %v300 = vsel %vm280, %v142, %v299
    %301 = vst [vmem:[%s271 + $0x1c] sm:$0x1] %v300
    %v302 = vld [vmem:[%s271 + $0x20] sm:$0xf]
    %v303 = vsel %vm274, %v149, %v302
    %304 = vst [vmem:[%s271 + $0x20] sm:$0xf] %v303
    %v305 = vld [vmem:[%s271 + $0x24] sm:$0x1]
    %v306 = vsel %vm280, %v150, %v305
    %307 = vst [vmem:[%s271 + $0x24] sm:$0x1] %v306
    %v308 = vld [vmem:[%s271 + $0x28] sm:$0xf]
    %v309 = vsel %vm274, %v157, %v308
    %310 = vst [vmem:[%s271 + $0x28] sm:$0xf] %v309
    %v311 = vld [vmem:[%s271 + $0x2c] sm:$0x1]
    %v312 = vsel %vm280, %v158, %v311
    %313 = vst [vmem:[%s271 + $0x2c] sm:$0x1] %v312
    %v314 = vld [vmem:[%s271 + $0x30] sm:$0xf]
    %v315 = vsel %vm274, %v165, %v314
    %316 = vst [vmem:[%s271 + $0x30] sm:$0xf] %v315
    %v317 = vld [vmem:[%s271 + $0x34] sm:$0x1]
    %v318 = vsel %vm280, %v166, %v317
    %319 = vst [vmem:[%s271 + $0x34] sm:$0x1] %v318
    %v320 = vld [vmem:[%s271 + $0x38] sm:$0xf]
    %v321 = vsel %vm274, %v173, %v320
    %322 = vst [vmem:[%s271 + $0x38] sm:$0xf] %v321
    %v323 = vld [vmem:[%s271 + $0x3c] sm:$0x1]
    %v324 = vsel %vm280, %v174, %v323
    %325 = vst [vmem:[%s271 + $0x3c] sm:$0x1] %v324
    %v326 = vld [vmem:[%s271 + $0x50] sm:$0xf]
    %v327 = vsel %vm274, %v181, %v326
    %328 = vst [vmem:[%s271 + $0x50] sm:$0xf] %v327
    %v329 = vld [vmem:[%s271 + $0x54] sm:$0x1]
    %v330 = vsel %vm280, %v182, %v329
    %331 = vst [vmem:[%s271 + $0x54] sm:$0x1] %v330
    %v332 = vld [vmem:[%s271 + $0x58] sm:$0xf]
    %v333 = vsel %vm274, %v189, %v332
    %334 = vst [vmem:[%s271 + $0x58] sm:$0xf] %v333
    %v335 = vld [vmem:[%s271 + $0x5c] sm:$0x1]
    %v336 = vsel %vm280, %v190, %v335
    %337 = vst [vmem:[%s271 + $0x5c] sm:$0x1] %v336
    %v338 = vld [vmem:[%s271 + $0x60] sm:$0xf]
    %v339 = vsel %vm274, %v197, %v338
    %340 = vst [vmem:[%s271 + $0x60] sm:$0xf] %v339
    %v341 = vld [vmem:[%s271 + $0x64] sm:$0x1]
    %v342 = vsel %vm280, %v198, %v341
    %343 = vst [vmem:[%s271 + $0x64] sm:$0x1] %v342
    %v344 = vld [vmem:[%s271 + $0x68] sm:$0xf]
    %v345 = vsel %vm274, %v205, %v344
    %346 = vst [vmem:[%s271 + $0x68] sm:$0xf] %v345
    %v347 = vld [vmem:[%s271 + $0x6c] sm:$0x1]
    %v348 = vsel %vm280, %v206, %v347
    %349 = vst [vmem:[%s271 + $0x6c] sm:$0x1] %v348
    %v350 = vld [vmem:[%s271 + $0x70] sm:$0xf]
    %v351 = vsel %vm274, %v213, %v350
    %352 = vst [vmem:[%s271 + $0x70] sm:$0xf] %v351
    %v353 = vld [vmem:[%s271 + $0x74] sm:$0x1]
    %v354 = vsel %vm280, %v214, %v353
    %355 = vst [vmem:[%s271 + $0x74] sm:$0x1] %v354
    %v356 = vld [vmem:[%s271 + $0x78] sm:$0xf]
    %v357 = vsel %vm274, %v221, %v356
    %358 = vst [vmem:[%s271 + $0x78] sm:$0xf] %v357
    %v359 = vld [vmem:[%s271 + $0x7c] sm:$0x1]
    %v360 = vsel %vm280, %v222, %v359
    %361 = vst [vmem:[%s271 + $0x7c] sm:$0x1] %v360
    %v362 = vld [vmem:[%s271 + $0x80] sm:$0xf]
    %v363 = vsel %vm274, %v229, %v362
    %364 = vst [vmem:[%s271 + $0x80] sm:$0xf] %v363
    %v365 = vld [vmem:[%s271 + $0x84] sm:$0x1]
    %v366 = vsel %vm280, %v230, %v365
    %367 = vst [vmem:[%s271 + $0x84] sm:$0x1] %v366
    %v368 = vld [vmem:[%s271 + $0x88] sm:$0xf]
    %v369 = vsel %vm274, %v237, %v368
    %370 = vst [vmem:[%s271 + $0x88] sm:$0xf] %v369
    %v371 = vld [vmem:[%s271 + $0x8c] sm:$0x1]
    %v372 = vsel %vm280, %v238, %v371
    %373 = vst [vmem:[%s271 + $0x8c] sm:$0x1] %v372
    %v374 = vld [vmem:[#allocation2] sm:$0xf]
    %v375 = vld [vmem:[#allocation2 + $0x8] sm:$0xf]
    %v376 = vld [vmem:[#allocation2 + $0x10] sm:$0xf]
    %v377 = vld [vmem:[#allocation2 + $0x18] sm:$0xf]
    %v378 = vld [vmem:[#allocation2 + $0x20] sm:$0xf]
    %v379 = vld [vmem:[#allocation2 + $0x28] sm:$0xf]
    %v380 = vld [vmem:[#allocation2 + $0x30] sm:$0xf]
    %v381 = vld [vmem:[#allocation2 + $0x38] sm:$0xf]
    %v382 = vld [vmem:[#allocation2 + $0x50] sm:$0xf]
    %v383 = vld [vmem:[#allocation2 + $0x58] sm:$0xf]
    %v384 = vld [vmem:[#allocation2 + $0x60] sm:$0xf]
    %v385 = vld [vmem:[#allocation2 + $0x68] sm:$0xf]
    %v386 = vld [vmem:[#allocation2 + $0x70] sm:$0xf]
    %v387 = vld [vmem:[#allocation2 + $0x78] sm:$0xf]
    %v388 = vld [vmem:[#allocation2 + $0x80] sm:$0xf]
    %v389 = vld [vmem:[#allocation2 + $0x88] sm:$0xf]
    %v390 = vld [vmem:[#allocation2 + $0x4] sm:$0x1]
    %v391 = vld [vmem:[#allocation2 + $0xc] sm:$0x1]
    %v392 = vld [vmem:[#allocation2 + $0x14] sm:$0x1]
    %v393 = vld [vmem:[#allocation2 + $0x1c] sm:$0x1]
    %v394 = vld [vmem:[#allocation2 + $0x24] sm:$0x1]
    %v395 = vld [vmem:[#allocation2 + $0x2c] sm:$0x1]
    %v396 = vld [vmem:[#allocation2 + $0x34] sm:$0x1]
    %v397 = vld [vmem:[#allocation2 + $0x3c] sm:$0x1]
    %v398 = vld [vmem:[#allocation2 + $0x54] sm:$0x1]
    %v399 = vld [vmem:[#allocation2 + $0x5c] sm:$0x1]
    %v400 = vld [vmem:[#allocation2 + $0x64] sm:$0x1]
    %v401 = vld [vmem:[#allocation2 + $0x6c] sm:$0x1]
    %v402 = vld [vmem:[#allocation2 + $0x74] sm:$0x1]
    %v403 = vld [vmem:[#allocation2 + $0x7c] sm:$0x1]
    %v404 = vld [vmem:[#allocation2 + $0x84] sm:$0x1]
    %v405 = vld [vmem:[#allocation2 + $0x8c] sm:$0x1]
    %v406 = vld [vmem:[#allocation2] sm:$0xe]
    %v407 = vld [vmem:[#allocation2 + $0x8] sm:$0xe]
    %v408 = vld [vmem:[#allocation2 + $0x10] sm:$0xe]
    %v409 = vld [vmem:[#allocation2 + $0x18] sm:$0xe]
    %v410 = vld [vmem:[#allocation2 + $0x20] sm:$0xe]
    %v411 = vld [vmem:[#allocation2 + $0x28] sm:$0xe]
    %v412 = vld [vmem:[#allocation2 + $0x30] sm:$0xe]
    %v413 = vld [vmem:[#allocation2 + $0x38] sm:$0xe]
    %v414 = vld [vmem:[#allocation2 + $0x50] sm:$0xe]
    %v415 = vld [vmem:[#allocation2 + $0x58] sm:$0xe]
    %v416 = vld [vmem:[#allocation2 + $0x60] sm:$0xe]
    %v417 = vld [vmem:[#allocation2 + $0x68] sm:$0xe]
    %v418 = vld [vmem:[#allocation2 + $0x70] sm:$0xe]
    %v419 = vld [vmem:[#allocation2 + $0x78] sm:$0xe]
    %v420 = vld [vmem:[#allocation2 + $0x80] sm:$0xe]
    %v421 = vld [vmem:[#allocation2 + $0x88] sm:$0xe]
    %v422 = vld [vmem:[%s271] sm:$0xf]
    %v423 = vld [vmem:[%s271 + $0x8] sm:$0xf]
    %v424 = vld [vmem:[%s271 + $0x10] sm:$0xf]
    %v425 = vld [vmem:[%s271 + $0x18] sm:$0xf]
    %v426 = vld [vmem:[%s271 + $0x20] sm:$0xf]
    %v427 = vld [vmem:[%s271 + $0x28] sm:$0xf]
    %v428 = vld [vmem:[%s271 + $0x30] sm:$0xf]
    %v429 = vld [vmem:[%s271 + $0x38] sm:$0xf]
    %v430 = vld [vmem:[%s271 + $0x50] sm:$0xf]
    %v431 = vld [vmem:[%s271 + $0x58] sm:$0xf]
    %v432 = vld [vmem:[%s271 + $0x60] sm:$0xf]
    %v433 = vld [vmem:[%s271 + $0x68] sm:$0xf]
    %v434 = vld [vmem:[%s271 + $0x70] sm:$0xf]
    %v435 = vld [vmem:[%s271 + $0x78] sm:$0xf]
    %v436 = vld [vmem:[%s271 + $0x80] sm:$0xf]
    %v437 = vld [vmem:[%s271 + $0x88] sm:$0xf]
    %v438 = vld [vmem:[%s271 + $0x4] sm:$0x1]
    %v439 = vld [vmem:[%s271 + $0xc] sm:$0x1]
    %v440 = vld [vmem:[%s271 + $0x14] sm:$0x1]
    %v441 = vld [vmem:[%s271 + $0x1c] sm:$0x1]
    %v442 = vld [vmem:[%s271 + $0x24] sm:$0x1]
    %v443 = vld [vmem:[%s271 + $0x2c] sm:$0x1]
    %v444 = vld [vmem:[%s271 + $0x34] sm:$0x1]
    %v445 = vld [vmem:[%s271 + $0x3c] sm:$0x1]
    %v446 = vld [vmem:[%s271 + $0x54] sm:$0x1]
    %v447 = vld [vmem:[%s271 + $0x5c] sm:$0x1]
    %v448 = vld [vmem:[%s271 + $0x64] sm:$0x1]
    %v449 = vld [vmem:[%s271 + $0x6c] sm:$0x1]
    %v450 = vld [vmem:[%s271 + $0x74] sm:$0x1]
    %v451 = vld [vmem:[%s271 + $0x7c] sm:$0x1]
    %v452 = vld [vmem:[%s271 + $0x84] sm:$0x1]
    %v453 = vld [vmem:[%s271 + $0x8c] sm:$0x1]
    %v454 = vld [vmem:[%s271] sm:$0xe]
    %v455 = vld [vmem:[%s271 + $0x8] sm:$0xe]
    %v456 = vld [vmem:[%s271 + $0x10] sm:$0xe]
    %v457 = vld [vmem:[%s271 + $0x18] sm:$0xe]
    %v458 = vld [vmem:[%s271 + $0x20] sm:$0xe]
    %v459 = vld [vmem:[%s271 + $0x28] sm:$0xe]
    %v460 = vld [vmem:[%s271 + $0x30] sm:$0xe]
    %v461 = vld [vmem:[%s271 + $0x38] sm:$0xe]
    %v462 = vld [vmem:[%s271 + $0x50] sm:$0xe]
    %v463 = vld [vmem:[%s271 + $0x58] sm:$0xe]
    %v464 = vld [vmem:[%s271 + $0x60] sm:$0xe]
    %v465 = vld [vmem:[%s271 + $0x68] sm:$0xe]
    %v466 = vld [vmem:[%s271 + $0x70] sm:$0xe]
    %v467 = vld [vmem:[%s271 + $0x78] sm:$0xe]
    %v468 = vld [vmem:[%s271 + $0x80] sm:$0xe]
    %v469 = vld [vmem:[%s271 + $0x88] sm:$0xe]
    %s470 = scalar_lea.vmem [#allocation2], 16
    %v471 = vld [vmem:[%s470] sm:$0xf]
    %v472 = vld [vmem:[%s470 + $0x8] sm:$0xf]
    %v473 = vld [vmem:[%s470 + $0x10] sm:$0xf]
    %v474 = vld [vmem:[%s470 + $0x18] sm:$0xf]
    %v475 = vld [vmem:[%s470 + $0x20] sm:$0xf]
    %v476 = vld [vmem:[%s470 + $0x28] sm:$0xf]
    %v477 = vld [vmem:[%s470 + $0x30] sm:$0xf]
    %v478 = vld [vmem:[%s470 + $0x38] sm:$0xf]
    %v479 = vld [vmem:[%s470 + $0x50] sm:$0xf]
    %v480 = vld [vmem:[%s470 + $0x58] sm:$0xf]
    %v481 = vld [vmem:[%s470 + $0x60] sm:$0xf]
    %v482 = vld [vmem:[%s470 + $0x68] sm:$0xf]
    %v483 = vld [vmem:[%s470 + $0x70] sm:$0xf]
    %v484 = vld [vmem:[%s470 + $0x78] sm:$0xf]
    %v485 = vld [vmem:[%s470 + $0x80] sm:$0xf]
    %v486 = vld [vmem:[%s470 + $0x88] sm:$0xf]
    %v487 = vld [vmem:[%s470 + $0x4] sm:$0x1]
    %v488 = vld [vmem:[%s470 + $0xc] sm:$0x1]
    %v489 = vld [vmem:[%s470 + $0x14] sm:$0x1]
    %v490 = vld [vmem:[%s470 + $0x1c] sm:$0x1]
    %v491 = vld [vmem:[%s470 + $0x24] sm:$0x1]
    %v492 = vld [vmem:[%s470 + $0x2c] sm:$0x1]
    %v493 = vld [vmem:[%s470 + $0x34] sm:$0x1]
    %v494 = vld [vmem:[%s470 + $0x3c] sm:$0x1]
    %v495 = vld [vmem:[%s470 + $0x54] sm:$0x1]
    %v496 = vld [vmem:[%s470 + $0x5c] sm:$0x1]
    %v497 = vld [vmem:[%s470 + $0x64] sm:$0x1]
    %v498 = vld [vmem:[%s470 + $0x6c] sm:$0x1]
    %v499 = vld [vmem:[%s470 + $0x74] sm:$0x1]
    %v500 = vld [vmem:[%s470 + $0x7c] sm:$0x1]
    %v501 = vld [vmem:[%s470 + $0x84] sm:$0x1]
    %v502 = vld [vmem:[%s470 + $0x8c] sm:$0x1]
    %v503 = vld [vmem:[%s470] sm:$0xe]
    %v504 = vld [vmem:[%s470 + $0x8] sm:$0xe]
    %v505 = vld [vmem:[%s470 + $0x10] sm:$0xe]
    %v506 = vld [vmem:[%s470 + $0x18] sm:$0xe]
    %v507 = vld [vmem:[%s470 + $0x20] sm:$0xe]
    %v508 = vld [vmem:[%s470 + $0x28] sm:$0xe]
    %v509 = vld [vmem:[%s470 + $0x30] sm:$0xe]
    %v510 = vld [vmem:[%s470 + $0x38] sm:$0xe]
    %v511 = vld [vmem:[%s470 + $0x50] sm:$0xe]
    %v512 = vld [vmem:[%s470 + $0x58] sm:$0xe]
    %v513 = vld [vmem:[%s470 + $0x60] sm:$0xe]
    %v514 = vld [vmem:[%s470 + $0x68] sm:$0xe]
    %v515 = vld [vmem:[%s470 + $0x70] sm:$0xe]
    %v516 = vld [vmem:[%s470 + $0x78] sm:$0xe]
    %v517 = vld [vmem:[%s470 + $0x80] sm:$0xe]
    %v518 = vld [vmem:[%s470 + $0x88] sm:$0xe]
    %v551 = vunpack.c.l.b16 %v374
    %v552 = vunpack.c.l.b16 %v390
    %v553 = vunpack.c.l.b16 %v375
    %v554 = vunpack.c.l.b16 %v391
    %v555 = vunpack.c.l.b16 %v376
    %v556 = vunpack.c.l.b16 %v392
    %v557 = vunpack.c.l.b16 %v377
    %v558 = vunpack.c.l.b16 %v393
    %v559 = vunpack.c.l.b16 %v378
    %v560 = vunpack.c.l.b16 %v394
    %v561 = vunpack.c.l.b16 %v379
    %v562 = vunpack.c.l.b16 %v395
    %v563 = vunpack.c.l.b16 %v380
    %v564 = vunpack.c.l.b16 %v396
    %v565 = vunpack.c.l.b16 %v381
    %v566 = vunpack.c.l.b16 %v397
    %v567 = vunpack.c.l.b16 %v382
    %v568 = vunpack.c.l.b16 %v398
    %v569 = vunpack.c.l.b16 %v383
    %v570 = vunpack.c.l.b16 %v399
    %v571 = vunpack.c.l.b16 %v384
    %v572 = vunpack.c.l.b16 %v400
    %v573 = vunpack.c.l.b16 %v385
    %v574 = vunpack.c.l.b16 %v401
    %v575 = vunpack.c.l.b16 %v386
    %v576 = vunpack.c.l.b16 %v402
    %v577 = vunpack.c.l.b16 %v387
    %v578 = vunpack.c.l.b16 %v403
    %v579 = vunpack.c.l.b16 %v388
    %v580 = vunpack.c.l.b16 %v404
    %v581 = vunpack.c.l.b16 %v389
    %v582 = vunpack.c.l.b16 %v405
    %v583 = vpack.c.b16 %v552, %v551
    %v584 = vpack.c.b16 %v554, %v553
    %v585 = vpack.c.b16 %v556, %v555
    %v586 = vpack.c.b16 %v558, %v557
    %v587 = vpack.c.b16 %v560, %v559
    %v588 = vpack.c.b16 %v562, %v561
    %v589 = vpack.c.b16 %v564, %v563
    %v590 = vpack.c.b16 %v566, %v565
    %v591 = vpack.c.b16 %v568, %v567
    %v592 = vpack.c.b16 %v570, %v569
    %v593 = vpack.c.b16 %v572, %v571
    %v594 = vpack.c.b16 %v574, %v573
    %v595 = vpack.c.b16 %v576, %v575
    %v596 = vpack.c.b16 %v578, %v577
    %v597 = vpack.c.b16 %v580, %v579
    %v598 = vpack.c.b16 %v582, %v581
    %v600 = vshrl.u32 %v583, 16
    %v602 = vshll.u32 %v583, 16
    %v604 = vrot.slane %v602, 1
    %v605 = vor.u32 %v600, %v604
    %v607 = vshrl.u32 %v584, 16
    %v609 = vshll.u32 %v584, 16
    %v611 = vrot.slane %v609, 1
    %v612 = vor.u32 %v607, %v611
    %v614 = vshrl.u32 %v585, 16
    %v616 = vshll.u32 %v585, 16
    %v618 = vrot.slane %v616, 1
    %v619 = vor.u32 %v614, %v618
    %v621 = vshrl.u32 %v586, 16
    %v623 = vshll.u32 %v586, 16
    %v625 = vrot.slane %v623, 1
    %v626 = vor.u32 %v621, %v625
    %v628 = vshrl.u32 %v587, 16
    %v630 = vshll.u32 %v587, 16
    %v632 = vrot.slane %v630, 1
    %v633 = vor.u32 %v628, %v632
    %v635 = vshrl.u32 %v588, 16
    %v637 = vshll.u32 %v588, 16
    %v639 = vrot.slane %v637, 1
    %v640 = vor.u32 %v635, %v639
    %v642 = vshrl.u32 %v589, 16
    %v644 = vshll.u32 %v589, 16
    %v646 = vrot.slane %v644, 1
    %v647 = vor.u32 %v642, %v646
    %v649 = vshrl.u32 %v590, 16
    %v651 = vshll.u32 %v590, 16
    %v653 = vrot.slane %v651, 1
    %v654 = vor.u32 %v649, %v653
    %v656 = vshrl.u32 %v591, 16
    %v658 = vshll.u32 %v591, 16
    %v660 = vrot.slane %v658, 1
    %v661 = vor.u32 %v656, %v660
    %v663 = vshrl.u32 %v592, 16
    %v665 = vshll.u32 %v592, 16
    %v667 = vrot.slane %v665, 1
    %v668 = vor.u32 %v663, %v667
    %v670 = vshrl.u32 %v593, 16
    %v672 = vshll.u32 %v593, 16
    %v674 = vrot.slane %v672, 1
    %v675 = vor.u32 %v670, %v674
    %v677 = vshrl.u32 %v594, 16
    %v679 = vshll.u32 %v594, 16
    %v681 = vrot.slane %v679, 1
    %v682 = vor.u32 %v677, %v681
    %v684 = vshrl.u32 %v595, 16
    %v686 = vshll.u32 %v595, 16
    %v688 = vrot.slane %v686, 1
    %v689 = vor.u32 %v684, %v688
    %v691 = vshrl.u32 %v596, 16
    %v693 = vshll.u32 %v596, 16
    %v695 = vrot.slane %v693, 1
    %v696 = vor.u32 %v691, %v695
    %v698 = vshrl.u32 %v597, 16
    %v700 = vshll.u32 %v597, 16
    %v702 = vrot.slane %v700, 1
    %v703 = vor.u32 %v698, %v702
    %v705 = vshrl.u32 %v598, 16
    %v707 = vshll.u32 %v598, 16
    %v709 = vrot.slane %v707, 1
    %v710 = vor.u32 %v705, %v709
    %v727 = vunpack.c.l.b16 %v406
    %v728 = vunpack.c.l.b16 %v407
    %v729 = vunpack.c.l.b16 %v408
    %v730 = vunpack.c.l.b16 %v409
    %v731 = vunpack.c.l.b16 %v410
    %v732 = vunpack.c.l.b16 %v411
    %v733 = vunpack.c.l.b16 %v412
    %v734 = vunpack.c.l.b16 %v413
    %v735 = vunpack.c.l.b16 %v414
    %v736 = vunpack.c.l.b16 %v415
    %v737 = vunpack.c.l.b16 %v416
    %v738 = vunpack.c.l.b16 %v417
    %v739 = vunpack.c.l.b16 %v418
    %v740 = vunpack.c.l.b16 %v419
    %v741 = vunpack.c.l.b16 %v420
    %v742 = vunpack.c.l.b16 %v421
    %v743 = vpack.c.b16 %v552, %v727
    %v744 = vpack.c.b16 %v554, %v728
    %v745 = vpack.c.b16 %v556, %v729
    %v746 = vpack.c.b16 %v558, %v730
    %v747 = vpack.c.b16 %v560, %v731
    %v748 = vpack.c.b16 %v562, %v732
    %v749 = vpack.c.b16 %v564, %v733
    %v750 = vpack.c.b16 %v566, %v734
    %v751 = vpack.c.b16 %v568, %v735
    %v752 = vpack.c.b16 %v570, %v736
    %v753 = vpack.c.b16 %v572, %v737
    %v754 = vpack.c.b16 %v574, %v738
    %v755 = vpack.c.b16 %v576, %v739
    %v756 = vpack.c.b16 %v578, %v740
    %v757 = vpack.c.b16 %v580, %v741
    %v758 = vpack.c.b16 %v582, %v742
    %v759 = vrot.slane %v743, 1
    %v760 = vrot.slane %v744, 1
    %v761 = vrot.slane %v745, 1
    %v762 = vrot.slane %v746, 1
    %v763 = vrot.slane %v747, 1
    %v764 = vrot.slane %v748, 1
    %v765 = vrot.slane %v749, 1
    %v766 = vrot.slane %v750, 1
    %v767 = vrot.slane %v751, 1
    %v768 = vrot.slane %v752, 1
    %v769 = vrot.slane %v753, 1
    %v770 = vrot.slane %v754, 1
    %v771 = vrot.slane %v755, 1
    %v772 = vrot.slane %v756, 1
    %v773 = vrot.slane %v757, 1
    %v774 = vrot.slane %v758, 1
    %v807 = vunpack.c.l.b16 %v422
    %v808 = vunpack.c.l.b16 %v438
    %v809 = vunpack.c.l.b16 %v423
    %v810 = vunpack.c.l.b16 %v439
    %v811 = vunpack.c.l.b16 %v424
    %v812 = vunpack.c.l.b16 %v440
    %v813 = vunpack.c.l.b16 %v425
    %v814 = vunpack.c.l.b16 %v441
    %v815 = vunpack.c.l.b16 %v426
    %v816 = vunpack.c.l.b16 %v442
    %v817 = vunpack.c.l.b16 %v427
    %v818 = vunpack.c.l.b16 %v443
    %v819 = vunpack.c.l.b16 %v428
    %v820 = vunpack.c.l.b16 %v444
    %v821 = vunpack.c.l.b16 %v429
    %v822 = vunpack.c.l.b16 %v445
    %v823 = vunpack.c.l.b16 %v430
    %v824 = vunpack.c.l.b16 %v446
    %v825 = vunpack.c.l.b16 %v431
    %v826 = vunpack.c.l.b16 %v447
    %v827 = vunpack.c.l.b16 %v432
    %v828 = vunpack.c.l.b16 %v448
    %v829 = vunpack.c.l.b16 %v433
    %v830 = vunpack.c.l.b16 %v449
    %v831 = vunpack.c.l.b16 %v434
    %v832 = vunpack.c.l.b16 %v450
    %v833 = vunpack.c.l.b16 %v435
    %v834 = vunpack.c.l.b16 %v451
    %v835 = vunpack.c.l.b16 %v436
    %v836 = vunpack.c.l.b16 %v452
    %v837 = vunpack.c.l.b16 %v437
    %v838 = vunpack.c.l.b16 %v453
    %v839 = vpack.c.b16 %v808, %v807
    %v840 = vpack.c.b16 %v810, %v809
    %v841 = vpack.c.b16 %v812, %v811
    %v842 = vpack.c.b16 %v814, %v813
    %v843 = vpack.c.b16 %v816, %v815
    %v844 = vpack.c.b16 %v818, %v817
    %v845 = vpack.c.b16 %v820, %v819
    %v846 = vpack.c.b16 %v822, %v821
    %v847 = vpack.c.b16 %v824, %v823
    %v848 = vpack.c.b16 %v826, %v825
    %v849 = vpack.c.b16 %v828, %v827
    %v850 = vpack.c.b16 %v830, %v829
    %v851 = vpack.c.b16 %v832, %v831
    %v852 = vpack.c.b16 %v834, %v833
    %v853 = vpack.c.b16 %v836, %v835
    %v854 = vpack.c.b16 %v838, %v837
    %v856 = vshrl.u32 %v839, 16
    %v858 = vshll.u32 %v839, 16
    %v860 = vrot.slane %v858, 1
    %v861 = vor.u32 %v856, %v860
    %v863 = vshrl.u32 %v840, 16
    %v865 = vshll.u32 %v840, 16
    %v867 = vrot.slane %v865, 1
    %v868 = vor.u32 %v863, %v867
    %v870 = vshrl.u32 %v841, 16
    %v872 = vshll.u32 %v841, 16
    %v874 = vrot.slane %v872, 1
    %v875 = vor.u32 %v870, %v874
    %v877 = vshrl.u32 %v842, 16
    %v879 = vshll.u32 %v842, 16
    %v881 = vrot.slane %v879, 1
    %v882 = vor.u32 %v877, %v881
    %v884 = vshrl.u32 %v843, 16
    %v886 = vshll.u32 %v843, 16
    %v888 = vrot.slane %v886, 1
    %v889 = vor.u32 %v884, %v888
    %v891 = vshrl.u32 %v844, 16
    %v893 = vshll.u32 %v844, 16
    %v895 = vrot.slane %v893, 1
    %v896 = vor.u32 %v891, %v895
    %v898 = vshrl.u32 %v845, 16
    %v900 = vshll.u32 %v845, 16
    %v902 = vrot.slane %v900, 1
    %v903 = vor.u32 %v898, %v902
    %v905 = vshrl.u32 %v846, 16
    %v907 = vshll.u32 %v846, 16
    %v909 = vrot.slane %v907, 1
    %v910 = vor.u32 %v905, %v909
    %v912 = vshrl.u32 %v847, 16
    %v914 = vshll.u32 %v847, 16
    %v916 = vrot.slane %v914, 1
    %v917 = vor.u32 %v912, %v916
    %v919 = vshrl.u32 %v848, 16
    %v921 = vshll.u32 %v848, 16
    %v923 = vrot.slane %v921, 1
    %v924 = vor.u32 %v919, %v923
    %v926 = vshrl.u32 %v849, 16
    %v928 = vshll.u32 %v849, 16
    %v930 = vrot.slane %v928, 1
    %v931 = vor.u32 %v926, %v930
    %v933 = vshrl.u32 %v850, 16
    %v935 = vshll.u32 %v850, 16
    %v937 = vrot.slane %v935, 1
    %v938 = vor.u32 %v933, %v937
    %v940 = vshrl.u32 %v851, 16
    %v942 = vshll.u32 %v851, 16
    %v944 = vrot.slane %v942, 1
    %v945 = vor.u32 %v940, %v944
    %v947 = vshrl.u32 %v852, 16
    %v949 = vshll.u32 %v852, 16
    %v951 = vrot.slane %v949, 1
    %v952 = vor.u32 %v947, %v951
    %v954 = vshrl.u32 %v853, 16
    %v956 = vshll.u32 %v853, 16
    %v958 = vrot.slane %v956, 1
    %v959 = vor.u32 %v954, %v958
    %v961 = vshrl.u32 %v854, 16
    %v963 = vshll.u32 %v854, 16
    %v965 = vrot.slane %v963, 1
    %v966 = vor.u32 %v961, %v965
    %v983 = vunpack.c.l.b16 %v454
    %v984 = vunpack.c.l.b16 %v455
    %v985 = vunpack.c.l.b16 %v456
    %v986 = vunpack.c.l.b16 %v457
    %v987 = vunpack.c.l.b16 %v458
    %v988 = vunpack.c.l.b16 %v459
    %v989 = vunpack.c.l.b16 %v460
    %v990 = vunpack.c.l.b16 %v461
    %v991 = vunpack.c.l.b16 %v462
    %v992 = vunpack.c.l.b16 %v463
    %v993 = vunpack.c.l.b16 %v464
    %v994 = vunpack.c.l.b16 %v465
    %v995 = vunpack.c.l.b16 %v466
    %v996 = vunpack.c.l.b16 %v467
    %v997 = vunpack.c.l.b16 %v468
    %v998 = vunpack.c.l.b16 %v469
    %v999 = vpack.c.b16 %v808, %v983
    %v1000 = vpack.c.b16 %v810, %v984
    %v1001 = vpack.c.b16 %v812, %v985
    %v1002 = vpack.c.b16 %v814, %v986
    %v1003 = vpack.c.b16 %v816, %v987
    %v1004 = vpack.c.b16 %v818, %v988
    %v1005 = vpack.c.b16 %v820, %v989
    %v1006 = vpack.c.b16 %v822, %v990
    %v1007 = vpack.c.b16 %v824, %v991
    %v1008 = vpack.c.b16 %v826, %v992
    %v1009 = vpack.c.b16 %v828, %v993
    %v1010 = vpack.c.b16 %v830, %v994
    %v1011 = vpack.c.b16 %v832, %v995
    %v1012 = vpack.c.b16 %v834, %v996
    %v1013 = vpack.c.b16 %v836, %v997
    %v1014 = vpack.c.b16 %v838, %v998
    %v1015 = vrot.slane %v999, 1
    %v1016 = vrot.slane %v1000, 1
    %v1017 = vrot.slane %v1001, 1
    %v1018 = vrot.slane %v1002, 1
    %v1019 = vrot.slane %v1003, 1
    %v1020 = vrot.slane %v1004, 1
    %v1021 = vrot.slane %v1005, 1
    %v1022 = vrot.slane %v1006, 1
    %v1023 = vrot.slane %v1007, 1
    %v1024 = vrot.slane %v1008, 1
    %v1025 = vrot.slane %v1009, 1
    %v1026 = vrot.slane %v1010, 1
    %v1027 = vrot.slane %v1011, 1
    %v1028 = vrot.slane %v1012, 1
    %v1029 = vrot.slane %v1013, 1
    %v1030 = vrot.slane %v1014, 1
    %v1063 = vunpack.c.l.b16 %v471
    %v1064 = vunpack.c.l.b16 %v487
    %v1065 = vunpack.c.l.b16 %v472
    %v1066 = vunpack.c.l.b16 %v488
    %v1067 = vunpack.c.l.b16 %v473
    %v1068 = vunpack.c.l.b16 %v489
    %v1069 = vunpack.c.l.b16 %v474
    %v1070 = vunpack.c.l.b16 %v490
    %v1071 = vunpack.c.l.b16 %v475
    %v1072 = vunpack.c.l.b16 %v491
    %v1073 = vunpack.c.l.b16 %v476
    %v1074 = vunpack.c.l.b16 %v492
    %v1075 = vunpack.c.l.b16 %v477
    %v1076 = vunpack.c.l.b16 %v493
    %v1077 = vunpack.c.l.b16 %v478
    %v1078 = vunpack.c.l.b16 %v494
    %v1079 = vunpack.c.l.b16 %v479
    %v1080 = vunpack.c.l.b16 %v495
    %v1081 = vunpack.c.l.b16 %v480
    %v1082 = vunpack.c.l.b16 %v496
    %v1083 = vunpack.c.l.b16 %v481
    %v1084 = vunpack.c.l.b16 %v497
    %v1085 = vunpack.c.l.b16 %v482
    %v1086 = vunpack.c.l.b16 %v498
    %v1087 = vunpack.c.l.b16 %v483
    %v1088 = vunpack.c.l.b16 %v499
    %v1089 = vunpack.c.l.b16 %v484
    %v1090 = vunpack.c.l.b16 %v500
    %v1091 = vunpack.c.l.b16 %v485
    %v1092 = vunpack.c.l.b16 %v501
    %v1093 = vunpack.c.l.b16 %v486
    %v1094 = vunpack.c.l.b16 %v502
    %v1095 = vpack.c.b16 %v1064, %v1063
    %v1096 = vpack.c.b16 %v1066, %v1065
    %v1097 = vpack.c.b16 %v1068, %v1067
    %v1098 = vpack.c.b16 %v1070, %v1069
    %v1099 = vpack.c.b16 %v1072, %v1071
    %v1100 = vpack.c.b16 %v1074, %v1073
    %v1101 = vpack.c.b16 %v1076, %v1075
    %v1102 = vpack.c.b16 %v1078, %v1077
    %v1103 = vpack.c.b16 %v1080, %v1079
    %v1104 = vpack.c.b16 %v1082, %v1081
    %v1105 = vpack.c.b16 %v1084, %v1083
    %v1106 = vpack.c.b16 %v1086, %v1085
    %v1107 = vpack.c.b16 %v1088, %v1087
    %v1108 = vpack.c.b16 %v1090, %v1089
    %v1109 = vpack.c.b16 %v1092, %v1091
    %v1110 = vpack.c.b16 %v1094, %v1093
    %v1112 = vshrl.u32 %v1095, 16
    %v1114 = vshll.u32 %v1095, 16
    %v1116 = vrot.slane %v1114, 1
    %v1117 = vor.u32 %v1112, %v1116
    %v1119 = vshrl.u32 %v1096, 16
    %v1121 = vshll.u32 %v1096, 16
    %v1123 = vrot.slane %v1121, 1
    %v1124 = vor.u32 %v1119, %v1123
    %v1126 = vshrl.u32 %v1097, 16
    %v1128 = vshll.u32 %v1097, 16
    %v1130 = vrot.slane %v1128, 1
    %v1131 = vor.u32 %v1126, %v1130
    %v1133 = vshrl.u32 %v1098, 16
    %v1135 = vshll.u32 %v1098, 16
    %v1137 = vrot.slane %v1135, 1
    %v1138 = vor.u32 %v1133, %v1137
    %v1140 = vshrl.u32 %v1099, 16
    %v1142 = vshll.u32 %v1099, 16
    %v1144 = vrot.slane %v1142, 1
    %v1145 = vor.u32 %v1140, %v1144
    %v1147 = vshrl.u32 %v1100, 16
    %v1149 = vshll.u32 %v1100, 16
    %v1151 = vrot.slane %v1149, 1
    %v1152 = vor.u32 %v1147, %v1151
    %v1154 = vshrl.u32 %v1101, 16
    %v1156 = vshll.u32 %v1101, 16
    %v1158 = vrot.slane %v1156, 1
    %v1159 = vor.u32 %v1154, %v1158
    %v1161 = vshrl.u32 %v1102, 16
    %v1163 = vshll.u32 %v1102, 16
    %v1165 = vrot.slane %v1163, 1
    %v1166 = vor.u32 %v1161, %v1165
    %v1168 = vshrl.u32 %v1103, 16
    %v1170 = vshll.u32 %v1103, 16
    %v1172 = vrot.slane %v1170, 1
    %v1173 = vor.u32 %v1168, %v1172
    %v1175 = vshrl.u32 %v1104, 16
    %v1177 = vshll.u32 %v1104, 16
    %v1179 = vrot.slane %v1177, 1
    %v1180 = vor.u32 %v1175, %v1179
    %v1182 = vshrl.u32 %v1105, 16
    %v1184 = vshll.u32 %v1105, 16
    %v1186 = vrot.slane %v1184, 1
    %v1187 = vor.u32 %v1182, %v1186
    %v1189 = vshrl.u32 %v1106, 16
    %v1191 = vshll.u32 %v1106, 16
    %v1193 = vrot.slane %v1191, 1
    %v1194 = vor.u32 %v1189, %v1193
    %v1196 = vshrl.u32 %v1107, 16
    %v1198 = vshll.u32 %v1107, 16
    %v1200 = vrot.slane %v1198, 1
    %v1201 = vor.u32 %v1196, %v1200
    %v1203 = vshrl.u32 %v1108, 16
    %v1205 = vshll.u32 %v1108, 16
    %v1207 = vrot.slane %v1205, 1
    %v1208 = vor.u32 %v1203, %v1207
    %v1210 = vshrl.u32 %v1109, 16
    %v1212 = vshll.u32 %v1109, 16
    %v1214 = vrot.slane %v1212, 1
    %v1215 = vor.u32 %v1210, %v1214
    %v1217 = vshrl.u32 %v1110, 16
    %v1219 = vshll.u32 %v1110, 16
    %v1221 = vrot.slane %v1219, 1
    %v1222 = vor.u32 %v1217, %v1221
    %v1239 = vunpack.c.l.b16 %v503
    %v1240 = vunpack.c.l.b16 %v504
    %v1241 = vunpack.c.l.b16 %v505
    %v1242 = vunpack.c.l.b16 %v506
    %v1243 = vunpack.c.l.b16 %v507
    %v1244 = vunpack.c.l.b16 %v508
    %v1245 = vunpack.c.l.b16 %v509
    %v1246 = vunpack.c.l.b16 %v510
    %v1247 = vunpack.c.l.b16 %v511
    %v1248 = vunpack.c.l.b16 %v512
    %v1249 = vunpack.c.l.b16 %v513
    %v1250 = vunpack.c.l.b16 %v514
    %v1251 = vunpack.c.l.b16 %v515
    %v1252 = vunpack.c.l.b16 %v516
    %v1253 = vunpack.c.l.b16 %v517
    %v1254 = vunpack.c.l.b16 %v518
    %v1255 = vpack.c.b16 %v1064, %v1239
    %v1256 = vpack.c.b16 %v1066, %v1240
    %v1257 = vpack.c.b16 %v1068, %v1241
    %v1258 = vpack.c.b16 %v1070, %v1242
    %v1259 = vpack.c.b16 %v1072, %v1243
    %v1260 = vpack.c.b16 %v1074, %v1244
    %v1261 = vpack.c.b16 %v1076, %v1245
    %v1262 = vpack.c.b16 %v1078, %v1246
    %v1263 = vpack.c.b16 %v1080, %v1247
    %v1264 = vpack.c.b16 %v1082, %v1248
    %v1265 = vpack.c.b16 %v1084, %v1249
    %v1266 = vpack.c.b16 %v1086, %v1250
    %v1267 = vpack.c.b16 %v1088, %v1251
    %v1268 = vpack.c.b16 %v1090, %v1252
    %v1269 = vpack.c.b16 %v1092, %v1253
    %v1270 = vpack.c.b16 %v1094, %v1254
    %v1271 = vrot.slane %v1255, 1
    %v1272 = vrot.slane %v1256, 1
    %v1273 = vrot.slane %v1257, 1
    %v1274 = vrot.slane %v1258, 1
    %v1275 = vrot.slane %v1259, 1
    %v1276 = vrot.slane %v1260, 1
    %v1277 = vrot.slane %v1261, 1
    %v1278 = vrot.slane %v1262, 1
    %v1279 = vrot.slane %v1263, 1
    %v1280 = vrot.slane %v1264, 1
    %v1281 = vrot.slane %v1265, 1
    %v1282 = vrot.slane %v1266, 1
    %v1283 = vrot.slane %v1267, 1
    %v1284 = vrot.slane %v1268, 1
    %v1285 = vrot.slane %v1269, 1
    %v1286 = vrot.slane %v1270, 1
    %v1287 = vunpack.c.l.b16 %v605
    %v1288 = vunpack.c.l.b16 %v759
    %v1289 = vunpack.c.l.b16 %v861
    %v1290 = vunpack.c.l.b16 %v1015
    %v1291 = vunpack.c.l.b16 %v1117
    %v1292 = vunpack.c.l.b16 %v1271
    %v1293 = vunpack.c.l.b16 %v612
    %v1294 = vunpack.c.l.b16 %v760
    %v1295 = vunpack.c.l.b16 %v868
    %v1296 = vunpack.c.l.b16 %v1016
    %v1297 = vunpack.c.l.b16 %v1124
    %v1298 = vunpack.c.l.b16 %v1272
    %v1299 = vunpack.c.l.b16 %v619
    %v1300 = vunpack.c.l.b16 %v761
    %v1301 = vunpack.c.l.b16 %v875
    %v1302 = vunpack.c.l.b16 %v1017
    %v1303 = vunpack.c.l.b16 %v1131
    %v1304 = vunpack.c.l.b16 %v1273
    %v1305 = vunpack.c.l.b16 %v626
    %v1306 = vunpack.c.l.b16 %v762
    %v1307 = vunpack.c.l.b16 %v882
    %v1308 = vunpack.c.l.b16 %v1018
    %v1309 = vunpack.c.l.b16 %v1138
    %v1310 = vunpack.c.l.b16 %v1274
    %v1311 = vunpack.c.l.b16 %v633
    %v1312 = vunpack.c.l.b16 %v763
    %v1313 = vunpack.c.l.b16 %v889
    %v1314 = vunpack.c.l.b16 %v1019
    %v1315 = vunpack.c.l.b16 %v1145
    %v1316 = vunpack.c.l.b16 %v1275
    %v1317 = vunpack.c.l.b16 %v640
    %v1318 = vunpack.c.l.b16 %v764
    %v1319 = vunpack.c.l.b16 %v896
    %v1320 = vunpack.c.l.b16 %v1020
    %v1321 = vunpack.c.l.b16 %v1152
    %v1322 = vunpack.c.l.b16 %v1276
    %v1323 = vunpack.c.l.b16 %v647
    %v1324 = vunpack.c.l.b16 %v765
    %v1325 = vunpack.c.l.b16 %v903
    %v1326 = vunpack.c.l.b16 %v1021
    %v1327 = vunpack.c.l.b16 %v1159
    %v1328 = vunpack.c.l.b16 %v1277
    %v1329 = vunpack.c.l.b16 %v654
    %v1330 = vunpack.c.l.b16 %v766
    %v1331 = vunpack.c.l.b16 %v910
    %v1332 = vunpack.c.l.b16 %v1022
    %v1333 = vunpack.c.l.b16 %v1166
    %v1334 = vunpack.c.l.b16 %v1278
    %v1335 = vunpack.c.l.b16 %v661
    %v1336 = vunpack.c.l.b16 %v767
    %v1337 = vunpack.c.l.b16 %v917
    %v1338 = vunpack.c.l.b16 %v1023
    %v1339 = vunpack.c.l.b16 %v1173
    %v1340 = vunpack.c.l.b16 %v1279
    %v1341 = vunpack.c.l.b16 %v668
    %v1342 = vunpack.c.l.b16 %v768
    %v1343 = vunpack.c.l.b16 %v924
    %v1344 = vunpack.c.l.b16 %v1024
    %v1345 = vunpack.c.l.b16 %v1180
    %v1346 = vunpack.c.l.b16 %v1280
    %v1347 = vunpack.c.l.b16 %v675
    %v1348 = vunpack.c.l.b16 %v769
    %v1349 = vunpack.c.l.b16 %v931
    %v1350 = vunpack.c.l.b16 %v1025
    %v1351 = vunpack.c.l.b16 %v1187
    %v1352 = vunpack.c.l.b16 %v1281
    %v1353 = vunpack.c.l.b16 %v682
    %v1354 = vunpack.c.l.b16 %v770
    %v1355 = vunpack.c.l.b16 %v938
    %v1356 = vunpack.c.l.b16 %v1026
    %v1357 = vunpack.c.l.b16 %v1194
    %v1358 = vunpack.c.l.b16 %v1282
    %v1359 = vunpack.c.l.b16 %v689
    %v1360 = vunpack.c.l.b16 %v771
    %v1361 = vunpack.c.l.b16 %v945
    %v1362 = vunpack.c.l.b16 %v1027
    %v1363 = vunpack.c.l.b16 %v1201
    %v1364 = vunpack.c.l.b16 %v1283
    %v1365 = vunpack.c.l.b16 %v696
    %v1366 = vunpack.c.l.b16 %v772
    %v1367 = vunpack.c.l.b16 %v952
    %v1368 = vunpack.c.l.b16 %v1028
    %v1369 = vunpack.c.l.b16 %v1208
    %v1370 = vunpack.c.l.b16 %v1284
    %v1371 = vunpack.c.l.b16 %v703
    %v1372 = vunpack.c.l.b16 %v773
    %v1373 = vunpack.c.l.b16 %v959
    %v1374 = vunpack.c.l.b16 %v1029
    %v1375 = vunpack.c.l.b16 %v1215
    %v1376 = vunpack.c.l.b16 %v1285
    %v1377 = vunpack.c.l.b16 %v710
    %v1378 = vunpack.c.l.b16 %v774
    %v1379 = vunpack.c.l.b16 %v966
    %v1380 = vunpack.c.l.b16 %v1030
    %v1381 = vunpack.c.l.b16 %v1222
    %v1382 = vunpack.c.l.b16 %v1286
    %v1383 = vld [vmem:[#allocation3] sm:$0xf]
    %v1384 = vld [vmem:[#allocation3 + $0x4] sm:$0xf]
    %v1385 = vld [vmem:[#allocation3 + $0x8] sm:$0xf]
    %v1386 = vld [vmem:[#allocation3 + $0xc] sm:$0xf]
    %v1387 = vld [vmem:[#allocation3 + $0x10] sm:$0xf]
    %v1388 = vld [vmem:[#allocation3 + $0x14] sm:$0xf]
    %v1389 = vld [vmem:[#allocation3 + $0x18] sm:$0xf]
    %v1390 = vld [vmem:[#allocation3 + $0x1c] sm:$0xf]
    %v1391 = vld [vmem:[#allocation3 + $0x20] sm:$0xf]
    %v1392 = vld [vmem:[#allocation3 + $0x24] sm:$0xf]
    %v1393 = vld [vmem:[#allocation3 + $0x28] sm:$0xf]
    %v1394 = vld [vmem:[#allocation3 + $0x2c] sm:$0xf]
    %v1395 = vld [vmem:[#allocation3 + $0x30] sm:$0xf]
    %v1396 = vld [vmem:[#allocation3 + $0x34] sm:$0xf]
    %v1397 = vld [vmem:[#allocation3 + $0x38] sm:$0xf]
    %v1398 = vld [vmem:[#allocation3 + $0x3c] sm:$0xf]
    %v1399 = vld [vmem:[#allocation3 + $0x40] sm:$0xf]
    %v1400 = vld [vmem:[#allocation3 + $0x44] sm:$0xf]
    %v1401 = vld [vmem:[#allocation3 + $0x48] sm:$0xf]
    %v1402 = vld [vmem:[#allocation3 + $0x4c] sm:$0xf]
    %v1403 = vld [vmem:[#allocation3 + $0x50] sm:$0xf]
    %v1404 = vld [vmem:[#allocation3 + $0x54] sm:$0xf]
    %v1405 = vld [vmem:[#allocation3 + $0x58] sm:$0xf]
    %v1406 = vld [vmem:[#allocation3 + $0x5c] sm:$0xf]
    %v1407 = vld [vmem:[#allocation3 + $0x60] sm:$0xf]
    %v1408 = vld [vmem:[#allocation3 + $0x64] sm:$0xf]
    %v1409 = vld [vmem:[#allocation3 + $0x68] sm:$0xf]
    %v1410 = vld [vmem:[#allocation3 + $0x6c] sm:$0xf]
    %v1411 = vld [vmem:[#allocation3 + $0x70] sm:$0xf]
    %v1412 = vld [vmem:[#allocation3 + $0x74] sm:$0xf]
    %v1413 = vld [vmem:[#allocation3 + $0x78] sm:$0xf]
    %v1414 = vld [vmem:[#allocation3 + $0x7c] sm:$0xf]
    %v1415 = vld [vmem:[#allocation3 + $0x80] sm:$0xf]
    %v1416 = vld [vmem:[#allocation3 + $0x84] sm:$0xf]
    %v1417 = vld [vmem:[#allocation3 + $0x88] sm:$0xf]
    %v1418 = vld [vmem:[#allocation3 + $0x8c] sm:$0xf]
    %v1419 = vld [vmem:[#allocation3 + $0x90] sm:$0xf]
    %v1420 = vld [vmem:[#allocation3 + $0x94] sm:$0xf]
    %v1421 = vld [vmem:[#allocation3 + $0x98] sm:$0xf]
    %v1422 = vld [vmem:[#allocation3 + $0x9c] sm:$0xf]
    %v1423 = vld [vmem:[#allocation3 + $0xa0] sm:$0xf]
    %v1424 = vld [vmem:[#allocation3 + $0xa4] sm:$0xf]
    %v1425 = vld [vmem:[#allocation3 + $0xa8] sm:$0xf]
    %v1426 = vld [vmem:[#allocation3 + $0xac] sm:$0xf]
    %v1427 = vld [vmem:[#allocation3 + $0xb0] sm:$0xf]
    %v1428 = vld [vmem:[#allocation3 + $0xb4] sm:$0xf]
    %v1429 = vld [vmem:[#allocation3 + $0xb8] sm:$0xf]
    %v1430 = vld [vmem:[#allocation3 + $0xbc] sm:$0xf]
    %v1431 = vld [vmem:[#allocation3 + $0xc0] sm:$0xf]
    %v1432 = vld [vmem:[#allocation3 + $0xc4] sm:$0xf]
    %v1433 = vld [vmem:[#allocation3 + $0xc8] sm:$0xf]
    %v1434 = vld [vmem:[#allocation3 + $0xcc] sm:$0xf]
    %v1435 = vld [vmem:[#allocation3 + $0xd0] sm:$0xf]
    %v1436 = vld [vmem:[#allocation3 + $0xd4] sm:$0xf]
    %v1437 = vld [vmem:[#allocation3 + $0xd8] sm:$0xf]
    %v1438 = vld [vmem:[#allocation3 + $0xdc] sm:$0xf]
    %v1439 = vld [vmem:[#allocation3 + $0xe0] sm:$0xf]
    %v1440 = vld [vmem:[#allocation3 + $0xe4] sm:$0xf]
    %v1441 = vld [vmem:[#allocation3 + $0xe8] sm:$0xf]
    %v1442 = vld [vmem:[#allocation3 + $0xec] sm:$0xf]
    %v1443 = vld [vmem:[#allocation3 + $0xf0] sm:$0xf]
    %v1444 = vld [vmem:[#allocation3 + $0xf4] sm:$0xf]
    %v1445 = vld [vmem:[#allocation3 + $0xf8] sm:$0xf]
    %v1446 = vld [vmem:[#allocation3 + $0xfc] sm:$0xf]
    %v1447 = vld [vmem:[#allocation3 + $0x100] sm:$0xf]
    %v1448 = vld [vmem:[#allocation3 + $0x104] sm:$0xf]
    %v1449 = vld [vmem:[#allocation3 + $0x108] sm:$0xf]
    %v1450 = vld [vmem:[#allocation3 + $0x10c] sm:$0xf]
    %v1451 = vld [vmem:[#allocation3 + $0x110] sm:$0xf]
    %v1452 = vld [vmem:[#allocation3 + $0x114] sm:$0xf]
    %v1453 = vld [vmem:[#allocation3 + $0x118] sm:$0xf]
    %v1454 = vld [vmem:[#allocation3 + $0x11c] sm:$0xf]
    %v1455 = vld [vmem:[#allocation3 + $0x120] sm:$0xf]
    %v1456 = vld [vmem:[#allocation3 + $0x124] sm:$0xf]
    %v1457 = vld [vmem:[#allocation3 + $0x128] sm:$0xf]
    %v1458 = vld [vmem:[#allocation3 + $0x12c] sm:$0xf]
    %v1459 = vld [vmem:[#allocation3 + $0x130] sm:$0xf]
    %v1460 = vld [vmem:[#allocation3 + $0x134] sm:$0xf]
    %v1461 = vld [vmem:[#allocation3 + $0x138] sm:$0xf]
    %v1462 = vld [vmem:[#allocation3 + $0x13c] sm:$0xf]
    %v1463 = vld [vmem:[#allocation3 + $0x140] sm:$0xf]
    %v1464 = vld [vmem:[#allocation3 + $0x144] sm:$0xf]
    %v1465 = vld [vmem:[#allocation3 + $0x148] sm:$0xf]
    %v1466 = vld [vmem:[#allocation3 + $0x14c] sm:$0xf]
    %v1467 = vld [vmem:[#allocation3 + $0x150] sm:$0xf]
    %v1468 = vld [vmem:[#allocation3 + $0x154] sm:$0xf]
    %v1469 = vld [vmem:[#allocation3 + $0x158] sm:$0xf]
    %v1470 = vld [vmem:[#allocation3 + $0x15c] sm:$0xf]
    %v1471 = vld [vmem:[#allocation3 + $0x160] sm:$0xf]
    %v1472 = vld [vmem:[#allocation3 + $0x164] sm:$0xf]
    %v1473 = vld [vmem:[#allocation3 + $0x168] sm:$0xf]
    %v1474 = vld [vmem:[#allocation3 + $0x16c] sm:$0xf]
    %v1475 = vld [vmem:[#allocation3 + $0x170] sm:$0xf]
    %v1476 = vld [vmem:[#allocation3 + $0x174] sm:$0xf]
    %v1477 = vld [vmem:[#allocation3 + $0x178] sm:$0xf]
    %v1478 = vld [vmem:[#allocation3 + $0x17c] sm:$0xf]
    %v1479 = vld [vmem:[#allocation3 + $0x180] sm:$0xf]
    %v1480 = vld [vmem:[#allocation3 + $0x184] sm:$0xf]
    %v1481 = vld [vmem:[#allocation3 + $0x188] sm:$0xf]
    %v1482 = vld [vmem:[#allocation3 + $0x18c] sm:$0xf]
    %v1483 = vld [vmem:[#allocation3 + $0x190] sm:$0xf]
    %v1484 = vld [vmem:[#allocation3 + $0x194] sm:$0xf]
    %v1485 = vld [vmem:[#allocation3 + $0x198] sm:$0xf]
    %v1486 = vld [vmem:[#allocation3 + $0x19c] sm:$0xf]
    %v1487 = vld [vmem:[#allocation3 + $0x1a0] sm:$0xf]
    %v1488 = vld [vmem:[#allocation3 + $0x1a4] sm:$0xf]
    %v1489 = vld [vmem:[#allocation3 + $0x1a8] sm:$0xf]
    %v1490 = vld [vmem:[#allocation3 + $0x1ac] sm:$0xf]
    %v1491 = vld [vmem:[#allocation3 + $0x1b0] sm:$0xf]
    %v1492 = vld [vmem:[#allocation3 + $0x1b4] sm:$0xf]
    %v1493 = vld [vmem:[#allocation3 + $0x1b8] sm:$0xf]
    %v1494 = vld [vmem:[#allocation3 + $0x1bc] sm:$0xf]
    %v1495 = vld [vmem:[#allocation3 + $0x1c0] sm:$0xf]
    %v1496 = vld [vmem:[#allocation3 + $0x1c4] sm:$0xf]
    %v1497 = vld [vmem:[#allocation3 + $0x1c8] sm:$0xf]
    %v1498 = vld [vmem:[#allocation3 + $0x1cc] sm:$0xf]
    %v1499 = vld [vmem:[#allocation3 + $0x1d0] sm:$0xf]
    %v1500 = vld [vmem:[#allocation3 + $0x1d4] sm:$0xf]
    %v1501 = vld [vmem:[#allocation3 + $0x1d8] sm:$0xf]
    %v1502 = vld [vmem:[#allocation3 + $0x1dc] sm:$0xf]
    %v1503 = vld [vmem:[#allocation3 + $0x1e0] sm:$0xf]
    %v1504 = vld [vmem:[#allocation3 + $0x1e4] sm:$0xf]
    %v1505 = vld [vmem:[#allocation3 + $0x1e8] sm:$0xf]
    %v1506 = vld [vmem:[#allocation3 + $0x1ec] sm:$0xf]
    %v1507 = vld [vmem:[#allocation3 + $0x1f0] sm:$0xf]
    %v1508 = vld [vmem:[#allocation3 + $0x1f4] sm:$0xf]
    %v1509 = vld [vmem:[#allocation3 + $0x1f8] sm:$0xf]
    %v1510 = vld [vmem:[#allocation3 + $0x1fc] sm:$0xf]
    %v1511 = vld [vmem:[#allocation3 + $0x200] sm:$0xf]
    %v1512 = vld [vmem:[#allocation3 + $0x204] sm:$0xf]
    %v1513 = vld [vmem:[#allocation3 + $0x208] sm:$0xf]
    %v1514 = vld [vmem:[#allocation3 + $0x20c] sm:$0xf]
    %v1515 = vld [vmem:[#allocation3 + $0x210] sm:$0xf]
    %v1516 = vld [vmem:[#allocation3 + $0x214] sm:$0xf]
    %v1517 = vld [vmem:[#allocation3 + $0x218] sm:$0xf]
    %v1518 = vld [vmem:[#allocation3 + $0x21c] sm:$0xf]
    %v1519 = vld [vmem:[#allocation3 + $0x220] sm:$0xf]
    %v1520 = vld [vmem:[#allocation3 + $0x224] sm:$0xf]
    %v1521 = vld [vmem:[#allocation3 + $0x228] sm:$0xf]
    %v1522 = vld [vmem:[#allocation3 + $0x22c] sm:$0xf]
    %v1523 = vld [vmem:[#allocation3 + $0x230] sm:$0xf]
    %v1524 = vld [vmem:[#allocation3 + $0x234] sm:$0xf]
    %v1525 = vld [vmem:[#allocation3 + $0x238] sm:$0xf]
    %v1526 = vld [vmem:[#allocation3 + $0x23c] sm:$0xf]
    %v1527 = vpack.c.b16 %v553, %v551
    %v1528 = vpack.c.b16 %v1293, %v1287
    %v1529 = vpack.c.b16 %v1294, %v1288
    %v1530 = vpack.c.b16 %v809, %v807
    %v1531 = vpack.c.b16 %v1295, %v1289
    %v1532 = vpack.c.b16 %v1296, %v1290
    %v1533 = vpack.c.b16 %v1065, %v1063
    %v1534 = vpack.c.b16 %v1297, %v1291
    %v1535 = vpack.c.b16 %v1298, %v1292
    %v1536 = vpack.c.b16 %v557, %v555
    %v1537 = vpack.c.b16 %v1305, %v1299
    %v1538 = vpack.c.b16 %v1306, %v1300
    %v1539 = vpack.c.b16 %v813, %v811
    %v1540 = vpack.c.b16 %v1307, %v1301
    %v1541 = vpack.c.b16 %v1308, %v1302
    %v1542 = vpack.c.b16 %v1069, %v1067
    %v1543 = vpack.c.b16 %v1309, %v1303
    %v1544 = vpack.c.b16 %v1310, %v1304
    %v1545 = vpack.c.b16 %v561, %v559
    %v1546 = vpack.c.b16 %v1317, %v1311
    %v1547 = vpack.c.b16 %v1318, %v1312
    %v1548 = vpack.c.b16 %v817, %v815
    %v1549 = vpack.c.b16 %v1319, %v1313
    %v1550 = vpack.c.b16 %v1320, %v1314
    %v1551 = vpack.c.b16 %v1073, %v1071
    %v1552 = vpack.c.b16 %v1321, %v1315
    %v1553 = vpack.c.b16 %v1322, %v1316
    %v1554 = vpack.c.b16 %v565, %v563
    %v1555 = vpack.c.b16 %v1329, %v1323
    %v1556 = vpack.c.b16 %v1330, %v1324
    %v1557 = vpack.c.b16 %v821, %v819
    %v1558 = vpack.c.b16 %v1331, %v1325
    %v1559 = vpack.c.b16 %v1332, %v1326
    %v1560 = vpack.c.b16 %v1077, %v1075
    %v1561 = vpack.c.b16 %v1333, %v1327
    %v1562 = vpack.c.b16 %v1334, %v1328
    %v1563 = vpack.c.b16 %v569, %v567
    %v1564 = vpack.c.b16 %v1341, %v1335
    %v1565 = vpack.c.b16 %v1342, %v1336
    %v1566 = vpack.c.b16 %v825, %v823
    %v1567 = vpack.c.b16 %v1343, %v1337
    %v1568 = vpack.c.b16 %v1344, %v1338
    %v1569 = vpack.c.b16 %v1081, %v1079
    %v1570 = vpack.c.b16 %v1345, %v1339
    %v1571 = vpack.c.b16 %v1346, %v1340
    %v1572 = vpack.c.b16 %v573, %v571
    %v1573 = vpack.c.b16 %v1353, %v1347
    %v1574 = vpack.c.b16 %v1354, %v1348
    %v1575 = vpack.c.b16 %v829, %v827
    %v1576 = vpack.c.b16 %v1355, %v1349
    %v1577 = vpack.c.b16 %v1356, %v1350
    %v1578 = vpack.c.b16 %v1085, %v1083
    %v1579 = vpack.c.b16 %v1357, %v1351
    %v1580 = vpack.c.b16 %v1358, %v1352
    %v1581 = vpack.c.b16 %v577, %v575
    %v1582 = vpack.c.b16 %v1365, %v1359
    %v1583 = vpack.c.b16 %v1366, %v1360
    %v1584 = vpack.c.b16 %v833, %v831
    %v1585 = vpack.c.b16 %v1367, %v1361
    %v1586 = vpack.c.b16 %v1368, %v1362
    %v1587 = vpack.c.b16 %v1089, %v1087
    %v1588 = vpack.c.b16 %v1369, %v1363
    %v1589 = vpack.c.b16 %v1370, %v1364
    %v1590 = vpack.c.b16 %v581, %v579
    %v1591 = vpack.c.b16 %v1377, %v1371
    %v1592 = vpack.c.b16 %v1378, %v1372
    %v1593 = vpack.c.b16 %v837, %v835
    %v1594 = vpack.c.b16 %v1379, %v1373
    %v1595 = vpack.c.b16 %v1380, %v1374
    %v1596 = vpack.c.b16 %v1093, %v1091
    %v1597 = vpack.c.b16 %v1381, %v1375
    %v1598 = vpack.c.b16 %v1382, %v1376
    %v1815 = vunpack.c.l.b16 %v1383
    %v1816 = vunpack.c.l.b16 %v1384
    %v1817 = vunpack.c.l.b16 %v1385
    %v1818 = vunpack.c.l.b16 %v1386
    %v1819 = vunpack.c.l.b16 %v1387
    %v1820 = vunpack.c.l.b16 %v1388
    %v1821 = vunpack.c.l.b16 %v1389
    %v1822 = vunpack.c.l.b16 %v1390
    %v1823 = vunpack.c.l.b16 %v1391
    %v1824 = vunpack.c.l.b16 %v1392
    %v1825 = vunpack.c.l.b16 %v1393
    %v1826 = vunpack.c.l.b16 %v1394
    %v1827 = vunpack.c.l.b16 %v1395
    %v1828 = vunpack.c.l.b16 %v1396
    %v1829 = vunpack.c.l.b16 %v1397
    %v1830 = vunpack.c.l.b16 %v1398
    %v1831 = vunpack.c.l.b16 %v1399
    %v1832 = vunpack.c.l.b16 %v1400
    %v1833 = vunpack.c.l.b16 %v1401
    %v1834 = vunpack.c.l.b16 %v1402
    %v1835 = vunpack.c.l.b16 %v1403
    %v1836 = vunpack.c.l.b16 %v1404
    %v1837 = vunpack.c.l.b16 %v1405
    %v1838 = vunpack.c.l.b16 %v1406
    %v1839 = vunpack.c.l.b16 %v1407
    %v1840 = vunpack.c.l.b16 %v1408
    %v1841 = vunpack.c.l.b16 %v1409
    %v1842 = vunpack.c.l.b16 %v1410
    %v1843 = vunpack.c.l.b16 %v1411
    %v1844 = vunpack.c.l.b16 %v1412
    %v1845 = vunpack.c.l.b16 %v1413
    %v1846 = vunpack.c.l.b16 %v1414
    %v1847 = vunpack.c.l.b16 %v1415
    %v1848 = vunpack.c.l.b16 %v1416
    %v1849 = vunpack.c.l.b16 %v1417
    %v1850 = vunpack.c.l.b16 %v1418
    %v1851 = vunpack.c.l.b16 %v1419
    %v1852 = vunpack.c.l.b16 %v1420
    %v1853 = vunpack.c.l.b16 %v1421
    %v1854 = vunpack.c.l.b16 %v1422
    %v1855 = vunpack.c.l.b16 %v1423
    %v1856 = vunpack.c.l.b16 %v1424
    %v1857 = vunpack.c.l.b16 %v1425
    %v1858 = vunpack.c.l.b16 %v1426
    %v1859 = vunpack.c.l.b16 %v1427
    %v1860 = vunpack.c.l.b16 %v1428
    %v1861 = vunpack.c.l.b16 %v1429
    %v1862 = vunpack.c.l.b16 %v1430
    %v1863 = vunpack.c.l.b16 %v1431
    %v1864 = vunpack.c.l.b16 %v1432
    %v1865 = vunpack.c.l.b16 %v1433
    %v1866 = vunpack.c.l.b16 %v1434
    %v1867 = vunpack.c.l.b16 %v1435
    %v1868 = vunpack.c.l.b16 %v1436
    %v1869 = vunpack.c.l.b16 %v1437
    %v1870 = vunpack.c.l.b16 %v1438
    %v1871 = vunpack.c.l.b16 %v1439
    %v1872 = vunpack.c.l.b16 %v1440
    %v1873 = vunpack.c.l.b16 %v1441
    %v1874 = vunpack.c.l.b16 %v1442
    %v1875 = vunpack.c.l.b16 %v1443
    %v1876 = vunpack.c.l.b16 %v1444
    %v1877 = vunpack.c.l.b16 %v1445
    %v1878 = vunpack.c.l.b16 %v1446
    %v1879 = vunpack.c.l.b16 %v1447
    %v1880 = vunpack.c.l.b16 %v1448
    %v1881 = vunpack.c.l.b16 %v1449
    %v1882 = vunpack.c.l.b16 %v1450
    %v1883 = vunpack.c.l.b16 %v1451
    %v1884 = vunpack.c.l.b16 %v1452
    %v1885 = vunpack.c.l.b16 %v1453
    %v1886 = vunpack.c.l.b16 %v1454
    %v1887 = vunpack.c.l.b16 %v1455
    %v1888 = vunpack.c.l.b16 %v1456
    %v1889 = vunpack.c.l.b16 %v1457
    %v1890 = vunpack.c.l.b16 %v1458
    %v1891 = vunpack.c.l.b16 %v1459
    %v1892 = vunpack.c.l.b16 %v1460
    %v1893 = vunpack.c.l.b16 %v1461
    %v1894 = vunpack.c.l.b16 %v1462
    %v1895 = vunpack.c.l.b16 %v1463
    %v1896 = vunpack.c.l.b16 %v1464
    %v1897 = vunpack.c.l.b16 %v1465
    %v1898 = vunpack.c.l.b16 %v1466
    %v1899 = vunpack.c.l.b16 %v1467
    %v1900 = vunpack.c.l.b16 %v1468
    %v1901 = vunpack.c.l.b16 %v1469
    %v1902 = vunpack.c.l.b16 %v1470
    %v1903 = vunpack.c.l.b16 %v1471
    %v1904 = vunpack.c.l.b16 %v1472
    %v1905 = vunpack.c.l.b16 %v1473
    %v1906 = vunpack.c.l.b16 %v1474
    %v1907 = vunpack.c.l.b16 %v1475
    %v1908 = vunpack.c.l.b16 %v1476
    %v1909 = vunpack.c.l.b16 %v1477
    %v1910 = vunpack.c.l.b16 %v1478
    %v1911 = vunpack.c.l.b16 %v1479
    %v1912 = vunpack.c.l.b16 %v1480
    %v1913 = vunpack.c.l.b16 %v1481
    %v1914 = vunpack.c.l.b16 %v1482
    %v1915 = vunpack.c.l.b16 %v1483
    %v1916 = vunpack.c.l.b16 %v1484
    %v1917 = vunpack.c.l.b16 %v1485
    %v1918 = vunpack.c.l.b16 %v1486
    %v1919 = vunpack.c.l.b16 %v1487
    %v1920 = vunpack.c.l.b16 %v1488
    %v1921 = vunpack.c.l.b16 %v1489
    %v1922 = vunpack.c.l.b16 %v1490
    %v1923 = vunpack.c.l.b16 %v1491
    %v1924 = vunpack.c.l.b16 %v1492
    %v1925 = vunpack.c.l.b16 %v1493
    %v1926 = vunpack.c.l.b16 %v1494
    %v1927 = vunpack.c.l.b16 %v1495
    %v1928 = vunpack.c.l.b16 %v1496
    %v1929 = vunpack.c.l.b16 %v1497
    %v1930 = vunpack.c.l.b16 %v1498
    %v1931 = vunpack.c.l.b16 %v1499
    %v1932 = vunpack.c.l.b16 %v1500
    %v1933 = vunpack.c.l.b16 %v1501
    %v1934 = vunpack.c.l.b16 %v1502
    %v1935 = vunpack.c.l.b16 %v1503
    %v1936 = vunpack.c.l.b16 %v1504
    %v1937 = vunpack.c.l.b16 %v1505
    %v1938 = vunpack.c.l.b16 %v1506
    %v1939 = vunpack.c.l.b16 %v1507
    %v1940 = vunpack.c.l.b16 %v1508
    %v1941 = vunpack.c.l.b16 %v1509
    %v1942 = vunpack.c.l.b16 %v1510
    %v1943 = vunpack.c.l.b16 %v1511
    %v1944 = vunpack.c.l.b16 %v1512
    %v1945 = vunpack.c.l.b16 %v1513
    %v1946 = vunpack.c.l.b16 %v1514
    %v1947 = vunpack.c.l.b16 %v1515
    %v1948 = vunpack.c.l.b16 %v1516
    %v1949 = vunpack.c.l.b16 %v1517
    %v1950 = vunpack.c.l.b16 %v1518
    %v1951 = vunpack.c.l.b16 %v1519
    %v1952 = vunpack.c.l.b16 %v1520
    %v1953 = vunpack.c.l.b16 %v1521
    %v1954 = vunpack.c.l.b16 %v1522
    %v1955 = vunpack.c.l.b16 %v1523
    %v1956 = vunpack.c.l.b16 %v1524
    %v1957 = vunpack.c.l.b16 %v1525
    %v1958 = vunpack.c.l.b16 %v1526
    %v1959 = vpack.c.b16 %v1816, %v1815
    %v1960 = vpack.c.b16 %v1818, %v1817
    %v1961 = vpack.c.b16 %v1820, %v1819
    %v1962 = vpack.c.b16 %v1822, %v1821
    %v1963 = vpack.c.b16 %v1824, %v1823
    %v1964 = vpack.c.b16 %v1826, %v1825
    %v1965 = vpack.c.b16 %v1828, %v1827
    %v1966 = vpack.c.b16 %v1830, %v1829
    %v1967 = vpack.c.b16 %v1832, %v1831
    %v1968 = vpack.c.b16 %v1834, %v1833
    %v1969 = vpack.c.b16 %v1836, %v1835
    %v1970 = vpack.c.b16 %v1838, %v1837
    %v1971 = vpack.c.b16 %v1840, %v1839
    %v1972 = vpack.c.b16 %v1842, %v1841
    %v1973 = vpack.c.b16 %v1844, %v1843
    %v1974 = vpack.c.b16 %v1846, %v1845
    %v1975 = vpack.c.b16 %v1848, %v1847
    %v1976 = vpack.c.b16 %v1850, %v1849
    %v1977 = vpack.c.b16 %v1852, %v1851
    %v1978 = vpack.c.b16 %v1854, %v1853
    %v1979 = vpack.c.b16 %v1856, %v1855
    %v1980 = vpack.c.b16 %v1858, %v1857
    %v1981 = vpack.c.b16 %v1860, %v1859
    %v1982 = vpack.c.b16 %v1862, %v1861
    %v1983 = vpack.c.b16 %v1864, %v1863
    %v1984 = vpack.c.b16 %v1866, %v1865
    %v1985 = vpack.c.b16 %v1868, %v1867
    %v1986 = vpack.c.b16 %v1870, %v1869
    %v1987 = vpack.c.b16 %v1872, %v1871
    %v1988 = vpack.c.b16 %v1874, %v1873
    %v1989 = vpack.c.b16 %v1876, %v1875
    %v1990 = vpack.c.b16 %v1878, %v1877
    %v1991 = vpack.c.b16 %v1880, %v1879
    %v1992 = vpack.c.b16 %v1882, %v1881
    %v1993 = vpack.c.b16 %v1884, %v1883
    %v1994 = vpack.c.b16 %v1886, %v1885
    %v1995 = vpack.c.b16 %v1888, %v1887
    %v1996 = vpack.c.b16 %v1890, %v1889
    %v1997 = vpack.c.b16 %v1892, %v1891
    %v1998 = vpack.c.b16 %v1894, %v1893
    %v1999 = vpack.c.b16 %v1896, %v1895
    %v2000 = vpack.c.b16 %v1898, %v1897
    %v2001 = vpack.c.b16 %v1900, %v1899
    %v2002 = vpack.c.b16 %v1902, %v1901
    %v2003 = vpack.c.b16 %v1904, %v1903
    %v2004 = vpack.c.b16 %v1906, %v1905
    %v2005 = vpack.c.b16 %v1908, %v1907
    %v2006 = vpack.c.b16 %v1910, %v1909
    %v2007 = vpack.c.b16 %v1912, %v1911
    %v2008 = vpack.c.b16 %v1914, %v1913
    %v2009 = vpack.c.b16 %v1916, %v1915
    %v2010 = vpack.c.b16 %v1918, %v1917
    %v2011 = vpack.c.b16 %v1920, %v1919
    %v2012 = vpack.c.b16 %v1922, %v1921
    %v2013 = vpack.c.b16 %v1924, %v1923
    %v2014 = vpack.c.b16 %v1926, %v1925
    %v2015 = vpack.c.b16 %v1928, %v1927
    %v2016 = vpack.c.b16 %v1930, %v1929
    %v2017 = vpack.c.b16 %v1932, %v1931
    %v2018 = vpack.c.b16 %v1934, %v1933
    %v2019 = vpack.c.b16 %v1936, %v1935
    %v2020 = vpack.c.b16 %v1938, %v1937
    %v2021 = vpack.c.b16 %v1940, %v1939
    %v2022 = vpack.c.b16 %v1942, %v1941
    %v2023 = vpack.c.b16 %v1944, %v1943
    %v2024 = vpack.c.b16 %v1946, %v1945
    %v2025 = vpack.c.b16 %v1948, %v1947
    %v2026 = vpack.c.b16 %v1950, %v1949
    %v2027 = vpack.c.b16 %v1952, %v1951
    %v2028 = vpack.c.b16 %v1954, %v1953
    %v2029 = vpack.c.b16 %v1956, %v1955
    %v2030 = vpack.c.b16 %v1958, %v1957
    %2103 = vmatprep.subr.bf16.mxu0 0
    %2104 = vmatpush1.bf16.msra.mxu0 %v1959
    %2105 = vmatprep.subr.bf16.mxu0 0
    %2106 = vmatpush1.bf16.msra.mxu0 %v1960
    %2107 = vmatprep.subr.bf16.mxu0 0
    %2108 = vmatpush1.bf16.msra.mxu0 %v1961
    %2109 = vmatprep.subr.bf16.mxu0 0
    %2110 = vmatpush1.bf16.msra.mxu0 %v1962
    %2111 = vmatprep.subr.bf16.mxu0 0
    %2112 = vmatpush1.bf16.msra.mxu0 %v1963
    %2113 = vmatprep.subr.bf16.mxu0 0
    %2114 = vmatpush1.bf16.msra.mxu0 %v1964
    %2115 = vmatprep.subr.bf16.mxu0 0
    %2116 = vmatpush1.bf16.msra.mxu0 %v1965
    %2117 = vmatprep.subr.bf16.mxu0 0
    %2118 = vmatpush1.bf16.msra.mxu0 %v1966
    %2119 = vmatprep.subr.bf16.mxu0 0
    %2120 = vmatpush1.bf16.msra.mxu0 %v1967
    %2121 = vmatprep.subr.bf16.mxu0 0
    %2122 = vmatpush1.bf16.msra.mxu0 %v1968
    %2123 = vmatprep.subr.bf16.mxu0 0
    %2124 = vmatpush1.bf16.msra.mxu0 %v1969
    %2125 = vmatprep.subr.bf16.mxu0 0
    %2126 = vmatpush1.bf16.msra.mxu0 %v1970
    %2127 = vmatprep.subr.bf16.mxu0 0
    %2128 = vmatpush1.bf16.msra.mxu0 %v1971
    %2129 = vmatprep.subr.bf16.mxu0 0
    %2130 = vmatpush1.bf16.msra.mxu0 %v1972
    %2131 = vmatprep.subr.bf16.mxu0 0
    %2132 = vmatpush1.bf16.msra.mxu0 %v1973
    %2133 = vmatprep.subr.bf16.mxu0 0
    %2134 = vmatpush1.bf16.msra.mxu0 %v1974
    %2135 = vmatprep.mubr.bf16.mxu0 %v1528
    %2136 = vmatmul.mubr.bf16.gmra.mrb[0].mxu0 %v1527
    %v2137 = vpop.f32.mrb[0].mxu0
    %v2138 = vadd.f32 0.0, %v2137
    %v2139 = vpop.f32.mrb[0].mxu0
    %v2140 = vpop.f32.mrb[0].mxu0
    %v2141 = vadd.f32 0.0, %v2140
    %v2142 = vpop.f32.mrb[0].mxu0
    %2143 = vmatprep.mubr.bf16.mxu0 %v1537
    %2144 = vmatmul.mubr.bf16.gmra.mrb[0].mxu0 %v1536
    %v2145 = vpop.f32.mrb[0].mxu0
    %v2146 = vadd.f32 0.0, %v2145
    %v2147 = vpop.f32.mrb[0].mxu0
    %v2148 = vpop.f32.mrb[0].mxu0
    %v2149 = vadd.f32 0.0, %v2148
    %v2150 = vpop.f32.mrb[0].mxu0
    %2151 = vmatprep.mubr.bf16.mxu0 %v1546
    %2152 = vmatmul.mubr.bf16.gmra.mrb[0].mxu0 %v1545
    %v2153 = vpop.f32.mrb[0].mxu0
    %v2154 = vadd.f32 0.0, %v2153
    %v2155 = vpop.f32.mrb[0].mxu0
    %v2156 = vpop.f32.mrb[0].mxu0
    %v2157 = vadd.f32 0.0, %v2156
    %v2158 = vpop.f32.mrb[0].mxu0
    %2159 = vmatprep.mubr.bf16.mxu0 %v1555
    %2160 = vmatmul.mubr.bf16.gmra.mrb[0].mxu0 %v1554
    %v2161 = vpop.f32.mrb[0].mxu0
    %v2162 = vadd.f32 0.0, %v2161
    %v2163 = vpop.f32.mrb[0].mxu0
    %v2164 = vpop.f32.mrb[0].mxu0
    %v2165 = vadd.f32 0.0, %v2164
    %v2166 = vpop.f32.mrb[0].mxu0
    %2167 = vmatprep.mubr.bf16.mxu0 %v1564
    %2168 = vmatmul.mubr.bf16.gmra.mrb[0].mxu0 %v1563
    %v2169 = vpop.f32.mrb[0].mxu0
    %v2170 = vadd.f32 0.0, %v2169
    %v2171 = vpop.f32.mrb[0].mxu0
    %v2172 = vpop.f32.mrb[0].mxu0
    %v2173 = vadd.f32 0.0, %v2172
    %v2174 = vpop.f32.mrb[0].mxu0
    %2175 = vmatprep.mubr.bf16.mxu0 %v1573
    %2176 = vmatmul.mubr.bf16.gmra.mrb[0].mxu0 %v1572
    %v2177 = vpop.f32.mrb[0].mxu0
    %v2178 = vadd.f32 0.0, %v2177
    %v2179 = vpop.f32.mrb[0].mxu0
    %v2180 = vpop.f32.mrb[0].mxu0
    %v2181 = vadd.f32 0.0, %v2180
    %v2182 = vpop.f32.mrb[0].mxu0
    %2183 = vmatprep.mubr.bf16.mxu0 %v1582
    %2184 = vmatmul.mubr.bf16.gmra.mrb[0].mxu0 %v1581
    %v2185 = vpop.f32.mrb[0].mxu0
    %v2186 = vadd.f32 0.0, %v2185
    %v2187 = vpop.f32.mrb[0].mxu0
    %v2188 = vpop.f32.mrb[0].mxu0
    %v2189 = vadd.f32 0.0, %v2188
    %v2190 = vpop.f32.mrb[0].mxu0
    %2191 = vmatprep.mubr.bf16.mxu0 %v1591
    %2192 = vmatmul.mubr.bf16.gmra.mrb[0].mxu0 %v1590
    %v2193 = vpop.f32.mrb[0].mxu0
    %v2194 = vadd.f32 0.0, %v2193
    %v2195 = vpop.f32.mrb[0].mxu0
    %v2196 = vpop.f32.mrb[0].mxu0
    %v2197 = vadd.f32 0.0, %v2196
    %v2198 = vpop.f32.mrb[0].mxu0
    %2199 = vdwg.mxu0
    %2200 = vmatprep.subr.bf16.mxu0 0
    %2201 = vmatpush1.bf16.msra.mxu0 %v1975
    %2202 = vmatprep.subr.bf16.mxu0 0
    %2203 = vmatpush1.bf16.msra.mxu0 %v1976
    %2204 = vmatprep.subr.bf16.mxu0 0
    %2205 = vmatpush1.bf16.msra.mxu0 %v1977
    %2206 = vmatprep.subr.bf16.mxu0 0
    %2207 = vmatpush1.bf16.msra.mxu0 %v1978
    %2208 = vmatprep.subr.bf16.mxu0 0
    %2209 = vmatpush1.bf16.msra.mxu0 %v1979
    %2210 = vmatprep.subr.bf16.mxu0 0
    %2211 = vmatpush1.bf16.msra.mxu0 %v1980
    %2212 = vmatprep.subr.bf16.mxu0 0
    %2213 = vmatpush1.bf16.msra.mxu0 %v1981
    %2214 = vmatprep.subr.bf16.mxu0 0
    %2215 = vmatpush1.bf16.msra.mxu0 %v1982
    %2216 = vmatprep.subr.bf16.mxu0 0
    %2217 = vmatpush1.bf16.msra.mxu0 %v1983
    %2218 = vmatprep.subr.bf16.mxu0 0
    %2219 = vmatpush1.bf16.msra.mxu0 %v1984
    %2220 = vmatprep.subr.bf16.mxu0 0
    %2221 = vmatpush1.bf16.msra.mxu0 %v1985
    %2222 = vmatprep.subr.bf16.mxu0 0
    %2223 = vmatpush1.bf16.msra.mxu0 %v1986
    %2224 = vmatprep.subr.bf16.mxu0 0
    %2225 = vmatpush1.bf16.msra.mxu0 %v1987
    %2226 = vmatprep.subr.bf16.mxu0 0
    %2227 = vmatpush1.bf16.msra.mxu0 %v1988
    %2228 = vmatprep.subr.bf16.mxu0 0
    %2229 = vmatpush1.bf16.msra.mxu0 %v1989
    %2230 = vmatprep.subr.bf16.mxu0 0
    %2231 = vmatpush1.bf16.msra.mxu0 %v1990
    %2232 = vmatprep.mubr.bf16.mxu0 %v1530
    %2233 = vmatmul.mubr.bf16.gmra.mrb[0].mxu0 %v1529
    %v2234 = vpop.f32.mrb[0].mxu0
    %v2235 = vadd.f32 %v2138, %v2234
    %v2236 = vpop.f32.mrb[0].mxu0
    %v2237 = vpop.f32.mrb[0].mxu0
    %v2238 = vadd.f32 %v2141, %v2237
    %v2239 = vpop.f32.mrb[0].mxu0
    %2240 = vmatprep.mubr.bf16.mxu0 %v1539
    %2241 = vmatmul.mubr.bf16.gmra.mrb[0].mxu0 %v1538
    %v2242 = vpop.f32.mrb[0].mxu0
    %v2243 = vadd.f32 %v2146, %v2242
    %v2244 = vpop.f32.mrb[0].mxu0
    %v2245 = vpop.f32.mrb[0].mxu0
    %v2246 = vadd.f32 %v2149, %v2245
    %v2247 = vpop.f32.mrb[0].mxu0
    %2248 = vmatprep.mubr.bf16.mxu0 %v1548
    %2249 = vmatmul.mubr.bf16.gmra.mrb[0].mxu0 %v1547
    %v2250 = vpop.f32.mrb[0].mxu0
    %v2251 = vadd.f32 %v2154, %v2250
    %v2252 = vpop.f32.mrb[0].mxu0
    %v2253 = vpop.f32.mrb[0].mxu0
    %v2254 = vadd.f32 %v2157, %v2253
    %v2255 = vpop.f32.mrb[0].mxu0
    %2256 = vmatprep.mubr.bf16.mxu0 %v1557
    %2257 = vmatmul.mubr.bf16.gmra.mrb[0].mxu0 %v1556
    %v2258 = vpop.f32.mrb[0].mxu0
    %v2259 = vadd.f32 %v2162, %v2258
    %v2260 = vpop.f32.mrb[0].mxu0
    %v2261 = vpop.f32.mrb[0].mxu0
    %v2262 = vadd.f32 %v2165, %v2261
    %v2263 = vpop.f32.mrb[0].mxu0
    %2264 = vmatprep.mubr.bf16.mxu0 %v1566
    %2265 = vmatmul.mubr.bf16.gmra.mrb[0].mxu0 %v1565
    %v2266 = vpop.f32.mrb[0].mxu0
    %v2267 = vadd.f32 %v2170, %v2266
    %v2268 = vpop.f32.mrb[0].mxu0
    %v2269 = vpop.f32.mrb[0].mxu0
    %v2270 = vadd.f32 %v2173, %v2269
    %v2271 = vpop.f32.mrb[0].mxu0
    %2272 = vmatprep.mubr.bf16.mxu0 %v1575
    %2273 = vmatmul.mubr.bf16.gmra.mrb[0].mxu0 %v1574
    %v2274 = vpop.f32.mrb[0].mxu0
    %v2275 = vadd.f32 %v2178, %v2274
    %v2276 = vpop.f32.mrb[0].mxu0
    %v2277 = vpop.f32.mrb[0].mxu0
    %v2278 = vadd.f32 %v2181, %v2277
    %v2279 = vpop.f32.mrb[0].mxu0
    %2280 = vmatprep.mubr.bf16.mxu0 %v1584
    %2281 = vmatmul.mubr.bf16.gmra.mrb[0].mxu0 %v1583
    %v2282 = vpop.f32.mrb[0].mxu0
    %v2283 = vadd.f32 %v2186, %v2282
    %v2284 = vpop.f32.mrb[0].mxu0
    %v2285 = vpop.f32.mrb[0].mxu0
    %v2286 = vadd.f32 %v2189, %v2285
    %v2287 = vpop.f32.mrb[0].mxu0
    %2288 = vmatprep.mubr.bf16.mxu0 %v1593
    %2289 = vmatmul.mubr.bf16.gmra.mrb[0].mxu0 %v1592
    %v2290 = vpop.f32.mrb[0].mxu0
    %v2291 = vadd.f32 %v2194, %v2290
    %v2292 = vpop.f32.mrb[0].mxu0
    %v2293 = vpop.f32.mrb[0].mxu0
    %v2294 = vadd.f32 %v2197, %v2293
    %v2295 = vpop.f32.mrb[0].mxu0
    %2296 = vdwg.mxu0
    %2297 = vmatprep.subr.bf16.mxu0 0
    %2298 = vmatpush1.bf16.msra.mxu0 %v1991
    %2299 = vmatprep.subr.bf16.mxu0 0
    %2300 = vmatpush1.bf16.msra.mxu0 %v1992
    %2301 = vmatprep.subr.bf16.mxu0 0
    %2302 = vmatpush1.bf16.msra.mxu0 %v1993
    %2303 = vmatprep.subr.bf16.mxu0 0
    %2304 = vmatpush1.bf16.msra.mxu0 %v1994
    %2305 = vmatprep.subr.bf16.mxu0 0
    %2306 = vmatpush1.bf16.msra.mxu0 %v1995
    %2307 = vmatprep.subr.bf16.mxu0 0
    %2308 = vmatpush1.bf16.msra.mxu0 %v1996
    %2309 = vmatprep.subr.bf16.mxu0 0
    %2310 = vmatpush1.bf16.msra.mxu0 %v1997
    %2311 = vmatprep.subr.bf16.mxu0 0
    %2312 = vmatpush1.bf16.msra.mxu0 %v1998
    %2313 = vmatprep.subr.bf16.mxu0 0
    %2314 = vmatpush1.bf16.msra.mxu0 %v1999
    %2315 = vmatprep.subr.bf16.mxu0 0
    %2316 = vmatpush1.bf16.msra.mxu0 %v2000
    %2317 = vmatprep.subr.bf16.mxu0 0
    %2318 = vmatpush1.bf16.msra.mxu0 %v2001
    %2319 = vmatprep.subr.bf16.mxu0 0
    %2320 = vmatpush1.bf16.msra.mxu0 %v2002
    %2321 = vmatprep.subr.bf16.mxu0 0
    %2322 = vmatpush1.bf16.msra.mxu0 %v2003
    %2323 = vmatprep.subr.bf16.mxu0 0
    %2324 = vmatpush1.bf16.msra.mxu0 %v2004
    %2325 = vmatprep.subr.bf16.mxu0 0
    %2326 = vmatpush1.bf16.msra.mxu0 %v2005
    %2327 = vmatprep.subr.bf16.mxu0 0
    %2328 = vmatpush1.bf16.msra.mxu0 %v2006
    %2329 = vmatprep.mubr.bf16.mxu0 %v1532
    %2330 = vmatmul.mubr.bf16.gmra.mrb[0].mxu0 %v1531
    %v2331 = vpop.f32.mrb[0].mxu0
    %v2332 = vadd.f32 %v2235, %v2331
    %v2333 = vpop.f32.mrb[0].mxu0
    %v2334 = vpop.f32.mrb[0].mxu0
    %v2335 = vadd.f32 %v2238, %v2334
    %v2336 = vpop.f32.mrb[0].mxu0
    %2337 = vmatprep.mubr.bf16.mxu0 %v1541
    %2338 = vmatmul.mubr.bf16.gmra.mrb[0].mxu0 %v1540
    %v2339 = vpop.f32.mrb[0].mxu0
    %v2340 = vadd.f32 %v2243, %v2339
    %v2341 = vpop.f32.mrb[0].mxu0
    %v2342 = vpop.f32.mrb[0].mxu0
    %v2343 = vadd.f32 %v2246, %v2342
    %v2344 = vpop.f32.mrb[0].mxu0
    %2345 = vmatprep.mubr.bf16.mxu0 %v1550
    %2346 = vmatmul.mubr.bf16.gmra.mrb[0].mxu0 %v1549
    %v2347 = vpop.f32.mrb[0].mxu0
    %v2348 = vadd.f32 %v2251, %v2347
    %v2349 = vpop.f32.mrb[0].mxu0
    %v2350 = vpop.f32.mrb[0].mxu0
    %v2351 = vadd.f32 %v2254, %v2350
    %v2352 = vpop.f32.mrb[0].mxu0
    %2353 = vmatprep.mubr.bf16.mxu0 %v1559
    %2354 = vmatmul.mubr.bf16.gmra.mrb[0].mxu0 %v1558
    %v2355 = vpop.f32.mrb[0].mxu0
    %v2356 = vadd.f32 %v2259, %v2355
    %v2357 = vpop.f32.mrb[0].mxu0
    %v2358 = vpop.f32.mrb[0].mxu0
    %v2359 = vadd.f32 %v2262, %v2358
    %v2360 = vpop.f32.mrb[0].mxu0
    %2361 = vmatprep.mubr.bf16.mxu0 %v1568
    %2362 = vmatmul.mubr.bf16.gmra.mrb[0].mxu0 %v1567
    %v2363 = vpop.f32.mrb[0].mxu0
    %v2364 = vadd.f32 %v2267, %v2363
    %v2365 = vpop.f32.mrb[0].mxu0
    %v2366 = vpop.f32.mrb[0].mxu0
    %v2367 = vadd.f32 %v2270, %v2366
    %v2368 = vpop.f32.mrb[0].mxu0
    %2369 = vmatprep.mubr.bf16.mxu0 %v1577
    %2370 = vmatmul.mubr.bf16.gmra.mrb[0].mxu0 %v1576
    %v2371 = vpop.f32.mrb[0].mxu0
    %v2372 = vadd.f32 %v2275, %v2371
    %v2373 = vpop.f32.mrb[0].mxu0
    %v2374 = vpop.f32.mrb[0].mxu0
    %v2375 = vadd.f32 %v2278, %v2374
    %v2376 = vpop.f32.mrb[0].mxu0
    %2377 = vmatprep.mubr.bf16.mxu0 %v1586
    %2378 = vmatmul.mubr.bf16.gmra.mrb[0].mxu0 %v1585
    %v2379 = vpop.f32.mrb[0].mxu0
    %v2380 = vadd.f32 %v2283, %v2379
    %v2381 = vpop.f32.mrb[0].mxu0
    %v2382 = vpop.f32.mrb[0].mxu0
    %v2383 = vadd.f32 %v2286, %v2382
    %v2384 = vpop.f32.mrb[0].mxu0
    %2385 = vmatprep.mubr.bf16.mxu0 %v1595
    %2386 = vmatmul.mubr.bf16.gmra.mrb[0].mxu0 %v1594
    %v2387 = vpop.f32.mrb[0].mxu0
    %v2388 = vadd.f32 %v2291, %v2387
    %v2389 = vpop.f32.mrb[0].mxu0
    %v2390 = vpop.f32.mrb[0].mxu0
    %v2391 = vadd.f32 %v2294, %v2390
    %v2392 = vpop.f32.mrb[0].mxu0
    %2393 = vdwg.mxu0
    %2394 = vmatprep.subr.bf16.mxu0 0
    %2395 = vmatpush1.bf16.msra.mxu0 %v2007
    %2396 = vmatprep.subr.bf16.mxu0 0
    %2397 = vmatpush1.bf16.msra.mxu0 %v2008
    %2398 = vmatprep.subr.bf16.mxu0 0
    %2399 = vmatpush1.bf16.msra.mxu0 %v2009
    %2400 = vmatprep.subr.bf16.mxu0 0
    %2401 = vmatpush1.bf16.msra.mxu0 %v2010
    %2402 = vmatprep.subr.bf16.mxu0 0
    %2403 = vmatpush1.bf16.msra.mxu0 %v2011
    %2404 = vmatprep.subr.bf16.mxu0 0
    %2405 = vmatpush1.bf16.msra.mxu0 %v2012
    %2406 = vmatprep.subr.bf16.mxu0 0
    %2407 = vmatpush1.bf16.msra.mxu0 %v2013
    %2408 = vmatprep.subr.bf16.mxu0 0
    %2409 = vmatpush1.bf16.msra.mxu0 %v2014
    %2410 = vmatprep.subr.bf16.mxu0 0
    %2411 = vmatpush1.bf16.msra.mxu0 %v2015
    %2412 = vmatprep.subr.bf16.mxu0 0
    %2413 = vmatpush1.bf16.msra.mxu0 %v2016
    %2414 = vmatprep.subr.bf16.mxu0 0
    %2415 = vmatpush1.bf16.msra.mxu0 %v2017
    %2416 = vmatprep.subr.bf16.mxu0 0
    %2417 = vmatpush1.bf16.msra.mxu0 %v2018
    %2418 = vmatprep.subr.bf16.mxu0 0
    %2419 = vmatpush1.bf16.msra.mxu0 %v2019
    %2420 = vmatprep.subr.bf16.mxu0 0
    %2421 = vmatpush1.bf16.msra.mxu0 %v2020
    %2422 = vmatprep.subr.bf16.mxu0 0
    %2423 = vmatpush1.bf16.msra.mxu0 %v2021
    %2424 = vmatprep.subr.bf16.mxu0 0
    %2425 = vmatpush1.bf16.msra.mxu0 %v2022
    %2426 = vmatprep.mubr.bf16.mxu0 %v1534
    %2427 = vmatmul.mubr.bf16.gmra.mrb[0].mxu0 %v1533
    %v2428 = vpop.f32.mrb[0].mxu0
    %v2429 = vadd.f32 %v2332, %v2428
    %v2430 = vpop.f32.mrb[0].mxu0
    %v2431 = vpop.f32.mrb[0].mxu0
    %v2432 = vadd.f32 %v2335, %v2431
    %v2433 = vpop.f32.mrb[0].mxu0
    %2434 = vmatprep.mubr.bf16.mxu0 %v1543
    %2435 = vmatmul.mubr.bf16.gmra.mrb[0].mxu0 %v1542
    %v2436 = vpop.f32.mrb[0].mxu0
    %v2437 = vadd.f32 %v2340, %v2436
    %v2438 = vpop.f32.mrb[0].mxu0
    %v2439 = vpop.f32.mrb[0].mxu0
    %v2440 = vadd.f32 %v2343, %v2439
    %v2441 = vpop.f32.mrb[0].mxu0
    %2442 = vmatprep.mubr.bf16.mxu0 %v1552
    %2443 = vmatmul.mubr.bf16.gmra.mrb[0].mxu0 %v1551
    %v2444 = vpop.f32.mrb[0].mxu0
    %v2445 = vadd.f32 %v2348, %v2444
    %v2446 = vpop.f32.mrb[0].mxu0
    %v2447 = vpop.f32.mrb[0].mxu0
    %v2448 = vadd.f32 %v2351, %v2447
    %v2449 = vpop.f32.mrb[0].mxu0
    %2450 = vmatprep.mubr.bf16.mxu0 %v1561
    %2451 = vmatmul.mubr.bf16.gmra.mrb[0].mxu0 %v1560
    %v2452 = vpop.f32.mrb[0].mxu0
    %v2453 = vadd.f32 %v2356, %v2452
    %v2454 = vpop.f32.mrb[0].mxu0
    %v2455 = vpop.f32.mrb[0].mxu0
    %v2456 = vadd.f32 %v2359, %v2455
    %v2457 = vpop.f32.mrb[0].mxu0
    %2458 = vmatprep.mubr.bf16.mxu0 %v1570
    %2459 = vmatmul.mubr.bf16.gmra.mrb[0].mxu0 %v1569
    %v2460 = vpop.f32.mrb[0].mxu0
    %v2461 = vadd.f32 %v2364, %v2460
    %v2462 = vpop.f32.mrb[0].mxu0
    %v2463 = vpop.f32.mrb[0].mxu0
    %v2464 = vadd.f32 %v2367, %v2463
    %v2465 = vpop.f32.mrb[0].mxu0
    %2466 = vmatprep.mubr.bf16.mxu0 %v1579
    %2467 = vmatmul.mubr.bf16.gmra.mrb[0].mxu0 %v1578
    %v2468 = vpop.f32.mrb[0].mxu0
    %v2469 = vadd.f32 %v2372, %v2468
    %v2470 = vpop.f32.mrb[0].mxu0
    %v2471 = vpop.f32.mrb[0].mxu0
    %v2472 = vadd.f32 %v2375, %v2471
    %v2473 = vpop.f32.mrb[0].mxu0
    %2474 = vmatprep.mubr.bf16.mxu0 %v1588
    %2475 = vmatmul.mubr.bf16.gmra.mrb[0].mxu0 %v1587
    %v2476 = vpop.f32.mrb[0].mxu0
    %v2477 = vadd.f32 %v2380, %v2476
    %v2478 = vpop.f32.mrb[0].mxu0
    %v2479 = vpop.f32.mrb[0].mxu0
    %v2480 = vadd.f32 %v2383, %v2479
    %v2481 = vpop.f32.mrb[0].mxu0
    %2482 = vmatprep.mubr.bf16.mxu0 %v1597
    %2483 = vmatmul.mubr.bf16.gmra.mrb[0].mxu0 %v1596
    %v2484 = vpop.f32.mrb[0].mxu0
    %v2485 = vadd.f32 %v2388, %v2484
    %v2486 = vpop.f32.mrb[0].mxu0
    %v2487 = vpop.f32.mrb[0].mxu0
    %v2488 = vadd.f32 %v2391, %v2487
    %v2489 = vpop.f32.mrb[0].mxu0
    %2490 = vdwg.mxu0
    %2491 = vmatprep.subr.bf16.mxu0 0
    %2492 = vmatpush1.bf16.msra.mxu0 %v2023
    %2493 = vmatprep.subr.bf16.mxu0 0
    %2494 = vmatpush1.bf16.msra.mxu0 %v2024
    %2495 = vmatprep.subr.bf16.mxu0 0
    %2496 = vmatpush1.bf16.msra.mxu0 %v2025
    %2497 = vmatprep.subr.bf16.mxu0 0
    %2498 = vmatpush1.bf16.msra.mxu0 %v2026
    %2499 = vmatprep.subr.bf16.mxu0 0
    %2500 = vmatpush1.bf16.msra.mxu0 %v2027
    %2501 = vmatprep.subr.bf16.mxu0 0
    %2502 = vmatpush1.bf16.msra.mxu0 %v2028
    %2503 = vmatprep.subr.bf16.mxu0 0
    %2504 = vmatpush1.bf16.msra.mxu0 %v2029
    %2505 = vmatprep.subr.bf16.mxu0 0
    %2506 = vmatpush1.bf16.msra.mxu0 %v2030
    %2507 = vmatprep.subr.bf16.mxu0 0
    %2508 = vmatpush1.bf16.msra.mxu0 0
    %2509 = vmatprep.subr.bf16.mxu0 0
    %2510 = vmatpush1.bf16.msra.mxu0 0
    %2511 = vmatprep.subr.bf16.mxu0 0
    %2512 = vmatpush1.bf16.msra.mxu0 0
    %2513 = vmatprep.subr.bf16.mxu0 0
    %2514 = vmatpush1.bf16.msra.mxu0 0
    %2515 = vmatprep.subr.bf16.mxu0 0
    %2516 = vmatpush1.bf16.msra.mxu0 0
    %2517 = vmatprep.subr.bf16.mxu0 0
    %2518 = vmatpush1.bf16.msra.mxu0 0
    %2519 = vmatprep.subr.bf16.mxu0 0
    %2520 = vmatpush1.bf16.msra.mxu0 0
    %2521 = vmatprep.subr.bf16.mxu0 0
    %2522 = vmatpush1.bf16.msra.mxu0 0
    %2523 = vmatprep.mubr.bf16.mxu0 0
    %2524 = vmatmul.mubr.bf16.gmra.mrb[0].mxu0 %v1535
    %v2525 = vpop.f32.mrb[0].mxu0
    %v2526 = vadd.f32 %v2429, %v2525
    %v2527 = vpop.f32.mrb[0].mxu0
    %v2528 = vpop.f32.mrb[0].mxu0
    %v2529 = vadd.f32 %v2432, %v2528
    %v2530 = vpop.f32.mrb[0].mxu0
    %2531 = vmatprep.mubr.bf16.mxu0 0
    %2532 = vmatmul.mubr.bf16.gmra.mrb[0].mxu0 %v1544
    %v2533 = vpop.f32.mrb[0].mxu0
    %v2534 = vadd.f32 %v2437, %v2533
    %v2535 = vpop.f32.mrb[0].mxu0
    %v2536 = vpop.f32.mrb[0].mxu0
    %v2537 = vadd.f32 %v2440, %v2536
    %v2538 = vpop.f32.mrb[0].mxu0
    %2539 = vmatprep.mubr.bf16.mxu0 0
    %2540 = vmatmul.mubr.bf16.gmra.mrb[0].mxu0 %v1553
    %v2541 = vpop.f32.mrb[0].mxu0
    %v2542 = vadd.f32 %v2445, %v2541
    %v2543 = vpop.f32.mrb[0].mxu0
    %v2544 = vpop.f32.mrb[0].mxu0
    %v2545 = vadd.f32 %v2448, %v2544
    %v2546 = vpop.f32.mrb[0].mxu0
    %2547 = vmatprep.mubr.bf16.mxu0 0
    %2548 = vmatmul.mubr.bf16.gmra.mrb[0].mxu0 %v1562
    %v2549 = vpop.f32.mrb[0].mxu0
    %v2550 = vadd.f32 %v2453, %v2549
    %v2551 = vpop.f32.mrb[0].mxu0
    %v2552 = vpop.f32.mrb[0].mxu0
    %v2553 = vadd.f32 %v2456, %v2552
    %v2554 = vpop.f32.mrb[0].mxu0
    %2555 = vmatprep.mubr.bf16.mxu0 0
    %2556 = vmatmul.mubr.bf16.gmra.mrb[0].mxu0 %v1571
    %v2557 = vpop.f32.mrb[0].mxu0
    %v2558 = vadd.f32 %v2461, %v2557
    %v2559 = vpop.f32.mrb[0].mxu0
    %v2560 = vpop.f32.mrb[0].mxu0
    %v2561 = vadd.f32 %v2464, %v2560
    %v2562 = vpop.f32.mrb[0].mxu0
    %2563 = vmatprep.mubr.bf16.mxu0 0
    %2564 = vmatmul.mubr.bf16.gmra.mrb[0].mxu0 %v1580
    %v2565 = vpop.f32.mrb[0].mxu0
    %v2566 = vadd.f32 %v2469, %v2565
    %v2567 = vpop.f32.mrb[0].mxu0
    %v2568 = vpop.f32.mrb[0].mxu0
    %v2569 = vadd.f32 %v2472, %v2568
    %v2570 = vpop.f32.mrb[0].mxu0
    %2571 = vmatprep.mubr.bf16.mxu0 0
    %2572 = vmatmul.mubr.bf16.gmra.mrb[0].mxu0 %v1589
    %v2573 = vpop.f32.mrb[0].mxu0
    %v2574 = vadd.f32 %v2477, %v2573
    %v2575 = vpop.f32.mrb[0].mxu0
    %v2576 = vpop.f32.mrb[0].mxu0
    %v2577 = vadd.f32 %v2480, %v2576
    %v2578 = vpop.f32.mrb[0].mxu0
    %2579 = vmatprep.mubr.bf16.mxu0 0
    %2580 = vmatmul.mubr.bf16.gmra.mrb[0].mxu0 %v1598
    %v2581 = vpop.f32.mrb[0].mxu0
    %v2582 = vadd.f32 %v2485, %v2581
    %v2583 = vpop.f32.mrb[0].mxu0
    %v2584 = vpop.f32.mrb[0].mxu0
    %v2585 = vadd.f32 %v2488, %v2584
    %v2586 = vpop.f32.mrb[0].mxu0
    %2587 = vdwg.mxu0
    %v2588 = vld [vmem:[#allocation5] sm:$0x1]
    %v2590 = vlaneseq
    %v2591 = vshrl.u32 %v2590, 7
    %v2592 = vsub.s32 0, %v2591
    %v2593 = vrot.slane %v2588, %v2592
    %v2595 = vmul.f32 %v2526, %v2593
    %v2596 = vmul.f32 %v2529, %v2593
    %v2597 = vmul.f32 %v2534, %v2593
    %v2598 = vmul.f32 %v2537, %v2593
    %v2599 = vmul.f32 %v2542, %v2593
    %v2600 = vmul.f32 %v2545, %v2593
    %v2601 = vmul.f32 %v2550, %v2593
    %v2602 = vmul.f32 %v2553, %v2593
    %v2603 = vmul.f32 %v2558, %v2593
    %v2604 = vmul.f32 %v2561, %v2593
    %v2605 = vmul.f32 %v2566, %v2593
    %v2606 = vmul.f32 %v2569, %v2593
    %v2607 = vmul.f32 %v2574, %v2593
    %v2608 = vmul.f32 %v2577, %v2593
    %v2609 = vmul.f32 %v2582, %v2593
    %v2610 = vmul.f32 %v2585, %v2593
    %v2611 = vld [vmem:[#allocation7] sm:$0x1]
    %v2613 = vlaneseq
    %v2614 = vshrl.u32 %v2613, 7
    %v2615 = vsub.s32 0, %v2614
    %v2616 = vrot.slane %v2611, %v2615
    %v2618 = vadd.f32 %v2595, %v2616
    %v2619 = vadd.f32 %v2596, %v2616
    %v2620 = vadd.f32 %v2597, %v2616
    %v2621 = vadd.f32 %v2598, %v2616
    %v2622 = vadd.f32 %v2599, %v2616
    %v2623 = vadd.f32 %v2600, %v2616
    %v2624 = vadd.f32 %v2601, %v2616
    %v2625 = vadd.f32 %v2602, %v2616
    %v2626 = vadd.f32 %v2603, %v2616
    %v2627 = vadd.f32 %v2604, %v2616
    %v2628 = vadd.f32 %v2605, %v2616
    %v2629 = vadd.f32 %v2606, %v2616
    %v2630 = vadd.f32 %v2607, %v2616
    %v2631 = vadd.f32 %v2608, %v2616
    %v2632 = vadd.f32 %v2609, %v2616
    %v2633 = vadd.f32 %v2610, %v2616
    %v2634 = vmax.f32 %v2618, 0.0
    %v2635 = vmax.f32 %v2619, 0.0
    %v2636 = vmax.f32 %v2620, 0.0
    %v2637 = vmax.f32 %v2621, 0.0
    %v2638 = vmax.f32 %v2622, 0.0
    %v2639 = vmax.f32 %v2623, 0.0
    %v2640 = vmax.f32 %v2624, 0.0
    %v2641 = vmax.f32 %v2625, 0.0
    %v2642 = vmax.f32 %v2626, 0.0
    %v2643 = vmax.f32 %v2627, 0.0
    %v2644 = vmax.f32 %v2628, 0.0
    %v2645 = vmax.f32 %v2629, 0.0
    %v2646 = vmax.f32 %v2630, 0.0
    %v2647 = vmax.f32 %v2631, 0.0
    %v2648 = vmax.f32 %v2632, 0.0
    %v2649 = vmax.f32 %v2633, 0.0
    %v2650 = vpack.c.bf16 %v2634, %v2634
    %v2651 = vpack.c.bf16 %v2635, %v2635
    %v2652 = vpack.c.bf16 %v2636, %v2636
    %v2653 = vpack.c.bf16 %v2637, %v2637
    %v2654 = vpack.c.bf16 %v2638, %v2638
    %v2655 = vpack.c.bf16 %v2639, %v2639
    %v2656 = vpack.c.bf16 %v2640, %v2640
    %v2657 = vpack.c.bf16 %v2641, %v2641
    %v2658 = vpack.c.bf16 %v2642, %v2642
    %v2659 = vpack.c.bf16 %v2643, %v2643
    %v2660 = vpack.c.bf16 %v2644, %v2644
    %v2661 = vpack.c.bf16 %v2645, %v2645
    %v2662 = vpack.c.bf16 %v2646, %v2646
    %v2663 = vpack.c.bf16 %v2647, %v2647
    %v2664 = vpack.c.bf16 %v2648, %v2648
    %v2665 = vpack.c.bf16 %v2649, %v2649
    %2666 = vst [vmem:[%s4] sm:$0xf] %v2650
    %2667 = vst [vmem:[%s4 + $0x4] sm:$0xf] %v2651
    %2668 = vst [vmem:[%s4 + $0x8] sm:$0xf] %v2652
    %2669 = vst [vmem:[%s4 + $0xc] sm:$0xf] %v2653
    %2670 = vst [vmem:[%s4 + $0x10] sm:$0xf] %v2654
    %2671 = vst [vmem:[%s4 + $0x14] sm:$0xf] %v2655
    %2672 = vst [vmem:[%s4 + $0x18] sm:$0xf] %v2656
    %2673 = vst [vmem:[%s4 + $0x1c] sm:$0xf] %v2657
    %2674 = vst [vmem:[%s4 + $0x20] sm:$0xf] %v2658
    %2675 = vst [vmem:[%s4 + $0x24] sm:$0xf] %v2659
    %2676 = vst [vmem:[%s4 + $0x28] sm:$0xf] %v2660
    %2677 = vst [vmem:[%s4 + $0x2c] sm:$0xf] %v2661
    %2678 = vst [vmem:[%s4 + $0x30] sm:$0xf] %v2662
    %2679 = vst [vmem:[%s4 + $0x34] sm:$0xf] %v2663
    %2680 = vst [vmem:[%s4 + $0x38] sm:$0xf] %v2664
    %2681 = vst [vmem:[%s4 + $0x3c] sm:$0xf] %v2665
    // Predicated region
    $region30: #{forward.8} parent=1 // pred_check
      _
    $region31: #{forward.8} parent=1 // pred_check_branch
      %2683 = sbr.rel (0) target = $region33
    $region32: #{forward.8} parent=1 // pred_region
      _
    $region33: #{forward.8} parent=1 // pred_fallthru
      _
    // Predicated region
    $region34: #{forward.8} parent=1 // pred_check
      _
    $region35: #{forward.8} parent=1 // pred_check_branch
      %2685 = sbr.rel (0) target = $region37
    $region36: #{forward.8} parent=1 // pred_region
      _
    $region37: #{forward.8} parent=1 // pred_fallthru
      _
    %2686 = vsyncpa [#allocation4], 1
    %2687 = vsyncpa [#allocation6], 1

// kernel: forward.9
$region0: #{forward.9}
  #allocation0 [shape = 'u32[]', space=smem, size = 0x4, offset = 0x4, fixed_abs, tag = 'smem constant byte address 0x4 - core index']
  #allocation1 [shape = 'u32[144,128]{1,0:T(1,128)}', space=vmem, size = 0x12000, scoped, tag = 'internal scratch']
  #allocation2 [shape = 'bf16[2,10,10,128]{3,2,1,0:T(8,128)(2,1)}', space=vmem, size = 0x14000, scoped, tag = 'scratch operand']
  %s0 = inlined_call_operand.vmem [shape: bf16[2,8,8,128], index: 0, kind: input, shape index: {}]
  %s1 = inlined_call_operand.hbm [shape: bf16[1152,128], index: 1, kind: input, shape index: {}]
  %s2 = inlined_call_operand.hbm [shape: f32[1,128], index: 2, kind: input, shape index: {}]
  %s3 = inlined_call_operand.hbm [shape: f32[1,128], index: 3, kind: input, shape index: {}]
  %s4 = inlined_call_operand.vmem [shape: bf16[2,8,8,128], index: 4, kind: input, shape index: {}]
  %s5 = inlined_call_operand.vmem [shape: bf16[2,8,8,128], index: 5, kind: output, shape index: {}]
  %s6 = sld [smem:[#allocation0]]
  $region42: #{forward.9} parent=0
    _
  %s8 = ssub.s32 1, %s6
  %s9 = scalar_select 0, %s8, %s6
  $region1: #{forward.9} parent=0
    #allocation3 [shape = 'u8[294912]{0}', space=vmem, size = 0x48000, scoped, tag = 'input window, operand 1, single buffered']
    #allocation4 [shape = 's32[1]{0}', space=sflag, size = 0x4, scoped, tag = 'scoped memory for forward.9']
    #allocation5 [shape = 'u8[512]{0}', space=vmem, size = 0x400, scoped, tag = 'input window, operand 2, single buffered']
    #allocation6 [shape = 's32[1]{0}', space=sflag, size = 0x4, scoped, tag = 'scoped memory for forward.9']
    #allocation7 [shape = 'u8[512]{0}', space=vmem, size = 0x400, scoped, tag = 'input window, operand 3, single buffered']
    %10 = vsyncpa [#allocation4], 0
    %11 = vsyncpa [#allocation6], 0
    // Predicated region
    $region2: #{forward.9} parent=1 // pred_check
      _
    $region3: #{forward.9} parent=1 // pred_check_branch
      %13 = sbr.rel (0) target = $region5
    $region4: #{forward.9} parent=1 // pred_region
      _
    $region5: #{forward.9} parent=1 // pred_fallthru
      _
    // Predicated region
    $region6: #{forward.9} parent=1 // pred_check
      _
    $region7: #{forward.9} parent=1 // pred_check_branch
      %15 = sbr.rel (0) target = $region9
    $region8: #{forward.9} parent=1 // pred_region
      %s17 = ssub.s32 9216, 9216
      %18 = vsyncadd [#allocation4], %s17
      %s19 = sshll.u32 [#allocation3], 4
      %s20 = int_to_ptr.vmem [resolvable:$true] %s19
      %25 = dma.hbm_to_vmem [thread:$0]  %s1, 9216, %s20, [#allocation4], 64, 64, 4
    $region9: #{forward.9} parent=1 // pred_fallthru
      _
    // Predicated region
    $region10: #{forward.9} parent=1 // pred_check
      _
    $region11: #{forward.9} parent=1 // pred_check_branch
      %27 = sbr.rel (0) target = $region13
    $region12: #{forward.9} parent=1 // pred_region
      %s29 = ssub.s32 16, 16
      %30 = vsyncadd [#allocation6], %s29
      %s32 = sshll.u32 [#allocation5], 4
      %s33 = int_to_ptr.vmem [resolvable:$true] %s32
      %35 = dma.hbm_to_vmem [thread:$0]  %s2, 16, %s33, [#allocation6]
    $region13: #{forward.9} parent=1 // pred_fallthru
      _
    // Predicated region
    $region14: #{forward.9} parent=1 // pred_check
      _
    $region15: #{forward.9} parent=1 // pred_check_branch
      %37 = sbr.rel (0) target = $region17
    $region16: #{forward.9} parent=1 // pred_region
      %s39 = ssub.s32 16, 16
      %40 = vsyncadd [#allocation6], %s39
      %s42 = sshll.u32 [#allocation7], 4
      %s43 = int_to_ptr.vmem [resolvable:$true] %s42
      %45 = dma.hbm_to_vmem [thread:$0]  %s3, 16, %s43, [#allocation6]
    $region17: #{forward.9} parent=1 // pred_fallthru
      _
    // Predicated region
    $region18: #{forward.9} parent=1 // pred_check
      _
    $region19: #{forward.9} parent=1 // pred_check_branch
      %47 = sbr.rel (0) target = $region21
    $region20: #{forward.9} parent=1 // pred_region
      _
    $region21: #{forward.9} parent=1 // pred_fallthru
      _
    // Predicated region
    $region22: #{forward.9} parent=1 // pred_check
      _
    $region23: #{forward.9} parent=1 // pred_check_branch
      %49 = sbr.rel (0) target = $region25
    $region24: #{forward.9} parent=1 // pred_region
      %50 = dma.done [#allocation4], 9216
    $region25: #{forward.9} parent=1 // pred_fallthru
      _
    // Predicated region
    $region26: #{forward.9} parent=1 // pred_check
      _
    $region27: #{forward.9} parent=1 // pred_check_branch
      %52 = sbr.rel (0) target = $region29
    $region28: #{forward.9} parent=1 // pred_region
      %53 = dma.done [#allocation6], 16
    $region29: #{forward.9} parent=1 // pred_fallthru
      _
    // Predicated region
    $region30: #{forward.9} parent=1 // pred_check
      _
    $region31: #{forward.9} parent=1 // pred_check_branch
      %55 = sbr.rel (0) target = $region33
    $region32: #{forward.9} parent=1 // pred_region
      %56 = dma.done [#allocation6], 16
    $region33: #{forward.9} parent=1 // pred_fallthru
      _
    %v58 = vld [vmem:[%s4] sm:$0xf]
    %v59 = vld [vmem:[%s4 + $0x4] sm:$0xf]
    %v60 = vld [vmem:[%s4 + $0x8] sm:$0xf]
    %v61 = vld [vmem:[%s4 + $0xc] sm:$0xf]
    %v62 = vld [vmem:[%s4 + $0x10] sm:$0xf]
    %v63 = vld [vmem:[%s4 + $0x14] sm:$0xf]
    %v64 = vld [vmem:[%s4 + $0x18] sm:$0xf]
    %v65 = vld [vmem:[%s4 + $0x1c] sm:$0xf]
    %v66 = vld [vmem:[%s4 + $0x20] sm:$0xf]
    %v67 = vld [vmem:[%s4 + $0x24] sm:$0xf]
    %v68 = vld [vmem:[%s4 + $0x28] sm:$0xf]
    %v69 = vld [vmem:[%s4 + $0x2c] sm:$0xf]
    %v70 = vld [vmem:[%s4 + $0x30] sm:$0xf]
    %v71 = vld [vmem:[%s4 + $0x34] sm:$0xf]
    %v72 = vld [vmem:[%s4 + $0x38] sm:$0xf]
    %v73 = vld [vmem:[%s4 + $0x3c] sm:$0xf]
    %74 = vst [vmem:[#allocation2] sm:$0xf] 0
    %75 = vst [vmem:[#allocation2 + $0x4] sm:$0x1] 0
    %76 = vst [vmem:[#allocation2 + $0x8] sm:$0xf] 0
    %77 = vst [vmem:[#allocation2 + $0xc] sm:$0x1] 0
    %78 = vst [vmem:[#allocation2 + $0x10] sm:$0xf] 0
    %79 = vst [vmem:[#allocation2 + $0x14] sm:$0x1] 0
    %80 = vst [vmem:[#allocation2 + $0x18] sm:$0xf] 0
    %81 = vst [vmem:[#allocation2 + $0x1c] sm:$0x1] 0
    %82 = vst [vmem:[#allocation2 + $0x20] sm:$0xf] 0
    %83 = vst [vmem:[#allocation2 + $0x24] sm:$0x1] 0
    %84 = vst [vmem:[#allocation2 + $0x28] sm:$0xf] 0
    %85 = vst [vmem:[#allocation2 + $0x2c] sm:$0x1] 0
    %86 = vst [vmem:[#allocation2 + $0x30] sm:$0xf] 0
    %87 = vst [vmem:[#allocation2 + $0x34] sm:$0x1] 0
    %88 = vst [vmem:[#allocation2 + $0x38] sm:$0xf] 0
    %89 = vst [vmem:[#allocation2 + $0x3c] sm:$0x1] 0
    %90 = vst [vmem:[#allocation2 + $0x40] sm:$0xf] 0
    %91 = vst [vmem:[#allocation2 + $0x44] sm:$0x1] 0
    %92 = vst [vmem:[#allocation2 + $0x48] sm:$0xf] 0
    %93 = vst [vmem:[#allocation2 + $0x4c] sm:$0x1] 0
    %94 = vst [vmem:[#allocation2 + $0x50] sm:$0xf] 0
    %95 = vst [vmem:[#allocation2 + $0x54] sm:$0x1] 0
    %96 = vst [vmem:[#allocation2 + $0x58] sm:$0xf] 0
    %97 = vst [vmem:[#allocation2 + $0x5c] sm:$0x1] 0
    %98 = vst [vmem:[#allocation2 + $0x60] sm:$0xf] 0
    %99 = vst [vmem:[#allocation2 + $0x64] sm:$0x1] 0
    %100 = vst [vmem:[#allocation2 + $0x68] sm:$0xf] 0
    %101 = vst [vmem:[#allocation2 + $0x6c] sm:$0x1] 0
    %102 = vst [vmem:[#allocation2 + $0x70] sm:$0xf] 0
    %103 = vst [vmem:[#allocation2 + $0x74] sm:$0x1] 0
    %104 = vst [vmem:[#allocation2 + $0x78] sm:$0xf] 0
    %105 = vst [vmem:[#allocation2 + $0x7c] sm:$0x1] 0
    %106 = vst [vmem:[#allocation2 + $0x80] sm:$0xf] 0
    %107 = vst [vmem:[#allocation2 + $0x84] sm:$0x1] 0
    %108 = vst [vmem:[#allocation2 + $0x88] sm:$0xf] 0
    %109 = vst [vmem:[#allocation2 + $0x8c] sm:$0x1] 0
    %110 = vst [vmem:[#allocation2 + $0x90] sm:$0xf] 0
    %111 = vst [vmem:[#allocation2 + $0x94] sm:$0x1] 0
    %112 = vst [vmem:[#allocation2 + $0x98] sm:$0xf] 0
    %113 = vst [vmem:[#allocation2 + $0x9c] sm:$0x1] 0
    %v114 = vld [vmem:[%s0] sm:$0xf]
    %v115 = vld [vmem:[%s0 + $0x4] sm:$0xf]
    %v116 = vld [vmem:[%s0 + $0x8] sm:$0xf]
    %v117 = vld [vmem:[%s0 + $0xc] sm:$0xf]
    %v118 = vld [vmem:[%s0 + $0x10] sm:$0xf]
    %v119 = vld [vmem:[%s0 + $0x14] sm:$0xf]
    %v120 = vld [vmem:[%s0 + $0x18] sm:$0xf]
    %v121 = vld [vmem:[%s0 + $0x1c] sm:$0xf]
    %v122 = vld [vmem:[%s0 + $0x20] sm:$0xf]
    %v123 = vld [vmem:[%s0 + $0x24] sm:$0xf]
    %v124 = vld [vmem:[%s0 + $0x28] sm:$0xf]
    %v125 = vld [vmem:[%s0 + $0x2c] sm:$0xf]
    %v126 = vld [vmem:[%s0 + $0x30] sm:$0xf]
    %v127 = vld [vmem:[%s0 + $0x34] sm:$0xf]
    %v128 = vld [vmem:[%s0 + $0x38] sm:$0xf]
    %v129 = vld [vmem:[%s0 + $0x3c] sm:$0xf]
    %v131 = vshrl.u32 %v114, 16
    %v133 = vrot.slane %v131, 7
    %v134 = vshll.u32 %v114, 16
    %v136 = vor.u32 %v133, %v134
    %v137 = vrot.slane %v133, 4
    %v139 = vshrl.u32 %v115, 16
    %v141 = vrot.slane %v139, 7
    %v142 = vshll.u32 %v115, 16
    %v144 = vor.u32 %v141, %v142
    %v145 = vrot.slane %v141, 4
    %v147 = vshrl.u32 %v116, 16
    %v149 = vrot.slane %v147, 7
    %v150 = vshll.u32 %v116, 16
    %v152 = vor.u32 %v149, %v150
    %v153 = vrot.slane %v149, 4
    %v155 = vshrl.u32 %v117, 16
    %v157 = vrot.slane %v155, 7
    %v158 = vshll.u32 %v117, 16
    %v160 = vor.u32 %v157, %v158
    %v161 = vrot.slane %v157, 4
    %v163 = vshrl.u32 %v118, 16
    %v165 = vrot.slane %v163, 7
    %v166 = vshll.u32 %v118, 16
    %v168 = vor.u32 %v165, %v166
    %v169 = vrot.slane %v165, 4
    %v171 = vshrl.u32 %v119, 16
    %v173 = vrot.slane %v171, 7
    %v174 = vshll.u32 %v119, 16
    %v176 = vor.u32 %v173, %v174
    %v177 = vrot.slane %v173, 4
    %v179 = vshrl.u32 %v120, 16
    %v181 = vrot.slane %v179, 7
    %v182 = vshll.u32 %v120, 16
    %v184 = vor.u32 %v181, %v182
    %v185 = vrot.slane %v181, 4
    %v187 = vshrl.u32 %v121, 16
    %v189 = vrot.slane %v187, 7
    %v190 = vshll.u32 %v121, 16
    %v192 = vor.u32 %v189, %v190
    %v193 = vrot.slane %v189, 4
    %v195 = vshrl.u32 %v122, 16
    %v197 = vrot.slane %v195, 7
    %v198 = vshll.u32 %v122, 16
    %v200 = vor.u32 %v197, %v198
    %v201 = vrot.slane %v197, 4
    %v203 = vshrl.u32 %v123, 16
    %v205 = vrot.slane %v203, 7
    %v206 = vshll.u32 %v123, 16
    %v208 = vor.u32 %v205, %v206
    %v209 = vrot.slane %v205, 4
    %v211 = vshrl.u32 %v124, 16
    %v213 = vrot.slane %v211, 7
    %v214 = vshll.u32 %v124, 16
    %v216 = vor.u32 %v213, %v214
    %v217 = vrot.slane %v213, 4
    %v219 = vshrl.u32 %v125, 16
    %v221 = vrot.slane %v219, 7
    %v222 = vshll.u32 %v125, 16
    %v224 = vor.u32 %v221, %v222
    %v225 = vrot.slane %v221, 4
    %v227 = vshrl.u32 %v126, 16
    %v229 = vrot.slane %v227, 7
    %v230 = vshll.u32 %v126, 16
    %v232 = vor.u32 %v229, %v230
    %v233 = vrot.slane %v229, 4
    %v235 = vshrl.u32 %v127, 16
    %v237 = vrot.slane %v235, 7
    %v238 = vshll.u32 %v127, 16
    %v240 = vor.u32 %v237, %v238
    %v241 = vrot.slane %v237, 4
    %v243 = vshrl.u32 %v128, 16
    %v245 = vrot.slane %v243, 7
    %v246 = vshll.u32 %v128, 16
    %v248 = vor.u32 %v245, %v246
    %v249 = vrot.slane %v245, 4
    %v251 = vshrl.u32 %v129, 16
    %v253 = vrot.slane %v251, 7
    %v254 = vshll.u32 %v129, 16
    %v256 = vor.u32 %v253, %v254
    %v257 = vrot.slane %v253, 4
    %s290 = scalar_lea.vmem [#allocation2], 8
    %vm291 = vcmask 1043456
    %vm292 = vsmask.f32 7938
    %vm293 = vmand %vm291, %vm292
    %v294 = vld [vmem:[%s290] sm:$0xf]
    %v295 = vsel %vm293, %v136, %v294
    %296 = vst [vmem:[%s290] sm:$0xf] %v295
    %vm297 = vcmask 1040384
    %vm298 = vsmask.f32 256
    %vm299 = vmand %vm297, %vm298
    %v300 = vld [vmem:[%s290 + $0x4] sm:$0x1]
    %v301 = vsel %vm299, %v137, %v300
    %302 = vst [vmem:[%s290 + $0x4] sm:$0x1] %v301
    %v303 = vld [vmem:[%s290 + $0x8] sm:$0xf]
    %v304 = vsel %vm293, %v144, %v303
    %305 = vst [vmem:[%s290 + $0x8] sm:$0xf] %v304
    %v306 = vld [vmem:[%s290 + $0xc] sm:$0x1]
    %v307 = vsel %vm299, %v145, %v306
    %308 = vst [vmem:[%s290 + $0xc] sm:$0x1] %v307
    %v309 = vld [vmem:[%s290 + $0x10] sm:$0xf]
    %v310 = vsel %vm293, %v152, %v309
    %311 = vst [vmem:[%s290 + $0x10] sm:$0xf] %v310
    %v312 = vld [vmem:[%s290 + $0x14] sm:$0x1]
    %v313 = vsel %vm299, %v153, %v312
    %314 = vst [vmem:[%s290 + $0x14] sm:$0x1] %v313
    %v315 = vld [vmem:[%s290 + $0x18] sm:$0xf]
    %v316 = vsel %vm293, %v160, %v315
    %317 = vst [vmem:[%s290 + $0x18] sm:$0xf] %v316
    %v318 = vld [vmem:[%s290 + $0x1c] sm:$0x1]
    %v319 = vsel %vm299, %v161, %v318
    %320 = vst [vmem:[%s290 + $0x1c] sm:$0x1] %v319
    %v321 = vld [vmem:[%s290 + $0x20] sm:$0xf]
    %v322 = vsel %vm293, %v168, %v321
    %323 = vst [vmem:[%s290 + $0x20] sm:$0xf] %v322
    %v324 = vld [vmem:[%s290 + $0x24] sm:$0x1]
    %v325 = vsel %vm299, %v169, %v324
    %326 = vst [vmem:[%s290 + $0x24] sm:$0x1] %v325
    %v327 = vld [vmem:[%s290 + $0x28] sm:$0xf]
    %v328 = vsel %vm293, %v176, %v327
    %329 = vst [vmem:[%s290 + $0x28] sm:$0xf] %v328
    %v330 = vld [vmem:[%s290 + $0x2c] sm:$0x1]
    %v331 = vsel %vm299, %v177, %v330
    %332 = vst [vmem:[%s290 + $0x2c] sm:$0x1] %v331
    %v333 = vld [vmem:[%s290 + $0x30] sm:$0xf]
    %v334 = vsel %vm293, %v184, %v333
    %335 = vst [vmem:[%s290 + $0x30] sm:$0xf] %v334
    %v336 = vld [vmem:[%s290 + $0x34] sm:$0x1]
    %v337 = vsel %vm299, %v185, %v336
    %338 = vst [vmem:[%s290 + $0x34] sm:$0x1] %v337
    %v339 = vld [vmem:[%s290 + $0x38] sm:$0xf]
    %v340 = vsel %vm293, %v192, %v339
    %341 = vst [vmem:[%s290 + $0x38] sm:$0xf] %v340
    %v342 = vld [vmem:[%s290 + $0x3c] sm:$0x1]
    %v343 = vsel %vm299, %v193, %v342
    %344 = vst [vmem:[%s290 + $0x3c] sm:$0x1] %v343
    %v345 = vld [vmem:[%s290 + $0x50] sm:$0xf]
    %v346 = vsel %vm293, %v200, %v345
    %347 = vst [vmem:[%s290 + $0x50] sm:$0xf] %v346
    %v348 = vld [vmem:[%s290 + $0x54] sm:$0x1]
    %v349 = vsel %vm299, %v201, %v348
    %350 = vst [vmem:[%s290 + $0x54] sm:$0x1] %v349
    %v351 = vld [vmem:[%s290 + $0x58] sm:$0xf]
    %v352 = vsel %vm293, %v208, %v351
    %353 = vst [vmem:[%s290 + $0x58] sm:$0xf] %v352
    %v354 = vld [vmem:[%s290 + $0x5c] sm:$0x1]
    %v355 = vsel %vm299, %v209, %v354
    %356 = vst [vmem:[%s290 + $0x5c] sm:$0x1] %v355
    %v357 = vld [vmem:[%s290 + $0x60] sm:$0xf]
    %v358 = vsel %vm293, %v216, %v357
    %359 = vst [vmem:[%s290 + $0x60] sm:$0xf] %v358
    %v360 = vld [vmem:[%s290 + $0x64] sm:$0x1]
    %v361 = vsel %vm299, %v217, %v360
    %362 = vst [vmem:[%s290 + $0x64] sm:$0x1] %v361
    %v363 = vld [vmem:[%s290 + $0x68] sm:$0xf]
    %v364 = vsel %vm293, %v224, %v363
    %365 = vst [vmem:[%s290 + $0x68] sm:$0xf] %v364
    %v366 = vld [vmem:[%s290 + $0x6c] sm:$0x1]
    %v367 = vsel %vm299, %v225, %v366
    %368 = vst [vmem:[%s290 + $0x6c] sm:$0x1] %v367
    %v369 = vld [vmem:[%s290 + $0x70] sm:$0xf]
    %v370 = vsel %vm293, %v232, %v369
    %371 = vst [vmem:[%s290 + $0x70] sm:$0xf] %v370
    %v372 = vld [vmem:[%s290 + $0x74] sm:$0x1]
    %v373 = vsel %vm299, %v233, %v372
    %374 = vst [vmem:[%s290 + $0x74] sm:$0x1] %v373
    %v375 = vld [vmem:[%s290 + $0x78] sm:$0xf]
    %v376 = vsel %vm293, %v240, %v375
    %377 = vst [vmem:[%s290 + $0x78] sm:$0xf] %v376
    %v378 = vld [vmem:[%s290 + $0x7c] sm:$0x1]
    %v379 = vsel %vm299, %v241, %v378
    %380 = vst [vmem:[%s290 + $0x7c] sm:$0x1] %v379
    %v381 = vld [vmem:[%s290 + $0x80] sm:$0xf]
    %v382 = vsel %vm293, %v248, %v381
    %383 = vst [vmem:[%s290 + $0x80] sm:$0xf] %v382
    %v384 = vld [vmem:[%s290 + $0x84] sm:$0x1]
    %v385 = vsel %vm299, %v249, %v384
    %386 = vst [vmem:[%s290 + $0x84] sm:$0x1] %v385
    %v387 = vld [vmem:[%s290 + $0x88] sm:$0xf]
    %v388 = vsel %vm293, %v256, %v387
    %389 = vst [vmem:[%s290 + $0x88] sm:$0xf] %v388
    %v390 = vld [vmem:[%s290 + $0x8c] sm:$0x1]
    %v391 = vsel %vm299, %v257, %v390
    %392 = vst [vmem:[%s290 + $0x8c] sm:$0x1] %v391
    %v393 = vld [vmem:[#allocation2] sm:$0xf]
    %v394 = vld [vmem:[#allocation2 + $0x8] sm:$0xf]
    %v395 = vld [vmem:[#allocation2 + $0x10] sm:$0xf]
    %v396 = vld [vmem:[#allocation2 + $0x18] sm:$0xf]
    %v397 = vld [vmem:[#allocation2 + $0x20] sm:$0xf]
    %v398 = vld [vmem:[#allocation2 + $0x28] sm:$0xf]
    %v399 = vld [vmem:[#allocation2 + $0x30] sm:$0xf]
    %v400 = vld [vmem:[#allocation2 + $0x38] sm:$0xf]
    %v401 = vld [vmem:[#allocation2 + $0x50] sm:$0xf]
    %v402 = vld [vmem:[#allocation2 + $0x58] sm:$0xf]
    %v403 = vld [vmem:[#allocation2 + $0x60] sm:$0xf]
    %v404 = vld [vmem:[#allocation2 + $0x68] sm:$0xf]
    %v405 = vld [vmem:[#allocation2 + $0x70] sm:$0xf]
    %v406 = vld [vmem:[#allocation2 + $0x78] sm:$0xf]
    %v407 = vld [vmem:[#allocation2 + $0x80] sm:$0xf]
    %v408 = vld [vmem:[#allocation2 + $0x88] sm:$0xf]
    %v409 = vld [vmem:[#allocation2 + $0x4] sm:$0x1]
    %v410 = vld [vmem:[#allocation2 + $0xc] sm:$0x1]
    %v411 = vld [vmem:[#allocation2 + $0x14] sm:$0x1]
    %v412 = vld [vmem:[#allocation2 + $0x1c] sm:$0x1]
    %v413 = vld [vmem:[#allocation2 + $0x24] sm:$0x1]
    %v414 = vld [vmem:[#allocation2 + $0x2c] sm:$0x1]
    %v415 = vld [vmem:[#allocation2 + $0x34] sm:$0x1]
    %v416 = vld [vmem:[#allocation2 + $0x3c] sm:$0x1]
    %v417 = vld [vmem:[#allocation2 + $0x54] sm:$0x1]
    %v418 = vld [vmem:[#allocation2 + $0x5c] sm:$0x1]
    %v419 = vld [vmem:[#allocation2 + $0x64] sm:$0x1]
    %v420 = vld [vmem:[#allocation2 + $0x6c] sm:$0x1]
    %v421 = vld [vmem:[#allocation2 + $0x74] sm:$0x1]
    %v422 = vld [vmem:[#allocation2 + $0x7c] sm:$0x1]
    %v423 = vld [vmem:[#allocation2 + $0x84] sm:$0x1]
    %v424 = vld [vmem:[#allocation2 + $0x8c] sm:$0x1]
    %v425 = vld [vmem:[#allocation2] sm:$0xe]
    %v426 = vld [vmem:[#allocation2 + $0x8] sm:$0xe]
    %v427 = vld [vmem:[#allocation2 + $0x10] sm:$0xe]
    %v428 = vld [vmem:[#allocation2 + $0x18] sm:$0xe]
    %v429 = vld [vmem:[#allocation2 + $0x20] sm:$0xe]
    %v430 = vld [vmem:[#allocation2 + $0x28] sm:$0xe]
    %v431 = vld [vmem:[#allocation2 + $0x30] sm:$0xe]
    %v432 = vld [vmem:[#allocation2 + $0x38] sm:$0xe]
    %v433 = vld [vmem:[#allocation2 + $0x50] sm:$0xe]
    %v434 = vld [vmem:[#allocation2 + $0x58] sm:$0xe]
    %v435 = vld [vmem:[#allocation2 + $0x60] sm:$0xe]
    %v436 = vld [vmem:[#allocation2 + $0x68] sm:$0xe]
    %v437 = vld [vmem:[#allocation2 + $0x70] sm:$0xe]
    %v438 = vld [vmem:[#allocation2 + $0x78] sm:$0xe]
    %v439 = vld [vmem:[#allocation2 + $0x80] sm:$0xe]
    %v440 = vld [vmem:[#allocation2 + $0x88] sm:$0xe]
    %v441 = vld [vmem:[%s290] sm:$0xf]
    %v442 = vld [vmem:[%s290 + $0x8] sm:$0xf]
    %v443 = vld [vmem:[%s290 + $0x10] sm:$0xf]
    %v444 = vld [vmem:[%s290 + $0x18] sm:$0xf]
    %v445 = vld [vmem:[%s290 + $0x20] sm:$0xf]
    %v446 = vld [vmem:[%s290 + $0x28] sm:$0xf]
    %v447 = vld [vmem:[%s290 + $0x30] sm:$0xf]
    %v448 = vld [vmem:[%s290 + $0x38] sm:$0xf]
    %v449 = vld [vmem:[%s290 + $0x50] sm:$0xf]
    %v450 = vld [vmem:[%s290 + $0x58] sm:$0xf]
    %v451 = vld [vmem:[%s290 + $0x60] sm:$0xf]
    %v452 = vld [vmem:[%s290 + $0x68] sm:$0xf]
    %v453 = vld [vmem:[%s290 + $0x70] sm:$0xf]
    %v454 = vld [vmem:[%s290 + $0x78] sm:$0xf]
    %v455 = vld [vmem:[%s290 + $0x80] sm:$0xf]
    %v456 = vld [vmem:[%s290 + $0x88] sm:$0xf]
    %v457 = vld [vmem:[%s290 + $0x4] sm:$0x1]
    %v458 = vld [vmem:[%s290 + $0xc] sm:$0x1]
    %v459 = vld [vmem:[%s290 + $0x14] sm:$0x1]
    %v460 = vld [vmem:[%s290 + $0x1c] sm:$0x1]
    %v461 = vld [vmem:[%s290 + $0x24] sm:$0x1]
    %v462 = vld [vmem:[%s290 + $0x2c] sm:$0x1]
    %v463 = vld [vmem:[%s290 + $0x34] sm:$0x1]
    %v464 = vld [vmem:[%s290 + $0x3c] sm:$0x1]
    %v465 = vld [vmem:[%s290 + $0x54] sm:$0x1]
    %v466 = vld [vmem:[%s290 + $0x5c] sm:$0x1]
    %v467 = vld [vmem:[%s290 + $0x64] sm:$0x1]
    %v468 = vld [vmem:[%s290 + $0x6c] sm:$0x1]
    %v469 = vld [vmem:[%s290 + $0x74] sm:$0x1]
    %v470 = vld [vmem:[%s290 + $0x7c] sm:$0x1]
    %v471 = vld [vmem:[%s290 + $0x84] sm:$0x1]
    %v472 = vld [vmem:[%s290 + $0x8c] sm:$0x1]
    %v473 = vld [vmem:[%s290] sm:$0xe]
    %v474 = vld [vmem:[%s290 + $0x8] sm:$0xe]
    %v475 = vld [vmem:[%s290 + $0x10] sm:$0xe]
    %v476 = vld [vmem:[%s290 + $0x18] sm:$0xe]
    %v477 = vld [vmem:[%s290 + $0x20] sm:$0xe]
    %v478 = vld [vmem:[%s290 + $0x28] sm:$0xe]
    %v479 = vld [vmem:[%s290 + $0x30] sm:$0xe]
    %v480 = vld [vmem:[%s290 + $0x38] sm:$0xe]
    %v481 = vld [vmem:[%s290 + $0x50] sm:$0xe]
    %v482 = vld [vmem:[%s290 + $0x58] sm:$0xe]
    %v483 = vld [vmem:[%s290 + $0x60] sm:$0xe]
    %v484 = vld [vmem:[%s290 + $0x68] sm:$0xe]
    %v485 = vld [vmem:[%s290 + $0x70] sm:$0xe]
    %v486 = vld [vmem:[%s290 + $0x78] sm:$0xe]
    %v487 = vld [vmem:[%s290 + $0x80] sm:$0xe]
    %v488 = vld [vmem:[%s290 + $0x88] sm:$0xe]
    %s489 = scalar_lea.vmem [#allocation2], 16
    %v490 = vld [vmem:[%s489] sm:$0xf]
    %v491 = vld [vmem:[%s489 + $0x8] sm:$0xf]
    %v492 = vld [vmem:[%s489 + $0x10] sm:$0xf]
    %v493 = vld [vmem:[%s489 + $0x18] sm:$0xf]
    %v494 = vld [vmem:[%s489 + $0x20] sm:$0xf]
    %v495 = vld [vmem:[%s489 + $0x28] sm:$0xf]
    %v496 = vld [vmem:[%s489 + $0x30] sm:$0xf]
    %v497 = vld [vmem:[%s489 + $0x38] sm:$0xf]
    %v498 = vld [vmem:[%s489 + $0x50] sm:$0xf]
    %v499 = vld [vmem:[%s489 + $0x58] sm:$0xf]
    %v500 = vld [vmem:[%s489 + $0x60] sm:$0xf]
    %v501 = vld [vmem:[%s489 + $0x68] sm:$0xf]
    %v502 = vld [vmem:[%s489 + $0x70] sm:$0xf]
    %v503 = vld [vmem:[%s489 + $0x78] sm:$0xf]
    %v504 = vld [vmem:[%s489 + $0x80] sm:$0xf]
    %v505 = vld [vmem:[%s489 + $0x88] sm:$0xf]
    %v506 = vld [vmem:[%s489 + $0x4] sm:$0x1]
    %v507 = vld [vmem:[%s489 + $0xc] sm:$0x1]
    %v508 = vld [vmem:[%s489 + $0x14] sm:$0x1]
    %v509 = vld [vmem:[%s489 + $0x1c] sm:$0x1]
    %v510 = vld [vmem:[%s489 + $0x24] sm:$0x1]
    %v511 = vld [vmem:[%s489 + $0x2c] sm:$0x1]
    %v512 = vld [vmem:[%s489 + $0x34] sm:$0x1]
    %v513 = vld [vmem:[%s489 + $0x3c] sm:$0x1]
    %v514 = vld [vmem:[%s489 + $0x54] sm:$0x1]
    %v515 = vld [vmem:[%s489 + $0x5c] sm:$0x1]
    %v516 = vld [vmem:[%s489 + $0x64] sm:$0x1]
    %v517 = vld [vmem:[%s489 + $0x6c] sm:$0x1]
    %v518 = vld [vmem:[%s489 + $0x74] sm:$0x1]
    %v519 = vld [vmem:[%s489 + $0x7c] sm:$0x1]
    %v520 = vld [vmem:[%s489 + $0x84] sm:$0x1]
    %v521 = vld [vmem:[%s489 + $0x8c] sm:$0x1]
    %v522 = vld [vmem:[%s489] sm:$0xe]
    %v523 = vld [vmem:[%s489 + $0x8] sm:$0xe]
    %v524 = vld [vmem:[%s489 + $0x10] sm:$0xe]
    %v525 = vld [vmem:[%s489 + $0x18] sm:$0xe]
    %v526 = vld [vmem:[%s489 + $0x20] sm:$0xe]
    %v527 = vld [vmem:[%s489 + $0x28] sm:$0xe]
    %v528 = vld [vmem:[%s489 + $0x30] sm:$0xe]
    %v529 = vld [vmem:[%s489 + $0x38] sm:$0xe]
    %v530 = vld [vmem:[%s489 + $0x50] sm:$0xe]
    %v531 = vld [vmem:[%s489 + $0x58] sm:$0xe]
    %v532 = vld [vmem:[%s489 + $0x60] sm:$0xe]
    %v533 = vld [vmem:[%s489 + $0x68] sm:$0xe]
    %v534 = vld [vmem:[%s489 + $0x70] sm:$0xe]
    %v535 = vld [vmem:[%s489 + $0x78] sm:$0xe]
    %v536 = vld [vmem:[%s489 + $0x80] sm:$0xe]
    %v537 = vld [vmem:[%s489 + $0x88] sm:$0xe]
    %v570 = vunpack.c.l.b16 %v393
    %v571 = vunpack.c.l.b16 %v409
    %v572 = vunpack.c.l.b16 %v394
    %v573 = vunpack.c.l.b16 %v410
    %v574 = vunpack.c.l.b16 %v395
    %v575 = vunpack.c.l.b16 %v411
    %v576 = vunpack.c.l.b16 %v396
    %v577 = vunpack.c.l.b16 %v412
    %v578 = vunpack.c.l.b16 %v397
    %v579 = vunpack.c.l.b16 %v413
    %v580 = vunpack.c.l.b16 %v398
    %v581 = vunpack.c.l.b16 %v414
    %v582 = vunpack.c.l.b16 %v399
    %v583 = vunpack.c.l.b16 %v415
    %v584 = vunpack.c.l.b16 %v400
    %v585 = vunpack.c.l.b16 %v416
    %v586 = vunpack.c.l.b16 %v401
    %v587 = vunpack.c.l.b16 %v417
    %v588 = vunpack.c.l.b16 %v402
    %v589 = vunpack.c.l.b16 %v418
    %v590 = vunpack.c.l.b16 %v403
    %v591 = vunpack.c.l.b16 %v419
    %v592 = vunpack.c.l.b16 %v404
    %v593 = vunpack.c.l.b16 %v420
    %v594 = vunpack.c.l.b16 %v405
    %v595 = vunpack.c.l.b16 %v421
    %v596 = vunpack.c.l.b16 %v406
    %v597 = vunpack.c.l.b16 %v422
    %v598 = vunpack.c.l.b16 %v407
    %v599 = vunpack.c.l.b16 %v423
    %v600 = vunpack.c.l.b16 %v408
    %v601 = vunpack.c.l.b16 %v424
    %v602 = vpack.c.b16 %v571, %v570
    %v603 = vpack.c.b16 %v573, %v572
    %v604 = vpack.c.b16 %v575, %v574
    %v605 = vpack.c.b16 %v577, %v576
    %v606 = vpack.c.b16 %v579, %v578
    %v607 = vpack.c.b16 %v581, %v580
    %v608 = vpack.c.b16 %v583, %v582
    %v609 = vpack.c.b16 %v585, %v584
    %v610 = vpack.c.b16 %v587, %v586
    %v611 = vpack.c.b16 %v589, %v588
    %v612 = vpack.c.b16 %v591, %v590
    %v613 = vpack.c.b16 %v593, %v592
    %v614 = vpack.c.b16 %v595, %v594
    %v615 = vpack.c.b16 %v597, %v596
    %v616 = vpack.c.b16 %v599, %v598
    %v617 = vpack.c.b16 %v601, %v600
    %v619 = vshrl.u32 %v602, 16
    %v621 = vshll.u32 %v602, 16
    %v623 = vrot.slane %v621, 1
    %v624 = vor.u32 %v619, %v623
    %v626 = vshrl.u32 %v603, 16
    %v628 = vshll.u32 %v603, 16
    %v630 = vrot.slane %v628, 1
    %v631 = vor.u32 %v626, %v630
    %v633 = vshrl.u32 %v604, 16
    %v635 = vshll.u32 %v604, 16
    %v637 = vrot.slane %v635, 1
    %v638 = vor.u32 %v633, %v637
    %v640 = vshrl.u32 %v605, 16
    %v642 = vshll.u32 %v605, 16
    %v644 = vrot.slane %v642, 1
    %v645 = vor.u32 %v640, %v644
    %v647 = vshrl.u32 %v606, 16
    %v649 = vshll.u32 %v606, 16
    %v651 = vrot.slane %v649, 1
    %v652 = vor.u32 %v647, %v651
    %v654 = vshrl.u32 %v607, 16
    %v656 = vshll.u32 %v607, 16
    %v658 = vrot.slane %v656, 1
    %v659 = vor.u32 %v654, %v658
    %v661 = vshrl.u32 %v608, 16
    %v663 = vshll.u32 %v608, 16
    %v665 = vrot.slane %v663, 1
    %v666 = vor.u32 %v661, %v665
    %v668 = vshrl.u32 %v609, 16
    %v670 = vshll.u32 %v609, 16
    %v672 = vrot.slane %v670, 1
    %v673 = vor.u32 %v668, %v672
    %v675 = vshrl.u32 %v610, 16
    %v677 = vshll.u32 %v610, 16
    %v679 = vrot.slane %v677, 1
    %v680 = vor.u32 %v675, %v679
    %v682 = vshrl.u32 %v611, 16
    %v684 = vshll.u32 %v611, 16
    %v686 = vrot.slane %v684, 1
    %v687 = vor.u32 %v682, %v686
    %v689 = vshrl.u32 %v612, 16
    %v691 = vshll.u32 %v612, 16
    %v693 = vrot.slane %v691, 1
    %v694 = vor.u32 %v689, %v693
    %v696 = vshrl.u32 %v613, 16
    %v698 = vshll.u32 %v613, 16
    %v700 = vrot.slane %v698, 1
    %v701 = vor.u32 %v696, %v700
    %v703 = vshrl.u32 %v614, 16
    %v705 = vshll.u32 %v614, 16
    %v707 = vrot.slane %v705, 1
    %v708 = vor.u32 %v703, %v707
    %v710 = vshrl.u32 %v615, 16
    %v712 = vshll.u32 %v615, 16
    %v714 = vrot.slane %v712, 1
    %v715 = vor.u32 %v710, %v714
    %v717 = vshrl.u32 %v616, 16
    %v719 = vshll.u32 %v616, 16
    %v721 = vrot.slane %v719, 1
    %v722 = vor.u32 %v717, %v721
    %v724 = vshrl.u32 %v617, 16
    %v726 = vshll.u32 %v617, 16
    %v728 = vrot.slane %v726, 1
    %v729 = vor.u32 %v724, %v728
    %v746 = vunpack.c.l.b16 %v425
    %v747 = vunpack.c.l.b16 %v426
    %v748 = vunpack.c.l.b16 %v427
    %v749 = vunpack.c.l.b16 %v428
    %v750 = vunpack.c.l.b16 %v429
    %v751 = vunpack.c.l.b16 %v430
    %v752 = vunpack.c.l.b16 %v431
    %v753 = vunpack.c.l.b16 %v432
    %v754 = vunpack.c.l.b16 %v433
    %v755 = vunpack.c.l.b16 %v434
    %v756 = vunpack.c.l.b16 %v435
    %v757 = vunpack.c.l.b16 %v436
    %v758 = vunpack.c.l.b16 %v437
    %v759 = vunpack.c.l.b16 %v438
    %v760 = vunpack.c.l.b16 %v439
    %v761 = vunpack.c.l.b16 %v440
    %v762 = vpack.c.b16 %v571, %v746
    %v763 = vpack.c.b16 %v573, %v747
    %v764 = vpack.c.b16 %v575, %v748
    %v765 = vpack.c.b16 %v577, %v749
    %v766 = vpack.c.b16 %v579, %v750
    %v767 = vpack.c.b16 %v581, %v751
    %v768 = vpack.c.b16 %v583, %v752
    %v769 = vpack.c.b16 %v585, %v753
    %v770 = vpack.c.b16 %v587, %v754
    %v771 = vpack.c.b16 %v589, %v755
    %v772 = vpack.c.b16 %v591, %v756
    %v773 = vpack.c.b16 %v593, %v757
    %v774 = vpack.c.b16 %v595, %v758
    %v775 = vpack.c.b16 %v597, %v759
    %v776 = vpack.c.b16 %v599, %v760
    %v777 = vpack.c.b16 %v601, %v761
    %v778 = vrot.slane %v762, 1
    %v779 = vrot.slane %v763, 1
    %v780 = vrot.slane %v764, 1
    %v781 = vrot.slane %v765, 1
    %v782 = vrot.slane %v766, 1
    %v783 = vrot.slane %v767, 1
    %v784 = vrot.slane %v768, 1
    %v785 = vrot.slane %v769, 1
    %v786 = vrot.slane %v770, 1
    %v787 = vrot.slane %v771, 1
    %v788 = vrot.slane %v772, 1
    %v789 = vrot.slane %v773, 1
    %v790 = vrot.slane %v774, 1
    %v791 = vrot.slane %v775, 1
    %v792 = vrot.slane %v776, 1
    %v793 = vrot.slane %v777, 1
    %v826 = vunpack.c.l.b16 %v441
    %v827 = vunpack.c.l.b16 %v457
    %v828 = vunpack.c.l.b16 %v442
    %v829 = vunpack.c.l.b16 %v458
    %v830 = vunpack.c.l.b16 %v443
    %v831 = vunpack.c.l.b16 %v459
    %v832 = vunpack.c.l.b16 %v444
    %v833 = vunpack.c.l.b16 %v460
    %v834 = vunpack.c.l.b16 %v445
    %v835 = vunpack.c.l.b16 %v461
    %v836 = vunpack.c.l.b16 %v446
    %v837 = vunpack.c.l.b16 %v462
    %v838 = vunpack.c.l.b16 %v447
    %v839 = vunpack.c.l.b16 %v463
    %v840 = vunpack.c.l.b16 %v448
    %v841 = vunpack.c.l.b16 %v464
    %v842 = vunpack.c.l.b16 %v449
    %v843 = vunpack.c.l.b16 %v465
    %v844 = vunpack.c.l.b16 %v450
    %v845 = vunpack.c.l.b16 %v466
    %v846 = vunpack.c.l.b16 %v451
    %v847 = vunpack.c.l.b16 %v467
    %v848 = vunpack.c.l.b16 %v452
    %v849 = vunpack.c.l.b16 %v468
    %v850 = vunpack.c.l.b16 %v453
    %v851 = vunpack.c.l.b16 %v469
    %v852 = vunpack.c.l.b16 %v454
    %v853 = vunpack.c.l.b16 %v470
    %v854 = vunpack.c.l.b16 %v455
    %v855 = vunpack.c.l.b16 %v471
    %v856 = vunpack.c.l.b16 %v456
    %v857 = vunpack.c.l.b16 %v472
    %v858 = vpack.c.b16 %v827, %v826
    %v859 = vpack.c.b16 %v829, %v828
    %v860 = vpack.c.b16 %v831, %v830
    %v861 = vpack.c.b16 %v833, %v832
    %v862 = vpack.c.b16 %v835, %v834
    %v863 = vpack.c.b16 %v837, %v836
    %v864 = vpack.c.b16 %v839, %v838
    %v865 = vpack.c.b16 %v841, %v840
    %v866 = vpack.c.b16 %v843, %v842
    %v867 = vpack.c.b16 %v845, %v844
    %v868 = vpack.c.b16 %v847, %v846
    %v869 = vpack.c.b16 %v849, %v848
    %v870 = vpack.c.b16 %v851, %v850
    %v871 = vpack.c.b16 %v853, %v852
    %v872 = vpack.c.b16 %v855, %v854
    %v873 = vpack.c.b16 %v857, %v856
    %v875 = vshrl.u32 %v858, 16
    %v877 = vshll.u32 %v858, 16
    %v879 = vrot.slane %v877, 1
    %v880 = vor.u32 %v875, %v879
    %v882 = vshrl.u32 %v859, 16
    %v884 = vshll.u32 %v859, 16
    %v886 = vrot.slane %v884, 1
    %v887 = vor.u32 %v882, %v886
    %v889 = vshrl.u32 %v860, 16
    %v891 = vshll.u32 %v860, 16
    %v893 = vrot.slane %v891, 1
    %v894 = vor.u32 %v889, %v893
    %v896 = vshrl.u32 %v861, 16
    %v898 = vshll.u32 %v861, 16
    %v900 = vrot.slane %v898, 1
    %v901 = vor.u32 %v896, %v900
    %v903 = vshrl.u32 %v862, 16
    %v905 = vshll.u32 %v862, 16
    %v907 = vrot.slane %v905, 1
    %v908 = vor.u32 %v903, %v907
    %v910 = vshrl.u32 %v863, 16
    %v912 = vshll.u32 %v863, 16
    %v914 = vrot.slane %v912, 1
    %v915 = vor.u32 %v910, %v914
    %v917 = vshrl.u32 %v864, 16
    %v919 = vshll.u32 %v864, 16
    %v921 = vrot.slane %v919, 1
    %v922 = vor.u32 %v917, %v921
    %v924 = vshrl.u32 %v865, 16
    %v926 = vshll.u32 %v865, 16
    %v928 = vrot.slane %v926, 1
    %v929 = vor.u32 %v924, %v928
    %v931 = vshrl.u32 %v866, 16
    %v933 = vshll.u32 %v866, 16
    %v935 = vrot.slane %v933, 1
    %v936 = vor.u32 %v931, %v935
    %v938 = vshrl.u32 %v867, 16
    %v940 = vshll.u32 %v867, 16
    %v942 = vrot.slane %v940, 1
    %v943 = vor.u32 %v938, %v942
    %v945 = vshrl.u32 %v868, 16
    %v947 = vshll.u32 %v868, 16
    %v949 = vrot.slane %v947, 1
    %v950 = vor.u32 %v945, %v949
    %v952 = vshrl.u32 %v869, 16
    %v954 = vshll.u32 %v869, 16
    %v956 = vrot.slane %v954, 1
    %v957 = vor.u32 %v952, %v956
    %v959 = vshrl.u32 %v870, 16
    %v961 = vshll.u32 %v870, 16
    %v963 = vrot.slane %v961, 1
    %v964 = vor.u32 %v959, %v963
    %v966 = vshrl.u32 %v871, 16
    %v968 = vshll.u32 %v871, 16
    %v970 = vrot.slane %v968, 1
    %v971 = vor.u32 %v966, %v970
    %v973 = vshrl.u32 %v872, 16
    %v975 = vshll.u32 %v872, 16
    %v977 = vrot.slane %v975, 1
    %v978 = vor.u32 %v973, %v977
    %v980 = vshrl.u32 %v873, 16
    %v982 = vshll.u32 %v873, 16
    %v984 = vrot.slane %v982, 1
    %v985 = vor.u32 %v980, %v984
    %v1002 = vunpack.c.l.b16 %v473
    %v1003 = vunpack.c.l.b16 %v474
    %v1004 = vunpack.c.l.b16 %v475
    %v1005 = vunpack.c.l.b16 %v476
    %v1006 = vunpack.c.l.b16 %v477
    %v1007 = vunpack.c.l.b16 %v478
    %v1008 = vunpack.c.l.b16 %v479
    %v1009 = vunpack.c.l.b16 %v480
    %v1010 = vunpack.c.l.b16 %v481
    %v1011 = vunpack.c.l.b16 %v482
    %v1012 = vunpack.c.l.b16 %v483
    %v1013 = vunpack.c.l.b16 %v484
    %v1014 = vunpack.c.l.b16 %v485
    %v1015 = vunpack.c.l.b16 %v486
    %v1016 = vunpack.c.l.b16 %v487
    %v1017 = vunpack.c.l.b16 %v488
    %v1018 = vpack.c.b16 %v827, %v1002
    %v1019 = vpack.c.b16 %v829, %v1003
    %v1020 = vpack.c.b16 %v831, %v1004
    %v1021 = vpack.c.b16 %v833, %v1005
    %v1022 = vpack.c.b16 %v835, %v1006
    %v1023 = vpack.c.b16 %v837, %v1007
    %v1024 = vpack.c.b16 %v839, %v1008
    %v1025 = vpack.c.b16 %v841, %v1009
    %v1026 = vpack.c.b16 %v843, %v1010
    %v1027 = vpack.c.b16 %v845, %v1011
    %v1028 = vpack.c.b16 %v847, %v1012
    %v1029 = vpack.c.b16 %v849, %v1013
    %v1030 = vpack.c.b16 %v851, %v1014
    %v1031 = vpack.c.b16 %v853, %v1015
    %v1032 = vpack.c.b16 %v855, %v1016
    %v1033 = vpack.c.b16 %v857, %v1017
    %v1034 = vrot.slane %v1018, 1
    %v1035 = vrot.slane %v1019, 1
    %v1036 = vrot.slane %v1020, 1
    %v1037 = vrot.slane %v1021, 1
    %v1038 = vrot.slane %v1022, 1
    %v1039 = vrot.slane %v1023, 1
    %v1040 = vrot.slane %v1024, 1
    %v1041 = vrot.slane %v1025, 1
    %v1042 = vrot.slane %v1026, 1
    %v1043 = vrot.slane %v1027, 1
    %v1044 = vrot.slane %v1028, 1
    %v1045 = vrot.slane %v1029, 1
    %v1046 = vrot.slane %v1030, 1
    %v1047 = vrot.slane %v1031, 1
    %v1048 = vrot.slane %v1032, 1
    %v1049 = vrot.slane %v1033, 1
    %v1082 = vunpack.c.l.b16 %v490
    %v1083 = vunpack.c.l.b16 %v506
    %v1084 = vunpack.c.l.b16 %v491
    %v1085 = vunpack.c.l.b16 %v507
    %v1086 = vunpack.c.l.b16 %v492
    %v1087 = vunpack.c.l.b16 %v508
    %v1088 = vunpack.c.l.b16 %v493
    %v1089 = vunpack.c.l.b16 %v509
    %v1090 = vunpack.c.l.b16 %v494
    %v1091 = vunpack.c.l.b16 %v510
    %v1092 = vunpack.c.l.b16 %v495
    %v1093 = vunpack.c.l.b16 %v511
    %v1094 = vunpack.c.l.b16 %v496
    %v1095 = vunpack.c.l.b16 %v512
    %v1096 = vunpack.c.l.b16 %v497
    %v1097 = vunpack.c.l.b16 %v513
    %v1098 = vunpack.c.l.b16 %v498
    %v1099 = vunpack.c.l.b16 %v514
    %v1100 = vunpack.c.l.b16 %v499
    %v1101 = vunpack.c.l.b16 %v515
    %v1102 = vunpack.c.l.b16 %v500
    %v1103 = vunpack.c.l.b16 %v516
    %v1104 = vunpack.c.l.b16 %v501
    %v1105 = vunpack.c.l.b16 %v517
    %v1106 = vunpack.c.l.b16 %v502
    %v1107 = vunpack.c.l.b16 %v518
    %v1108 = vunpack.c.l.b16 %v503
    %v1109 = vunpack.c.l.b16 %v519
    %v1110 = vunpack.c.l.b16 %v504
    %v1111 = vunpack.c.l.b16 %v520
    %v1112 = vunpack.c.l.b16 %v505
    %v1113 = vunpack.c.l.b16 %v521
    %v1114 = vpack.c.b16 %v1083, %v1082
    %v1115 = vpack.c.b16 %v1085, %v1084
    %v1116 = vpack.c.b16 %v1087, %v1086
    %v1117 = vpack.c.b16 %v1089, %v1088
    %v1118 = vpack.c.b16 %v1091, %v1090
    %v1119 = vpack.c.b16 %v1093, %v1092
    %v1120 = vpack.c.b16 %v1095, %v1094
    %v1121 = vpack.c.b16 %v1097, %v1096
    %v1122 = vpack.c.b16 %v1099, %v1098
    %v1123 = vpack.c.b16 %v1101, %v1100
    %v1124 = vpack.c.b16 %v1103, %v1102
    %v1125 = vpack.c.b16 %v1105, %v1104
    %v1126 = vpack.c.b16 %v1107, %v1106
    %v1127 = vpack.c.b16 %v1109, %v1108
    %v1128 = vpack.c.b16 %v1111, %v1110
    %v1129 = vpack.c.b16 %v1113, %v1112
    %v1131 = vshrl.u32 %v1114, 16
    %v1133 = vshll.u32 %v1114, 16
    %v1135 = vrot.slane %v1133, 1
    %v1136 = vor.u32 %v1131, %v1135
    %v1138 = vshrl.u32 %v1115, 16
    %v1140 = vshll.u32 %v1115, 16
    %v1142 = vrot.slane %v1140, 1
    %v1143 = vor.u32 %v1138, %v1142
    %v1145 = vshrl.u32 %v1116, 16
    %v1147 = vshll.u32 %v1116, 16
    %v1149 = vrot.slane %v1147, 1
    %v1150 = vor.u32 %v1145, %v1149
    %v1152 = vshrl.u32 %v1117, 16
    %v1154 = vshll.u32 %v1117, 16
    %v1156 = vrot.slane %v1154, 1
    %v1157 = vor.u32 %v1152, %v1156
    %v1159 = vshrl.u32 %v1118, 16
    %v1161 = vshll.u32 %v1118, 16
    %v1163 = vrot.slane %v1161, 1
    %v1164 = vor.u32 %v1159, %v1163
    %v1166 = vshrl.u32 %v1119, 16
    %v1168 = vshll.u32 %v1119, 16
    %v1170 = vrot.slane %v1168, 1
    %v1171 = vor.u32 %v1166, %v1170
    %v1173 = vshrl.u32 %v1120, 16
    %v1175 = vshll.u32 %v1120, 16
    %v1177 = vrot.slane %v1175, 1
    %v1178 = vor.u32 %v1173, %v1177
    %v1180 = vshrl.u32 %v1121, 16
    %v1182 = vshll.u32 %v1121, 16
    %v1184 = vrot.slane %v1182, 1
    %v1185 = vor.u32 %v1180, %v1184
    %v1187 = vshrl.u32 %v1122, 16
    %v1189 = vshll.u32 %v1122, 16
    %v1191 = vrot.slane %v1189, 1
    %v1192 = vor.u32 %v1187, %v1191
    %v1194 = vshrl.u32 %v1123, 16
    %v1196 = vshll.u32 %v1123, 16
    %v1198 = vrot.slane %v1196, 1
    %v1199 = vor.u32 %v1194, %v1198
    %v1201 = vshrl.u32 %v1124, 16
    %v1203 = vshll.u32 %v1124, 16
    %v1205 = vrot.slane %v1203, 1
    %v1206 = vor.u32 %v1201, %v1205
    %v1208 = vshrl.u32 %v1125, 16
    %v1210 = vshll.u32 %v1125, 16
    %v1212 = vrot.slane %v1210, 1
    %v1213 = vor.u32 %v1208, %v1212
    %v1215 = vshrl.u32 %v1126, 16
    %v1217 = vshll.u32 %v1126, 16
    %v1219 = vrot.slane %v1217, 1
    %v1220 = vor.u32 %v1215, %v1219
    %v1222 = vshrl.u32 %v1127, 16
    %v1224 = vshll.u32 %v1127, 16
    %v1226 = vrot.slane %v1224, 1
    %v1227 = vor.u32 %v1222, %v1226
    %v1229 = vshrl.u32 %v1128, 16
    %v1231 = vshll.u32 %v1128, 16
    %v1233 = vrot.slane %v1231, 1
    %v1234 = vor.u32 %v1229, %v1233
    %v1236 = vshrl.u32 %v1129, 16
    %v1238 = vshll.u32 %v1129, 16
    %v1240 = vrot.slane %v1238, 1
    %v1241 = vor.u32 %v1236, %v1240
    %v1258 = vunpack.c.l.b16 %v522
    %v1259 = vunpack.c.l.b16 %v523
    %v1260 = vunpack.c.l.b16 %v524
    %v1261 = vunpack.c.l.b16 %v525
    %v1262 = vunpack.c.l.b16 %v526
    %v1263 = vunpack.c.l.b16 %v527
    %v1264 = vunpack.c.l.b16 %v528
    %v1265 = vunpack.c.l.b16 %v529
    %v1266 = vunpack.c.l.b16 %v530
    %v1267 = vunpack.c.l.b16 %v531
    %v1268 = vunpack.c.l.b16 %v532
    %v1269 = vunpack.c.l.b16 %v533
    %v1270 = vunpack.c.l.b16 %v534
    %v1271 = vunpack.c.l.b16 %v535
    %v1272 = vunpack.c.l.b16 %v536
    %v1273 = vunpack.c.l.b16 %v537
    %v1274 = vpack.c.b16 %v1083, %v1258
    %v1275 = vpack.c.b16 %v1085, %v1259
    %v1276 = vpack.c.b16 %v1087, %v1260
    %v1277 = vpack.c.b16 %v1089, %v1261
    %v1278 = vpack.c.b16 %v1091, %v1262
    %v1279 = vpack.c.b16 %v1093, %v1263
    %v1280 = vpack.c.b16 %v1095, %v1264
    %v1281 = vpack.c.b16 %v1097, %v1265
    %v1282 = vpack.c.b16 %v1099, %v1266
    %v1283 = vpack.c.b16 %v1101, %v1267
    %v1284 = vpack.c.b16 %v1103, %v1268
    %v1285 = vpack.c.b16 %v1105, %v1269
    %v1286 = vpack.c.b16 %v1107, %v1270
    %v1287 = vpack.c.b16 %v1109, %v1271
    %v1288 = vpack.c.b16 %v1111, %v1272
    %v1289 = vpack.c.b16 %v1113, %v1273
    %v1290 = vrot.slane %v1274, 1
    %v1291 = vrot.slane %v1275, 1
    %v1292 = vrot.slane %v1276, 1
    %v1293 = vrot.slane %v1277, 1
    %v1294 = vrot.slane %v1278, 1
    %v1295 = vrot.slane %v1279, 1
    %v1296 = vrot.slane %v1280, 1
    %v1297 = vrot.slane %v1281, 1
    %v1298 = vrot.slane %v1282, 1
    %v1299 = vrot.slane %v1283, 1
    %v1300 = vrot.slane %v1284, 1
    %v1301 = vrot.slane %v1285, 1
    %v1302 = vrot.slane %v1286, 1
    %v1303 = vrot.slane %v1287, 1
    %v1304 = vrot.slane %v1288, 1
    %v1305 = vrot.slane %v1289, 1
    %v1306 = vunpack.c.l.b16 %v624
    %v1307 = vunpack.c.l.b16 %v778
    %v1308 = vunpack.c.l.b16 %v880
    %v1309 = vunpack.c.l.b16 %v1034
    %v1310 = vunpack.c.l.b16 %v1136
    %v1311 = vunpack.c.l.b16 %v1290
    %v1312 = vunpack.c.l.b16 %v631
    %v1313 = vunpack.c.l.b16 %v779
    %v1314 = vunpack.c.l.b16 %v887
    %v1315 = vunpack.c.l.b16 %v1035
    %v1316 = vunpack.c.l.b16 %v1143
    %v1317 = vunpack.c.l.b16 %v1291
    %v1318 = vunpack.c.l.b16 %v638
    %v1319 = vunpack.c.l.b16 %v780
    %v1320 = vunpack.c.l.b16 %v894
    %v1321 = vunpack.c.l.b16 %v1036
    %v1322 = vunpack.c.l.b16 %v1150
    %v1323 = vunpack.c.l.b16 %v1292
    %v1324 = vunpack.c.l.b16 %v645
    %v1325 = vunpack.c.l.b16 %v781
    %v1326 = vunpack.c.l.b16 %v901
    %v1327 = vunpack.c.l.b16 %v1037
    %v1328 = vunpack.c.l.b16 %v1157
    %v1329 = vunpack.c.l.b16 %v1293
    %v1330 = vunpack.c.l.b16 %v652
    %v1331 = vunpack.c.l.b16 %v782
    %v1332 = vunpack.c.l.b16 %v908
    %v1333 = vunpack.c.l.b16 %v1038
    %v1334 = vunpack.c.l.b16 %v1164
    %v1335 = vunpack.c.l.b16 %v1294
    %v1336 = vunpack.c.l.b16 %v659
    %v1337 = vunpack.c.l.b16 %v783
    %v1338 = vunpack.c.l.b16 %v915
    %v1339 = vunpack.c.l.b16 %v1039
    %v1340 = vunpack.c.l.b16 %v1171
    %v1341 = vunpack.c.l.b16 %v1295
    %v1342 = vunpack.c.l.b16 %v666
    %v1343 = vunpack.c.l.b16 %v784
    %v1344 = vunpack.c.l.b16 %v922
    %v1345 = vunpack.c.l.b16 %v1040
    %v1346 = vunpack.c.l.b16 %v1178
    %v1347 = vunpack.c.l.b16 %v1296
    %v1348 = vunpack.c.l.b16 %v673
    %v1349 = vunpack.c.l.b16 %v785
    %v1350 = vunpack.c.l.b16 %v929
    %v1351 = vunpack.c.l.b16 %v1041
    %v1352 = vunpack.c.l.b16 %v1185
    %v1353 = vunpack.c.l.b16 %v1297
    %v1354 = vunpack.c.l.b16 %v680
    %v1355 = vunpack.c.l.b16 %v786
    %v1356 = vunpack.c.l.b16 %v936
    %v1357 = vunpack.c.l.b16 %v1042
    %v1358 = vunpack.c.l.b16 %v1192
    %v1359 = vunpack.c.l.b16 %v1298
    %v1360 = vunpack.c.l.b16 %v687
    %v1361 = vunpack.c.l.b16 %v787
    %v1362 = vunpack.c.l.b16 %v943
    %v1363 = vunpack.c.l.b16 %v1043
    %v1364 = vunpack.c.l.b16 %v1199
    %v1365 = vunpack.c.l.b16 %v1299
    %v1366 = vunpack.c.l.b16 %v694
    %v1367 = vunpack.c.l.b16 %v788
    %v1368 = vunpack.c.l.b16 %v950
    %v1369 = vunpack.c.l.b16 %v1044
    %v1370 = vunpack.c.l.b16 %v1206
    %v1371 = vunpack.c.l.b16 %v1300
    %v1372 = vunpack.c.l.b16 %v701
    %v1373 = vunpack.c.l.b16 %v789
    %v1374 = vunpack.c.l.b16 %v957
    %v1375 = vunpack.c.l.b16 %v1045
    %v1376 = vunpack.c.l.b16 %v1213
    %v1377 = vunpack.c.l.b16 %v1301
    %v1378 = vunpack.c.l.b16 %v708
    %v1379 = vunpack.c.l.b16 %v790
    %v1380 = vunpack.c.l.b16 %v964
    %v1381 = vunpack.c.l.b16 %v1046
    %v1382 = vunpack.c.l.b16 %v1220
    %v1383 = vunpack.c.l.b16 %v1302
    %v1384 = vunpack.c.l.b16 %v715
    %v1385 = vunpack.c.l.b16 %v791
    %v1386 = vunpack.c.l.b16 %v971
    %v1387 = vunpack.c.l.b16 %v1047
    %v1388 = vunpack.c.l.b16 %v1227
    %v1389 = vunpack.c.l.b16 %v1303
    %v1390 = vunpack.c.l.b16 %v722
    %v1391 = vunpack.c.l.b16 %v792
    %v1392 = vunpack.c.l.b16 %v978
    %v1393 = vunpack.c.l.b16 %v1048
    %v1394 = vunpack.c.l.b16 %v1234
    %v1395 = vunpack.c.l.b16 %v1304
    %v1396 = vunpack.c.l.b16 %v729
    %v1397 = vunpack.c.l.b16 %v793
    %v1398 = vunpack.c.l.b16 %v985
    %v1399 = vunpack.c.l.b16 %v1049
    %v1400 = vunpack.c.l.b16 %v1241
    %v1401 = vunpack.c.l.b16 %v1305
    %v1402 = vld [vmem:[#allocation3] sm:$0xf]
    %v1403 = vld [vmem:[#allocation3 + $0x4] sm:$0xf]
    %v1404 = vld [vmem:[#allocation3 + $0x8] sm:$0xf]
    %v1405 = vld [vmem:[#allocation3 + $0xc] sm:$0xf]
    %v1406 = vld [vmem:[#allocation3 + $0x10] sm:$0xf]
    %v1407 = vld [vmem:[#allocation3 + $0x14] sm:$0xf]
    %v1408 = vld [vmem:[#allocation3 + $0x18] sm:$0xf]
    %v1409 = vld [vmem:[#allocation3 + $0x1c] sm:$0xf]
    %v1410 = vld [vmem:[#allocation3 + $0x20] sm:$0xf]
    %v1411 = vld [vmem:[#allocation3 + $0x24] sm:$0xf]
    %v1412 = vld [vmem:[#allocation3 + $0x28] sm:$0xf]
    %v1413 = vld [vmem:[#allocation3 + $0x2c] sm:$0xf]
    %v1414 = vld [vmem:[#allocation3 + $0x30] sm:$0xf]
    %v1415 = vld [vmem:[#allocation3 + $0x34] sm:$0xf]
    %v1416 = vld [vmem:[#allocation3 + $0x38] sm:$0xf]
    %v1417 = vld [vmem:[#allocation3 + $0x3c] sm:$0xf]
    %v1418 = vld [vmem:[#allocation3 + $0x40] sm:$0xf]
    %v1419 = vld [vmem:[#allocation3 + $0x44] sm:$0xf]
    %v1420 = vld [vmem:[#allocation3 + $0x48] sm:$0xf]
    %v1421 = vld [vmem:[#allocation3 + $0x4c] sm:$0xf]
    %v1422 = vld [vmem:[#allocation3 + $0x50] sm:$0xf]
    %v1423 = vld [vmem:[#allocation3 + $0x54] sm:$0xf]
    %v1424 = vld [vmem:[#allocation3 + $0x58] sm:$0xf]
    %v1425 = vld [vmem:[#allocation3 + $0x5c] sm:$0xf]
    %v1426 = vld [vmem:[#allocation3 + $0x60] sm:$0xf]
    %v1427 = vld [vmem:[#allocation3 + $0x64] sm:$0xf]
    %v1428 = vld [vmem:[#allocation3 + $0x68] sm:$0xf]
    %v1429 = vld [vmem:[#allocation3 + $0x6c] sm:$0xf]
    %v1430 = vld [vmem:[#allocation3 + $0x70] sm:$0xf]
    %v1431 = vld [vmem:[#allocation3 + $0x74] sm:$0xf]
    %v1432 = vld [vmem:[#allocation3 + $0x78] sm:$0xf]
    %v1433 = vld [vmem:[#allocation3 + $0x7c] sm:$0xf]
    %v1434 = vld [vmem:[#allocation3 + $0x80] sm:$0xf]
    %v1435 = vld [vmem:[#allocation3 + $0x84] sm:$0xf]
    %v1436 = vld [vmem:[#allocation3 + $0x88] sm:$0xf]
    %v1437 = vld [vmem:[#allocation3 + $0x8c] sm:$0xf]
    %v1438 = vld [vmem:[#allocation3 + $0x90] sm:$0xf]
    %v1439 = vld [vmem:[#allocation3 + $0x94] sm:$0xf]
    %v1440 = vld [vmem:[#allocation3 + $0x98] sm:$0xf]
    %v1441 = vld [vmem:[#allocation3 + $0x9c] sm:$0xf]
    %v1442 = vld [vmem:[#allocation3 + $0xa0] sm:$0xf]
    %v1443 = vld [vmem:[#allocation3 + $0xa4] sm:$0xf]
    %v1444 = vld [vmem:[#allocation3 + $0xa8] sm:$0xf]
    %v1445 = vld [vmem:[#allocation3 + $0xac] sm:$0xf]
    %v1446 = vld [vmem:[#allocation3 + $0xb0] sm:$0xf]
    %v1447 = vld [vmem:[#allocation3 + $0xb4] sm:$0xf]
    %v1448 = vld [vmem:[#allocation3 + $0xb8] sm:$0xf]
    %v1449 = vld [vmem:[#allocation3 + $0xbc] sm:$0xf]
    %v1450 = vld [vmem:[#allocation3 + $0xc0] sm:$0xf]
    %v1451 = vld [vmem:[#allocation3 + $0xc4] sm:$0xf]
    %v1452 = vld [vmem:[#allocation3 + $0xc8] sm:$0xf]
    %v1453 = vld [vmem:[#allocation3 + $0xcc] sm:$0xf]
    %v1454 = vld [vmem:[#allocation3 + $0xd0] sm:$0xf]
    %v1455 = vld [vmem:[#allocation3 + $0xd4] sm:$0xf]
    %v1456 = vld [vmem:[#allocation3 + $0xd8] sm:$0xf]
    %v1457 = vld [vmem:[#allocation3 + $0xdc] sm:$0xf]
    %v1458 = vld [vmem:[#allocation3 + $0xe0] sm:$0xf]
    %v1459 = vld [vmem:[#allocation3 + $0xe4] sm:$0xf]
    %v1460 = vld [vmem:[#allocation3 + $0xe8] sm:$0xf]
    %v1461 = vld [vmem:[#allocation3 + $0xec] sm:$0xf]
    %v1462 = vld [vmem:[#allocation3 + $0xf0] sm:$0xf]
    %v1463 = vld [vmem:[#allocation3 + $0xf4] sm:$0xf]
    %v1464 = vld [vmem:[#allocation3 + $0xf8] sm:$0xf]
    %v1465 = vld [vmem:[#allocation3 + $0xfc] sm:$0xf]
    %v1466 = vld [vmem:[#allocation3 + $0x100] sm:$0xf]
    %v1467 = vld [vmem:[#allocation3 + $0x104] sm:$0xf]
    %v1468 = vld [vmem:[#allocation3 + $0x108] sm:$0xf]
    %v1469 = vld [vmem:[#allocation3 + $0x10c] sm:$0xf]
    %v1470 = vld [vmem:[#allocation3 + $0x110] sm:$0xf]
    %v1471 = vld [vmem:[#allocation3 + $0x114] sm:$0xf]
    %v1472 = vld [vmem:[#allocation3 + $0x118] sm:$0xf]
    %v1473 = vld [vmem:[#allocation3 + $0x11c] sm:$0xf]
    %v1474 = vld [vmem:[#allocation3 + $0x120] sm:$0xf]
    %v1475 = vld [vmem:[#allocation3 + $0x124] sm:$0xf]
    %v1476 = vld [vmem:[#allocation3 + $0x128] sm:$0xf]
    %v1477 = vld [vmem:[#allocation3 + $0x12c] sm:$0xf]
    %v1478 = vld [vmem:[#allocation3 + $0x130] sm:$0xf]
    %v1479 = vld [vmem:[#allocation3 + $0x134] sm:$0xf]
    %v1480 = vld [vmem:[#allocation3 + $0x138] sm:$0xf]
    %v1481 = vld [vmem:[#allocation3 + $0x13c] sm:$0xf]
    %v1482 = vld [vmem:[#allocation3 + $0x140] sm:$0xf]
    %v1483 = vld [vmem:[#allocation3 + $0x144] sm:$0xf]
    %v1484 = vld [vmem:[#allocation3 + $0x148] sm:$0xf]
    %v1485 = vld [vmem:[#allocation3 + $0x14c] sm:$0xf]
    %v1486 = vld [vmem:[#allocation3 + $0x150] sm:$0xf]
    %v1487 = vld [vmem:[#allocation3 + $0x154] sm:$0xf]
    %v1488 = vld [vmem:[#allocation3 + $0x158] sm:$0xf]
    %v1489 = vld [vmem:[#allocation3 + $0x15c] sm:$0xf]
    %v1490 = vld [vmem:[#allocation3 + $0x160] sm:$0xf]
    %v1491 = vld [vmem:[#allocation3 + $0x164] sm:$0xf]
    %v1492 = vld [vmem:[#allocation3 + $0x168] sm:$0xf]
    %v1493 = vld [vmem:[#allocation3 + $0x16c] sm:$0xf]
    %v1494 = vld [vmem:[#allocation3 + $0x170] sm:$0xf]
    %v1495 = vld [vmem:[#allocation3 + $0x174] sm:$0xf]
    %v1496 = vld [vmem:[#allocation3 + $0x178] sm:$0xf]
    %v1497 = vld [vmem:[#allocation3 + $0x17c] sm:$0xf]
    %v1498 = vld [vmem:[#allocation3 + $0x180] sm:$0xf]
    %v1499 = vld [vmem:[#allocation3 + $0x184] sm:$0xf]
    %v1500 = vld [vmem:[#allocation3 + $0x188] sm:$0xf]
    %v1501 = vld [vmem:[#allocation3 + $0x18c] sm:$0xf]
    %v1502 = vld [vmem:[#allocation3 + $0x190] sm:$0xf]
    %v1503 = vld [vmem:[#allocation3 + $0x194] sm:$0xf]
    %v1504 = vld [vmem:[#allocation3 + $0x198] sm:$0xf]
    %v1505 = vld [vmem:[#allocation3 + $0x19c] sm:$0xf]
    %v1506 = vld [vmem:[#allocation3 + $0x1a0] sm:$0xf]
    %v1507 = vld [vmem:[#allocation3 + $0x1a4] sm:$0xf]
    %v1508 = vld [vmem:[#allocation3 + $0x1a8] sm:$0xf]
    %v1509 = vld [vmem:[#allocation3 + $0x1ac] sm:$0xf]
    %v1510 = vld [vmem:[#allocation3 + $0x1b0] sm:$0xf]
    %v1511 = vld [vmem:[#allocation3 + $0x1b4] sm:$0xf]
    %v1512 = vld [vmem:[#allocation3 + $0x1b8] sm:$0xf]
    %v1513 = vld [vmem:[#allocation3 + $0x1bc] sm:$0xf]
    %v1514 = vld [vmem:[#allocation3 + $0x1c0] sm:$0xf]
    %v1515 = vld [vmem:[#allocation3 + $0x1c4] sm:$0xf]
    %v1516 = vld [vmem:[#allocation3 + $0x1c8] sm:$0xf]
    %v1517 = vld [vmem:[#allocation3 + $0x1cc] sm:$0xf]
    %v1518 = vld [vmem:[#allocation3 + $0x1d0] sm:$0xf]
    %v1519 = vld [vmem:[#allocation3 + $0x1d4] sm:$0xf]
    %v1520 = vld [vmem:[#allocation3 + $0x1d8] sm:$0xf]
    %v1521 = vld [vmem:[#allocation3 + $0x1dc] sm:$0xf]
    %v1522 = vld [vmem:[#allocation3 + $0x1e0] sm:$0xf]
    %v1523 = vld [vmem:[#allocation3 + $0x1e4] sm:$0xf]
    %v1524 = vld [vmem:[#allocation3 + $0x1e8] sm:$0xf]
    %v1525 = vld [vmem:[#allocation3 + $0x1ec] sm:$0xf]
    %v1526 = vld [vmem:[#allocation3 + $0x1f0] sm:$0xf]
    %v1527 = vld [vmem:[#allocation3 + $0x1f4] sm:$0xf]
    %v1528 = vld [vmem:[#allocation3 + $0x1f8] sm:$0xf]
    %v1529 = vld [vmem:[#allocation3 + $0x1fc] sm:$0xf]
    %v1530 = vld [vmem:[#allocation3 + $0x200] sm:$0xf]
    %v1531 = vld [vmem:[#allocation3 + $0x204] sm:$0xf]
    %v1532 = vld [vmem:[#allocation3 + $0x208] sm:$0xf]
    %v1533 = vld [vmem:[#allocation3 + $0x20c] sm:$0xf]
    %v1534 = vld [vmem:[#allocation3 + $0x210] sm:$0xf]
    %v1535 = vld [vmem:[#allocation3 + $0x214] sm:$0xf]
    %v1536 = vld [vmem:[#allocation3 + $0x218] sm:$0xf]
    %v1537 = vld [vmem:[#allocation3 + $0x21c] sm:$0xf]
    %v1538 = vld [vmem:[#allocation3 + $0x220] sm:$0xf]
    %v1539 = vld [vmem:[#allocation3 + $0x224] sm:$0xf]
    %v1540 = vld [vmem:[#allocation3 + $0x228] sm:$0xf]
    %v1541 = vld [vmem:[#allocation3 + $0x22c] sm:$0xf]
    %v1542 = vld [vmem:[#allocation3 + $0x230] sm:$0xf]
    %v1543 = vld [vmem:[#allocation3 + $0x234] sm:$0xf]
    %v1544 = vld [vmem:[#allocation3 + $0x238] sm:$0xf]
    %v1545 = vld [vmem:[#allocation3 + $0x23c] sm:$0xf]
    %v1546 = vpack.c.b16 %v572, %v570
    %v1547 = vpack.c.b16 %v1312, %v1306
    %v1548 = vpack.c.b16 %v1313, %v1307
    %v1549 = vpack.c.b16 %v828, %v826
    %v1550 = vpack.c.b16 %v1314, %v1308
    %v1551 = vpack.c.b16 %v1315, %v1309
    %v1552 = vpack.c.b16 %v1084, %v1082
    %v1553 = vpack.c.b16 %v1316, %v1310
    %v1554 = vpack.c.b16 %v1317, %v1311
    %v1555 = vpack.c.b16 %v576, %v574
    %v1556 = vpack.c.b16 %v1324, %v1318
    %v1557 = vpack.c.b16 %v1325, %v1319
    %v1558 = vpack.c.b16 %v832, %v830
    %v1559 = vpack.c.b16 %v1326, %v1320
    %v1560 = vpack.c.b16 %v1327, %v1321
    %v1561 = vpack.c.b16 %v1088, %v1086
    %v1562 = vpack.c.b16 %v1328, %v1322
    %v1563 = vpack.c.b16 %v1329, %v1323
    %v1564 = vpack.c.b16 %v580, %v578
    %v1565 = vpack.c.b16 %v1336, %v1330
    %v1566 = vpack.c.b16 %v1337, %v1331
    %v1567 = vpack.c.b16 %v836, %v834
    %v1568 = vpack.c.b16 %v1338, %v1332
    %v1569 = vpack.c.b16 %v1339, %v1333
    %v1570 = vpack.c.b16 %v1092, %v1090
    %v1571 = vpack.c.b16 %v1340, %v1334
    %v1572 = vpack.c.b16 %v1341, %v1335
    %v1573 = vpack.c.b16 %v584, %v582
    %v1574 = vpack.c.b16 %v1348, %v1342
    %v1575 = vpack.c.b16 %v1349, %v1343
    %v1576 = vpack.c.b16 %v840, %v838
    %v1577 = vpack.c.b16 %v1350, %v1344
    %v1578 = vpack.c.b16 %v1351, %v1345
    %v1579 = vpack.c.b16 %v1096, %v1094
    %v1580 = vpack.c.b16 %v1352, %v1346
    %v1581 = vpack.c.b16 %v1353, %v1347
    %v1582 = vpack.c.b16 %v588, %v586
    %v1583 = vpack.c.b16 %v1360, %v1354
    %v1584 = vpack.c.b16 %v1361, %v1355
    %v1585 = vpack.c.b16 %v844, %v842
    %v1586 = vpack.c.b16 %v1362, %v1356
    %v1587 = vpack.c.b16 %v1363, %v1357
    %v1588 = vpack.c.b16 %v1100, %v1098
    %v1589 = vpack.c.b16 %v1364, %v1358
    %v1590 = vpack.c.b16 %v1365, %v1359
    %v1591 = vpack.c.b16 %v592, %v590
    %v1592 = vpack.c.b16 %v1372, %v1366
    %v1593 = vpack.c.b16 %v1373, %v1367
    %v1594 = vpack.c.b16 %v848, %v846
    %v1595 = vpack.c.b16 %v1374, %v1368
    %v1596 = vpack.c.b16 %v1375, %v1369
    %v1597 = vpack.c.b16 %v1104, %v1102
    %v1598 = vpack.c.b16 %v1376, %v1370
    %v1599 = vpack.c.b16 %v1377, %v1371
    %v1600 = vpack.c.b16 %v596, %v594
    %v1601 = vpack.c.b16 %v1384, %v1378
    %v1602 = vpack.c.b16 %v1385, %v1379
    %v1603 = vpack.c.b16 %v852, %v850
    %v1604 = vpack.c.b16 %v1386, %v1380
    %v1605 = vpack.c.b16 %v1387, %v1381
    %v1606 = vpack.c.b16 %v1108, %v1106
    %v1607 = vpack.c.b16 %v1388, %v1382
    %v1608 = vpack.c.b16 %v1389, %v1383
    %v1609 = vpack.c.b16 %v600, %v598
    %v1610 = vpack.c.b16 %v1396, %v1390
    %v1611 = vpack.c.b16 %v1397, %v1391
    %v1612 = vpack.c.b16 %v856, %v854
    %v1613 = vpack.c.b16 %v1398, %v1392
    %v1614 = vpack.c.b16 %v1399, %v1393
    %v1615 = vpack.c.b16 %v1112, %v1110
    %v1616 = vpack.c.b16 %v1400, %v1394
    %v1617 = vpack.c.b16 %v1401, %v1395
    %v1834 = vunpack.c.l.b16 %v1402
    %v1835 = vunpack.c.l.b16 %v1403
    %v1836 = vunpack.c.l.b16 %v1404
    %v1837 = vunpack.c.l.b16 %v1405
    %v1838 = vunpack.c.l.b16 %v1406
    %v1839 = vunpack.c.l.b16 %v1407
    %v1840 = vunpack.c.l.b16 %v1408
    %v1841 = vunpack.c.l.b16 %v1409
    %v1842 = vunpack.c.l.b16 %v1410
    %v1843 = vunpack.c.l.b16 %v1411
    %v1844 = vunpack.c.l.b16 %v1412
    %v1845 = vunpack.c.l.b16 %v1413
    %v1846 = vunpack.c.l.b16 %v1414
    %v1847 = vunpack.c.l.b16 %v1415
    %v1848 = vunpack.c.l.b16 %v1416
    %v1849 = vunpack.c.l.b16 %v1417
    %v1850 = vunpack.c.l.b16 %v1418
    %v1851 = vunpack.c.l.b16 %v1419
    %v1852 = vunpack.c.l.b16 %v1420
    %v1853 = vunpack.c.l.b16 %v1421
    %v1854 = vunpack.c.l.b16 %v1422
    %v1855 = vunpack.c.l.b16 %v1423
    %v1856 = vunpack.c.l.b16 %v1424
    %v1857 = vunpack.c.l.b16 %v1425
    %v1858 = vunpack.c.l.b16 %v1426
    %v1859 = vunpack.c.l.b16 %v1427
    %v1860 = vunpack.c.l.b16 %v1428
    %v1861 = vunpack.c.l.b16 %v1429
    %v1862 = vunpack.c.l.b16 %v1430
    %v1863 = vunpack.c.l.b16 %v1431
    %v1864 = vunpack.c.l.b16 %v1432
    %v1865 = vunpack.c.l.b16 %v1433
    %v1866 = vunpack.c.l.b16 %v1434
    %v1867 = vunpack.c.l.b16 %v1435
    %v1868 = vunpack.c.l.b16 %v1436
    %v1869 = vunpack.c.l.b16 %v1437
    %v1870 = vunpack.c.l.b16 %v1438
    %v1871 = vunpack.c.l.b16 %v1439
    %v1872 = vunpack.c.l.b16 %v1440
    %v1873 = vunpack.c.l.b16 %v1441
    %v1874 = vunpack.c.l.b16 %v1442
    %v1875 = vunpack.c.l.b16 %v1443
    %v1876 = vunpack.c.l.b16 %v1444
    %v1877 = vunpack.c.l.b16 %v1445
    %v1878 = vunpack.c.l.b16 %v1446
    %v1879 = vunpack.c.l.b16 %v1447
    %v1880 = vunpack.c.l.b16 %v1448
    %v1881 = vunpack.c.l.b16 %v1449
    %v1882 = vunpack.c.l.b16 %v1450
    %v1883 = vunpack.c.l.b16 %v1451
    %v1884 = vunpack.c.l.b16 %v1452
    %v1885 = vunpack.c.l.b16 %v1453
    %v1886 = vunpack.c.l.b16 %v1454
    %v1887 = vunpack.c.l.b16 %v1455
    %v1888 = vunpack.c.l.b16 %v1456
    %v1889 = vunpack.c.l.b16 %v1457
    %v1890 = vunpack.c.l.b16 %v1458
    %v1891 = vunpack.c.l.b16 %v1459
    %v1892 = vunpack.c.l.b16 %v1460
    %v1893 = vunpack.c.l.b16 %v1461
    %v1894 = vunpack.c.l.b16 %v1462
    %v1895 = vunpack.c.l.b16 %v1463
    %v1896 = vunpack.c.l.b16 %v1464
    %v1897 = vunpack.c.l.b16 %v1465
    %v1898 = vunpack.c.l.b16 %v1466
    %v1899 = vunpack.c.l.b16 %v1467
    %v1900 = vunpack.c.l.b16 %v1468
    %v1901 = vunpack.c.l.b16 %v1469
    %v1902 = vunpack.c.l.b16 %v1470
    %v1903 = vunpack.c.l.b16 %v1471
    %v1904 = vunpack.c.l.b16 %v1472
    %v1905 = vunpack.c.l.b16 %v1473
    %v1906 = vunpack.c.l.b16 %v1474
    %v1907 = vunpack.c.l.b16 %v1475
    %v1908 = vunpack.c.l.b16 %v1476
    %v1909 = vunpack.c.l.b16 %v1477
    %v1910 = vunpack.c.l.b16 %v1478
    %v1911 = vunpack.c.l.b16 %v1479
    %v1912 = vunpack.c.l.b16 %v1480
    %v1913 = vunpack.c.l.b16 %v1481
    %v1914 = vunpack.c.l.b16 %v1482
    %v1915 = vunpack.c.l.b16 %v1483
    %v1916 = vunpack.c.l.b16 %v1484
    %v1917 = vunpack.c.l.b16 %v1485
    %v1918 = vunpack.c.l.b16 %v1486
    %v1919 = vunpack.c.l.b16 %v1487
    %v1920 = vunpack.c.l.b16 %v1488
    %v1921 = vunpack.c.l.b16 %v1489
    %v1922 = vunpack.c.l.b16 %v1490
    %v1923 = vunpack.c.l.b16 %v1491
    %v1924 = vunpack.c.l.b16 %v1492
    %v1925 = vunpack.c.l.b16 %v1493
    %v1926 = vunpack.c.l.b16 %v1494
    %v1927 = vunpack.c.l.b16 %v1495
    %v1928 = vunpack.c.l.b16 %v1496
    %v1929 = vunpack.c.l.b16 %v1497
    %v1930 = vunpack.c.l.b16 %v1498
    %v1931 = vunpack.c.l.b16 %v1499
    %v1932 = vunpack.c.l.b16 %v1500
    %v1933 = vunpack.c.l.b16 %v1501
    %v1934 = vunpack.c.l.b16 %v1502
    %v1935 = vunpack.c.l.b16 %v1503
    %v1936 = vunpack.c.l.b16 %v1504
    %v1937 = vunpack.c.l.b16 %v1505
    %v1938 = vunpack.c.l.b16 %v1506
    %v1939 = vunpack.c.l.b16 %v1507
    %v1940 = vunpack.c.l.b16 %v1508
    %v1941 = vunpack.c.l.b16 %v1509
    %v1942 = vunpack.c.l.b16 %v1510
    %v1943 = vunpack.c.l.b16 %v1511
    %v1944 = vunpack.c.l.b16 %v1512
    %v1945 = vunpack.c.l.b16 %v1513
    %v1946 = vunpack.c.l.b16 %v1514
    %v1947 = vunpack.c.l.b16 %v1515
    %v1948 = vunpack.c.l.b16 %v1516
    %v1949 = vunpack.c.l.b16 %v1517
    %v1950 = vunpack.c.l.b16 %v1518
    %v1951 = vunpack.c.l.b16 %v1519
    %v1952 = vunpack.c.l.b16 %v1520
    %v1953 = vunpack.c.l.b16 %v1521
    %v1954 = vunpack.c.l.b16 %v1522
    %v1955 = vunpack.c.l.b16 %v1523
    %v1956 = vunpack.c.l.b16 %v1524
    %v1957 = vunpack.c.l.b16 %v1525
    %v1958 = vunpack.c.l.b16 %v1526
    %v1959 = vunpack.c.l.b16 %v1527
    %v1960 = vunpack.c.l.b16 %v1528
    %v1961 = vunpack.c.l.b16 %v1529
    %v1962 = vunpack.c.l.b16 %v1530
    %v1963 = vunpack.c.l.b16 %v1531
    %v1964 = vunpack.c.l.b16 %v1532
    %v1965 = vunpack.c.l.b16 %v1533
    %v1966 = vunpack.c.l.b16 %v1534
    %v1967 = vunpack.c.l.b16 %v1535
    %v1968 = vunpack.c.l.b16 %v1536
    %v1969 = vunpack.c.l.b16 %v1537
    %v1970 = vunpack.c.l.b16 %v1538
    %v1971 = vunpack.c.l.b16 %v1539
    %v1972 = vunpack.c.l.b16 %v1540
    %v1973 = vunpack.c.l.b16 %v1541
    %v1974 = vunpack.c.l.b16 %v1542
    %v1975 = vunpack.c.l.b16 %v1543
    %v1976 = vunpack.c.l.b16 %v1544
    %v1977 = vunpack.c.l.b16 %v1545
    %v1978 = vpack.c.b16 %v1835, %v1834
    %v1979 = vpack.c.b16 %v1837, %v1836
    %v1980 = vpack.c.b16 %v1839, %v1838
    %v1981 = vpack.c.b16 %v1841, %v1840
    %v1982 = vpack.c.b16 %v1843, %v1842
    %v1983 = vpack.c.b16 %v1845, %v1844
    %v1984 = vpack.c.b16 %v1847, %v1846
    %v1985 = vpack.c.b16 %v1849, %v1848
    %v1986 = vpack.c.b16 %v1851, %v1850
    %v1987 = vpack.c.b16 %v1853, %v1852
    %v1988 = vpack.c.b16 %v1855, %v1854
    %v1989 = vpack.c.b16 %v1857, %v1856
    %v1990 = vpack.c.b16 %v1859, %v1858
    %v1991 = vpack.c.b16 %v1861, %v1860
    %v1992 = vpack.c.b16 %v1863, %v1862
    %v1993 = vpack.c.b16 %v1865, %v1864
    %v1994 = vpack.c.b16 %v1867, %v1866
    %v1995 = vpack.c.b16 %v1869, %v1868
    %v1996 = vpack.c.b16 %v1871, %v1870
    %v1997 = vpack.c.b16 %v1873, %v1872
    %v1998 = vpack.c.b16 %v1875, %v1874
    %v1999 = vpack.c.b16 %v1877, %v1876
    %v2000 = vpack.c.b16 %v1879, %v1878
    %v2001 = vpack.c.b16 %v1881, %v1880
    %v2002 = vpack.c.b16 %v1883, %v1882
    %v2003 = vpack.c.b16 %v1885, %v1884
    %v2004 = vpack.c.b16 %v1887, %v1886
    %v2005 = vpack.c.b16 %v1889, %v1888
    %v2006 = vpack.c.b16 %v1891, %v1890
    %v2007 = vpack.c.b16 %v1893, %v1892
    %v2008 = vpack.c.b16 %v1895, %v1894
    %v2009 = vpack.c.b16 %v1897, %v1896
    %v2010 = vpack.c.b16 %v1899, %v1898
    %v2011 = vpack.c.b16 %v1901, %v1900
    %v2012 = vpack.c.b16 %v1903, %v1902
    %v2013 = vpack.c.b16 %v1905, %v1904
    %v2014 = vpack.c.b16 %v1907, %v1906
    %v2015 = vpack.c.b16 %v1909, %v1908
    %v2016 = vpack.c.b16 %v1911, %v1910
    %v2017 = vpack.c.b16 %v1913, %v1912
    %v2018 = vpack.c.b16 %v1915, %v1914
    %v2019 = vpack.c.b16 %v1917, %v1916
    %v2020 = vpack.c.b16 %v1919, %v1918
    %v2021 = vpack.c.b16 %v1921, %v1920
    %v2022 = vpack.c.b16 %v1923, %v1922
    %v2023 = vpack.c.b16 %v1925, %v1924
    %v2024 = vpack.c.b16 %v1927, %v1926
    %v2025 = vpack.c.b16 %v1929, %v1928
    %v2026 = vpack.c.b16 %v1931, %v1930
    %v2027 = vpack.c.b16 %v1933, %v1932
    %v2028 = vpack.c.b16 %v1935, %v1934
    %v2029 = vpack.c.b16 %v1937, %v1936
    %v2030 = vpack.c.b16 %v1939, %v1938
    %v2031 = vpack.c.b16 %v1941, %v1940
    %v2032 = vpack.c.b16 %v1943, %v1942
    %v2033 = vpack.c.b16 %v1945, %v1944
    %v2034 = vpack.c.b16 %v1947, %v1946
    %v2035 = vpack.c.b16 %v1949, %v1948
    %v2036 = vpack.c.b16 %v1951, %v1950
    %v2037 = vpack.c.b16 %v1953, %v1952
    %v2038 = vpack.c.b16 %v1955, %v1954
    %v2039 = vpack.c.b16 %v1957, %v1956
    %v2040 = vpack.c.b16 %v1959, %v1958
    %v2041 = vpack.c.b16 %v1961, %v1960
    %v2042 = vpack.c.b16 %v1963, %v1962
    %v2043 = vpack.c.b16 %v1965, %v1964
    %v2044 = vpack.c.b16 %v1967, %v1966
    %v2045 = vpack.c.b16 %v1969, %v1968
    %v2046 = vpack.c.b16 %v1971, %v1970
    %v2047 = vpack.c.b16 %v1973, %v1972
    %v2048 = vpack.c.b16 %v1975, %v1974
    %v2049 = vpack.c.b16 %v1977, %v1976
    %2122 = vmatprep.subr.bf16.mxu0 0
    %2123 = vmatpush1.bf16.msra.mxu0 %v1978
    %2124 = vmatprep.subr.bf16.mxu0 0
    %2125 = vmatpush1.bf16.msra.mxu0 %v1979
    %2126 = vmatprep.subr.bf16.mxu0 0
    %2127 = vmatpush1.bf16.msra.mxu0 %v1980
    %2128 = vmatprep.subr.bf16.mxu0 0
    %2129 = vmatpush1.bf16.msra.mxu0 %v1981
    %2130 = vmatprep.subr.bf16.mxu0 0
    %2131 = vmatpush1.bf16.msra.mxu0 %v1982
    %2132 = vmatprep.subr.bf16.mxu0 0
    %2133 = vmatpush1.bf16.msra.mxu0 %v1983
    %2134 = vmatprep.subr.bf16.mxu0 0
    %2135 = vmatpush1.bf16.msra.mxu0 %v1984
    %2136 = vmatprep.subr.bf16.mxu0 0
    %2137 = vmatpush1.bf16.msra.mxu0 %v1985
    %2138 = vmatprep.subr.bf16.mxu0 0
    %2139 = vmatpush1.bf16.msra.mxu0 %v1986
    %2140 = vmatprep.subr.bf16.mxu0 0
    %2141 = vmatpush1.bf16.msra.mxu0 %v1987
    %2142 = vmatprep.subr.bf16.mxu0 0
    %2143 = vmatpush1.bf16.msra.mxu0 %v1988
    %2144 = vmatprep.subr.bf16.mxu0 0
    %2145 = vmatpush1.bf16.msra.mxu0 %v1989
    %2146 = vmatprep.subr.bf16.mxu0 0
    %2147 = vmatpush1.bf16.msra.mxu0 %v1990
    %2148 = vmatprep.subr.bf16.mxu0 0
    %2149 = vmatpush1.bf16.msra.mxu0 %v1991
    %2150 = vmatprep.subr.bf16.mxu0 0
    %2151 = vmatpush1.bf16.msra.mxu0 %v1992
    %2152 = vmatprep.subr.bf16.mxu0 0
    %2153 = vmatpush1.bf16.msra.mxu0 %v1993
    %2154 = vmatprep.mubr.bf16.mxu0 %v1547
    %2155 = vmatmul.mubr.bf16.gmra.mrb[0].mxu0 %v1546
    %v2156 = vpop.f32.mrb[0].mxu0
    %v2157 = vadd.f32 0.0, %v2156
    %v2158 = vpop.f32.mrb[0].mxu0
    %v2159 = vpop.f32.mrb[0].mxu0
    %v2160 = vadd.f32 0.0, %v2159
    %v2161 = vpop.f32.mrb[0].mxu0
    %2162 = vmatprep.mubr.bf16.mxu0 %v1556
    %2163 = vmatmul.mubr.bf16.gmra.mrb[0].mxu0 %v1555
    %v2164 = vpop.f32.mrb[0].mxu0
    %v2165 = vadd.f32 0.0, %v2164
    %v2166 = vpop.f32.mrb[0].mxu0
    %v2167 = vpop.f32.mrb[0].mxu0
    %v2168 = vadd.f32 0.0, %v2167
    %v2169 = vpop.f32.mrb[0].mxu0
    %2170 = vmatprep.mubr.bf16.mxu0 %v1565
    %2171 = vmatmul.mubr.bf16.gmra.mrb[0].mxu0 %v1564
    %v2172 = vpop.f32.mrb[0].mxu0
    %v2173 = vadd.f32 0.0, %v2172
    %v2174 = vpop.f32.mrb[0].mxu0
    %v2175 = vpop.f32.mrb[0].mxu0
    %v2176 = vadd.f32 0.0, %v2175
    %v2177 = vpop.f32.mrb[0].mxu0
    %2178 = vmatprep.mubr.bf16.mxu0 %v1574
    %2179 = vmatmul.mubr.bf16.gmra.mrb[0].mxu0 %v1573
    %v2180 = vpop.f32.mrb[0].mxu0
    %v2181 = vadd.f32 0.0, %v2180
    %v2182 = vpop.f32.mrb[0].mxu0
    %v2183 = vpop.f32.mrb[0].mxu0
    %v2184 = vadd.f32 0.0, %v2183
    %v2185 = vpop.f32.mrb[0].mxu0
    %2186 = vmatprep.mubr.bf16.mxu0 %v1583
    %2187 = vmatmul.mubr.bf16.gmra.mrb[0].mxu0 %v1582
    %v2188 = vpop.f32.mrb[0].mxu0
    %v2189 = vadd.f32 0.0, %v2188
    %v2190 = vpop.f32.mrb[0].mxu0
    %v2191 = vpop.f32.mrb[0].mxu0
    %v2192 = vadd.f32 0.0, %v2191
    %v2193 = vpop.f32.mrb[0].mxu0
    %2194 = vmatprep.mubr.bf16.mxu0 %v1592
    %2195 = vmatmul.mubr.bf16.gmra.mrb[0].mxu0 %v1591
    %v2196 = vpop.f32.mrb[0].mxu0
    %v2197 = vadd.f32 0.0, %v2196
    %v2198 = vpop.f32.mrb[0].mxu0
    %v2199 = vpop.f32.mrb[0].mxu0
    %v2200 = vadd.f32 0.0, %v2199
    %v2201 = vpop.f32.mrb[0].mxu0
    %2202 = vmatprep.mubr.bf16.mxu0 %v1601
    %2203 = vmatmul.mubr.bf16.gmra.mrb[0].mxu0 %v1600
    %v2204 = vpop.f32.mrb[0].mxu0
    %v2205 = vadd.f32 0.0, %v2204
    %v2206 = vpop.f32.mrb[0].mxu0
    %v2207 = vpop.f32.mrb[0].mxu0
    %v2208 = vadd.f32 0.0, %v2207
    %v2209 = vpop.f32.mrb[0].mxu0
    %2210 = vmatprep.mubr.bf16.mxu0 %v1610
    %2211 = vmatmul.mubr.bf16.gmra.mrb[0].mxu0 %v1609
    %v2212 = vpop.f32.mrb[0].mxu0
    %v2213 = vadd.f32 0.0, %v2212
    %v2214 = vpop.f32.mrb[0].mxu0
    %v2215 = vpop.f32.mrb[0].mxu0
    %v2216 = vadd.f32 0.0, %v2215
    %v2217 = vpop.f32.mrb[0].mxu0
    %2218 = vdwg.mxu0
    %2219 = vmatprep.subr.bf16.mxu0 0
    %2220 = vmatpush1.bf16.msra.mxu0 %v1994
    %2221 = vmatprep.subr.bf16.mxu0 0
    %2222 = vmatpush1.bf16.msra.mxu0 %v1995
    %2223 = vmatprep.subr.bf16.mxu0 0
    %2224 = vmatpush1.bf16.msra.mxu0 %v1996
    %2225 = vmatprep.subr.bf16.mxu0 0
    %2226 = vmatpush1.bf16.msra.mxu0 %v1997
    %2227 = vmatprep.subr.bf16.mxu0 0
    %2228 = vmatpush1.bf16.msra.mxu0 %v1998
    %2229 = vmatprep.subr.bf16.mxu0 0
    %2230 = vmatpush1.bf16.msra.mxu0 %v1999
    %2231 = vmatprep.subr.bf16.mxu0 0
    %2232 = vmatpush1.bf16.msra.mxu0 %v2000
    %2233 = vmatprep.subr.bf16.mxu0 0
    %2234 = vmatpush1.bf16.msra.mxu0 %v2001
    %2235 = vmatprep.subr.bf16.mxu0 0
    %2236 = vmatpush1.bf16.msra.mxu0 %v2002
    %2237 = vmatprep.subr.bf16.mxu0 0
    %2238 = vmatpush1.bf16.msra.mxu0 %v2003
    %2239 = vmatprep.subr.bf16.mxu0 0
    %2240 = vmatpush1.bf16.msra.mxu0 %v2004
    %2241 = vmatprep.subr.bf16.mxu0 0
    %2242 = vmatpush1.bf16.msra.mxu0 %v2005
    %2243 = vmatprep.subr.bf16.mxu0 0
    %2244 = vmatpush1.bf16.msra.mxu0 %v2006
    %2245 = vmatprep.subr.bf16.mxu0 0
    %2246 = vmatpush1.bf16.msra.mxu0 %v2007
    %2247 = vmatprep.subr.bf16.mxu0 0
    %2248 = vmatpush1.bf16.msra.mxu0 %v2008
    %2249 = vmatprep.subr.bf16.mxu0 0
    %2250 = vmatpush1.bf16.msra.mxu0 %v2009
    %2251 = vmatprep.mubr.bf16.mxu0 %v1549
    %2252 = vmatmul.mubr.bf16.gmra.mrb[0].mxu0 %v1548
    %v2253 = vpop.f32.mrb[0].mxu0
    %v2254 = vadd.f32 %v2157, %v2253
    %v2255 = vpop.f32.mrb[0].mxu0
    %v2256 = vpop.f32.mrb[0].mxu0
    %v2257 = vadd.f32 %v2160, %v2256
    %v2258 = vpop.f32.mrb[0].mxu0
    %2259 = vmatprep.mubr.bf16.mxu0 %v1558
    %2260 = vmatmul.mubr.bf16.gmra.mrb[0].mxu0 %v1557
    %v2261 = vpop.f32.mrb[0].mxu0
    %v2262 = vadd.f32 %v2165, %v2261
    %v2263 = vpop.f32.mrb[0].mxu0
    %v2264 = vpop.f32.mrb[0].mxu0
    %v2265 = vadd.f32 %v2168, %v2264
    %v2266 = vpop.f32.mrb[0].mxu0
    %2267 = vmatprep.mubr.bf16.mxu0 %v1567
    %2268 = vmatmul.mubr.bf16.gmra.mrb[0].mxu0 %v1566
    %v2269 = vpop.f32.mrb[0].mxu0
    %v2270 = vadd.f32 %v2173, %v2269
    %v2271 = vpop.f32.mrb[0].mxu0
    %v2272 = vpop.f32.mrb[0].mxu0
    %v2273 = vadd.f32 %v2176, %v2272
    %v2274 = vpop.f32.mrb[0].mxu0
    %2275 = vmatprep.mubr.bf16.mxu0 %v1576
    %2276 = vmatmul.mubr.bf16.gmra.mrb[0].mxu0 %v1575
    %v2277 = vpop.f32.mrb[0].mxu0
    %v2278 = vadd.f32 %v2181, %v2277
    %v2279 = vpop.f32.mrb[0].mxu0
    %v2280 = vpop.f32.mrb[0].mxu0
    %v2281 = vadd.f32 %v2184, %v2280
    %v2282 = vpop.f32.mrb[0].mxu0
    %2283 = vmatprep.mubr.bf16.mxu0 %v1585
    %2284 = vmatmul.mubr.bf16.gmra.mrb[0].mxu0 %v1584
    %v2285 = vpop.f32.mrb[0].mxu0
    %v2286 = vadd.f32 %v2189, %v2285
    %v2287 = vpop.f32.mrb[0].mxu0
    %v2288 = vpop.f32.mrb[0].mxu0
    %v2289 = vadd.f32 %v2192, %v2288
    %v2290 = vpop.f32.mrb[0].mxu0
    %2291 = vmatprep.mubr.bf16.mxu0 %v1594
    %2292 = vmatmul.mubr.bf16.gmra.mrb[0].mxu0 %v1593
    %v2293 = vpop.f32.mrb[0].mxu0
    %v2294 = vadd.f32 %v2197, %v2293
    %v2295 = vpop.f32.mrb[0].mxu0
    %v2296 = vpop.f32.mrb[0].mxu0
    %v2297 = vadd.f32 %v2200, %v2296
    %v2298 = vpop.f32.mrb[0].mxu0
    %2299 = vmatprep.mubr.bf16.mxu0 %v1603
    %2300 = vmatmul.mubr.bf16.gmra.mrb[0].mxu0 %v1602
    %v2301 = vpop.f32.mrb[0].mxu0
    %v2302 = vadd.f32 %v2205, %v2301
    %v2303 = vpop.f32.mrb[0].mxu0
    %v2304 = vpop.f32.mrb[0].mxu0
    %v2305 = vadd.f32 %v2208, %v2304
    %v2306 = vpop.f32.mrb[0].mxu0
    %2307 = vmatprep.mubr.bf16.mxu0 %v1612
    %2308 = vmatmul.mubr.bf16.gmra.mrb[0].mxu0 %v1611
    %v2309 = vpop.f32.mrb[0].mxu0
    %v2310 = vadd.f32 %v2213, %v2309
    %v2311 = vpop.f32.mrb[0].mxu0
    %v2312 = vpop.f32.mrb[0].mxu0
    %v2313 = vadd.f32 %v2216, %v2312
    %v2314 = vpop.f32.mrb[0].mxu0
    %2315 = vdwg.mxu0
    %2316 = vmatprep.subr.bf16.mxu0 0
    %2317 = vmatpush1.bf16.msra.mxu0 %v2010
    %2318 = vmatprep.subr.bf16.mxu0 0
    %2319 = vmatpush1.bf16.msra.mxu0 %v2011
    %2320 = vmatprep.subr.bf16.mxu0 0
    %2321 = vmatpush1.bf16.msra.mxu0 %v2012
    %2322 = vmatprep.subr.bf16.mxu0 0
    %2323 = vmatpush1.bf16.msra.mxu0 %v2013
    %2324 = vmatprep.subr.bf16.mxu0 0
    %2325 = vmatpush1.bf16.msra.mxu0 %v2014
    %2326 = vmatprep.subr.bf16.mxu0 0
    %2327 = vmatpush1.bf16.msra.mxu0 %v2015
    %2328 = vmatprep.subr.bf16.mxu0 0
    %2329 = vmatpush1.bf16.msra.mxu0 %v2016
    %2330 = vmatprep.subr.bf16.mxu0 0
    %2331 = vmatpush1.bf16.msra.mxu0 %v2017
    %2332 = vmatprep.subr.bf16.mxu0 0
    %2333 = vmatpush1.bf16.msra.mxu0 %v2018
    %2334 = vmatprep.subr.bf16.mxu0 0
    %2335 = vmatpush1.bf16.msra.mxu0 %v2019
    %2336 = vmatprep.subr.bf16.mxu0 0
    %2337 = vmatpush1.bf16.msra.mxu0 %v2020
    %2338 = vmatprep.subr.bf16.mxu0 0
    %2339 = vmatpush1.bf16.msra.mxu0 %v2021
    %2340 = vmatprep.subr.bf16.mxu0 0
    %2341 = vmatpush1.bf16.msra.mxu0 %v2022
    %2342 = vmatprep.subr.bf16.mxu0 0
    %2343 = vmatpush1.bf16.msra.mxu0 %v2023
    %2344 = vmatprep.subr.bf16.mxu0 0
    %2345 = vmatpush1.bf16.msra.mxu0 %v2024
    %2346 = vmatprep.subr.bf16.mxu0 0
    %2347 = vmatpush1.bf16.msra.mxu0 %v2025
    %2348 = vmatprep.mubr.bf16.mxu0 %v1551
    %2349 = vmatmul.mubr.bf16.gmra.mrb[0].mxu0 %v1550
    %v2350 = vpop.f32.mrb[0].mxu0
    %v2351 = vadd.f32 %v2254, %v2350
    %v2352 = vpop.f32.mrb[0].mxu0
    %v2353 = vpop.f32.mrb[0].mxu0
    %v2354 = vadd.f32 %v2257, %v2353
    %v2355 = vpop.f32.mrb[0].mxu0
    %2356 = vmatprep.mubr.bf16.mxu0 %v1560
    %2357 = vmatmul.mubr.bf16.gmra.mrb[0].mxu0 %v1559
    %v2358 = vpop.f32.mrb[0].mxu0
    %v2359 = vadd.f32 %v2262, %v2358
    %v2360 = vpop.f32.mrb[0].mxu0
    %v2361 = vpop.f32.mrb[0].mxu0
    %v2362 = vadd.f32 %v2265, %v2361
    %v2363 = vpop.f32.mrb[0].mxu0
    %2364 = vmatprep.mubr.bf16.mxu0 %v1569
    %2365 = vmatmul.mubr.bf16.gmra.mrb[0].mxu0 %v1568
    %v2366 = vpop.f32.mrb[0].mxu0
    %v2367 = vadd.f32 %v2270, %v2366
    %v2368 = vpop.f32.mrb[0].mxu0
    %v2369 = vpop.f32.mrb[0].mxu0
    %v2370 = vadd.f32 %v2273, %v2369
    %v2371 = vpop.f32.mrb[0].mxu0
    %2372 = vmatprep.mubr.bf16.mxu0 %v1578
    %2373 = vmatmul.mubr.bf16.gmra.mrb[0].mxu0 %v1577
    %v2374 = vpop.f32.mrb[0].mxu0
    %v2375 = vadd.f32 %v2278, %v2374
    %v2376 = vpop.f32.mrb[0].mxu0
    %v2377 = vpop.f32.mrb[0].mxu0
    %v2378 = vadd.f32 %v2281, %v2377
    %v2379 = vpop.f32.mrb[0].mxu0
    %2380 = vmatprep.mubr.bf16.mxu0 %v1587
    %2381 = vmatmul.mubr.bf16.gmra.mrb[0].mxu0 %v1586
    %v2382 = vpop.f32.mrb[0].mxu0
    %v2383 = vadd.f32 %v2286, %v2382
    %v2384 = vpop.f32.mrb[0].mxu0
    %v2385 = vpop.f32.mrb[0].mxu0
    %v2386 = vadd.f32 %v2289, %v2385
    %v2387 = vpop.f32.mrb[0].mxu0
    %2388 = vmatprep.mubr.bf16.mxu0 %v1596
    %2389 = vmatmul.mubr.bf16.gmra.mrb[0].mxu0 %v1595
    %v2390 = vpop.f32.mrb[0].mxu0
    %v2391 = vadd.f32 %v2294, %v2390
    %v2392 = vpop.f32.mrb[0].mxu0
    %v2393 = vpop.f32.mrb[0].mxu0
    %v2394 = vadd.f32 %v2297, %v2393
    %v2395 = vpop.f32.mrb[0].mxu0
    %2396 = vmatprep.mubr.bf16.mxu0 %v1605
    %2397 = vmatmul.mubr.bf16.gmra.mrb[0].mxu0 %v1604
    %v2398 = vpop.f32.mrb[0].mxu0
    %v2399 = vadd.f32 %v2302, %v2398
    %v2400 = vpop.f32.mrb[0].mxu0
    %v2401 = vpop.f32.mrb[0].mxu0
    %v2402 = vadd.f32 %v2305, %v2401
    %v2403 = vpop.f32.mrb[0].mxu0
    %2404 = vmatprep.mubr.bf16.mxu0 %v1614
    %2405 = vmatmul.mubr.bf16.gmra.mrb[0].mxu0 %v1613
    %v2406 = vpop.f32.mrb[0].mxu0
    %v2407 = vadd.f32 %v2310, %v2406
    %v2408 = vpop.f32.mrb[0].mxu0
    %v2409 = vpop.f32.mrb[0].mxu0
    %v2410 = vadd.f32 %v2313, %v2409
    %v2411 = vpop.f32.mrb[0].mxu0
    %2412 = vdwg.mxu0
    %2413 = vmatprep.subr.bf16.mxu0 0
    %2414 = vmatpush1.bf16.msra.mxu0 %v2026
    %2415 = vmatprep.subr.bf16.mxu0 0
    %2416 = vmatpush1.bf16.msra.mxu0 %v2027
    %2417 = vmatprep.subr.bf16.mxu0 0
    %2418 = vmatpush1.bf16.msra.mxu0 %v2028
    %2419 = vmatprep.subr.bf16.mxu0 0
    %2420 = vmatpush1.bf16.msra.mxu0 %v2029
    %2421 = vmatprep.subr.bf16.mxu0 0
    %2422 = vmatpush1.bf16.msra.mxu0 %v2030
    %2423 = vmatprep.subr.bf16.mxu0 0
    %2424 = vmatpush1.bf16.msra.mxu0 %v2031
    %2425 = vmatprep.subr.bf16.mxu0 0
    %2426 = vmatpush1.bf16.msra.mxu0 %v2032
    %2427 = vmatprep.subr.bf16.mxu0 0
    %2428 = vmatpush1.bf16.msra.mxu0 %v2033
    %2429 = vmatprep.subr.bf16.mxu0 0
    %2430 = vmatpush1.bf16.msra.mxu0 %v2034
    %2431 = vmatprep.subr.bf16.mxu0 0
    %2432 = vmatpush1.bf16.msra.mxu0 %v2035
    %2433 = vmatprep.subr.bf16.mxu0 0
    %2434 = vmatpush1.bf16.msra.mxu0 %v2036
    %2435 = vmatprep.subr.bf16.mxu0 0
    %2436 = vmatpush1.bf16.msra.mxu0 %v2037
    %2437 = vmatprep.subr.bf16.mxu0 0
    %2438 = vmatpush1.bf16.msra.mxu0 %v2038
    %2439 = vmatprep.subr.bf16.mxu0 0
    %2440 = vmatpush1.bf16.msra.mxu0 %v2039
    %2441 = vmatprep.subr.bf16.mxu0 0
    %2442 = vmatpush1.bf16.msra.mxu0 %v2040
    %2443 = vmatprep.subr.bf16.mxu0 0
    %2444 = vmatpush1.bf16.msra.mxu0 %v2041
    %2445 = vmatprep.mubr.bf16.mxu0 %v1553
    %2446 = vmatmul.mubr.bf16.gmra.mrb[0].mxu0 %v1552
    %v2447 = vpop.f32.mrb[0].mxu0
    %v2448 = vadd.f32 %v2351, %v2447
    %v2449 = vpop.f32.mrb[0].mxu0
    %v2450 = vpop.f32.mrb[0].mxu0
    %v2451 = vadd.f32 %v2354, %v2450
    %v2452 = vpop.f32.mrb[0].mxu0
    %2453 = vmatprep.mubr.bf16.mxu0 %v1562
    %2454 = vmatmul.mubr.bf16.gmra.mrb[0].mxu0 %v1561
    %v2455 = vpop.f32.mrb[0].mxu0
    %v2456 = vadd.f32 %v2359, %v2455
    %v2457 = vpop.f32.mrb[0].mxu0
    %v2458 = vpop.f32.mrb[0].mxu0
    %v2459 = vadd.f32 %v2362, %v2458
    %v2460 = vpop.f32.mrb[0].mxu0
    %2461 = vmatprep.mubr.bf16.mxu0 %v1571
    %2462 = vmatmul.mubr.bf16.gmra.mrb[0].mxu0 %v1570
    %v2463 = vpop.f32.mrb[0].mxu0
    %v2464 = vadd.f32 %v2367, %v2463
    %v2465 = vpop.f32.mrb[0].mxu0
    %v2466 = vpop.f32.mrb[0].mxu0
    %v2467 = vadd.f32 %v2370, %v2466
    %v2468 = vpop.f32.mrb[0].mxu0
    %2469 = vmatprep.mubr.bf16.mxu0 %v1580
    %2470 = vmatmul.mubr.bf16.gmra.mrb[0].mxu0 %v1579
    %v2471 = vpop.f32.mrb[0].mxu0
    %v2472 = vadd.f32 %v2375, %v2471
    %v2473 = vpop.f32.mrb[0].mxu0
    %v2474 = vpop.f32.mrb[0].mxu0
    %v2475 = vadd.f32 %v2378, %v2474
    %v2476 = vpop.f32.mrb[0].mxu0
    %2477 = vmatprep.mubr.bf16.mxu0 %v1589
    %2478 = vmatmul.mubr.bf16.gmra.mrb[0].mxu0 %v1588
    %v2479 = vpop.f32.mrb[0].mxu0
    %v2480 = vadd.f32 %v2383, %v2479
    %v2481 = vpop.f32.mrb[0].mxu0
    %v2482 = vpop.f32.mrb[0].mxu0
    %v2483 = vadd.f32 %v2386, %v2482
    %v2484 = vpop.f32.mrb[0].mxu0
    %2485 = vmatprep.mubr.bf16.mxu0 %v1598
    %2486 = vmatmul.mubr.bf16.gmra.mrb[0].mxu0 %v1597
    %v2487 = vpop.f32.mrb[0].mxu0
    %v2488 = vadd.f32 %v2391, %v2487
    %v2489 = vpop.f32.mrb[0].mxu0
    %v2490 = vpop.f32.mrb[0].mxu0
    %v2491 = vadd.f32 %v2394, %v2490
    %v2492 = vpop.f32.mrb[0].mxu0
    %2493 = vmatprep.mubr.bf16.mxu0 %v1607
    %2494 = vmatmul.mubr.bf16.gmra.mrb[0].mxu0 %v1606
    %v2495 = vpop.f32.mrb[0].mxu0
    %v2496 = vadd.f32 %v2399, %v2495
    %v2497 = vpop.f32.mrb[0].mxu0
    %v2498 = vpop.f32.mrb[0].mxu0
    %v2499 = vadd.f32 %v2402, %v2498
    %v2500 = vpop.f32.mrb[0].mxu0
    %2501 = vmatprep.mubr.bf16.mxu0 %v1616
    %2502 = vmatmul.mubr.bf16.gmra.mrb[0].mxu0 %v1615
    %v2503 = vpop.f32.mrb[0].mxu0
    %v2504 = vadd.f32 %v2407, %v2503
    %v2505 = vpop.f32.mrb[0].mxu0
    %v2506 = vpop.f32.mrb[0].mxu0
    %v2507 = vadd.f32 %v2410, %v2506
    %v2508 = vpop.f32.mrb[0].mxu0
    %2509 = vdwg.mxu0
    %2510 = vmatprep.subr.bf16.mxu0 0
    %2511 = vmatpush1.bf16.msra.mxu0 %v2042
    %2512 = vmatprep.subr.bf16.mxu0 0
    %2513 = vmatpush1.bf16.msra.mxu0 %v2043
    %2514 = vmatprep.subr.bf16.mxu0 0
    %2515 = vmatpush1.bf16.msra.mxu0 %v2044
    %2516 = vmatprep.subr.bf16.mxu0 0
    %2517 = vmatpush1.bf16.msra.mxu0 %v2045
    %2518 = vmatprep.subr.bf16.mxu0 0
    %2519 = vmatpush1.bf16.msra.mxu0 %v2046
    %2520 = vmatprep.subr.bf16.mxu0 0
    %2521 = vmatpush1.bf16.msra.mxu0 %v2047
    %2522 = vmatprep.subr.bf16.mxu0 0
    %2523 = vmatpush1.bf16.msra.mxu0 %v2048
    %2524 = vmatprep.subr.bf16.mxu0 0
    %2525 = vmatpush1.bf16.msra.mxu0 %v2049
    %2526 = vmatprep.subr.bf16.mxu0 0
    %2527 = vmatpush1.bf16.msra.mxu0 0
    %2528 = vmatprep.subr.bf16.mxu0 0
    %2529 = vmatpush1.bf16.msra.mxu0 0
    %2530 = vmatprep.subr.bf16.mxu0 0
    %2531 = vmatpush1.bf16.msra.mxu0 0
    %2532 = vmatprep.subr.bf16.mxu0 0
    %2533 = vmatpush1.bf16.msra.mxu0 0
    %2534 = vmatprep.subr.bf16.mxu0 0
    %2535 = vmatpush1.bf16.msra.mxu0 0
    %2536 = vmatprep.subr.bf16.mxu0 0
    %2537 = vmatpush1.bf16.msra.mxu0 0
    %2538 = vmatprep.subr.bf16.mxu0 0
    %2539 = vmatpush1.bf16.msra.mxu0 0
    %2540 = vmatprep.subr.bf16.mxu0 0
    %2541 = vmatpush1.bf16.msra.mxu0 0
    %2542 = vmatprep.mubr.bf16.mxu0 0
    %2543 = vmatmul.mubr.bf16.gmra.mrb[0].mxu0 %v1554
    %v2544 = vpop.f32.mrb[0].mxu0
    %v2545 = vadd.f32 %v2448, %v2544
    %v2546 = vpop.f32.mrb[0].mxu0
    %v2547 = vpop.f32.mrb[0].mxu0
    %v2548 = vadd.f32 %v2451, %v2547
    %v2549 = vpop.f32.mrb[0].mxu0
    %2550 = vmatprep.mubr.bf16.mxu0 0
    %2551 = vmatmul.mubr.bf16.gmra.mrb[0].mxu0 %v1563
    %v2552 = vpop.f32.mrb[0].mxu0
    %v2553 = vadd.f32 %v2456, %v2552
    %v2554 = vpop.f32.mrb[0].mxu0
    %v2555 = vpop.f32.mrb[0].mxu0
    %v2556 = vadd.f32 %v2459, %v2555
    %v2557 = vpop.f32.mrb[0].mxu0
    %2558 = vmatprep.mubr.bf16.mxu0 0
    %2559 = vmatmul.mubr.bf16.gmra.mrb[0].mxu0 %v1572
    %v2560 = vpop.f32.mrb[0].mxu0
    %v2561 = vadd.f32 %v2464, %v2560
    %v2562 = vpop.f32.mrb[0].mxu0
    %v2563 = vpop.f32.mrb[0].mxu0
    %v2564 = vadd.f32 %v2467, %v2563
    %v2565 = vpop.f32.mrb[0].mxu0
    %2566 = vmatprep.mubr.bf16.mxu0 0
    %2567 = vmatmul.mubr.bf16.gmra.mrb[0].mxu0 %v1581
    %v2568 = vpop.f32.mrb[0].mxu0
    %v2569 = vadd.f32 %v2472, %v2568
    %v2570 = vpop.f32.mrb[0].mxu0
    %v2571 = vpop.f32.mrb[0].mxu0
    %v2572 = vadd.f32 %v2475, %v2571
    %v2573 = vpop.f32.mrb[0].mxu0
    %2574 = vmatprep.mubr.bf16.mxu0 0
    %2575 = vmatmul.mubr.bf16.gmra.mrb[0].mxu0 %v1590
    %v2576 = vpop.f32.mrb[0].mxu0
    %v2577 = vadd.f32 %v2480, %v2576
    %v2578 = vpop.f32.mrb[0].mxu0
    %v2579 = vpop.f32.mrb[0].mxu0
    %v2580 = vadd.f32 %v2483, %v2579
    %v2581 = vpop.f32.mrb[0].mxu0
    %2582 = vmatprep.mubr.bf16.mxu0 0
    %2583 = vmatmul.mubr.bf16.gmra.mrb[0].mxu0 %v1599
    %v2584 = vpop.f32.mrb[0].mxu0
    %v2585 = vadd.f32 %v2488, %v2584
    %v2586 = vpop.f32.mrb[0].mxu0
    %v2587 = vpop.f32.mrb[0].mxu0
    %v2588 = vadd.f32 %v2491, %v2587
    %v2589 = vpop.f32.mrb[0].mxu0
    %2590 = vmatprep.mubr.bf16.mxu0 0
    %2591 = vmatmul.mubr.bf16.gmra.mrb[0].mxu0 %v1608
    %v2592 = vpop.f32.mrb[0].mxu0
    %v2593 = vadd.f32 %v2496, %v2592
    %v2594 = vpop.f32.mrb[0].mxu0
    %v2595 = vpop.f32.mrb[0].mxu0
    %v2596 = vadd.f32 %v2499, %v2595
    %v2597 = vpop.f32.mrb[0].mxu0
    %2598 = vmatprep.mubr.bf16.mxu0 0
    %2599 = vmatmul.mubr.bf16.gmra.mrb[0].mxu0 %v1617
    %v2600 = vpop.f32.mrb[0].mxu0
    %v2601 = vadd.f32 %v2504, %v2600
    %v2602 = vpop.f32.mrb[0].mxu0
    %v2603 = vpop.f32.mrb[0].mxu0
    %v2604 = vadd.f32 %v2507, %v2603
    %v2605 = vpop.f32.mrb[0].mxu0
    %2606 = vdwg.mxu0
    %v2607 = vld [vmem:[#allocation5] sm:$0x1]
    %v2609 = vlaneseq
    %v2610 = vshrl.u32 %v2609, 7
    %v2611 = vsub.s32 0, %v2610
    %v2612 = vrot.slane %v2607, %v2611
    %v2614 = vmul.f32 %v2545, %v2612
    %v2615 = vmul.f32 %v2548, %v2612
    %v2616 = vmul.f32 %v2553, %v2612
    %v2617 = vmul.f32 %v2556, %v2612
    %v2618 = vmul.f32 %v2561, %v2612
    %v2619 = vmul.f32 %v2564, %v2612
    %v2620 = vmul.f32 %v2569, %v2612
    %v2621 = vmul.f32 %v2572, %v2612
    %v2622 = vmul.f32 %v2577, %v2612
    %v2623 = vmul.f32 %v2580, %v2612
    %v2624 = vmul.f32 %v2585, %v2612
    %v2625 = vmul.f32 %v2588, %v2612
    %v2626 = vmul.f32 %v2593, %v2612
    %v2627 = vmul.f32 %v2596, %v2612
    %v2628 = vmul.f32 %v2601, %v2612
    %v2629 = vmul.f32 %v2604, %v2612
    %v2630 = vld [vmem:[#allocation7] sm:$0x1]
    %v2632 = vlaneseq
    %v2633 = vshrl.u32 %v2632, 7
    %v2634 = vsub.s32 0, %v2633
    %v2635 = vrot.slane %v2630, %v2634
    %v2637 = vadd.f32 %v2614, %v2635
    %v2638 = vadd.f32 %v2615, %v2635
    %v2639 = vadd.f32 %v2616, %v2635
    %v2640 = vadd.f32 %v2617, %v2635
    %v2641 = vadd.f32 %v2618, %v2635
    %v2642 = vadd.f32 %v2619, %v2635
    %v2643 = vadd.f32 %v2620, %v2635
    %v2644 = vadd.f32 %v2621, %v2635
    %v2645 = vadd.f32 %v2622, %v2635
    %v2646 = vadd.f32 %v2623, %v2635
    %v2647 = vadd.f32 %v2624, %v2635
    %v2648 = vadd.f32 %v2625, %v2635
    %v2649 = vadd.f32 %v2626, %v2635
    %v2650 = vadd.f32 %v2627, %v2635
    %v2651 = vadd.f32 %v2628, %v2635
    %v2652 = vadd.f32 %v2629, %v2635
    %v2653 = vunpack.c.l.bf16 %v58
    %v2654 = vunpack.c.l.bf16 %v59
    %v2655 = vunpack.c.l.bf16 %v60
    %v2656 = vunpack.c.l.bf16 %v61
    %v2657 = vunpack.c.l.bf16 %v62
    %v2658 = vunpack.c.l.bf16 %v63
    %v2659 = vunpack.c.l.bf16 %v64
    %v2660 = vunpack.c.l.bf16 %v65
    %v2661 = vunpack.c.l.bf16 %v66
    %v2662 = vunpack.c.l.bf16 %v67
    %v2663 = vunpack.c.l.bf16 %v68
    %v2664 = vunpack.c.l.bf16 %v69
    %v2665 = vunpack.c.l.bf16 %v70
    %v2666 = vunpack.c.l.bf16 %v71
    %v2667 = vunpack.c.l.bf16 %v72
    %v2668 = vunpack.c.l.bf16 %v73
    %v2669 = vadd.f32 %v2637, %v2653
    %v2670 = vadd.f32 %v2638, %v2654
    %v2671 = vadd.f32 %v2639, %v2655
    %v2672 = vadd.f32 %v2640, %v2656
    %v2673 = vadd.f32 %v2641, %v2657
    %v2674 = vadd.f32 %v2642, %v2658
    %v2675 = vadd.f32 %v2643, %v2659
    %v2676 = vadd.f32 %v2644, %v2660
    %v2677 = vadd.f32 %v2645, %v2661
    %v2678 = vadd.f32 %v2646, %v2662
    %v2679 = vadd.f32 %v2647, %v2663
    %v2680 = vadd.f32 %v2648, %v2664
    %v2681 = vadd.f32 %v2649, %v2665
    %v2682 = vadd.f32 %v2650, %v2666
    %v2683 = vadd.f32 %v2651, %v2667
    %v2684 = vadd.f32 %v2652, %v2668
    %v2685 = vmax.f32 %v2669, 0.0
    %v2686 = vmax.f32 %v2670, 0.0
    %v2687 = vmax.f32 %v2671, 0.0
    %v2688 = vmax.f32 %v2672, 0.0
    %v2689 = vmax.f32 %v2673, 0.0
    %v2690 = vmax.f32 %v2674, 0.0
    %v2691 = vmax.f32 %v2675, 0.0
    %v2692 = vmax.f32 %v2676, 0.0
    %v2693 = vmax.f32 %v2677, 0.0
    %v2694 = vmax.f32 %v2678, 0.0
    %v2695 = vmax.f32 %v2679, 0.0
    %v2696 = vmax.f32 %v2680, 0.0
    %v2697 = vmax.f32 %v2681, 0.0
    %v2698 = vmax.f32 %v2682, 0.0
    %v2699 = vmax.f32 %v2683, 0.0
    %v2700 = vmax.f32 %v2684, 0.0
    %v2701 = vpack.c.bf16 %v2685, %v2685
    %v2702 = vpack.c.bf16 %v2686, %v2686
    %v2703 = vpack.c.bf16 %v2687, %v2687
    %v2704 = vpack.c.bf16 %v2688, %v2688
    %v2705 = vpack.c.bf16 %v2689, %v2689
    %v2706 = vpack.c.bf16 %v2690, %v2690
    %v2707 = vpack.c.bf16 %v2691, %v2691
    %v2708 = vpack.c.bf16 %v2692, %v2692
    %v2709 = vpack.c.bf16 %v2693, %v2693
    %v2710 = vpack.c.bf16 %v2694, %v2694
    %v2711 = vpack.c.bf16 %v2695, %v2695
    %v2712 = vpack.c.bf16 %v2696, %v2696
    %v2713 = vpack.c.bf16 %v2697, %v2697
    %v2714 = vpack.c.bf16 %v2698, %v2698
    %v2715 = vpack.c.bf16 %v2699, %v2699
    %v2716 = vpack.c.bf16 %v2700, %v2700
    %2717 = vst [vmem:[%s5] sm:$0xf] %v2701
    %2718 = vst [vmem:[%s5 + $0x4] sm:$0xf] %v2702
    %2719 = vst [vmem:[%s5 + $0x8] sm:$0xf] %v2703
    %2720 = vst [vmem:[%s5 + $0xc] sm:$0xf] %v2704
    %2721 = vst [vmem:[%s5 + $0x10] sm:$0xf] %v2705
    %2722 = vst [vmem:[%s5 + $0x14] sm:$0xf] %v2706
    %2723 = vst [vmem:[%s5 + $0x18] sm:$0xf] %v2707
    %2724 = vst [vmem:[%s5 + $0x1c] sm:$0xf] %v2708
    %2725 = vst [vmem:[%s5 + $0x20] sm:$0xf] %v2709
    %2726 = vst [vmem:[%s5 + $0x24] sm:$0xf] %v2710
    %2727 = vst [vmem:[%s5 + $0x28] sm:$0xf] %v2711
    %2728 = vst [vmem:[%s5 + $0x2c] sm:$0xf] %v2712
    %2729 = vst [vmem:[%s5 + $0x30] sm:$0xf] %v2713
    %2730 = vst [vmem:[%s5 + $0x34] sm:$0xf] %v2714
    %2731 = vst [vmem:[%s5 + $0x38] sm:$0xf] %v2715
    %2732 = vst [vmem:[%s5 + $0x3c] sm:$0xf] %v2716
    // Predicated region
    $region34: #{forward.9} parent=1 // pred_check
      _
    $region35: #{forward.9} parent=1 // pred_check_branch
      %2734 = sbr.rel (0) target = $region37
    $region36: #{forward.9} parent=1 // pred_region
      _
    $region37: #{forward.9} parent=1 // pred_fallthru
      _
    // Predicated region
    $region38: #{forward.9} parent=1 // pred_check
      _
    $region39: #{forward.9} parent=1 // pred_check_branch
      %2736 = sbr.rel (0) target = $region41
    $region40: #{forward.9} parent=1 // pred_region
      _
    $region41: #{forward.9} parent=1 // pred_fallthru
      _
    %2737 = vsyncpa [#allocation4], 1
    %2738 = vsyncpa [#allocation6], 1

// kernel: forward.13
$region0: #{forward.13}
  #allocation0 [shape = 'u32[]', space=smem, size = 0x4, offset = 0x4, fixed_abs, tag = 'smem constant byte address 0x4 - core index']
  #allocation1 [shape = 'u32[144,128]{1,0:T(1,128)}', space=vmem, size = 0x12000, scoped, tag = 'internal scratch']
  #allocation2 [shape = 'f32[2,128]{1,0:T(2,128)}', space=vmem, size = 0x400, scoped, tag = 'scratch operand']
  #allocation3 [shape = 'bf16[1,1]{1,0:T(2,128)S(1)}', space=vmem, size = 0x200, scoped, tag = 'scoped memory for forward.13']
  %s0 = inlined_call_operand.vmem [shape: bf16[2,128], index: 0, kind: input, shape index: {}]
  %s1 = inlined_call_operand.vmem [shape: bf16[2,1,128], index: 1, kind: input, shape index: {}]
  %s2 = inlined_call_operand.vmem [shape: bf16[2,128,128], index: 2, kind: input, shape index: {}]
  %s3 = inlined_call_operand.vmem [shape: bf16[2,128,128], index: 3, kind: input, shape index: {}]
  %s4 = inlined_call_operand.vmem [shape: bf16[2,1,128], index: 4, kind: input, shape index: {}]
  %s5 = inlined_call_operand.vmem [shape: bf16[2,128,256], index: 5, kind: input, shape index: {}]
  %s6 = inlined_call_operand.vmem [shape: bf16[2,128,256], index: 6, kind: input, shape index: {}]
  %s7 = inlined_call_operand.vmem [shape: bf16[2,256,128], index: 7, kind: input, shape index: {}]
  %s8 = inlined_call_operand.vmem [shape: bf16[1,128], index: 8, kind: input, shape index: {}]
  %s9 = inlined_call_operand.vmem [shape: bf16[128,16], index: 9, kind: input, shape index: {}]
  %s10 = inlined_call_operand.vmem [shape: bf16[1,16], index: 10, kind: input, shape index: {}]
  %s11 = inlined_call_operand.vmem [shape: bf16[128,1], index: 11, kind: input, shape index: {}]
  %s12 = inlined_call_operand.<no memory space> [shape: bf16[1,1], index: 12, kind: input, shape index: {}]
  %s13 = inlined_call_operand.hbm [shape: bf16[2,16], index: 13, kind: output, shape index: {0}]
  %s14 = inlined_call_operand.hbm [shape: bf16[2,1], index: 14, kind: output, shape index: {1}]
  %15 = xla_tuple %s13, %s14
  %s16 = sld [smem:[#allocation0]]
  $region101: #{forward.13} parent=0
    _
  %s18 = ssub.s32 1, %s16
  %s19 = scalar_select 0, %s18, %s16
  %v20 = vstv %s12
  %21 = vst [vmem:[#allocation3] sm:$0x1] %v20
  $region1: #{forward.13} parent=0
    #allocation4 [shape = 'u8[512]{0}', space=vmem, size = 0x400, scoped, tag = 'output window, operand 0, single buffered']
    #allocation5 [shape = 's32[2]{0}', space=sflag, size = 0x8, scoped, tag = 'scoped memory for forward.13']
    #allocation6 [shape = 'u8[512]{0}', space=vmem, size = 0x400, scoped, tag = 'output window, operand 1, single buffered']
    #allocation7 [shape = 's32[1]{0}', space=sflag, size = 0x4, scoped, tag = 'scoped memory for forward.13']
    %22 = vsyncpa [#allocation5], 0
    %23 = vsyncpa [#allocation7], 0
    loop: start=0, step=1, limit=4
    $region2: #{forward.13} parent=1 // loop_pre_header
      _
    $region3: #{forward.13} parent=1 // loop_header
      %s25 = sphi 0, %s29
      %p26 = scmp.ge.s32.totalorder %s25, 4
      %s33 = sphi 0, %s33
      %s35 = sphi 0, %s33
      %s36 = sphi 0, %s35
      %s50 = sphi 0, %s36
      %s56 = sphi 0, %s58
      %s59 = sphi 0, %s56
      %s60 = sphi 0, %s59
      %s76 = sphi 0, %s60
      %s82 = sphi 0, %s84
      %s85 = sphi 0, %s82
      %s86 = sphi 0, %s85
      %s102 = sphi 0, %s86
      %s108 = sphi 0, %s110
      %s111 = sphi 0, %s108
      %s112 = sphi 0, %s111
      %s128 = sphi 0, %s112
      %s134 = sphi 0, %s136
      %s137 = sphi 0, %s134
      %s138 = sphi 0, %s137
      %s154 = sphi 0, %s138
      %s160 = sphi 0, %s162
      %s163 = sphi 0, %s160
      %s164 = sphi 0, %s163
      %s180 = sphi 0, %s164
      %s186 = sphi 0, %s188
      %s189 = sphi 0, %s186
      %s190 = sphi 0, %s189
      %s206 = sphi 0, %s190
      %s212 = sphi 0, %s214
      %s215 = sphi 0, %s212
      %s216 = sphi 0, %s215
      %s232 = sphi 0, %s216
      %s236 = sphi 0, %s236
      %s238 = sphi 0, %s236
      %s239 = sphi 0, %s238
      %s253 = sphi 0, %s239
      %s257 = sphi 0, %s257
      %s259 = sphi 0, %s257
      %s260 = sphi 0, %s259
      %s274 = sphi 0, %s260
      %s278 = sphi 0, %s278
      %s280 = sphi 0, %s278
      %s281 = sphi 0, %s280
      %s295 = sphi 0, %s281
      %s299 = sphi 0, %s299
      %s301 = sphi 0, %s299
      %s302 = sphi 0, %s301
      %s316 = sphi 0, %s302
      %s320 = sphi 0, %s320
      %s322 = sphi 0, %s320
      %s323 = sphi 0, %s322
      %s337 = sphi 0, %s323
      %s341 = sphi 0, %s341
      %s343 = sphi 0, %s341
      %s344 = sphi 0, %s343
      %s358 = sphi 0, %s344
      %s362 = sphi 0, %s362
      %s364 = sphi 0, %s362
      %s365 = sphi 0, %s364
      %s379 = sphi 0, %s365
    $region4: #{forward.13} parent=1 // loop_header_branch
      %28 = sbr.rel (%p26) target = $region8
    $region5: #{forward.13} parent=1 // loop_body
      %s30 = ssub.s32 %s25, 1
      %s31 = ssub.s32 %s25, 2
      %s32 = sadd.s32 %s25, 1
      %s34 = sadd.s32 %s33, 1
      %p37 = scmp.eq.s32.totalorder %s25, 1
      %p38 = scmp.ne.s32.totalorder %s33, %s35
      %p39 = scmp.eq.s32.totalorder %s25, 0
      %p40 = por %p38, %p39
      %p41 = scmp.ne.s32.totalorder %s33, %s35
      %p42 = scmp.eq.s32.totalorder %s30, 1
      %p43 = por %p41, %p42
      %p44 = scmp.ne.s32.totalorder %s35, %s36
      %p45 = scmp.eq.s32.totalorder %s30, 0
      %p46 = por %p44, %p45
      %p47 = scmp.ne.s32.totalorder %s35, %s36
      %p48 = scmp.eq.s32.totalorder %s31, 1
      %p49 = por %p47, %p48
      %p51 = scmp.ne.s32.totalorder %s36, %s50
      %p52 = scmp.eq.s32.totalorder %s31, 0
      %p53 = por %p51, %p52
      %s54 = ssub.s32 %s25, %s32
      %p55 = scmp.eq.s32.totalorder %s54, 0
      %s57 = sadd.s32 %s56, 1
      %s58 = scalar_select %p55, %s56, %s57
      %p61 = pneg %p55
      %p62 = scmp.eq.s32.totalorder %s25, 1
      %p63 = por %p61, %p62
      %p64 = scmp.ne.s32.totalorder %s56, %s59
      %p65 = scmp.eq.s32.totalorder %s25, 0
      %p66 = por %p64, %p65
      %p67 = scmp.ne.s32.totalorder %s56, %s59
      %p68 = scmp.eq.s32.totalorder %s30, 1
      %p69 = por %p67, %p68
      %p70 = scmp.ne.s32.totalorder %s59, %s60
      %p71 = scmp.eq.s32.totalorder %s30, 0
      %p72 = por %p70, %p71
      %p73 = scmp.ne.s32.totalorder %s59, %s60
      %p74 = scmp.eq.s32.totalorder %s31, 1
      %p75 = por %p73, %p74
      %p77 = scmp.ne.s32.totalorder %s60, %s76
      %p78 = scmp.eq.s32.totalorder %s31, 0
      %p79 = por %p77, %p78
      %s80 = ssub.s32 %s25, %s32
      %p81 = scmp.eq.s32.totalorder %s80, 0
      %s83 = sadd.s32 %s82, 1
      %s84 = scalar_select %p81, %s82, %s83
      %p87 = pneg %p81
      %p88 = scmp.eq.s32.totalorder %s25, 1
      %p89 = por %p87, %p88
      %p90 = scmp.ne.s32.totalorder %s82, %s85
      %p91 = scmp.eq.s32.totalorder %s25, 0
      %p92 = por %p90, %p91
      %p93 = scmp.ne.s32.totalorder %s82, %s85
      %p94 = scmp.eq.s32.totalorder %s30, 1
      %p95 = por %p93, %p94
      %p96 = scmp.ne.s32.totalorder %s85, %s86
      %p97 = scmp.eq.s32.totalorder %s30, 0
      %p98 = por %p96, %p97
      %p99 = scmp.ne.s32.totalorder %s85, %s86
      %p100 = scmp.eq.s32.totalorder %s31, 1
      %p101 = por %p99, %p100
      %p103 = scmp.ne.s32.totalorder %s86, %s102
      %p104 = scmp.eq.s32.totalorder %s31, 0
      %p105 = por %p103, %p104
      %s106 = ssub.s32 %s25, %s32
      %p107 = scmp.eq.s32.totalorder %s106, 0
      %s109 = sadd.s32 %s108, 1
      %s110 = scalar_select %p107, %s108, %s109
      %p113 = pneg %p107
      %p114 = scmp.eq.s32.totalorder %s25, 1
      %p115 = por %p113, %p114
      %p116 = scmp.ne.s32.totalorder %s108, %s111
      %p117 = scmp.eq.s32.totalorder %s25, 0
      %p118 = por %p116, %p117
      %p119 = scmp.ne.s32.totalorder %s108, %s111
      %p120 = scmp.eq.s32.totalorder %s30, 1
      %p121 = por %p119, %p120
      %p122 = scmp.ne.s32.totalorder %s111, %s112
      %p123 = scmp.eq.s32.totalorder %s30, 0
      %p124 = por %p122, %p123
      %p125 = scmp.ne.s32.totalorder %s111, %s112
      %p126 = scmp.eq.s32.totalorder %s31, 1
      %p127 = por %p125, %p126
      %p129 = scmp.ne.s32.totalorder %s112, %s128
      %p130 = scmp.eq.s32.totalorder %s31, 0
      %p131 = por %p129, %p130
      %s132 = ssub.s32 %s25, %s32
      %p133 = scmp.eq.s32.totalorder %s132, 0
      %s135 = sadd.s32 %s134, 1
      %s136 = scalar_select %p133, %s134, %s135
      %p139 = pneg %p133
      %p140 = scmp.eq.s32.totalorder %s25, 1
      %p141 = por %p139, %p140
      %p142 = scmp.ne.s32.totalorder %s134, %s137
      %p143 = scmp.eq.s32.totalorder %s25, 0
      %p144 = por %p142, %p143
      %p145 = scmp.ne.s32.totalorder %s134, %s137
      %p146 = scmp.eq.s32.totalorder %s30, 1
      %p147 = por %p145, %p146
      %p148 = scmp.ne.s32.totalorder %s137, %s138
      %p149 = scmp.eq.s32.totalorder %s30, 0
      %p150 = por %p148, %p149
      %p151 = scmp.ne.s32.totalorder %s137, %s138
      %p152 = scmp.eq.s32.totalorder %s31, 1
      %p153 = por %p151, %p152
      %p155 = scmp.ne.s32.totalorder %s138, %s154
      %p156 = scmp.eq.s32.totalorder %s31, 0
      %p157 = por %p155, %p156
      %s158 = ssub.s32 %s25, %s32
      %p159 = scmp.eq.s32.totalorder %s158, 0
      %s161 = sadd.s32 %s160, 1
      %s162 = scalar_select %p159, %s160, %s161
      %p165 = pneg %p159
      %p166 = scmp.eq.s32.totalorder %s25, 1
      %p167 = por %p165, %p166
      %p168 = scmp.ne.s32.totalorder %s160, %s163
      %p169 = scmp.eq.s32.totalorder %s25, 0
      %p170 = por %p168, %p169
      %p171 = scmp.ne.s32.totalorder %s160, %s163
      %p172 = scmp.eq.s32.totalorder %s30, 1
      %p173 = por %p171, %p172
      %p174 = scmp.ne.s32.totalorder %s163, %s164
      %p175 = scmp.eq.s32.totalorder %s30, 0
      %p176 = por %p174, %p175
      %p177 = scmp.ne.s32.totalorder %s163, %s164
      %p178 = scmp.eq.s32.totalorder %s31, 1
      %p179 = por %p177, %p178
      %p181 = scmp.ne.s32.totalorder %s164, %s180
      %p182 = scmp.eq.s32.totalorder %s31, 0
      %p183 = por %p181, %p182
      %s184 = ssub.s32 %s25, %s32
      %p185 = scmp.eq.s32.totalorder %s184, 0
      %s187 = sadd.s32 %s186, 1
      %s188 = scalar_select %p185, %s186, %s187
      %p191 = pneg %p185
      %p192 = scmp.eq.s32.totalorder %s25, 1
      %p193 = por %p191, %p192
      %p194 = scmp.ne.s32.totalorder %s186, %s189
      %p195 = scmp.eq.s32.totalorder %s25, 0
      %p196 = por %p194, %p195
      %p197 = scmp.ne.s32.totalorder %s186, %s189
      %p198 = scmp.eq.s32.totalorder %s30, 1
      %p199 = por %p197, %p198
      %p200 = scmp.ne.s32.totalorder %s189, %s190
      %p201 = scmp.eq.s32.totalorder %s30, 0
      %p202 = por %p200, %p201
      %p203 = scmp.ne.s32.totalorder %s189, %s190
      %p204 = scmp.eq.s32.totalorder %s31, 1
      %p205 = por %p203, %p204
      %p207 = scmp.ne.s32.totalorder %s190, %s206
      %p208 = scmp.eq.s32.totalorder %s31, 0
      %p209 = por %p207, %p208
      %s210 = ssub.s32 %s25, %s32
      %p211 = scmp.eq.s32.totalorder %s210, 0
      %s213 = sadd.s32 %s212, 1
      %s214 = scalar_select %p211, %s212, %s213
      %p217 = pneg %p211
      %p218 = scmp.eq.s32.totalorder %s25, 1
      %p219 = por %p217, %p218
      %p220 = scmp.ne.s32.totalorder %s212, %s215
      %p221 = scmp.eq.s32.totalorder %s25, 0
      %p222 = por %p220, %p221
      %p223 = scmp.ne.s32.totalorder %s212, %s215
      %p224 = scmp.eq.s32.totalorder %s30, 1
      %p225 = por %p223, %p224
      %p226 = scmp.ne.s32.totalorder %s215, %s216
      %p227 = scmp.eq.s32.totalorder %s30, 0
      %p228 = por %p226, %p227
      %p229 = scmp.ne.s32.totalorder %s215, %s216
      %p230 = scmp.eq.s32.totalorder %s31, 1
      %p231 = por %p229, %p230
      %p233 = scmp.ne.s32.totalorder %s216, %s232
      %p234 = scmp.eq.s32.totalorder %s31, 0
      %p235 = por %p233, %p234
      %s237 = sadd.s32 %s236, 1
      %p240 = scmp.eq.s32.totalorder %s25, 1
      %p241 = scmp.ne.s32.totalorder %s236, %s238
      %p242 = scmp.eq.s32.totalorder %s25, 0
      %p243 = por %p241, %p242
      %p244 = scmp.ne.s32.totalorder %s236, %s238
      %p245 = scmp.eq.s32.totalorder %s30, 1
      %p246 = por %p244, %p245
      %p247 = scmp.ne.s32.totalorder %s238, %s239
      %p248 = scmp.eq.s32.totalorder %s30, 0
      %p249 = por %p247, %p248
      %p250 = scmp.ne.s32.totalorder %s238, %s239
      %p251 = scmp.eq.s32.totalorder %s31, 1
      %p252 = por %p250, %p251
      %p254 = scmp.ne.s32.totalorder %s239, %s253
      %p255 = scmp.eq.s32.totalorder %s31, 0
      %p256 = por %p254, %p255
      %s258 = sadd.s32 %s257, 1
      %p261 = scmp.eq.s32.totalorder %s25, 1
      %p262 = scmp.ne.s32.totalorder %s257, %s259
      %p263 = scmp.eq.s32.totalorder %s25, 0
      %p264 = por %p262, %p263
      %p265 = scmp.ne.s32.totalorder %s257, %s259
      %p266 = scmp.eq.s32.totalorder %s30, 1
      %p267 = por %p265, %p266
      %p268 = scmp.ne.s32.totalorder %s259, %s260
      %p269 = scmp.eq.s32.totalorder %s30, 0
      %p270 = por %p268, %p269
      %p271 = scmp.ne.s32.totalorder %s259, %s260
      %p272 = scmp.eq.s32.totalorder %s31, 1
      %p273 = por %p271, %p272
      %p275 = scmp.ne.s32.totalorder %s260, %s274
      %p276 = scmp.eq.s32.totalorder %s31, 0
      %p277 = por %p275, %p276
      %s279 = sadd.s32 %s278, 1
      %p282 = scmp.eq.s32.totalorder %s25, 1
      %p283 = scmp.ne.s32.totalorder %s278, %s280
      %p284 = scmp.eq.s32.totalorder %s25, 0
      %p285 = por %p283, %p284
      %p286 = scmp.ne.s32.totalorder %s278, %s280
      %p287 = scmp.eq.s32.totalorder %s30, 1
      %p288 = por %p286, %p287
      %p289 = scmp.ne.s32.totalorder %s280, %s281
      %p290 = scmp.eq.s32.totalorder %s30, 0
      %p291 = por %p289, %p290
      %p292 = scmp.ne.s32.totalorder %s280, %s281
      %p293 = scmp.eq.s32.totalorder %s31, 1
      %p294 = por %p292, %p293
      %p296 = scmp.ne.s32.totalorder %s281, %s295
      %p297 = scmp.eq.s32.totalorder %s31, 0
      %p298 = por %p296, %p297
      %s300 = sadd.s32 %s299, 1
      %p303 = scmp.eq.s32.totalorder %s25, 1
      %p304 = scmp.ne.s32.totalorder %s299, %s301
      %p305 = scmp.eq.s32.totalorder %s25, 0
      %p306 = por %p304, %p305
      %p307 = scmp.ne.s32.totalorder %s299, %s301
      %p308 = scmp.eq.s32.totalorder %s30, 1
      %p309 = por %p307, %p308
      %p310 = scmp.ne.s32.totalorder %s301, %s302
      %p311 = scmp.eq.s32.totalorder %s30, 0
      %p312 = por %p310, %p311
      %p313 = scmp.ne.s32.totalorder %s301, %s302
      %p314 = scmp.eq.s32.totalorder %s31, 1
      %p315 = por %p313, %p314
      %p317 = scmp.ne.s32.totalorder %s302, %s316
      %p318 = scmp.eq.s32.totalorder %s31, 0
      %p319 = por %p317, %p318
      %s321 = sadd.s32 %s320, 1
      %p324 = scmp.eq.s32.totalorder %s25, 1
      %p325 = scmp.ne.s32.totalorder %s320, %s322
      %p326 = scmp.eq.s32.totalorder %s25, 0
      %p327 = por %p325, %p326
      %p328 = scmp.ne.s32.totalorder %s320, %s322
      %p329 = scmp.eq.s32.totalorder %s30, 1
      %p330 = por %p328, %p329
      %p331 = scmp.ne.s32.totalorder %s322, %s323
      %p332 = scmp.eq.s32.totalorder %s30, 0
      %p333 = por %p331, %p332
      %p334 = scmp.ne.s32.totalorder %s322, %s323
      %p335 = scmp.eq.s32.totalorder %s31, 1
      %p336 = por %p334, %p335
      %p338 = scmp.ne.s32.totalorder %s323, %s337
      %p339 = scmp.eq.s32.totalorder %s31, 0
      %p340 = por %p338, %p339
      %s342 = sadd.s32 %s341, 1
      %p345 = scmp.eq.s32.totalorder %s25, 1
      %p346 = scmp.ne.s32.totalorder %s341, %s343
      %p347 = scmp.eq.s32.totalorder %s25, 0
      %p348 = por %p346, %p347
      %p349 = scmp.ne.s32.totalorder %s341, %s343
      %p350 = scmp.eq.s32.totalorder %s30, 1
      %p351 = por %p349, %p350
      %p352 = scmp.ne.s32.totalorder %s343, %s344
      %p353 = scmp.eq.s32.totalorder %s30, 0
      %p354 = por %p352, %p353
      %p355 = scmp.ne.s32.totalorder %s343, %s344
      %p356 = scmp.eq.s32.totalorder %s31, 1
      %p357 = por %p355, %p356
      %p359 = scmp.ne.s32.totalorder %s344, %s358
      %p360 = scmp.eq.s32.totalorder %s31, 0
      %p361 = por %p359, %p360
      %s363 = sadd.s32 %s362, 1
      %p366 = scmp.eq.s32.totalorder %s25, 1
      %p367 = scmp.ne.s32.totalorder %s362, %s364
      %p368 = scmp.eq.s32.totalorder %s25, 0
      %p369 = por %p367, %p368
      %p370 = scmp.ne.s32.totalorder %s362, %s364
      %p371 = scmp.eq.s32.totalorder %s30, 1
      %p372 = por %p370, %p371
      %p373 = scmp.ne.s32.totalorder %s364, %s365
      %p374 = scmp.eq.s32.totalorder %s30, 0
      %p375 = por %p373, %p374
      %p376 = scmp.ne.s32.totalorder %s364, %s365
      %p377 = scmp.eq.s32.totalorder %s31, 1
      %p378 = por %p376, %p377
      %p380 = scmp.ne.s32.totalorder %s365, %s379
      %p381 = scmp.eq.s32.totalorder %s31, 0
      %p382 = por %p380, %p381
      %p383 = scmp.le.s32.totalorder 1, %s25
      %p384 = scmp.lt.s32.totalorder %s25, 3
      %p385 = pnand %p383, %p384
      %p386 = pneg %p385
      // Predicated region
      $region9: #{forward.13} parent=5 // pred_check
        _
      $region10: #{forward.13} parent=5 // pred_check_branch
        %388 = sbr.rel (%p385) target = $region12
      $region11: #{forward.13} parent=5 // pred_region
        %s389 = ssub.s32 %s25, 1
        // Predicated region
        $region13: #{forward.13} parent=11 // pred_check
          %p390 = pneg %p46
        $region14: #{forward.13} parent=11 // pred_check_branch
          %392 = sbr.rel (%p390) target = $region16
        $region15: #{forward.13} parent=11 // pred_region
          _
        $region16: #{forward.13} parent=11 // pred_fallthru
          _
        // Predicated region
        $region17: #{forward.13} parent=11 // pred_check
          %p393 = pneg %p249
        $region18: #{forward.13} parent=11 // pred_check_branch
          %395 = sbr.rel (%p393) target = $region20
        $region19: #{forward.13} parent=11 // pred_region
          _
        $region20: #{forward.13} parent=11 // pred_fallthru
          _
        // Predicated region
        $region21: #{forward.13} parent=11 // pred_check
          %p396 = pneg %p270
        $region22: #{forward.13} parent=11 // pred_check_branch
          %398 = sbr.rel (%p396) target = $region24
        $region23: #{forward.13} parent=11 // pred_region
          _
        $region24: #{forward.13} parent=11 // pred_fallthru
          _
        // Predicated region
        $region25: #{forward.13} parent=11 // pred_check
          %p399 = pneg %p291
        $region26: #{forward.13} parent=11 // pred_check_branch
          %401 = sbr.rel (%p399) target = $region28
        $region27: #{forward.13} parent=11 // pred_region
          _
        $region28: #{forward.13} parent=11 // pred_fallthru
          _
        // Predicated region
        $region29: #{forward.13} parent=11 // pred_check
          %p402 = pneg %p312
        $region30: #{forward.13} parent=11 // pred_check_branch
          %404 = sbr.rel (%p402) target = $region32
        $region31: #{forward.13} parent=11 // pred_region
          _
        $region32: #{forward.13} parent=11 // pred_fallthru
          _
        // Predicated region
        $region33: #{forward.13} parent=11 // pred_check
          %p405 = pneg %p333
        $region34: #{forward.13} parent=11 // pred_check_branch
          %407 = sbr.rel (%p405) target = $region36
        $region35: #{forward.13} parent=11 // pred_region
          _
        $region36: #{forward.13} parent=11 // pred_fallthru
          _
      $region12: #{forward.13} parent=5 // pred_fallthru
        _
      %p408 = scmp.lt.s32.totalorder %s25, 2
      // Predicated region
      $region37: #{forward.13} parent=5 // pred_check
        %p409 = pneg %p408
      $region38: #{forward.13} parent=5 // pred_check_branch
        %411 = sbr.rel (%p409) target = $region40
      $region39: #{forward.13} parent=5 // pred_region
        // Predicated region
        $region41: #{forward.13} parent=39 // pred_check
          %p412 = pneg %p66
        $region42: #{forward.13} parent=39 // pred_check_branch
          %414 = sbr.rel (%p412) target = $region44
        $region43: #{forward.13} parent=39 // pred_region
          %p415 = scmp.lt.s32.totalorder %s25, 1
          %s416 = scalar_select %p415, %s25, 1
          %s417 = scalar_lea.vmem %s1, %s416
        $region44: #{forward.13} parent=39 // pred_fallthru
          _
        // Predicated region
        $region45: #{forward.13} parent=39 // pred_check
          %p418 = pneg %p92
        $region46: #{forward.13} parent=39 // pred_check_branch
          %420 = sbr.rel (%p418) target = $region48
        $region47: #{forward.13} parent=39 // pred_region
          %p421 = scmp.lt.s32.totalorder %s25, 1
          %s422 = scalar_select %p421, %s25, 1
          %s423 = smul.addr %s422, 16
          %s424 = smul.addr %s423, 4
          %s425 = scalar_lea.vmem %s2, %s424
        $region48: #{forward.13} parent=39 // pred_fallthru
          _
        // Predicated region
        $region49: #{forward.13} parent=39 // pred_check
          %p426 = pneg %p118
        $region50: #{forward.13} parent=39 // pred_check_branch
          %428 = sbr.rel (%p426) target = $region52
        $region51: #{forward.13} parent=39 // pred_region
          %p429 = scmp.lt.s32.totalorder %s25, 1
          %s430 = scalar_select %p429, %s25, 1
          %s431 = smul.addr %s430, 16
          %s432 = smul.addr %s431, 4
          %s433 = scalar_lea.vmem %s3, %s432
        $region52: #{forward.13} parent=39 // pred_fallthru
          _
        // Predicated region
        $region53: #{forward.13} parent=39 // pred_check
          %p434 = pneg %p144
        $region54: #{forward.13} parent=39 // pred_check_branch
          %436 = sbr.rel (%p434) target = $region56
        $region55: #{forward.13} parent=39 // pred_region
          %p437 = scmp.lt.s32.totalorder %s25, 1
          %s438 = scalar_select %p437, %s25, 1
          %s439 = scalar_lea.vmem %s4, %s438
        $region56: #{forward.13} parent=39 // pred_fallthru
          _
        // Predicated region
        $region57: #{forward.13} parent=39 // pred_check
          %p440 = pneg %p170
        $region58: #{forward.13} parent=39 // pred_check_branch
          %442 = sbr.rel (%p440) target = $region60
        $region59: #{forward.13} parent=39 // pred_region
          %p443 = scmp.lt.s32.totalorder %s25, 1
          %s444 = scalar_select %p443, %s25, 1
          %s445 = smul.addr %s444, 32
          %s446 = smul.addr %s445, 4
          %s447 = scalar_lea.vmem %s5, %s446
        $region60: #{forward.13} parent=39 // pred_fallthru
          _
        // Predicated region
        $region61: #{forward.13} parent=39 // pred_check
          %p448 = pneg %p196
        $region62: #{forward.13} parent=39 // pred_check_branch
          %450 = sbr.rel (%p448) target = $region64
        $region63: #{forward.13} parent=39 // pred_region
          %p451 = scmp.lt.s32.totalorder %s25, 1
          %s452 = scalar_select %p451, %s25, 1
          %s453 = smul.addr %s452, 32
          %s454 = smul.addr %s453, 4
          %s455 = scalar_lea.vmem %s6, %s454
        $region64: #{forward.13} parent=39 // pred_fallthru
          _
        // Predicated region
        $region65: #{forward.13} parent=39 // pred_check
          %p456 = pneg %p222
        $region66: #{forward.13} parent=39 // pred_check_branch
          %458 = sbr.rel (%p456) target = $region68
        $region67: #{forward.13} parent=39 // pred_region
          %p459 = scmp.lt.s32.totalorder %s25, 1
          %s460 = scalar_select %p459, %s25, 1
          %s461 = smul.addr %s460, 32
          %s462 = smul.addr %s461, 4
          %s463 = scalar_lea.vmem %s7, %s462
        $region68: #{forward.13} parent=39 // pred_fallthru
          _
      $region40: #{forward.13} parent=5 // pred_fallthru
        _
      %p464 = scmp.le.s32.totalorder 1, %s25
      %p465 = scmp.lt.s32.totalorder %s25, 3
      %p466 = pnand %p464, %p465
      %p467 = pneg %p466
      // Predicated region
      $region69: #{forward.13} parent=5 // pred_check
        _
      $region70: #{forward.13} parent=5 // pred_check_branch
        %469 = sbr.rel (%p466) target = $region72
      $region71: #{forward.13} parent=5 // pred_region
        %s470 = ssub.s32 %s25, 1
        %p471 = pneg %p46
        %p472 = pneg %p43
        %p473 = scmp.lt.s32.totalorder %s30, 1
        %s474 = scalar_select %p473, %s30, 1
        %s475 = scalar_lea.vmem %s1, %s474
        %p476 = pneg %p72
        %p477 = pneg %p69
        %p478 = scmp.lt.s32.totalorder %s30, 1
        %s479 = scalar_select %p478, %s30, 1
        %s480 = smul.addr %s479, 16
        %s481 = smul.addr %s480, 4
        %s482 = scalar_lea.vmem %s2, %s481
        %p483 = pneg %p98
        %p484 = pneg %p95
        %p485 = scmp.lt.s32.totalorder %s30, 1
        %s486 = scalar_select %p485, %s30, 1
        %s487 = smul.addr %s486, 16
        %s488 = smul.addr %s487, 4
        %s489 = scalar_lea.vmem %s3, %s488
        %p490 = pneg %p124
        %p491 = pneg %p121
        %p492 = scmp.lt.s32.totalorder %s30, 1
        %s493 = scalar_select %p492, %s30, 1
        %s494 = scalar_lea.vmem %s4, %s493
        %p495 = pneg %p150
        %p496 = pneg %p147
        %p497 = scmp.lt.s32.totalorder %s30, 1
        %s498 = scalar_select %p497, %s30, 1
        %s499 = smul.addr %s498, 32
        %s500 = smul.addr %s499, 4
        %s501 = scalar_lea.vmem %s5, %s500
        %p502 = pneg %p176
        %p503 = pneg %p173
        %p504 = scmp.lt.s32.totalorder %s30, 1
        %s505 = scalar_select %p504, %s30, 1
        %s506 = smul.addr %s505, 32
        %s507 = smul.addr %s506, 4
        %s508 = scalar_lea.vmem %s6, %s507
        %p509 = pneg %p202
        %p510 = pneg %p199
        %p511 = scmp.lt.s32.totalorder %s30, 1
        %s512 = scalar_select %p511, %s30, 1
        %s513 = smul.addr %s512, 32
        %s514 = smul.addr %s513, 4
        %s515 = scalar_lea.vmem %s7, %s514
        %p516 = pneg %p228
        %p517 = pneg %p225
        %p518 = pneg %p249
        %p519 = pneg %p246
        %p520 = pneg %p270
        %p521 = pneg %p267
        %p522 = pneg %p291
        %p523 = pneg %p288
        %p524 = pneg %p312
        %p525 = pneg %p309
        %p526 = pneg %p333
        %p527 = pneg %p330
        %p528 = pneg %p354
        %p529 = pneg %p351
        %p530 = pneg %p375
        %p531 = pneg %p372
        %p532 = scmp.lt.s32.totalorder %s30, 1
        %s533 = scalar_select %p532, %s30, 1
        %s534 = scalar_lea.vmem %s1, %s533
        %p535 = scmp.lt.s32.totalorder %s30, 1
        %s536 = scalar_select %p535, %s30, 1
        %s537 = smul.addr %s536, 16
        %s538 = smul.addr %s537, 4
        %s539 = scalar_lea.vmem %s2, %s538
        %p540 = scmp.lt.s32.totalorder %s30, 1
        %s541 = scalar_select %p540, %s30, 1
        %s542 = smul.addr %s541, 16
        %s543 = smul.addr %s542, 4
        %s544 = scalar_lea.vmem %s3, %s543
        %p545 = scmp.lt.s32.totalorder %s30, 1
        %s546 = scalar_select %p545, %s30, 1
        %s547 = scalar_lea.vmem %s4, %s546
        %p548 = scmp.lt.s32.totalorder %s30, 1
        %s549 = scalar_select %p548, %s30, 1
        %s550 = smul.addr %s549, 32
        %s551 = smul.addr %s550, 4
        %s552 = scalar_lea.vmem %s5, %s551
        %p553 = scmp.lt.s32.totalorder %s30, 1
        %s554 = scalar_select %p553, %s30, 1
        %s555 = smul.addr %s554, 32
        %s556 = smul.addr %s555, 4
        %s557 = scalar_lea.vmem %s6, %s556
        %p558 = scmp.lt.s32.totalorder %s30, 1
        %s559 = scalar_select %p558, %s30, 1
        %s560 = smul.addr %s559, 32
        %s561 = smul.addr %s560, 4
        %s562 = scalar_lea.vmem %s7, %s561
        %p564 = scmp.eq.s32.totalorder %s30, 0
        // Predicated region
        $region73: #{forward.13} parent=71 // pred_check
          %p565 = pneg %p564
        $region74: #{forward.13} parent=71 // pred_check_branch
          %567 = sbr.rel (%p565) target = $region76
        $region75: #{forward.13} parent=71 // pred_region
          %v568 = vld [vmem:[%s0] sm:$0x1]
          %v569 = vunpack.c.l.bf16 %v568
          %570 = vst [vmem:[#allocation2] sm:$0x3] %v569
        $region76: #{forward.13} parent=71 // pred_fallthru
          _
        %v571 = vld [vmem:[#allocation2] sm:$0x3]
        %v572 = vld [vmem:[%s534] sm:$0x1]
        %v573 = vunpack.c.l.bf16 %v572
        %v574 = vmul.f32 %v571, %v571
        %vm575 = vcmask 1041408
        %v576 = vsel %vm575, %v574, 0.0
        %577 = vadd.xlane.f32.xlu0 %v576
        %v578 = vpop.xlane.xlu0 %577
        %v579 = vrcp.pop 128.0
        %v580 = vmul.f32 %v578, %v579
        %v581 = vadd.f32 %v580, 1e-05
        %v582 = vrsqrt.pop %v581
        %v583 = vmul.f32 %v571, %v582
        %v584 = vlaneseq
        %v585 = vshrl.u32 %v584, 7
        %v586 = vsub.s32 0, %v585
        %v587 = vrot.slane %v573, %v586
        %v588 = vmul.f32 %v583, %v587
        %v589 = vpack.c.bf16 %v588, %v588
        %v590 = vld [vmem:[%s539] sm:$0xf]
        %v591 = vld [vmem:[%s539 + $0x4] sm:$0xf]
        %v592 = vld [vmem:[%s539 + $0x8] sm:$0xf]
        %v593 = vld [vmem:[%s539 + $0xc] sm:$0xf]
        %v594 = vld [vmem:[%s539 + $0x10] sm:$0xf]
        %v595 = vld [vmem:[%s539 + $0x14] sm:$0xf]
        %v596 = vld [vmem:[%s539 + $0x18] sm:$0xf]
        %v597 = vld [vmem:[%s539 + $0x1c] sm:$0xf]
        %v598 = vld [vmem:[%s539 + $0x20] sm:$0xf]
        %v599 = vld [vmem:[%s539 + $0x24] sm:$0xf]
        %v600 = vld [vmem:[%s539 + $0x28] sm:$0xf]
        %v601 = vld [vmem:[%s539 + $0x2c] sm:$0xf]
        %v602 = vld [vmem:[%s539 + $0x30] sm:$0xf]
        %v603 = vld [vmem:[%s539 + $0x34] sm:$0xf]
        %v604 = vld [vmem:[%s539 + $0x38] sm:$0xf]
        %v605 = vld [vmem:[%s539 + $0x3c] sm:$0xf]
        %v622 = vunpack.c.l.b16 %v590
        %v623 = vunpack.c.l.b16 %v591
        %v624 = vunpack.c.l.b16 %v592
        %v625 = vunpack.c.l.b16 %v593
        %v626 = vunpack.c.l.b16 %v594
        %v627 = vunpack.c.l.b16 %v595
        %v628 = vunpack.c.l.b16 %v596
        %v629 = vunpack.c.l.b16 %v597
        %v630 = vunpack.c.l.b16 %v598
        %v631 = vunpack.c.l.b16 %v599
        %v632 = vunpack.c.l.b16 %v600
        %v633 = vunpack.c.l.b16 %v601
        %v634 = vunpack.c.l.b16 %v602
        %v635 = vunpack.c.l.b16 %v603
        %v636 = vunpack.c.l.b16 %v604
        %v637 = vunpack.c.l.b16 %v605
        %v638 = vpack.c.b16 %v623, %v622
        %v639 = vpack.c.b16 %v625, %v624
        %v640 = vpack.c.b16 %v627, %v626
        %v641 = vpack.c.b16 %v629, %v628
        %v642 = vpack.c.b16 %v631, %v630
        %v643 = vpack.c.b16 %v633, %v632
        %v644 = vpack.c.b16 %v635, %v634
        %v645 = vpack.c.b16 %v637, %v636
        %654 = vmatprep.subr.bf16.mxu0 0
        %655 = vmatpush1.bf16.msra.mxu0 %v638
        %656 = vmatprep.subr.bf16.mxu0 0
        %657 = vmatpush1.bf16.msra.mxu0 %v639
        %658 = vmatprep.subr.bf16.mxu0 0
        %659 = vmatpush1.bf16.msra.mxu0 %v640
        %660 = vmatprep.subr.bf16.mxu0 0
        %661 = vmatpush1.bf16.msra.mxu0 %v641
        %662 = vmatprep.subr.bf16.mxu0 0
        %663 = vmatpush1.bf16.msra.mxu0 %v642
        %664 = vmatprep.subr.bf16.mxu0 0
        %665 = vmatpush1.bf16.msra.mxu0 %v643
        %666 = vmatprep.subr.bf16.mxu0 0
        %667 = vmatpush1.bf16.msra.mxu0 %v644
        %668 = vmatprep.subr.bf16.mxu0 0
        %669 = vmatpush1.bf16.msra.mxu0 %v645
        %670 = vmatprep.subr.bf16.mxu0 0
        %671 = vmatpush1.bf16.msra.mxu0 0
        %672 = vmatprep.subr.bf16.mxu0 0
        %673 = vmatpush1.bf16.msra.mxu0 0
        %674 = vmatprep.subr.bf16.mxu0 0
        %675 = vmatpush1.bf16.msra.mxu0 0
        %676 = vmatprep.subr.bf16.mxu0 0
        %677 = vmatpush1.bf16.msra.mxu0 0
        %678 = vmatprep.subr.bf16.mxu0 0
        %679 = vmatpush1.bf16.msra.mxu0 0
        %680 = vmatprep.subr.bf16.mxu0 0
        %681 = vmatpush1.bf16.msra.mxu0 0
        %682 = vmatprep.subr.bf16.mxu0 0
        %683 = vmatpush1.bf16.msra.mxu0 0
        %684 = vmatprep.subr.bf16.mxu0 0
        %685 = vmatpush1.bf16.msra.mxu0 0
        %686 = vmatprep.mubr.bf16.mxu0 0
        %687 = vmatmul.mubr.bf16.gmra.mrb[0].mxu0 %v589
        %v688 = vpop.f32.mrb[0].mxu0
        %v689 = vadd.f32 0.0, %v688
        %v690 = vpop.f32.mrb[0].mxu0
        %v691 = vpop.f32.mrb[0].mxu0
        %v692 = vpop.f32.mrb[0].mxu0
        %693 = vdwg.mxu0
        %v694 = vpack.c.bf16 %v689, %v689
        %v695 = vld [vmem:[%s544] sm:$0xf]
        %v696 = vld [vmem:[%s544 + $0x4] sm:$0xf]
        %v697 = vld [vmem:[%s544 + $0x8] sm:$0xf]
        %v698 = vld [vmem:[%s544 + $0xc] sm:$0xf]
        %v699 = vld [vmem:[%s544 + $0x10] sm:$0xf]
        %v700 = vld [vmem:[%s544 + $0x14] sm:$0xf]
        %v701 = vld [vmem:[%s544 + $0x18] sm:$0xf]
        %v702 = vld [vmem:[%s544 + $0x1c] sm:$0xf]
        %v703 = vld [vmem:[%s544 + $0x20] sm:$0xf]
        %v704 = vld [vmem:[%s544 + $0x24] sm:$0xf]
        %v705 = vld [vmem:[%s544 + $0x28] sm:$0xf]
        %v706 = vld [vmem:[%s544 + $0x2c] sm:$0xf]
        %v707 = vld [vmem:[%s544 + $0x30] sm:$0xf]
        %v708 = vld [vmem:[%s544 + $0x34] sm:$0xf]
        %v709 = vld [vmem:[%s544 + $0x38] sm:$0xf]
        %v710 = vld [vmem:[%s544 + $0x3c] sm:$0xf]
        %v727 = vunpack.c.l.b16 %v695
        %v728 = vunpack.c.l.b16 %v696
        %v729 = vunpack.c.l.b16 %v697
        %v730 = vunpack.c.l.b16 %v698
        %v731 = vunpack.c.l.b16 %v699
        %v732 = vunpack.c.l.b16 %v700
        %v733 = vunpack.c.l.b16 %v701
        %v734 = vunpack.c.l.b16 %v702
        %v735 = vunpack.c.l.b16 %v703
        %v736 = vunpack.c.l.b16 %v704
        %v737 = vunpack.c.l.b16 %v705
        %v738 = vunpack.c.l.b16 %v706
        %v739 = vunpack.c.l.b16 %v707
        %v740 = vunpack.c.l.b16 %v708
        %v741 = vunpack.c.l.b16 %v709
        %v742 = vunpack.c.l.b16 %v710
        %v743 = vpack.c.b16 %v728, %v727
        %v744 = vpack.c.b16 %v730, %v729
        %v745 = vpack.c.b16 %v732, %v731
        %v746 = vpack.c.b16 %v734, %v733
        %v747 = vpack.c.b16 %v736, %v735
        %v748 = vpack.c.b16 %v738, %v737
        %v749 = vpack.c.b16 %v740, %v739
        %v750 = vpack.c.b16 %v742, %v741
        %759 = vmatprep.subr.bf16.mxu0 0
        %760 = vmatpush1.bf16.msra.mxu0 %v743
        %761 = vmatprep.subr.bf16.mxu0 0
        %762 = vmatpush1.bf16.msra.mxu0 %v744
        %763 = vmatprep.subr.bf16.mxu0 0
        %764 = vmatpush1.bf16.msra.mxu0 %v745
        %765 = vmatprep.subr.bf16.mxu0 0
        %766 = vmatpush1.bf16.msra.mxu0 %v746
        %767 = vmatprep.subr.bf16.mxu0 0
        %768 = vmatpush1.bf16.msra.mxu0 %v747
        %769 = vmatprep.subr.bf16.mxu0 0
        %770 = vmatpush1.bf16.msra.mxu0 %v748
        %771 = vmatprep.subr.bf16.mxu0 0
        %772 = vmatpush1.bf16.msra.mxu0 %v749
        %773 = vmatprep.subr.bf16.mxu0 0
        %774 = vmatpush1.bf16.msra.mxu0 %v750
        %775 = vmatprep.subr.bf16.mxu0 0
        %776 = vmatpush1.bf16.msra.mxu0 0
        %777 = vmatprep.subr.bf16.mxu0 0
        %778 = vmatpush1.bf16.msra.mxu0 0
        %779 = vmatprep.subr.bf16.mxu0 0
        %780 = vmatpush1.bf16.msra.mxu0 0
        %781 = vmatprep.subr.bf16.mxu0 0
        %782 = vmatpush1.bf16.msra.mxu0 0
        %783 = vmatprep.subr.bf16.mxu0 0
        %784 = vmatpush1.bf16.msra.mxu0 0
        %785 = vmatprep.subr.bf16.mxu0 0
        %786 = vmatpush1.bf16.msra.mxu0 0
        %787 = vmatprep.subr.bf16.mxu0 0
        %788 = vmatpush1.bf16.msra.mxu0 0
        %789 = vmatprep.subr.bf16.mxu0 0
        %790 = vmatpush1.bf16.msra.mxu0 0
        %791 = vmatprep.mubr.bf16.mxu0 0
        %792 = vmatmul.mubr.bf16.gmra.mrb[0].mxu0 %v694
        %v793 = vpop.f32.mrb[0].mxu0
        %v794 = vadd.f32 0.0, %v793
        %v795 = vpop.f32.mrb[0].mxu0
        %v796 = vpop.f32.mrb[0].mxu0
        %v797 = vpop.f32.mrb[0].mxu0
        %798 = vdwg.mxu0
        %v799 = vadd.f32 %v571, %v794
        %v800 = vld [vmem:[%s547] sm:$0x1]
        %v801 = vunpack.c.l.bf16 %v800
        %v802 = vmul.f32 %v799, %v799
        %v803 = vsel %vm575, %v802, 0.0
        %804 = vadd.xlane.f32.xlu0 %v803
        %v805 = vpop.xlane.xlu0 %804
        %v806 = vmul.f32 %v805, %v579
        %v807 = vadd.f32 %v806, 1e-05
        %v808 = vrsqrt.pop %v807
        %v809 = vmul.f32 %v799, %v808
        %v810 = vlaneseq
        %v811 = vshrl.u32 %v810, 7
        %v812 = vsub.s32 0, %v811
        %v813 = vrot.slane %v801, %v812
        %v814 = vmul.f32 %v809, %v813
        %v815 = vpack.c.bf16 %v814, %v814
        %v816 = vld [vmem:[%s552] sm:$0xff]
        %v817 = vld [vmem:[%s552 + $0x8] sm:$0xff]
        %v818 = vld [vmem:[%s552 + $0x10] sm:$0xff]
        %v819 = vld [vmem:[%s552 + $0x18] sm:$0xff]
        %v820 = vld [vmem:[%s552 + $0x20] sm:$0xff]
        %v821 = vld [vmem:[%s552 + $0x28] sm:$0xff]
        %v822 = vld [vmem:[%s552 + $0x30] sm:$0xff]
        %v823 = vld [vmem:[%s552 + $0x38] sm:$0xff]
        %v824 = vld [vmem:[%s552 + $0x40] sm:$0xff]
        %v825 = vld [vmem:[%s552 + $0x48] sm:$0xff]
        %v826 = vld [vmem:[%s552 + $0x50] sm:$0xff]
        %v827 = vld [vmem:[%s552 + $0x58] sm:$0xff]
        %v828 = vld [vmem:[%s552 + $0x60] sm:$0xff]
        %v829 = vld [vmem:[%s552 + $0x68] sm:$0xff]
        %v830 = vld [vmem:[%s552 + $0x70] sm:$0xff]
        %v831 = vld [vmem:[%s552 + $0x78] sm:$0xff]
        %v848 = vunpack.c.l.b16 %v816
        %v849 = vunpack.c.h.b16 %v816
        %v850 = vunpack.c.l.b16 %v817
        %v851 = vunpack.c.h.b16 %v817
        %v852 = vunpack.c.l.b16 %v818
        %v853 = vunpack.c.h.b16 %v818
        %v854 = vunpack.c.l.b16 %v819
        %v855 = vunpack.c.h.b16 %v819
        %v856 = vunpack.c.l.b16 %v820
        %v857 = vunpack.c.h.b16 %v820
        %v858 = vunpack.c.l.b16 %v821
        %v859 = vunpack.c.h.b16 %v821
        %v860 = vunpack.c.l.b16 %v822
        %v861 = vunpack.c.h.b16 %v822
        %v862 = vunpack.c.l.b16 %v823
        %v863 = vunpack.c.h.b16 %v823
        %v864 = vunpack.c.l.b16 %v824
        %v865 = vunpack.c.h.b16 %v824
        %v866 = vunpack.c.l.b16 %v825
        %v867 = vunpack.c.h.b16 %v825
        %v868 = vunpack.c.l.b16 %v826
        %v869 = vunpack.c.h.b16 %v826
        %v870 = vunpack.c.l.b16 %v827
        %v871 = vunpack.c.h.b16 %v827
        %v872 = vunpack.c.l.b16 %v828
        %v873 = vunpack.c.h.b16 %v828
        %v874 = vunpack.c.l.b16 %v829
        %v875 = vunpack.c.h.b16 %v829
        %v876 = vunpack.c.l.b16 %v830
        %v877 = vunpack.c.h.b16 %v830
        %v878 = vunpack.c.l.b16 %v831
        %v879 = vunpack.c.h.b16 %v831
        %v880 = vpack.c.b16 %v850, %v848
        %v881 = vpack.c.b16 %v851, %v849
        %v882 = vpack.c.b16 %v854, %v852
        %v883 = vpack.c.b16 %v855, %v853
        %v884 = vpack.c.b16 %v858, %v856
        %v885 = vpack.c.b16 %v859, %v857
        %v886 = vpack.c.b16 %v862, %v860
        %v887 = vpack.c.b16 %v863, %v861
        %v888 = vpack.c.b16 %v866, %v864
        %v889 = vpack.c.b16 %v867, %v865
        %v890 = vpack.c.b16 %v870, %v868
        %v891 = vpack.c.b16 %v871, %v869
        %v892 = vpack.c.b16 %v874, %v872
        %v893 = vpack.c.b16 %v875, %v873
        %v894 = vpack.c.b16 %v878, %v876
        %v895 = vpack.c.b16 %v879, %v877
        %912 = vmatprep.subr.bf16.mxu0 %v881
        %913 = vmatpush1.bf16.msra.mxu0 %v880
        %914 = vmatprep.subr.bf16.mxu0 %v883
        %915 = vmatpush1.bf16.msra.mxu0 %v882
        %916 = vmatprep.subr.bf16.mxu0 %v885
        %917 = vmatpush1.bf16.msra.mxu0 %v884
        %918 = vmatprep.subr.bf16.mxu0 %v887
        %919 = vmatpush1.bf16.msra.mxu0 %v886
        %920 = vmatprep.subr.bf16.mxu0 %v889
        %921 = vmatpush1.bf16.msra.mxu0 %v888
        %922 = vmatprep.subr.bf16.mxu0 %v891
        %923 = vmatpush1.bf16.msra.mxu0 %v890
        %924 = vmatprep.subr.bf16.mxu0 %v893
        %925 = vmatpush1.bf16.msra.mxu0 %v892
        %926 = vmatprep.subr.bf16.mxu0 %v895
        %927 = vmatpush1.bf16.msra.mxu0 %v894
        %928 = vmatprep.subr.bf16.mxu0 0
        %929 = vmatpush1.bf16.msra.mxu0 0
        %930 = vmatprep.subr.bf16.mxu0 0
        %931 = vmatpush1.bf16.msra.mxu0 0
        %932 = vmatprep.subr.bf16.mxu0 0
        %933 = vmatpush1.bf16.msra.mxu0 0
        %934 = vmatprep.subr.bf16.mxu0 0
        %935 = vmatpush1.bf16.msra.mxu0 0
        %936 = vmatprep.subr.bf16.mxu0 0
        %937 = vmatpush1.bf16.msra.mxu0 0
        %938 = vmatprep.subr.bf16.mxu0 0
        %939 = vmatpush1.bf16.msra.mxu0 0
        %940 = vmatprep.subr.bf16.mxu0 0
        %941 = vmatpush1.bf16.msra.mxu0 0
        %942 = vmatprep.subr.bf16.mxu0 0
        %943 = vmatpush1.bf16.msra.mxu0 0
        %944 = vmatprep.mubr.bf16.mxu0 0
        %945 = vmatmul.mubr.bf16.gmra.mrb[0].mxu0 %v815
        %v946 = vpop.f32.mrb[0].mxu0
        %v947 = vadd.f32 0.0, %v946
        %v948 = vpop.f32.mrb[0].mxu0
        %v949 = vadd.f32 0.0, %v948
        %v950 = vpop.f32.mrb[0].mxu0
        %v951 = vpop.f32.mrb[0].mxu0
        %952 = vdwg.mxu0
        %v953 = vld [vmem:[%s557] sm:$0xff]
        %v954 = vld [vmem:[%s557 + $0x8] sm:$0xff]
        %v955 = vld [vmem:[%s557 + $0x10] sm:$0xff]
        %v956 = vld [vmem:[%s557 + $0x18] sm:$0xff]
        %v957 = vld [vmem:[%s557 + $0x20] sm:$0xff]
        %v958 = vld [vmem:[%s557 + $0x28] sm:$0xff]
        %v959 = vld [vmem:[%s557 + $0x30] sm:$0xff]
        %v960 = vld [vmem:[%s557 + $0x38] sm:$0xff]
        %v961 = vld [vmem:[%s557 + $0x40] sm:$0xff]
        %v962 = vld [vmem:[%s557 + $0x48] sm:$0xff]
        %v963 = vld [vmem:[%s557 + $0x50] sm:$0xff]
        %v964 = vld [vmem:[%s557 + $0x58] sm:$0xff]
        %v965 = vld [vmem:[%s557 + $0x60] sm:$0xff]
        %v966 = vld [vmem:[%s557 + $0x68] sm:$0xff]
        %v967 = vld [vmem:[%s557 + $0x70] sm:$0xff]
        %v968 = vld [vmem:[%s557 + $0x78] sm:$0xff]
        %v985 = vunpack.c.l.b16 %v953
        %v986 = vunpack.c.h.b16 %v953
        %v987 = vunpack.c.l.b16 %v954
        %v988 = vunpack.c.h.b16 %v954
        %v989 = vunpack.c.l.b16 %v955
        %v990 = vunpack.c.h.b16 %v955
        %v991 = vunpack.c.l.b16 %v956
        %v992 = vunpack.c.h.b16 %v956
        %v993 = vunpack.c.l.b16 %v957
        %v994 = vunpack.c.h.b16 %v957
        %v995 = vunpack.c.l.b16 %v958
        %v996 = vunpack.c.h.b16 %v958
        %v997 = vunpack.c.l.b16 %v959
        %v998 = vunpack.c.h.b16 %v959
        %v999 = vunpack.c.l.b16 %v960
        %v1000 = vunpack.c.h.b16 %v960
        %v1001 = vunpack.c.l.b16 %v961
        %v1002 = vunpack.c.h.b16 %v961
        %v1003 = vunpack.c.l.b16 %v962
        %v1004 = vunpack.c.h.b16 %v962
        %v1005 = vunpack.c.l.b16 %v963
        %v1006 = vunpack.c.h.b16 %v963
        %v1007 = vunpack.c.l.b16 %v964
        %v1008 = vunpack.c.h.b16 %v964
        %v1009 = vunpack.c.l.b16 %v965
        %v1010 = vunpack.c.h.b16 %v965
        %v1011 = vunpack.c.l.b16 %v966
        %v1012 = vunpack.c.h.b16 %v966
        %v1013 = vunpack.c.l.b16 %v967
        %v1014 = vunpack.c.h.b16 %v967
        %v1015 = vunpack.c.l.b16 %v968
        %v1016 = vunpack.c.h.b16 %v968
        %v1017 = vpack.c.b16 %v987, %v985
        %v1018 = vpack.c.b16 %v988, %v986
        %v1019 = vpack.c.b16 %v991, %v989
        %v1020 = vpack.c.b16 %v992, %v990
        %v1021 = vpack.c.b16 %v995, %v993
        %v1022 = vpack.c.b16 %v996, %v994
        %v1023 = vpack.c.b16 %v999, %v997
        %v1024 = vpack.c.b16 %v1000, %v998
        %v1025 = vpack.c.b16 %v1003, %v1001
        %v1026 = vpack.c.b16 %v1004, %v1002
        %v1027 = vpack.c.b16 %v1007, %v1005
        %v1028 = vpack.c.b16 %v1008, %v1006
        %v1029 = vpack.c.b16 %v1011, %v1009
        %v1030 = vpack.c.b16 %v1012, %v1010
        %v1031 = vpack.c.b16 %v1015, %v1013
        %v1032 = vpack.c.b16 %v1016, %v1014
        %1049 = vmatprep.subr.bf16.mxu0 %v1018
        %1050 = vmatpush1.bf16.msra.mxu0 %v1017
        %1051 = vmatprep.subr.bf16.mxu0 %v1020
        %1052 = vmatpush1.bf16.msra.mxu0 %v1019
        %1053 = vmatprep.subr.bf16.mxu0 %v1022
        %1054 = vmatpush1.bf16.msra.mxu0 %v1021
        %1055 = vmatprep.subr.bf16.mxu0 %v1024
        %1056 = vmatpush1.bf16.msra.mxu0 %v1023
        %1057 = vmatprep.subr.bf16.mxu0 %v1026
        %1058 = vmatpush1.bf16.msra.mxu0 %v1025
        %1059 = vmatprep.subr.bf16.mxu0 %v1028
        %1060 = vmatpush1.bf16.msra.mxu0 %v1027
        %1061 = vmatprep.subr.bf16.mxu0 %v1030
        %1062 = vmatpush1.bf16.msra.mxu0 %v1029
        %1063 = vmatprep.subr.bf16.mxu0 %v1032
        %1064 = vmatpush1.bf16.msra.mxu0 %v1031
        %1065 = vmatprep.subr.bf16.mxu0 0
        %1066 = vmatpush1.bf16.msra.mxu0 0
        %1067 = vmatprep.subr.bf16.mxu0 0
        %1068 = vmatpush1.bf16.msra.mxu0 0
        %1069 = vmatprep.subr.bf16.mxu0 0
        %1070 = vmatpush1.bf16.msra.mxu0 0
        %1071 = vmatprep.subr.bf16.mxu0 0
        %1072 = vmatpush1.bf16.msra.mxu0 0
        %1073 = vmatprep.subr.bf16.mxu0 0
        %1074 = vmatpush1.bf16.msra.mxu0 0
        %1075 = vmatprep.subr.bf16.mxu0 0
        %1076 = vmatpush1.bf16.msra.mxu0 0
        %1077 = vmatprep.subr.bf16.mxu0 0
        %1078 = vmatpush1.bf16.msra.mxu0 0
        %1079 = vmatprep.subr.bf16.mxu0 0
        %1080 = vmatpush1.bf16.msra.mxu0 0
        %1081 = vmatprep.mubr.bf16.mxu0 0
        %1082 = vmatmul.mubr.bf16.gmra.mrb[0].mxu0 %v815
        %v1083 = vpop.f32.mrb[0].mxu0
        %v1084 = vadd.f32 0.0, %v1083
        %v1085 = vpop.f32.mrb[0].mxu0
        %v1086 = vadd.f32 0.0, %v1085
        %v1087 = vpop.f32.mrb[0].mxu0
        %v1088 = vpop.f32.mrb[0].mxu0
        %1089 = vdwg.mxu0
        %v1090 = vxor.u32 %v947, 2147483648
        %v1091 = vxor.u32 %v949, 2147483648
        %v1092 = vmul.f32 %v1090, 1.442695
        %v1093 = vpow.pop %v1092
        %v1094 = vmul.f32 %v1091, 1.442695
        %v1095 = vpow.pop %v1094
        %v1096 = vadd.f32 %v1093, 1.0
        %v1097 = vadd.f32 %v1095, 1.0
        %v1098 = vrcp.pop %v1096
        %v1099 = vmul.f32 1.0, %v1098
        %v1100 = vrcp.pop %v1097
        %v1101 = vmul.f32 1.0, %v1100
        %v1102 = vmul.f32 %v947, %v1099
        %v1103 = vmul.f32 %v949, %v1101
        %v1104 = vmul.f32 %v1102, %v1084
        %v1105 = vmul.f32 %v1103, %v1086
        %v1106 = vpack.c.bf16 %v1104, %v1104
        %v1107 = vpack.c.bf16 %v1105, %v1105
        %v1108 = vld [vmem:[%s562] sm:$0xf]
        %v1109 = vld [vmem:[%s562 + $0x4] sm:$0xf]
        %v1110 = vld [vmem:[%s562 + $0x8] sm:$0xf]
        %v1111 = vld [vmem:[%s562 + $0xc] sm:$0xf]
        %v1112 = vld [vmem:[%s562 + $0x10] sm:$0xf]
        %v1113 = vld [vmem:[%s562 + $0x14] sm:$0xf]
        %v1114 = vld [vmem:[%s562 + $0x18] sm:$0xf]
        %v1115 = vld [vmem:[%s562 + $0x1c] sm:$0xf]
        %v1116 = vld [vmem:[%s562 + $0x20] sm:$0xf]
        %v1117 = vld [vmem:[%s562 + $0x24] sm:$0xf]
        %v1118 = vld [vmem:[%s562 + $0x28] sm:$0xf]
        %v1119 = vld [vmem:[%s562 + $0x2c] sm:$0xf]
        %v1120 = vld [vmem:[%s562 + $0x30] sm:$0xf]
        %v1121 = vld [vmem:[%s562 + $0x34] sm:$0xf]
        %v1122 = vld [vmem:[%s562 + $0x38] sm:$0xf]
        %v1123 = vld [vmem:[%s562 + $0x3c] sm:$0xf]
        %v1124 = vld [vmem:[%s562 + $0x40] sm:$0xf]
        %v1125 = vld [vmem:[%s562 + $0x44] sm:$0xf]
        %v1126 = vld [vmem:[%s562 + $0x48] sm:$0xf]
        %v1127 = vld [vmem:[%s562 + $0x4c] sm:$0xf]
        %v1128 = vld [vmem:[%s562 + $0x50] sm:$0xf]
        %v1129 = vld [vmem:[%s562 + $0x54] sm:$0xf]
        %v1130 = vld [vmem:[%s562 + $0x58] sm:$0xf]
        %v1131 = vld [vmem:[%s562 + $0x5c] sm:$0xf]
        %v1132 = vld [vmem:[%s562 + $0x60] sm:$0xf]
        %v1133 = vld [vmem:[%s562 + $0x64] sm:$0xf]
        %v1134 = vld [vmem:[%s562 + $0x68] sm:$0xf]
        %v1135 = vld [vmem:[%s562 + $0x6c] sm:$0xf]
        %v1136 = vld [vmem:[%s562 + $0x70] sm:$0xf]
        %v1137 = vld [vmem:[%s562 + $0x74] sm:$0xf]
        %v1138 = vld [vmem:[%s562 + $0x78] sm:$0xf]
        %v1139 = vld [vmem:[%s562 + $0x7c] sm:$0xf]
        %v1172 = vunpack.c.l.b16 %v1108
        %v1173 = vunpack.c.l.b16 %v1109
        %v1174 = vunpack.c.l.b16 %v1110
        %v1175 = vunpack.c.l.b16 %v1111
        %v1176 = vunpack.c.l.b16 %v1112
        %v1177 = vunpack.c.l.b16 %v1113
        %v1178 = vunpack.c.l.b16 %v1114
        %v1179 = vunpack.c.l.b16 %v1115
        %v1180 = vunpack.c.l.b16 %v1116
        %v1181 = vunpack.c.l.b16 %v1117
        %v1182 = vunpack.c.l.b16 %v1118
        %v1183 = vunpack.c.l.b16 %v1119
        %v1184 = vunpack.c.l.b16 %v1120
        %v1185 = vunpack.c.l.b16 %v1121
        %v1186 = vunpack.c.l.b16 %v1122
        %v1187 = vunpack.c.l.b16 %v1123
        %v1188 = vunpack.c.l.b16 %v1124
        %v1189 = vunpack.c.l.b16 %v1125
        %v1190 = vunpack.c.l.b16 %v1126
        %v1191 = vunpack.c.l.b16 %v1127
        %v1192 = vunpack.c.l.b16 %v1128
        %v1193 = vunpack.c.l.b16 %v1129
        %v1194 = vunpack.c.l.b16 %v1130
        %v1195 = vunpack.c.l.b16 %v1131
        %v1196 = vunpack.c.l.b16 %v1132
        %v1197 = vunpack.c.l.b16 %v1133
        %v1198 = vunpack.c.l.b16 %v1134
        %v1199 = vunpack.c.l.b16 %v1135
        %v1200 = vunpack.c.l.b16 %v1136
        %v1201 = vunpack.c.l.b16 %v1137
        %v1202 = vunpack.c.l.b16 %v1138
        %v1203 = vunpack.c.l.b16 %v1139
        %v1204 = vpack.c.b16 %v1173, %v1172
        %v1205 = vpack.c.b16 %v1175, %v1174
        %v1206 = vpack.c.b16 %v1177, %v1176
        %v1207 = vpack.c.b16 %v1179, %v1178
        %v1208 = vpack.c.b16 %v1181, %v1180
        %v1209 = vpack.c.b16 %v1183, %v1182
        %v1210 = vpack.c.b16 %v1185, %v1184
        %v1211 = vpack.c.b16 %v1187, %v1186
        %v1212 = vpack.c.b16 %v1189, %v1188
        %v1213 = vpack.c.b16 %v1191, %v1190
        %v1214 = vpack.c.b16 %v1193, %v1192
        %v1215 = vpack.c.b16 %v1195, %v1194
        %v1216 = vpack.c.b16 %v1197, %v1196
        %v1217 = vpack.c.b16 %v1199, %v1198
        %v1218 = vpack.c.b16 %v1201, %v1200
        %v1219 = vpack.c.b16 %v1203, %v1202
        %1236 = vmatprep.subr.bf16.mxu0 0
        %1237 = vmatpush1.bf16.msra.mxu0 %v1204
        %1238 = vmatprep.subr.bf16.mxu0 0
        %1239 = vmatpush1.bf16.msra.mxu0 %v1205
        %1240 = vmatprep.subr.bf16.mxu0 0
        %1241 = vmatpush1.bf16.msra.mxu0 %v1206
        %1242 = vmatprep.subr.bf16.mxu0 0
        %1243 = vmatpush1.bf16.msra.mxu0 %v1207
        %1244 = vmatprep.subr.bf16.mxu0 0
        %1245 = vmatpush1.bf16.msra.mxu0 %v1208
        %1246 = vmatprep.subr.bf16.mxu0 0
        %1247 = vmatpush1.bf16.msra.mxu0 %v1209
        %1248 = vmatprep.subr.bf16.mxu0 0
        %1249 = vmatpush1.bf16.msra.mxu0 %v1210
        %1250 = vmatprep.subr.bf16.mxu0 0
        %1251 = vmatpush1.bf16.msra.mxu0 %v1211
        %1252 = vmatprep.subr.bf16.mxu0 0
        %1253 = vmatpush1.bf16.msra.mxu0 %v1212
        %1254 = vmatprep.subr.bf16.mxu0 0
        %1255 = vmatpush1.bf16.msra.mxu0 %v1213
        %1256 = vmatprep.subr.bf16.mxu0 0
        %1257 = vmatpush1.bf16.msra.mxu0 %v1214
        %1258 = vmatprep.subr.bf16.mxu0 0
        %1259 = vmatpush1.bf16.msra.mxu0 %v1215
        %1260 = vmatprep.subr.bf16.mxu0 0
        %1261 = vmatpush1.bf16.msra.mxu0 %v1216
        %1262 = vmatprep.subr.bf16.mxu0 0
        %1263 = vmatpush1.bf16.msra.mxu0 %v1217
        %1264 = vmatprep.subr.bf16.mxu0 0
        %1265 = vmatpush1.bf16.msra.mxu0 %v1218
        %1266 = vmatprep.subr.bf16.mxu0 0
        %1267 = vmatpush1.bf16.msra.mxu0 %v1219
        %1268 = vmatprep.mubr.bf16.mxu0 %v1107
        %1269 = vmatmul.mubr.bf16.gmra.mrb[0].mxu0 %v1106
        %v1270 = vpop.f32.mrb[0].mxu0
        %v1271 = vadd.f32 0.0, %v1270
        %v1272 = vpop.f32.mrb[0].mxu0
        %v1273 = vpop.f32.mrb[0].mxu0
        %v1274 = vpop.f32.mrb[0].mxu0
        %1275 = vdwg.mxu0
        %v1276 = vadd.f32 %v799, %v1271
        %1277 = vst [vmem:[#allocation2] sm:$0x3] %v1276
        %p1278 = scmp.eq.s32.totalorder %s30, 1
        // Predicated region
        $region77: #{forward.13} parent=71 // pred_check
          %p1279 = pneg %p1278
        $region78: #{forward.13} parent=71 // pred_check_branch
          %1281 = sbr.rel (%p1279) target = $region80
        $region79: #{forward.13} parent=71 // pred_region
          %v1282 = vld [vmem:[%s8] sm:$0x1]
          %v1283 = vunpack.c.l.bf16 %v1282
          %v1284 = vmul.f32 %v1276, %v1276
          %v1285 = vsel %vm575, %v1284, 0.0
          %1286 = vadd.xlane.f32.xlu0 %v1285
          %v1287 = vpop.xlane.xlu0 %1286
          %v1288 = vmul.f32 %v1287, %v579
          %v1289 = vadd.f32 %v1288, 1e-05
          %v1290 = vrsqrt.pop %v1289
          %v1291 = vmul.f32 %v1276, %v1290
          %v1292 = vlaneseq
          %v1293 = vshrl.u32 %v1292, 7
          %v1294 = vsub.s32 0, %v1293
          %v1295 = vrot.slane %v1283, %v1294
          %v1296 = vmul.f32 %v1291, %v1295
          %v1297 = vpack.c.bf16 %v1296, %v1296
          %v1298 = vld [vmem:[%s9] sm:$0xf]
          %v1299 = vld [vmem:[%s9 + $0x4] sm:$0xf]
          %v1300 = vld [vmem:[%s9 + $0x8] sm:$0xf]
          %v1301 = vld [vmem:[%s9 + $0xc] sm:$0xf]
          %v1302 = vld [vmem:[%s9 + $0x10] sm:$0xf]
          %v1303 = vld [vmem:[%s9 + $0x14] sm:$0xf]
          %v1304 = vld [vmem:[%s9 + $0x18] sm:$0xf]
          %v1305 = vld [vmem:[%s9 + $0x1c] sm:$0xf]
          %v1306 = vld [vmem:[%s9 + $0x20] sm:$0xf]
          %v1307 = vld [vmem:[%s9 + $0x24] sm:$0xf]
          %v1308 = vld [vmem:[%s9 + $0x28] sm:$0xf]
          %v1309 = vld [vmem:[%s9 + $0x2c] sm:$0xf]
          %v1310 = vld [vmem:[%s9 + $0x30] sm:$0xf]
          %v1311 = vld [vmem:[%s9 + $0x34] sm:$0xf]
          %v1312 = vld [vmem:[%s9 + $0x38] sm:$0xf]
          %v1313 = vld [vmem:[%s9 + $0x3c] sm:$0xf]
          %v1314 = vld [vmem:[%s10] sm:$0x1]
          %v1315 = vunpack.c.l.bf16 %v1314
          %v1316 = vlaneseq
          %v1317 = vshrl.u32 %v1316, 7
          %v1318 = vsub.s32 0, %v1317
          %v1319 = vrot.slane %v1315, %v1318
          %v1336 = vunpack.c.l.b16 %v1298
          %v1337 = vunpack.c.l.b16 %v1299
          %v1338 = vunpack.c.l.b16 %v1300
          %v1339 = vunpack.c.l.b16 %v1301
          %v1340 = vunpack.c.l.b16 %v1302
          %v1341 = vunpack.c.l.b16 %v1303
          %v1342 = vunpack.c.l.b16 %v1304
          %v1343 = vunpack.c.l.b16 %v1305
          %v1344 = vunpack.c.l.b16 %v1306
          %v1345 = vunpack.c.l.b16 %v1307
          %v1346 = vunpack.c.l.b16 %v1308
          %v1347 = vunpack.c.l.b16 %v1309
          %v1348 = vunpack.c.l.b16 %v1310
          %v1349 = vunpack.c.l.b16 %v1311
          %v1350 = vunpack.c.l.b16 %v1312
          %v1351 = vunpack.c.l.b16 %v1313
          %v1352 = vpack.c.b16 %v1337, %v1336
          %v1353 = vpack.c.b16 %v1339, %v1338
          %v1354 = vpack.c.b16 %v1341, %v1340
          %v1355 = vpack.c.b16 %v1343, %v1342
          %v1356 = vpack.c.b16 %v1345, %v1344
          %v1357 = vpack.c.b16 %v1347, %v1346
          %v1358 = vpack.c.b16 %v1349, %v1348
          %v1359 = vpack.c.b16 %v1351, %v1350
          %1368 = vmatprep.subr.bf16.mxu0 0
          %1369 = vmatpush1.bf16.msra.mxu0 %v1352
          %1370 = vmatprep.subr.bf16.mxu0 0
          %1371 = vmatpush1.bf16.msra.mxu0 %v1353
          %1372 = vmatprep.subr.bf16.mxu0 0
          %1373 = vmatpush1.bf16.msra.mxu0 %v1354
          %1374 = vmatprep.subr.bf16.mxu0 0
          %1375 = vmatpush1.bf16.msra.mxu0 %v1355
          %1376 = vmatprep.subr.bf16.mxu0 0
          %1377 = vmatpush1.bf16.msra.mxu0 %v1356
          %1378 = vmatprep.subr.bf16.mxu0 0
          %1379 = vmatpush1.bf16.msra.mxu0 %v1357
          %1380 = vmatprep.subr.bf16.mxu0 0
          %1381 = vmatpush1.bf16.msra.mxu0 %v1358
          %1382 = vmatprep.subr.bf16.mxu0 0
          %1383 = vmatpush1.bf16.msra.mxu0 %v1359
          %1384 = vmatprep.subr.bf16.mxu0 0
          %1385 = vmatpush1.bf16.msra.mxu0 0
          %1386 = vmatprep.subr.bf16.mxu0 0
          %1387 = vmatpush1.bf16.msra.mxu0 0
          %1388 = vmatprep.subr.bf16.mxu0 0
          %1389 = vmatpush1.bf16.msra.mxu0 0
          %1390 = vmatprep.subr.bf16.mxu0 0
          %1391 = vmatpush1.bf16.msra.mxu0 0
          %1392 = vmatprep.subr.bf16.mxu0 0
          %1393 = vmatpush1.bf16.msra.mxu0 0
          %1394 = vmatprep.subr.bf16.mxu0 0
          %1395 = vmatpush1.bf16.msra.mxu0 0
          %1396 = vmatprep.subr.bf16.mxu0 0
          %1397 = vmatpush1.bf16.msra.mxu0 0
          %1398 = vmatprep.subr.bf16.mxu0 0
          %1399 = vmatpush1.bf16.msra.mxu0 0
          %1400 = vmatprep.mubr.bf16.mxu0 0
          %1401 = vmatmul.mubr.bf16.gmra.mrb[0].mxu0 %v1297
          %v1402 = vpop.f32.mrb[0].mxu0
          %v1403 = vadd.f32 %v1319, %v1402
          %v1404 = vpop.f32.mrb[0].mxu0
          %v1405 = vpop.f32.mrb[0].mxu0
          %v1406 = vpop.f32.mrb[0].mxu0
          %1407 = vdwg.mxu0
          %v1408 = vld [vmem:[%s11] sm:$0xf]
          %v1409 = vld [vmem:[%s11 + $0x4] sm:$0xf]
          %v1410 = vld [vmem:[%s11 + $0x8] sm:$0xf]
          %v1411 = vld [vmem:[%s11 + $0xc] sm:$0xf]
          %v1412 = vld [vmem:[%s11 + $0x10] sm:$0xf]
          %v1413 = vld [vmem:[%s11 + $0x14] sm:$0xf]
          %v1414 = vld [vmem:[%s11 + $0x18] sm:$0xf]
          %v1415 = vld [vmem:[%s11 + $0x1c] sm:$0xf]
          %v1416 = vld [vmem:[%s11 + $0x20] sm:$0xf]
          %v1417 = vld [vmem:[%s11 + $0x24] sm:$0xf]
          %v1418 = vld [vmem:[%s11 + $0x28] sm:$0xf]
          %v1419 = vld [vmem:[%s11 + $0x2c] sm:$0xf]
          %v1420 = vld [vmem:[%s11 + $0x30] sm:$0xf]
          %v1421 = vld [vmem:[%s11 + $0x34] sm:$0xf]
          %v1422 = vld [vmem:[%s11 + $0x38] sm:$0xf]
          %v1423 = vld [vmem:[%s11 + $0x3c] sm:$0xf]
          %v1424 = vld [vmem:[#allocation3] sm:$0x1]
          %v1425 = vunpack.c.l.bf16 %v1424
          %v1426 = vlaneseq
          %v1427 = vshrl.u32 %v1426, 7
          %v1428 = vsub.s32 0, %v1427
          %v1429 = vrot.slane %v1425, %v1428
          %v1446 = vunpack.c.l.b16 %v1408
          %v1447 = vunpack.c.l.b16 %v1409
          %v1448 = vunpack.c.l.b16 %v1410
          %v1449 = vunpack.c.l.b16 %v1411
          %v1450 = vunpack.c.l.b16 %v1412
          %v1451 = vunpack.c.l.b16 %v1413
          %v1452 = vunpack.c.l.b16 %v1414
          %v1453 = vunpack.c.l.b16 %v1415
          %v1454 = vunpack.c.l.b16 %v1416
          %v1455 = vunpack.c.l.b16 %v1417
          %v1456 = vunpack.c.l.b16 %v1418
          %v1457 = vunpack.c.l.b16 %v1419
          %v1458 = vunpack.c.l.b16 %v1420
          %v1459 = vunpack.c.l.b16 %v1421
          %v1460 = vunpack.c.l.b16 %v1422
          %v1461 = vunpack.c.l.b16 %v1423
          %v1462 = vpack.c.b16 %v1447, %v1446
          %v1463 = vpack.c.b16 %v1449, %v1448
          %v1464 = vpack.c.b16 %v1451, %v1450
          %v1465 = vpack.c.b16 %v1453, %v1452
          %v1466 = vpack.c.b16 %v1455, %v1454
          %v1467 = vpack.c.b16 %v1457, %v1456
          %v1468 = vpack.c.b16 %v1459, %v1458
          %v1469 = vpack.c.b16 %v1461, %v1460
          %1478 = vmatprep.subr.bf16.mxu0 0
          %1479 = vmatpush1.bf16.msra.mxu0 %v1462
          %1480 = vmatprep.subr.bf16.mxu0 0
          %1481 = vmatpush1.bf16.msra.mxu0 %v1463
          %1482 = vmatprep.subr.bf16.mxu0 0
          %1483 = vmatpush1.bf16.msra.mxu0 %v1464
          %1484 = vmatprep.subr.bf16.mxu0 0
          %1485 = vmatpush1.bf16.msra.mxu0 %v1465
          %1486 = vmatprep.subr.bf16.mxu0 0
          %1487 = vmatpush1.bf16.msra.mxu0 %v1466
          %1488 = vmatprep.subr.bf16.mxu0 0
          %1489 = vmatpush1.bf16.msra.mxu0 %v1467
          %1490 = vmatprep.subr.bf16.mxu0 0
          %1491 = vmatpush1.bf16.msra.mxu0 %v1468
          %1492 = vmatprep.subr.bf16.mxu0 0
          %1493 = vmatpush1.bf16.msra.mxu0 %v1469
          %1494 = vmatprep.subr.bf16.mxu0 0
          %1495 = vmatpush1.bf16.msra.mxu0 0
          %1496 = vmatprep.subr.bf16.mxu0 0
          %1497 = vmatpush1.bf16.msra.mxu0 0
          %1498 = vmatprep.subr.bf16.mxu0 0
          %1499 = vmatpush1.bf16.msra.mxu0 0
          %1500 = vmatprep.subr.bf16.mxu0 0
          %1501 = vmatpush1.bf16.msra.mxu0 0
          %1502 = vmatprep.subr.bf16.mxu0 0
          %1503 = vmatpush1.bf16.msra.mxu0 0
          %1504 = vmatprep.subr.bf16.mxu0 0
          %1505 = vmatpush1.bf16.msra.mxu0 0
          %1506 = vmatprep.subr.bf16.mxu0 0
          %1507 = vmatpush1.bf16.msra.mxu0 0
          %1508 = vmatprep.subr.bf16.mxu0 0
          %1509 = vmatpush1.bf16.msra.mxu0 0
          %1510 = vmatprep.mubr.bf16.mxu0 0
          %1511 = vmatmul.mubr.bf16.gmra.mrb[0].mxu0 %v1297
          %v1512 = vpop.f32.mrb[0].mxu0
          %v1513 = vadd.f32 %v1429, %v1512
          %v1514 = vpop.f32.mrb[0].mxu0
          %v1515 = vpop.f32.mrb[0].mxu0
          %v1516 = vpop.f32.mrb[0].mxu0
          %1517 = vdwg.mxu0
          %v1518 = vpack.c.bf16 %v1403, %v1403
          %vm1519 = vcmask 122880
          %1520 = vst.msk [vmem:[#allocation4] sm:$0x1] %vm1519, %v1518
          %v1521 = vtanh.pop %v1513
          %v1522 = vpack.c.bf16 %v1521, %v1521
          %vm1523 = vcmask 0
          %1524 = vst.msk [vmem:[#allocation6] sm:$0x1] %vm1523, %v1522
        $region80: #{forward.13} parent=71 // pred_fallthru
          _
        // Predicated region
        $region81: #{forward.13} parent=71 // pred_check
          %p1525 = pneg %p351
        $region82: #{forward.13} parent=71 // pred_check_branch
          %1527 = sbr.rel (%p1525) target = $region84
        $region83: #{forward.13} parent=71 // pred_region
          %s1529 = ssub.s32 16, 16
          %1530 = vsyncadd [#allocation5], %s1529
          %s1532 = sshll.u32 [#allocation4], 4
          %s1533 = int_to_ptr.vmem [resolvable:$true] %s1532
          %1535 = dma.vmem_to_hbm [thread:$0]  %s1533, 16, %s13, [#allocation5]
        $region84: #{forward.13} parent=71 // pred_fallthru
          _
        // Predicated region
        $region85: #{forward.13} parent=71 // pred_check
          %p1536 = pneg %p372
        $region86: #{forward.13} parent=71 // pred_check_branch
          %1538 = sbr.rel (%p1536) target = $region88
        $region87: #{forward.13} parent=71 // pred_region
          %s1540 = ssub.s32 16, 16
          %1541 = vsyncadd [#allocation7], %s1540
          %s1543 = sshll.u32 [#allocation6], 4
          %s1544 = int_to_ptr.vmem [resolvable:$true] %s1543
          %1546 = dma.vmem_to_hbm [thread:$0]  %s1544, 16, %s14, [#allocation7]
        $region88: #{forward.13} parent=71 // pred_fallthru
          _
        // Predicated region
        $region89: #{forward.13} parent=71 // pred_check
          %p1547 = pneg %p351
        $region90: #{forward.13} parent=71 // pred_check_branch
          %1549 = sbr.rel (%p1547) target = $region92
        $region91: #{forward.13} parent=71 // pred_region
          %1550 = dma.done [#allocation5], 16
        $region92: #{forward.13} parent=71 // pred_fallthru
          _
        // Predicated region
        $region93: #{forward.13} parent=71 // pred_check
          %p1551 = pneg %p372
        $region94: #{forward.13} parent=71 // pred_check_branch
          %1553 = sbr.rel (%p1551) target = $region96
        $region95: #{forward.13} parent=71 // pred_region
          %1554 = dma.done [#allocation7], 16
        $region96: #{forward.13} parent=71 // pred_fallthru
          _
      $region72: #{forward.13} parent=5 // pred_fallthru
        _
      %p1555 = scmp.le.s32.totalorder 2, %s25
      // Predicated region
      $region97: #{forward.13} parent=5 // pred_check
        %p1556 = pneg %p1555
      $region98: #{forward.13} parent=5 // pred_check_branch
        %1558 = sbr.rel (%p1556) target = $region100
      $region99: #{forward.13} parent=5 // pred_region
        %s1559 = ssub.s32 %s25, 2
      $region100: #{forward.13} parent=5 // pred_fallthru
        _
    $region6: #{forward.13} parent=1 // loop_footer
      %s29 = sadd.s32 1, %s25
    $region7: #{forward.13} parent=1 // loop_footer_branch
      %24 = sbr.rel target = $region3
    $region8: #{forward.13} parent=1 // loop_exit
      _
    %1560 = vsyncpa [#allocation5], 1
    %s1561 = scalar_lea.sflag [#allocation5], 1
    %1562 = vsyncpa %s1561, 1
    %1563 = vsyncpa [#allocation7], 1

</llo_original>
